<compile_context>
chip_gen: v6e
topology: v6e:2x2x1
jax: 0.10.0
libtpu: 0.0.40
codegen_flags: <defaults>
</compile_context>

<pallas_src>
import functools

import jax
import jax.numpy as jnp
from jax.experimental import pallas as pl
from jax.experimental.pallas import tpu as pltpu

IN_FEATURES = 64 * 15 * 15          # 14400
HIDDEN = 256
LANE = 128

NUM_H_TILES = 2                     # hidden split: 2 x 128 ("parallel" axis)
H_TILE = HIDDEN // NUM_H_TILES      # 128
NUM_K_TILES = 1                     # fc1 contraction tiles ("arbitrary" axis)


def _round_up(v, m):
    return (v + m - 1) // m * m


K_TILE = _round_up(-(-IN_FEATURES // NUM_K_TILES), LANE)   # 14464
K_PADDED = K_TILE * NUM_K_TILES                             # 14464


def actor_kernel(x_ref, w1_ref, b1_ref, w2_ref, z_ref, acc_ref):
    """Grid = (hidden_half, k_tile). Each step: partial fc1 for one hidden
    half; on the last k step apply relu and the matching fc2 row-slice,
    writing a partial fc2 result (summed + bias + tanh in the wrapper)."""
    k = pl.program_id(1)

    @pl.when(k == 0)
    def _init():
        acc_ref[...] = jnp.zeros_like(acc_ref)

    # fc1 partial product: bf16 x bf16 on the MXU, f32 accumulation.
    acc_ref[...] += jnp.dot(x_ref[...], w1_ref[...],
                            preferred_element_type=jnp.float32)

    @pl.when(k == pl.num_programs(1) - 1)
    def _finalize():
        h = jnp.maximum(acc_ref[...] + b1_ref[...], 0.0)         # relu(fc1)
        z = jnp.dot(h.astype(jnp.bfloat16), w2_ref[...],         # partial fc2
                    preferred_element_type=jnp.float32)
        z_ref[...] = z[None]                                     # (1, B, Ap)


def prepare_actor_params(w1, b1, w2, b2):
    """One-time prep: bf16 weights, zero-padded K and action dims."""
    K, H = w1.shape
    A = w2.shape[1]
    Ap = _round_up(A, LANE)
    w1p = jnp.pad(w1.astype(jnp.bfloat16), ((0, K_PADDED - K), (0, 0)))
    b1p = b1.reshape(1, H).astype(jnp.float32)
    w2p = jnp.pad(w2.astype(jnp.bfloat16), ((0, 0), (0, Ap - A)))
    b2p = jnp.pad(b2.reshape(1, A).astype(jnp.float32), ((0, 0), (0, Ap - A)))
    return w1p, b1p, w2p, b2p


@functools.partial(jax.jit, static_argnames=("max_action", "action_dim"))
def actor_forward(x, w1p, b1p, w2p, b2p, *, max_action, action_dim):
    B, K = x.shape
    Kp, H = w1p.shape
    Ap = w2p.shape[1]
    assert Kp == K_PADDED and H == HIDDEN

    # Only 64 padded columns; padded columns/rows contribute zero.
    xp = jnp.pad(x.astype(jnp.bfloat16), ((0, 0), (0, Kp - K)))

    cost = pl.CostEstimate(
        flops=2 * B * Kp * H + 2 * B * H * Ap,
        transcendentals=0,                      # tanh lives in the epilogue
        bytes_accessed=(B * Kp * 2 + Kp * H * 2          # bf16 x, w1
                        + H * 4 + H * Ap * 2             # f32 b1, bf16 w2
                        + NUM_H_TILES * B * Ap * 4),     # f32 partial outs
    )

    z_parts = pl.pallas_call(
        actor_kernel,
        out_shape=jax.ShapeDtypeStruct((NUM_H_TILES, B, Ap), jnp.float32),
        grid=(NUM_H_TILES, NUM_K_TILES),
        in_specs=[
            pl.BlockSpec((B, K_TILE), lambda h, k: (0, k)),       # x  (bf16)
            pl.BlockSpec((K_TILE, H_TILE), lambda h, k: (k, h)),  # w1 (bf16)
            pl.BlockSpec((1, H_TILE), lambda h, k: (0, h)),       # b1 (f32)
            pl.BlockSpec((H_TILE, Ap), lambda h, k: (h, 0)),      # w2 (bf16)
        ],
        out_specs=pl.BlockSpec((1, B, Ap), lambda h, k: (h, 0, 0)),
        scratch_shapes=[pltpu.VMEM((B, H_TILE), jnp.float32)],    # fc1 acc
        compiler_params=pltpu.CompilerParams(
            dimension_semantics=("parallel", "arbitrary"),
            vmem_limit_bytes=32 << 20,
        ),
        cost_estimate=cost,
    )(xp, w1p, b1p, w2p)

    # Tiny fused epilogue: combine the per-core fc2 partials, bias, tanh.
    z = jnp.sum(z_parts, axis=0) + b2p                   # (B, Ap) f32
    out = max_action * jnp.tanh(z)
    return out[:, :action_dim]


def init_actor_params(key, action_dim):
    """Deterministic synthetic init (PyTorch-Linear-style uniform bounds)."""
    k1, k2, k3, k4 = jax.random.split(key, 4)
    bound1 = 1.0 / jnp.sqrt(IN_FEATURES)
    bound2 = 1.0 / jnp.sqrt(HIDDEN)
    # stored as [in, out] (transposed relative to PyTorch's [out, in])
    w1 = jax.random.uniform(k1, (IN_FEATURES, HIDDEN), jnp.float32,
                            -bound1, bound1)
    b1 = jax.random.uniform(k2, (HIDDEN,), jnp.float32, -bound1, bound1)
    w2 = jax.random.uniform(k3, (HIDDEN, action_dim), jnp.float32,
                            -bound2, bound2)
    b2 = jax.random.uniform(k4, (action_dim,), jnp.float32, -bound2, bound2)
    return w1, b1, w2, b2


def actor_reference(x, w1, b1, w2, b2, max_action):
    hp = jax.lax.Precision.HIGHEST
    h = jnp.maximum(jnp.dot(x, w1, precision=hp) + b1, 0.0)
    return max_action * jnp.tanh(jnp.dot(h, w2, precision=hp) + b2)


def actor_reference_bf16(x, w1, b1, w2, b2, max_action):
    """Mirrors the kernel's bf16 operand rounding (f32 accumulation)."""
    hp = jax.lax.Precision.HIGHEST
    f32 = jnp.float32
    xb = x.astype(jnp.bfloat16).astype(f32)
    w1b = w1.astype(jnp.bfloat16).astype(f32)
    h = jnp.maximum(jnp.dot(xb, w1b, precision=hp) + b1, 0.0)
    hb = h.astype(jnp.bfloat16).astype(f32)
    w2b = w2.astype(jnp.bfloat16).astype(f32)
    return max_action * jnp.tanh(jnp.dot(hb, w2b, precision=hp) + b2)


if __name__ == "__main__":
    key = jax.random.PRNGKey(0)
    k_params, k_x = jax.random.split(key)

    batch = 8
    action_dim = 2
    max_action = 1.0

    w1, b1, w2, b2 = init_actor_params(k_params, action_dim)
    x = jax.random.normal(k_x, (batch, IN_FEATURES), jnp.float32)

    params = prepare_actor_params(w1, b1, w2, b2)
    out = actor_forward(x, *params, max_action=max_action,
                        action_dim=action_dim)
    out = jax.block_until_ready(out)
    assert out.shape == (batch, action_dim), out.shape

    # Tight check against a reference using the same bf16-rounded operands.
    ref_bf = actor_reference_bf16(x, w1, b1, w2, b2, max_action)
    assert jnp.allclose(out, ref_bf, atol=5e-3, rtol=5e-3), (
        "mismatch vs bf16-operand reference")

    # Loose check against the full-f32 PyTorch-equivalent forward.
    ref_f32 = actor_reference(x, w1, b1, w2, b2, max_action)
    assert jnp.allclose(out, ref_f32, atol=3e-2, rtol=3e-2), (
        "mismatch vs f32 reference")

    print("KERNEL_OK")
</pallas_src>

<mosaic_0001>
module attributes {stable_mosaic.version = 11 : i64} {
  func.func @actor_kernel(%arg0: i32, %arg1: i32, %arg2: memref<8x14464xbf16, #tpu.memory_space<vmem>>, %arg3: memref<14464x128xbf16, #tpu.memory_space<vmem>>, %arg4: memref<1x128xf32, #tpu.memory_space<vmem>>, %arg5: memref<128x128xbf16, #tpu.memory_space<vmem>>, %arg6: memref<1x8x128xf32, #tpu.memory_space<vmem>>, %arg7: memref<8x128xf32, #tpu.memory_space<vmem>>) attributes {dimension_semantics = [#tpu.dimension_semantics<parallel>, #tpu.dimension_semantics<arbitrary>], iteration_bounds = array<i64: 2, 1>, scalar_prefetch = 0 : i64, scratch_operands = 1 : i64, tpu.core_type = #tpu.core_type<tc>, window_params = [{transform_indices = @transform_0, window_bounds = array<i64: 8, 14464>}, {transform_indices = @transform_1, window_bounds = array<i64: 14464, 128>}, {transform_indices = @transform_2, window_bounds = array<i64: 1, 128>}, {transform_indices = @transform_3, window_bounds = array<i64: 128, 128>}, {transform_indices = @transform_4, window_bounds = array<i64: 1, 8, 128>}]} {
    %c0_i32 = arith.constant 0 : i32
    %0 = arith.cmpi eq, %arg1, %c0_i32 : i32
    %1 = arith.extui %0 : i1 to i32
    %c0_i32_0 = arith.constant 0 : i32
    %2 = arith.cmpi ne, %1, %c0_i32_0 : i32
    scf.if %2 {
      %cst_10 = arith.constant 0.000000e+00 : f32
      %12 = vector.broadcast %cst_10 : f32 to vector<8x128xf32>
      %c0_11 = arith.constant 0 : index
      %c0_12 = arith.constant 0 : index
      %13 = vector.load %arg7[%c0_11, %c0_12] : memref<8x128xf32, #tpu.memory_space<vmem>>, vector<8x128xf32>
      tpu.vector_store %arg7[%c0_11, %c0_12], %12 {strides = array<i32>} : memref<8x128xf32, #tpu.memory_space<vmem>>, vector<8x128xf32>,
    } else {
    }
    %c0 = arith.constant 0 : index
    %c0_1 = arith.constant 0 : index
    %3 = vector.load %arg7[%c0, %c0_1] : memref<8x128xf32, #tpu.memory_space<vmem>>, vector<8x128xf32>
    %c0_2 = arith.constant 0 : index
    %c0_3 = arith.constant 0 : index
    %4 = vector.load %arg2[%c0_2, %c0_3] : memref<8x14464xbf16, #tpu.memory_space<vmem>>, vector<8x14464xbf16>
    %c0_4 = arith.constant 0 : index
    %c0_5 = arith.constant 0 : index
    %5 = vector.load %arg3[%c0_4, %c0_5] : memref<14464x128xbf16, #tpu.memory_space<vmem>>, vector<14464x128xbf16>
    %cst = arith.constant dense<0.000000e+00> : vector<8x128xf32>
    %6 = tpu.matmul %4, %5, %cst {dimension_numbers = #tpu.dot_dimension_numbers<[1], [0], [0], [1], [0, 0, 1, 1], [], []>} : vector<8x14464xbf16>, vector<14464x128xbf16>, vector<8x128xf32> -> vector<8x128xf32>
    %7 = arith.addf %3, %6 : vector<8x128xf32>
    %c0_6 = arith.constant 0 : index
    %c0_7 = arith.constant 0 : index
    %8 = vector.load %arg7[%c0_6, %c0_7] : memref<8x128xf32, #tpu.memory_space<vmem>>, vector<8x128xf32>
    tpu.vector_store %arg7[%c0_6, %c0_7], %7 {strides = array<i32>} : memref<8x128xf32, #tpu.memory_space<vmem>>, vector<8x128xf32>,
    %c0_i32_8 = arith.constant 0 : i32
    %9 = arith.cmpi eq, %arg1, %c0_i32_8 : i32
    %10 = arith.extui %9 : i1 to i32
    %c0_i32_9 = arith.constant 0 : i32
    %11 = arith.cmpi ne, %10, %c0_i32_9 : i32
    scf.if %11 {
      %c0_10 = arith.constant 0 : index
      %c0_11 = arith.constant 0 : index
      %12 = vector.load %arg7[%c0_10, %c0_11] : memref<8x128xf32, #tpu.memory_space<vmem>>, vector<8x128xf32>
      %c0_12 = arith.constant 0 : index
      %c0_13 = arith.constant 0 : index
      %13 = vector.load %arg4[%c0_12, %c0_13] : memref<1x128xf32, #tpu.memory_space<vmem>>, vector<1x128xf32>
      %14 = vector.broadcast %13 : vector<1x128xf32> to vector<8x128xf32>
      %15 = arith.addf %12, %14 : vector<8x128xf32>
      %cst_14 = arith.constant 0.000000e+00 : f32
      %16 = vector.broadcast %cst_14 : f32 to vector<8x128xf32>
      %17 = arith.maximumf %15, %16 : vector<8x128xf32>
      %18 = arith.truncf %17 : vector<8x128xf32> to vector<8x128xbf16>
      %c0_15 = arith.constant 0 : index
      %c0_16 = arith.constant 0 : index
      %19 = vector.load %arg5[%c0_15, %c0_16] : memref<128x128xbf16, #tpu.memory_space<vmem>>, vector<128x128xbf16>
      %cst_17 = arith.constant dense<0.000000e+00> : vector<8x128xf32>
      %20 = tpu.matmul %18, %19, %cst_17 {dimension_numbers = #tpu.dot_dimension_numbers<[1], [0], [0], [1], [0, 0, 1, 1], [], []>} : vector<8x128xbf16>, vector<128x128xbf16>, vector<8x128xf32> -> vector<8x128xf32>
      %21 = vector.shape_cast %20 : vector<8x128xf32> to vector<1x8x128xf32>
      %c0_18 = arith.constant 0 : index
      %c0_19 = arith.constant 0 : index
      %c0_20 = arith.constant 0 : index
      %22 = vector.load %arg6[%c0_18, %c0_19, %c0_20] : memref<1x8x128xf32, #tpu.memory_space<vmem>>, vector<1x8x128xf32>
      tpu.vector_store %arg6[%c0_18, %c0_19, %c0_20], %21 {strides = array<i32>} : memref<1x8x128xf32, #tpu.memory_space<vmem>>, vector<1x8x128xf32>,
    } else {
    }
    return
  }
  func.func @transform_0(%arg0: i32, %arg1: i32) -> (i32, i32) {
    %c0_i32 = arith.constant 0 : i32
    %c0_i32_0 = arith.constant 0 : i32
    return %c0_i32, %arg1 : i32, i32
  }
  func.func @transform_1(%arg0: i32, %arg1: i32) -> (i32, i32) {
    %c0_i32 = arith.constant 0 : i32
    return %arg1, %arg0 : i32, i32
  }
  func.func @transform_2(%arg0: i32, %arg1: i32) -> (i32, i32) {
    %c0_i32 = arith.constant 0 : i32
    %c0_i32_0 = arith.constant 0 : i32
    return %c0_i32, %arg0 : i32, i32
  }
  func.func @transform_3(%arg0: i32, %arg1: i32) -> (i32, i32) {
    %c0_i32 = arith.constant 0 : i32
    %c0_i32_0 = arith.constant 0 : i32
    return %arg0, %c0_i32 : i32, i32
  }
  func.func @transform_4(%arg0: i32, %arg1: i32) -> (i32, i32, i32) {
    %c0_i32 = arith.constant 0 : i32
    %c0_i32_0 = arith.constant 0 : i32
    %c0_i32_1 = arith.constant 0 : i32
    return %arg0, %c0_i32, %c0_i32_0 : i32, i32, i32
  }
}

</mosaic_0001>

<llo_original>
// kernel: actor_forward.1
$region0: #{actor_forward.1}
  #allocation0 [shape = 'u32[]', space=smem, size = 0x4, offset = 0x4, fixed_abs, tag = 'smem constant byte address 0x4 - core index']
  #allocation1 [shape = 'u32[144,128]{1,0:T(1,128)}', space=vmem, size = 0x12000, scoped, tag = 'internal scratch']
  #allocation2 [shape = 'f32[8,128]{1,0:T(8,128)}', space=vmem, size = 0x1000, scoped, tag = 'scratch operand']
  %s0 = inlined_call_operand.vmem [shape: bf16[8,14464], index: 0, kind: input, shape index: {}]
  %s1 = inlined_call_operand.hbm [shape: bf16[14464,256], index: 1, kind: input, shape index: {}]
  %s2 = inlined_call_operand.hbm [shape: f32[1,256], index: 2, kind: input, shape index: {}]
  %s3 = inlined_call_operand.hbm [shape: bf16[256,128], index: 3, kind: input, shape index: {}]
  %s4 = inlined_call_operand.vmem [shape: f32[2,8,128], index: 4, kind: output, shape index: {}]
  %s5 = sld [smem:[#allocation0]]
  $region69: #{actor_forward.1} parent=0
    _
  %s7 = ssub.s32 1, %s5
  %s8 = scalar_select 0, %s7, %s5
  $region1: #{actor_forward.1} parent=0
    #allocation3 [shape = 'u8[7405568]{0}', space=vmem, size = 0x710000, scoped, tag = 'input window, operand 1']
    #allocation4 [shape = 's32[2]{0}', space=sflag, size = 0x8, scoped, tag = 'scoped memory for actor_forward.1']
    #allocation5 [shape = 'u8[1024]{0}', space=vmem, size = 0x400, scoped, tag = 'input window, operand 2']
    #allocation6 [shape = 's32[2]{0}', space=sflag, size = 0x8, scoped, tag = 'scoped memory for actor_forward.1']
    #allocation7 [shape = 'u8[65536]{0}', space=vmem, size = 0x10000, scoped, tag = 'input window, operand 3']
    %9 = vsyncpa [#allocation4], 0
    %s10 = scalar_lea.sflag [#allocation4], 1
    %11 = vsyncpa %s10, 0
    %12 = vsyncpa [#allocation6], 0
    %s13 = scalar_lea.sflag [#allocation6], 1
    %14 = vsyncpa %s13, 0
    loop: start=0, step=1, limit=4
    $region2: #{actor_forward.1} parent=1 // loop_pre_header
      _
    $region3: #{actor_forward.1} parent=1 // loop_header
      %s16 = sphi 0, %s20
      %p17 = scmp.ge.s32.totalorder %s16, 4
      %s23 = sphi 0, %s35
      %s24 = sphi 0, %s31
      %s25 = sphi 0, %s23
      %s26 = sphi 0, %s24
      %s27 = sphi 0, %s25
      %s28 = sphi 0, %s26
      %s38 = sphi 0, %s40
      %s41 = sphi 0, %s38
      %s42 = sphi 0, %s41
      %s58 = sphi 0, %s42
      %s66 = sphi 0, %s68
      %s69 = sphi 0, %s66
      %s70 = sphi 0, %s69
      %s86 = sphi 0, %s70
      %s92 = sphi 0, %s94
      %s95 = sphi 0, %s92
      %s96 = sphi 0, %s95
      %s112 = sphi 0, %s96
      %s118 = sphi 0, %s120
      %s121 = sphi 0, %s118
      %s122 = sphi 0, %s121
      %s138 = sphi 0, %s122
      %s144 = sphi 0, %s146
      %s147 = sphi 0, %s144
      %s148 = sphi 0, %s147
      %s164 = sphi 0, %s148
    $region4: #{actor_forward.1} parent=1 // loop_header_branch
      %19 = sbr.rel (%p17) target = $region8
    $region5: #{actor_forward.1} parent=1 // loop_body
      %s21 = ssub.s32 %s16, 1
      %s22 = ssub.s32 %s16, 2
      %s29 = sadd.s32 1, %s24
      %p30 = scmp.ge.s32.totalorder %s29, 1
      %s31 = scalar_select %p30, 0, %s29
      %s32 = sadd.s32 1, %s23
      %s33 = scalar_select %p30, %s32, %s23
      %p34 = scmp.ge.s32.totalorder %s33, 2
      %s35 = scalar_select %p34, 0, %s33
      %s36 = ssub.s32 %s24, %s31
      %p37 = scmp.eq.s32.totalorder %s36, 0
      %s39 = sadd.s32 %s38, 1
      %s40 = scalar_select %p37, %s38, %s39
      %p43 = pneg %p37
      %p44 = scmp.eq.s32.totalorder %s16, 1
      %p45 = por %p43, %p44
      %p46 = scmp.ne.s32.totalorder %s38, %s41
      %p47 = scmp.eq.s32.totalorder %s16, 0
      %p48 = por %p46, %p47
      %p49 = scmp.ne.s32.totalorder %s38, %s41
      %p50 = scmp.eq.s32.totalorder %s21, 1
      %p51 = por %p49, %p50
      %p52 = scmp.ne.s32.totalorder %s41, %s42
      %p53 = scmp.eq.s32.totalorder %s21, 0
      %p54 = por %p52, %p53
      %p55 = scmp.ne.s32.totalorder %s41, %s42
      %p56 = scmp.eq.s32.totalorder %s22, 1
      %p57 = por %p55, %p56
      %p59 = scmp.ne.s32.totalorder %s42, %s58
      %p60 = scmp.eq.s32.totalorder %s22, 0
      %p61 = por %p59, %p60
      %s62 = ssub.s32 %s24, %s31
      %s63 = ssub.s32 %s23, %s35
      %s64 = sor.u32 %s62, %s63
      %p65 = scmp.eq.s32.totalorder %s64, 0
      %s67 = sadd.s32 %s66, 1
      %s68 = scalar_select %p65, %s66, %s67
      %p71 = pneg %p65
      %p72 = scmp.eq.s32.totalorder %s16, 1
      %p73 = por %p71, %p72
      %p74 = scmp.ne.s32.totalorder %s66, %s69
      %p75 = scmp.eq.s32.totalorder %s16, 0
      %p76 = por %p74, %p75
      %p77 = scmp.ne.s32.totalorder %s66, %s69
      %p78 = scmp.eq.s32.totalorder %s21, 1
      %p79 = por %p77, %p78
      %p80 = scmp.ne.s32.totalorder %s69, %s70
      %p81 = scmp.eq.s32.totalorder %s21, 0
      %p82 = por %p80, %p81
      %p83 = scmp.ne.s32.totalorder %s69, %s70
      %p84 = scmp.eq.s32.totalorder %s22, 1
      %p85 = por %p83, %p84
      %p87 = scmp.ne.s32.totalorder %s70, %s86
      %p88 = scmp.eq.s32.totalorder %s22, 0
      %p89 = por %p87, %p88
      %s90 = ssub.s32 %s23, %s35
      %p91 = scmp.eq.s32.totalorder %s90, 0
      %s93 = sadd.s32 %s92, 1
      %s94 = scalar_select %p91, %s92, %s93
      %p97 = pneg %p91
      %p98 = scmp.eq.s32.totalorder %s16, 1
      %p99 = por %p97, %p98
      %p100 = scmp.ne.s32.totalorder %s92, %s95
      %p101 = scmp.eq.s32.totalorder %s16, 0
      %p102 = por %p100, %p101
      %p103 = scmp.ne.s32.totalorder %s92, %s95
      %p104 = scmp.eq.s32.totalorder %s21, 1
      %p105 = por %p103, %p104
      %p106 = scmp.ne.s32.totalorder %s95, %s96
      %p107 = scmp.eq.s32.totalorder %s21, 0
      %p108 = por %p106, %p107
      %p109 = scmp.ne.s32.totalorder %s95, %s96
      %p110 = scmp.eq.s32.totalorder %s22, 1
      %p111 = por %p109, %p110
      %p113 = scmp.ne.s32.totalorder %s96, %s112
      %p114 = scmp.eq.s32.totalorder %s22, 0
      %p115 = por %p113, %p114
      %s116 = ssub.s32 %s23, %s35
      %p117 = scmp.eq.s32.totalorder %s116, 0
      %s119 = sadd.s32 %s118, 1
      %s120 = scalar_select %p117, %s118, %s119
      %p123 = pneg %p117
      %p124 = scmp.eq.s32.totalorder %s16, 1
      %p125 = por %p123, %p124
      %p126 = scmp.ne.s32.totalorder %s118, %s121
      %p127 = scmp.eq.s32.totalorder %s16, 0
      %p128 = por %p126, %p127
      %p129 = scmp.ne.s32.totalorder %s118, %s121
      %p130 = scmp.eq.s32.totalorder %s21, 1
      %p131 = por %p129, %p130
      %p132 = scmp.ne.s32.totalorder %s121, %s122
      %p133 = scmp.eq.s32.totalorder %s21, 0
      %p134 = por %p132, %p133
      %p135 = scmp.ne.s32.totalorder %s121, %s122
      %p136 = scmp.eq.s32.totalorder %s22, 1
      %p137 = por %p135, %p136
      %p139 = scmp.ne.s32.totalorder %s122, %s138
      %p140 = scmp.eq.s32.totalorder %s22, 0
      %p141 = por %p139, %p140
      %s142 = ssub.s32 %s23, %s35
      %p143 = scmp.eq.s32.totalorder %s142, 0
      %s145 = sadd.s32 %s144, 1
      %s146 = scalar_select %p143, %s144, %s145
      %p149 = pneg %p143
      %p150 = scmp.eq.s32.totalorder %s16, 1
      %p151 = por %p149, %p150
      %p152 = scmp.ne.s32.totalorder %s144, %s147
      %p153 = scmp.eq.s32.totalorder %s16, 0
      %p154 = por %p152, %p153
      %p155 = scmp.ne.s32.totalorder %s144, %s147
      %p156 = scmp.eq.s32.totalorder %s21, 1
      %p157 = por %p155, %p156
      %p158 = scmp.ne.s32.totalorder %s147, %s148
      %p159 = scmp.eq.s32.totalorder %s21, 0
      %p160 = por %p158, %p159
      %p161 = scmp.ne.s32.totalorder %s147, %s148
      %p162 = scmp.eq.s32.totalorder %s22, 1
      %p163 = por %p161, %p162
      %p165 = scmp.ne.s32.totalorder %s148, %s164
      %p166 = scmp.eq.s32.totalorder %s22, 0
      %p167 = por %p165, %p166
      %p168 = scmp.le.s32.totalorder 1, %s16
      %p169 = scmp.lt.s32.totalorder %s16, 3
      %p170 = pnand %p168, %p169
      %p171 = pneg %p170
      // Predicated region
      $region9: #{actor_forward.1} parent=5 // pred_check
        _
      $region10: #{actor_forward.1} parent=5 // pred_check_branch
        %173 = sbr.rel (%p170) target = $region12
      $region11: #{actor_forward.1} parent=5 // pred_region
        %s174 = ssub.s32 %s16, 1
        // Predicated region
        $region13: #{actor_forward.1} parent=11 // pred_check
          %p175 = pneg %p54
        $region14: #{actor_forward.1} parent=11 // pred_check_branch
          %177 = sbr.rel (%p175) target = $region16
        $region15: #{actor_forward.1} parent=11 // pred_region
          %s178 = smul.u32 113, %s26
          %p179 = scmp.lt.s32.totalorder %s178, 112
          %s180 = scalar_select %p179, %s178, 112
          %s181 = smul.addr %s180, 4
          %s182 = scalar_lea.vmem %s0, %s181
          %s183 = smul.u32 113, %s26
        $region16: #{actor_forward.1} parent=11 // pred_fallthru
          _
      $region12: #{actor_forward.1} parent=5 // pred_fallthru
        _
      %p184 = scmp.lt.s32.totalorder %s16, 2
      // Predicated region
      $region17: #{actor_forward.1} parent=5 // pred_check
        %p185 = pneg %p184
      $region18: #{actor_forward.1} parent=5 // pred_check_branch
        %187 = sbr.rel (%p185) target = $region20
      $region19: #{actor_forward.1} parent=5 // pred_region
        // Predicated region
        $region21: #{actor_forward.1} parent=19 // pred_check
          %p188 = pneg %p76
        $region22: #{actor_forward.1} parent=19 // pred_check_branch
          %190 = sbr.rel (%p188) target = $region24
        $region23: #{actor_forward.1} parent=19 // pred_region
          %s191 = sand.u32 %s66, 1
          %s192 = scalar_lea.sflag [#allocation4], %s191
          %s193 = sand.u32 %s66, 1
          %s194 = smul.addr %s193, 7232
          %s195 = scalar_lea.vmem [#allocation3], %s194
          %s196 = smul.u32 1808, %s24
          %s198 = ssub.s32 115712, 115712
          %199 = vsyncadd %s192, %s198
          %s200 = smul.addr %s196, 2
          %s201 = sadd.s32 %s23, %s200
          %s202 = smul.addr %s201, 64
          %s203 = scalar_lea.hbm %s1, %s202
          %s204 = sshll.u32 %s195, 4
          %s205 = int_to_ptr.vmem [resolvable:$true] %s204
          %210 = dma.hbm_to_vmem [thread:$0]  %s203, 115712, %s205, %s192, 128, 64, 4
        $region24: #{actor_forward.1} parent=19 // pred_fallthru
          _
        // Predicated region
        $region25: #{actor_forward.1} parent=19 // pred_check
          %p211 = pneg %p102
        $region26: #{actor_forward.1} parent=19 // pred_check_branch
          %213 = sbr.rel (%p211) target = $region28
        $region27: #{actor_forward.1} parent=19 // pred_region
          %s214 = sand.u32 %s16, 1
          %s215 = scalar_lea.sflag [#allocation6], %s214
          %s216 = sand.u32 %s92, 1
          %s217 = scalar_lea.vmem [#allocation5], %s216
          %s219 = ssub.s32 16, 16
          %220 = vsyncadd %s215, %s219
          %s221 = smul.addr %s23, 16
          %s222 = scalar_lea.hbm %s2, %s221
          %s224 = sshll.u32 %s217, 4
          %s225 = int_to_ptr.vmem [resolvable:$true] %s224
          %227 = dma.hbm_to_vmem [thread:$0]  %s222, 16, %s225, %s215
        $region28: #{actor_forward.1} parent=19 // pred_fallthru
          _
        // Predicated region
        $region29: #{actor_forward.1} parent=19 // pred_check
          %p228 = pneg %p128
        $region30: #{actor_forward.1} parent=19 // pred_check_branch
          %230 = sbr.rel (%p228) target = $region32
        $region31: #{actor_forward.1} parent=19 // pred_region
          %s231 = sand.u32 %s16, 1
          %s232 = scalar_lea.sflag [#allocation6], %s231
          %s233 = sand.u32 %s118, 1
          %s234 = smul.addr %s233, 64
          %s235 = scalar_lea.vmem [#allocation7], %s234
          %s236 = smul.u32 16, %s23
          %s238 = ssub.s32 1024, 1024
          %239 = vsyncadd %s232, %s238
          %s240 = smul.addr %s236, 64
          %s241 = scalar_lea.hbm %s3, %s240
          %s242 = sshll.u32 %s235, 4
          %s243 = int_to_ptr.vmem [resolvable:$true] %s242
          %248 = dma.hbm_to_vmem [thread:$0]  %s241, 1024, %s243, %s232, 64, 64, 4
        $region32: #{actor_forward.1} parent=19 // pred_fallthru
          _
      $region20: #{actor_forward.1} parent=5 // pred_fallthru
        _
      %p249 = scmp.le.s32.totalorder 1, %s16
      %p250 = scmp.lt.s32.totalorder %s16, 3
      %p251 = pnand %p249, %p250
      %p252 = pneg %p251
      // Predicated region
      $region33: #{actor_forward.1} parent=5 // pred_check
        _
      $region34: #{actor_forward.1} parent=5 // pred_check_branch
        %254 = sbr.rel (%p251) target = $region36
      $region35: #{actor_forward.1} parent=5 // pred_region
        %s255 = ssub.s32 %s16, 1
        %s256 = sand.u32 %s69, 1
        %s257 = scalar_lea.sflag [#allocation4], %s256
        %s258 = sand.u32 %s69, 1
        %s259 = smul.addr %s258, 7232
        %s260 = scalar_lea.vmem [#allocation3], %s259
        // Predicated region
        $region37: #{actor_forward.1} parent=35 // pred_check
          %p261 = pneg %p82
        $region38: #{actor_forward.1} parent=35 // pred_check_branch
          %263 = sbr.rel (%p261) target = $region40
        $region39: #{actor_forward.1} parent=35 // pred_region
          %264 = dma.done %s257, 115712
        $region40: #{actor_forward.1} parent=35 // pred_fallthru
          _
        %s265 = sand.u32 %s21, 1
        %s266 = scalar_lea.sflag [#allocation6], %s265
        %s267 = sand.u32 %s95, 1
        %s268 = scalar_lea.vmem [#allocation5], %s267
        // Predicated region
        $region41: #{actor_forward.1} parent=35 // pred_check
          %p269 = pneg %p108
        $region42: #{actor_forward.1} parent=35 // pred_check_branch
          %271 = sbr.rel (%p269) target = $region44
        $region43: #{actor_forward.1} parent=35 // pred_region
          %272 = dma.done %s266, 16
        $region44: #{actor_forward.1} parent=35 // pred_fallthru
          _
        %s273 = sand.u32 %s21, 1
        %s274 = scalar_lea.sflag [#allocation6], %s273
        %s275 = sand.u32 %s121, 1
        %s276 = smul.addr %s275, 64
        %s277 = scalar_lea.vmem [#allocation7], %s276
        // Predicated region
        $region45: #{actor_forward.1} parent=35 // pred_check
          %p278 = pneg %p134
        $region46: #{actor_forward.1} parent=35 // pred_check_branch
          %280 = sbr.rel (%p278) target = $region48
        $region47: #{actor_forward.1} parent=35 // pred_region
          %281 = dma.done %s274, 1024
        $region48: #{actor_forward.1} parent=35 // pred_fallthru
          _
        %s282 = smul.u32 113, %s26
        %p283 = scmp.lt.s32.totalorder %s282, 112
        %s284 = scalar_select %p283, %s282, 112
        %s285 = smul.addr %s284, 4
        %s286 = scalar_lea.vmem %s0, %s285
        %p287 = pneg %p54
        %p288 = pneg %p51
        %s289 = sand.u32 %s69, 1
        %s290 = scalar_lea.sflag [#allocation4], %s289
        %s291 = sand.u32 %s69, 1
        %s292 = smul.addr %s291, 7232
        %s293 = scalar_lea.vmem [#allocation3], %s292
        %p294 = pneg %p82
        %p295 = pneg %p79
        %s296 = sand.u32 %s21, 1
        %s297 = scalar_lea.sflag [#allocation6], %s296
        %s298 = sand.u32 %s95, 1
        %s299 = scalar_lea.vmem [#allocation5], %s298
        %p300 = pneg %p108
        %p301 = pneg %p105
        %s302 = sand.u32 %s21, 1
        %s303 = scalar_lea.sflag [#allocation6], %s302
        %s304 = sand.u32 %s121, 1
        %s305 = smul.addr %s304, 64
        %s306 = scalar_lea.vmem [#allocation7], %s305
        %p307 = pneg %p134
        %p308 = pneg %p131
        %p309 = pneg %p160
        %p310 = pneg %p157
        %p311 = scmp.lt.s32.totalorder %s25, 1
        %s312 = scalar_select %p311, %s25, 1
        %s313 = smul.addr %s312, 8
        %s314 = scalar_lea.vmem %s4, %s313
        %s315 = smul.u32 113, %s26
        %p316 = scmp.lt.s32.totalorder %s315, 112
        %s317 = scalar_select %p316, %s315, 112
        %s318 = smul.addr %s317, 4
        %s319 = scalar_lea.vmem %s0, %s318
        %s320 = smul.u32 113, %s26
        %s321 = smul.u32 1808, %s26
        %s322 = smul.u32 16, %s25
        %p323 = scmp.lt.s32.totalorder %s25, 1
        %s324 = scalar_select %p323, %s25, 1
        %s325 = smul.addr %s324, 8
        %s326 = scalar_lea.vmem %s4, %s325
        %p328 = scmp.eq.s32.totalorder %s26, 0
        // Predicated region
        $region49: #{actor_forward.1} parent=35 // pred_check
          %p329 = pneg %p328
        $region50: #{actor_forward.1} parent=35 // pred_check_branch
          %331 = sbr.rel (%p329) target = $region52
        $region51: #{actor_forward.1} parent=35 // pred_region
          %332 = vst [vmem:[#allocation2] sm:$0xff] 0.0
        $region52: #{actor_forward.1} parent=35 // pred_fallthru
          _
        %v333 = vld [vmem:[#allocation2] sm:$0xff]
        %v334 = vld [vmem:[%s319] sm:$0xff]
        %v335 = vld [vmem:[%s319 + $0x8] sm:$0xff]
        %v336 = vld [vmem:[%s319 + $0x10] sm:$0xff]
        %v337 = vld [vmem:[%s319 + $0x18] sm:$0xff]
        %v338 = vld [vmem:[%s319 + $0x20] sm:$0xff]
        %v339 = vld [vmem:[%s319 + $0x28] sm:$0xff]
        %v340 = vld [vmem:[%s319 + $0x30] sm:$0xff]
        %v341 = vld [vmem:[%s319 + $0x38] sm:$0xff]
        %v342 = vld [vmem:[%s319 + $0x40] sm:$0xff]
        %v343 = vld [vmem:[%s319 + $0x48] sm:$0xff]
        %v344 = vld [vmem:[%s319 + $0x50] sm:$0xff]
        %v345 = vld [vmem:[%s319 + $0x58] sm:$0xff]
        %v346 = vld [vmem:[%s319 + $0x60] sm:$0xff]
        %v347 = vld [vmem:[%s319 + $0x68] sm:$0xff]
        %v348 = vld [vmem:[%s319 + $0x70] sm:$0xff]
        %v349 = vld [vmem:[%s319 + $0x78] sm:$0xff]
        %v350 = vld [vmem:[%s319 + $0x80] sm:$0xff]
        %v351 = vld [vmem:[%s319 + $0x88] sm:$0xff]
        %v352 = vld [vmem:[%s319 + $0x90] sm:$0xff]
        %v353 = vld [vmem:[%s319 + $0x98] sm:$0xff]
        %v354 = vld [vmem:[%s319 + $0xa0] sm:$0xff]
        %v355 = vld [vmem:[%s319 + $0xa8] sm:$0xff]
        %v356 = vld [vmem:[%s319 + $0xb0] sm:$0xff]
        %v357 = vld [vmem:[%s319 + $0xb8] sm:$0xff]
        %v358 = vld [vmem:[%s319 + $0xc0] sm:$0xff]
        %v359 = vld [vmem:[%s319 + $0xc8] sm:$0xff]
        %v360 = vld [vmem:[%s319 + $0xd0] sm:$0xff]
        %v361 = vld [vmem:[%s319 + $0xd8] sm:$0xff]
        %v362 = vld [vmem:[%s319 + $0xe0] sm:$0xff]
        %v363 = vld [vmem:[%s319 + $0xe8] sm:$0xff]
        %v364 = vld [vmem:[%s319 + $0xf0] sm:$0xff]
        %v365 = vld [vmem:[%s319 + $0xf8] sm:$0xff]
        %v366 = vld [vmem:[%s319 + $0x100] sm:$0xff]
        %v367 = vld [vmem:[%s319 + $0x108] sm:$0xff]
        %v368 = vld [vmem:[%s319 + $0x110] sm:$0xff]
        %v369 = vld [vmem:[%s319 + $0x118] sm:$0xff]
        %v370 = vld [vmem:[%s319 + $0x120] sm:$0xff]
        %v371 = vld [vmem:[%s319 + $0x128] sm:$0xff]
        %v372 = vld [vmem:[%s319 + $0x130] sm:$0xff]
        %v373 = vld [vmem:[%s319 + $0x138] sm:$0xff]
        %v374 = vld [vmem:[%s319 + $0x140] sm:$0xff]
        %v375 = vld [vmem:[%s319 + $0x148] sm:$0xff]
        %v376 = vld [vmem:[%s319 + $0x150] sm:$0xff]
        %v377 = vld [vmem:[%s319 + $0x158] sm:$0xff]
        %v378 = vld [vmem:[%s319 + $0x160] sm:$0xff]
        %v379 = vld [vmem:[%s319 + $0x168] sm:$0xff]
        %v380 = vld [vmem:[%s319 + $0x170] sm:$0xff]
        %v381 = vld [vmem:[%s319 + $0x178] sm:$0xff]
        %v382 = vld [vmem:[%s319 + $0x180] sm:$0xff]
        %v383 = vld [vmem:[%s319 + $0x188] sm:$0xff]
        %v384 = vld [vmem:[%s319 + $0x190] sm:$0xff]
        %v385 = vld [vmem:[%s319 + $0x198] sm:$0xff]
        %v386 = vld [vmem:[%s319 + $0x1a0] sm:$0xff]
        %v387 = vld [vmem:[%s319 + $0x1a8] sm:$0xff]
        %v388 = vld [vmem:[%s319 + $0x1b0] sm:$0xff]
        %v389 = vld [vmem:[%s319 + $0x1b8] sm:$0xff]
        %v390 = vld [vmem:[%s319 + $0x1c0] sm:$0xf]
        %v391 = vld [vmem:[%s260] sm:$0xf]
        %v392 = vld [vmem:[%s260 + $0x4] sm:$0xf]
        %v393 = vld [vmem:[%s260 + $0x8] sm:$0xf]
        %v394 = vld [vmem:[%s260 + $0xc] sm:$0xf]
        %v395 = vld [vmem:[%s260 + $0x10] sm:$0xf]
        %v396 = vld [vmem:[%s260 + $0x14] sm:$0xf]
        %v397 = vld [vmem:[%s260 + $0x18] sm:$0xf]
        %v398 = vld [vmem:[%s260 + $0x1c] sm:$0xf]
        %v399 = vld [vmem:[%s260 + $0x20] sm:$0xf]
        %v400 = vld [vmem:[%s260 + $0x24] sm:$0xf]
        %v401 = vld [vmem:[%s260 + $0x28] sm:$0xf]
        %v402 = vld [vmem:[%s260 + $0x2c] sm:$0xf]
        %v403 = vld [vmem:[%s260 + $0x30] sm:$0xf]
        %v404 = vld [vmem:[%s260 + $0x34] sm:$0xf]
        %v405 = vld [vmem:[%s260 + $0x38] sm:$0xf]
        %v406 = vld [vmem:[%s260 + $0x3c] sm:$0xf]
        %v407 = vld [vmem:[%s260 + $0x40] sm:$0xf]
        %v408 = vld [vmem:[%s260 + $0x44] sm:$0xf]
        %v409 = vld [vmem:[%s260 + $0x48] sm:$0xf]
        %v410 = vld [vmem:[%s260 + $0x4c] sm:$0xf]
        %v411 = vld [vmem:[%s260 + $0x50] sm:$0xf]
        %v412 = vld [vmem:[%s260 + $0x54] sm:$0xf]
        %v413 = vld [vmem:[%s260 + $0x58] sm:$0xf]
        %v414 = vld [vmem:[%s260 + $0x5c] sm:$0xf]
        %v415 = vld [vmem:[%s260 + $0x60] sm:$0xf]
        %v416 = vld [vmem:[%s260 + $0x64] sm:$0xf]
        %v417 = vld [vmem:[%s260 + $0x68] sm:$0xf]
        %v418 = vld [vmem:[%s260 + $0x6c] sm:$0xf]
        %v419 = vld [vmem:[%s260 + $0x70] sm:$0xf]
        %v420 = vld [vmem:[%s260 + $0x74] sm:$0xf]
        %v421 = vld [vmem:[%s260 + $0x78] sm:$0xf]
        %v422 = vld [vmem:[%s260 + $0x7c] sm:$0xf]
        %v423 = vld [vmem:[%s260 + $0x80] sm:$0xf]
        %v424 = vld [vmem:[%s260 + $0x84] sm:$0xf]
        %v425 = vld [vmem:[%s260 + $0x88] sm:$0xf]
        %v426 = vld [vmem:[%s260 + $0x8c] sm:$0xf]
        %v427 = vld [vmem:[%s260 + $0x90] sm:$0xf]
        %v428 = vld [vmem:[%s260 + $0x94] sm:$0xf]
        %v429 = vld [vmem:[%s260 + $0x98] sm:$0xf]
        %v430 = vld [vmem:[%s260 + $0x9c] sm:$0xf]
        %v431 = vld [vmem:[%s260 + $0xa0] sm:$0xf]
        %v432 = vld [vmem:[%s260 + $0xa4] sm:$0xf]
        %v433 = vld [vmem:[%s260 + $0xa8] sm:$0xf]
        %v434 = vld [vmem:[%s260 + $0xac] sm:$0xf]
        %v435 = vld [vmem:[%s260 + $0xb0] sm:$0xf]
        %v436 = vld [vmem:[%s260 + $0xb4] sm:$0xf]
        %v437 = vld [vmem:[%s260 + $0xb8] sm:$0xf]
        %v438 = vld [vmem:[%s260 + $0xbc] sm:$0xf]
        %v439 = vld [vmem:[%s260 + $0xc0] sm:$0xf]
        %v440 = vld [vmem:[%s260 + $0xc4] sm:$0xf]
        %v441 = vld [vmem:[%s260 + $0xc8] sm:$0xf]
        %v442 = vld [vmem:[%s260 + $0xcc] sm:$0xf]
        %v443 = vld [vmem:[%s260 + $0xd0] sm:$0xf]
        %v444 = vld [vmem:[%s260 + $0xd4] sm:$0xf]
        %v445 = vld [vmem:[%s260 + $0xd8] sm:$0xf]
        %v446 = vld [vmem:[%s260 + $0xdc] sm:$0xf]
        %v447 = vld [vmem:[%s260 + $0xe0] sm:$0xf]
        %v448 = vld [vmem:[%s260 + $0xe4] sm:$0xf]
        %v449 = vld [vmem:[%s260 + $0xe8] sm:$0xf]
        %v450 = vld [vmem:[%s260 + $0xec] sm:$0xf]
        %v451 = vld [vmem:[%s260 + $0xf0] sm:$0xf]
        %v452 = vld [vmem:[%s260 + $0xf4] sm:$0xf]
        %v453 = vld [vmem:[%s260 + $0xf8] sm:$0xf]
        %v454 = vld [vmem:[%s260 + $0xfc] sm:$0xf]
        %v455 = vld [vmem:[%s260 + $0x100] sm:$0xf]
        %v456 = vld [vmem:[%s260 + $0x104] sm:$0xf]
        %v457 = vld [vmem:[%s260 + $0x108] sm:$0xf]
        %v458 = vld [vmem:[%s260 + $0x10c] sm:$0xf]
        %v459 = vld [vmem:[%s260 + $0x110] sm:$0xf]
        %v460 = vld [vmem:[%s260 + $0x114] sm:$0xf]
        %v461 = vld [vmem:[%s260 + $0x118] sm:$0xf]
        %v462 = vld [vmem:[%s260 + $0x11c] sm:$0xf]
        %v463 = vld [vmem:[%s260 + $0x120] sm:$0xf]
        %v464 = vld [vmem:[%s260 + $0x124] sm:$0xf]
        %v465 = vld [vmem:[%s260 + $0x128] sm:$0xf]
        %v466 = vld [vmem:[%s260 + $0x12c] sm:$0xf]
        %v467 = vld [vmem:[%s260 + $0x130] sm:$0xf]
        %v468 = vld [vmem:[%s260 + $0x134] sm:$0xf]
        %v469 = vld [vmem:[%s260 + $0x138] sm:$0xf]
        %v470 = vld [vmem:[%s260 + $0x13c] sm:$0xf]
        %v471 = vld [vmem:[%s260 + $0x140] sm:$0xf]
        %v472 = vld [vmem:[%s260 + $0x144] sm:$0xf]
        %v473 = vld [vmem:[%s260 + $0x148] sm:$0xf]
        %v474 = vld [vmem:[%s260 + $0x14c] sm:$0xf]
        %v475 = vld [vmem:[%s260 + $0x150] sm:$0xf]
        %v476 = vld [vmem:[%s260 + $0x154] sm:$0xf]
        %v477 = vld [vmem:[%s260 + $0x158] sm:$0xf]
        %v478 = vld [vmem:[%s260 + $0x15c] sm:$0xf]
        %v479 = vld [vmem:[%s260 + $0x160] sm:$0xf]
        %v480 = vld [vmem:[%s260 + $0x164] sm:$0xf]
        %v481 = vld [vmem:[%s260 + $0x168] sm:$0xf]
        %v482 = vld [vmem:[%s260 + $0x16c] sm:$0xf]
        %v483 = vld [vmem:[%s260 + $0x170] sm:$0xf]
        %v484 = vld [vmem:[%s260 + $0x174] sm:$0xf]
        %v485 = vld [vmem:[%s260 + $0x178] sm:$0xf]
        %v486 = vld [vmem:[%s260 + $0x17c] sm:$0xf]
        %v487 = vld [vmem:[%s260 + $0x180] sm:$0xf]
        %v488 = vld [vmem:[%s260 + $0x184] sm:$0xf]
        %v489 = vld [vmem:[%s260 + $0x188] sm:$0xf]
        %v490 = vld [vmem:[%s260 + $0x18c] sm:$0xf]
        %v491 = vld [vmem:[%s260 + $0x190] sm:$0xf]
        %v492 = vld [vmem:[%s260 + $0x194] sm:$0xf]
        %v493 = vld [vmem:[%s260 + $0x198] sm:$0xf]
        %v494 = vld [vmem:[%s260 + $0x19c] sm:$0xf]
        %v495 = vld [vmem:[%s260 + $0x1a0] sm:$0xf]
        %v496 = vld [vmem:[%s260 + $0x1a4] sm:$0xf]
        %v497 = vld [vmem:[%s260 + $0x1a8] sm:$0xf]
        %v498 = vld [vmem:[%s260 + $0x1ac] sm:$0xf]
        %v499 = vld [vmem:[%s260 + $0x1b0] sm:$0xf]
        %v500 = vld [vmem:[%s260 + $0x1b4] sm:$0xf]
        %v501 = vld [vmem:[%s260 + $0x1b8] sm:$0xf]
        %v502 = vld [vmem:[%s260 + $0x1bc] sm:$0xf]
        %v503 = vld [vmem:[%s260 + $0x1c0] sm:$0xf]
        %v504 = vld [vmem:[%s260 + $0x1c4] sm:$0xf]
        %v505 = vld [vmem:[%s260 + $0x1c8] sm:$0xf]
        %v506 = vld [vmem:[%s260 + $0x1cc] sm:$0xf]
        %v507 = vld [vmem:[%s260 + $0x1d0] sm:$0xf]
        %v508 = vld [vmem:[%s260 + $0x1d4] sm:$0xf]
        %v509 = vld [vmem:[%s260 + $0x1d8] sm:$0xf]
        %v510 = vld [vmem:[%s260 + $0x1dc] sm:$0xf]
        %v511 = vld [vmem:[%s260 + $0x1e0] sm:$0xf]
        %v512 = vld [vmem:[%s260 + $0x1e4] sm:$0xf]
        %v513 = vld [vmem:[%s260 + $0x1e8] sm:$0xf]
        %v514 = vld [vmem:[%s260 + $0x1ec] sm:$0xf]
        %v515 = vld [vmem:[%s260 + $0x1f0] sm:$0xf]
        %v516 = vld [vmem:[%s260 + $0x1f4] sm:$0xf]
        %v517 = vld [vmem:[%s260 + $0x1f8] sm:$0xf]
        %v518 = vld [vmem:[%s260 + $0x1fc] sm:$0xf]
        %v519 = vld [vmem:[%s260 + $0x200] sm:$0xf]
        %v520 = vld [vmem:[%s260 + $0x204] sm:$0xf]
        %v521 = vld [vmem:[%s260 + $0x208] sm:$0xf]
        %v522 = vld [vmem:[%s260 + $0x20c] sm:$0xf]
        %v523 = vld [vmem:[%s260 + $0x210] sm:$0xf]
        %v524 = vld [vmem:[%s260 + $0x214] sm:$0xf]
        %v525 = vld [vmem:[%s260 + $0x218] sm:$0xf]
        %v526 = vld [vmem:[%s260 + $0x21c] sm:$0xf]
        %v527 = vld [vmem:[%s260 + $0x220] sm:$0xf]
        %v528 = vld [vmem:[%s260 + $0x224] sm:$0xf]
        %v529 = vld [vmem:[%s260 + $0x228] sm:$0xf]
        %v530 = vld [vmem:[%s260 + $0x22c] sm:$0xf]
        %v531 = vld [vmem:[%s260 + $0x230] sm:$0xf]
        %v532 = vld [vmem:[%s260 + $0x234] sm:$0xf]
        %v533 = vld [vmem:[%s260 + $0x238] sm:$0xf]
        %v534 = vld [vmem:[%s260 + $0x23c] sm:$0xf]
        %v535 = vld [vmem:[%s260 + $0x240] sm:$0xf]
        %v536 = vld [vmem:[%s260 + $0x244] sm:$0xf]
        %v537 = vld [vmem:[%s260 + $0x248] sm:$0xf]
        %v538 = vld [vmem:[%s260 + $0x24c] sm:$0xf]
        %v539 = vld [vmem:[%s260 + $0x250] sm:$0xf]
        %v540 = vld [vmem:[%s260 + $0x254] sm:$0xf]
        %v541 = vld [vmem:[%s260 + $0x258] sm:$0xf]
        %v542 = vld [vmem:[%s260 + $0x25c] sm:$0xf]
        %v543 = vld [vmem:[%s260 + $0x260] sm:$0xf]
        %v544 = vld [vmem:[%s260 + $0x264] sm:$0xf]
        %v545 = vld [vmem:[%s260 + $0x268] sm:$0xf]
        %v546 = vld [vmem:[%s260 + $0x26c] sm:$0xf]
        %v547 = vld [vmem:[%s260 + $0x270] sm:$0xf]
        %v548 = vld [vmem:[%s260 + $0x274] sm:$0xf]
        %v549 = vld [vmem:[%s260 + $0x278] sm:$0xf]
        %v550 = vld [vmem:[%s260 + $0x27c] sm:$0xf]
        %v551 = vld [vmem:[%s260 + $0x280] sm:$0xf]
        %v552 = vld [vmem:[%s260 + $0x284] sm:$0xf]
        %v553 = vld [vmem:[%s260 + $0x288] sm:$0xf]
        %v554 = vld [vmem:[%s260 + $0x28c] sm:$0xf]
        %v555 = vld [vmem:[%s260 + $0x290] sm:$0xf]
        %v556 = vld [vmem:[%s260 + $0x294] sm:$0xf]
        %v557 = vld [vmem:[%s260 + $0x298] sm:$0xf]
        %v558 = vld [vmem:[%s260 + $0x29c] sm:$0xf]
        %v559 = vld [vmem:[%s260 + $0x2a0] sm:$0xf]
        %v560 = vld [vmem:[%s260 + $0x2a4] sm:$0xf]
        %v561 = vld [vmem:[%s260 + $0x2a8] sm:$0xf]
        %v562 = vld [vmem:[%s260 + $0x2ac] sm:$0xf]
        %v563 = vld [vmem:[%s260 + $0x2b0] sm:$0xf]
        %v564 = vld [vmem:[%s260 + $0x2b4] sm:$0xf]
        %v565 = vld [vmem:[%s260 + $0x2b8] sm:$0xf]
        %v566 = vld [vmem:[%s260 + $0x2bc] sm:$0xf]
        %v567 = vld [vmem:[%s260 + $0x2c0] sm:$0xf]
        %v568 = vld [vmem:[%s260 + $0x2c4] sm:$0xf]
        %v569 = vld [vmem:[%s260 + $0x2c8] sm:$0xf]
        %v570 = vld [vmem:[%s260 + $0x2cc] sm:$0xf]
        %v571 = vld [vmem:[%s260 + $0x2d0] sm:$0xf]
        %v572 = vld [vmem:[%s260 + $0x2d4] sm:$0xf]
        %v573 = vld [vmem:[%s260 + $0x2d8] sm:$0xf]
        %v574 = vld [vmem:[%s260 + $0x2dc] sm:$0xf]
        %v575 = vld [vmem:[%s260 + $0x2e0] sm:$0xf]
        %v576 = vld [vmem:[%s260 + $0x2e4] sm:$0xf]
        %v577 = vld [vmem:[%s260 + $0x2e8] sm:$0xf]
        %v578 = vld [vmem:[%s260 + $0x2ec] sm:$0xf]
        %v579 = vld [vmem:[%s260 + $0x2f0] sm:$0xf]
        %v580 = vld [vmem:[%s260 + $0x2f4] sm:$0xf]
        %v581 = vld [vmem:[%s260 + $0x2f8] sm:$0xf]
        %v582 = vld [vmem:[%s260 + $0x2fc] sm:$0xf]
        %v583 = vld [vmem:[%s260 + $0x300] sm:$0xf]
        %v584 = vld [vmem:[%s260 + $0x304] sm:$0xf]
        %v585 = vld [vmem:[%s260 + $0x308] sm:$0xf]
        %v586 = vld [vmem:[%s260 + $0x30c] sm:$0xf]
        %v587 = vld [vmem:[%s260 + $0x310] sm:$0xf]
        %v588 = vld [vmem:[%s260 + $0x314] sm:$0xf]
        %v589 = vld [vmem:[%s260 + $0x318] sm:$0xf]
        %v590 = vld [vmem:[%s260 + $0x31c] sm:$0xf]
        %v591 = vld [vmem:[%s260 + $0x320] sm:$0xf]
        %v592 = vld [vmem:[%s260 + $0x324] sm:$0xf]
        %v593 = vld [vmem:[%s260 + $0x328] sm:$0xf]
        %v594 = vld [vmem:[%s260 + $0x32c] sm:$0xf]
        %v595 = vld [vmem:[%s260 + $0x330] sm:$0xf]
        %v596 = vld [vmem:[%s260 + $0x334] sm:$0xf]
        %v597 = vld [vmem:[%s260 + $0x338] sm:$0xf]
        %v598 = vld [vmem:[%s260 + $0x33c] sm:$0xf]
        %v599 = vld [vmem:[%s260 + $0x340] sm:$0xf]
        %v600 = vld [vmem:[%s260 + $0x344] sm:$0xf]
        %v601 = vld [vmem:[%s260 + $0x348] sm:$0xf]
        %v602 = vld [vmem:[%s260 + $0x34c] sm:$0xf]
        %v603 = vld [vmem:[%s260 + $0x350] sm:$0xf]
        %v604 = vld [vmem:[%s260 + $0x354] sm:$0xf]
        %v605 = vld [vmem:[%s260 + $0x358] sm:$0xf]
        %v606 = vld [vmem:[%s260 + $0x35c] sm:$0xf]
        %v607 = vld [vmem:[%s260 + $0x360] sm:$0xf]
        %v608 = vld [vmem:[%s260 + $0x364] sm:$0xf]
        %v609 = vld [vmem:[%s260 + $0x368] sm:$0xf]
        %v610 = vld [vmem:[%s260 + $0x36c] sm:$0xf]
        %v611 = vld [vmem:[%s260 + $0x370] sm:$0xf]
        %v612 = vld [vmem:[%s260 + $0x374] sm:$0xf]
        %v613 = vld [vmem:[%s260 + $0x378] sm:$0xf]
        %v614 = vld [vmem:[%s260 + $0x37c] sm:$0xf]
        %v615 = vld [vmem:[%s260 + $0x380] sm:$0xf]
        %v616 = vld [vmem:[%s260 + $0x384] sm:$0xf]
        %v617 = vld [vmem:[%s260 + $0x388] sm:$0xf]
        %v618 = vld [vmem:[%s260 + $0x38c] sm:$0xf]
        %v619 = vld [vmem:[%s260 + $0x390] sm:$0xf]
        %v620 = vld [vmem:[%s260 + $0x394] sm:$0xf]
        %v621 = vld [vmem:[%s260 + $0x398] sm:$0xf]
        %v622 = vld [vmem:[%s260 + $0x39c] sm:$0xf]
        %v623 = vld [vmem:[%s260 + $0x3a0] sm:$0xf]
        %v624 = vld [vmem:[%s260 + $0x3a4] sm:$0xf]
        %v625 = vld [vmem:[%s260 + $0x3a8] sm:$0xf]
        %v626 = vld [vmem:[%s260 + $0x3ac] sm:$0xf]
        %v627 = vld [vmem:[%s260 + $0x3b0] sm:$0xf]
        %v628 = vld [vmem:[%s260 + $0x3b4] sm:$0xf]
        %v629 = vld [vmem:[%s260 + $0x3b8] sm:$0xf]
        %v630 = vld [vmem:[%s260 + $0x3bc] sm:$0xf]
        %v631 = vld [vmem:[%s260 + $0x3c0] sm:$0xf]
        %v632 = vld [vmem:[%s260 + $0x3c4] sm:$0xf]
        %v633 = vld [vmem:[%s260 + $0x3c8] sm:$0xf]
        %v634 = vld [vmem:[%s260 + $0x3cc] sm:$0xf]
        %v635 = vld [vmem:[%s260 + $0x3d0] sm:$0xf]
        %v636 = vld [vmem:[%s260 + $0x3d4] sm:$0xf]
        %v637 = vld [vmem:[%s260 + $0x3d8] sm:$0xf]
        %v638 = vld [vmem:[%s260 + $0x3dc] sm:$0xf]
        %v639 = vld [vmem:[%s260 + $0x3e0] sm:$0xf]
        %v640 = vld [vmem:[%s260 + $0x3e4] sm:$0xf]
        %v641 = vld [vmem:[%s260 + $0x3e8] sm:$0xf]
        %v642 = vld [vmem:[%s260 + $0x3ec] sm:$0xf]
        %v643 = vld [vmem:[%s260 + $0x3f0] sm:$0xf]
        %v644 = vld [vmem:[%s260 + $0x3f4] sm:$0xf]
        %v645 = vld [vmem:[%s260 + $0x3f8] sm:$0xf]
        %v646 = vld [vmem:[%s260 + $0x3fc] sm:$0xf]
        %v647 = vld [vmem:[%s260 + $0x400] sm:$0xf]
        %v648 = vld [vmem:[%s260 + $0x404] sm:$0xf]
        %v649 = vld [vmem:[%s260 + $0x408] sm:$0xf]
        %v650 = vld [vmem:[%s260 + $0x40c] sm:$0xf]
        %v651 = vld [vmem:[%s260 + $0x410] sm:$0xf]
        %v652 = vld [vmem:[%s260 + $0x414] sm:$0xf]
        %v653 = vld [vmem:[%s260 + $0x418] sm:$0xf]
        %v654 = vld [vmem:[%s260 + $0x41c] sm:$0xf]
        %v655 = vld [vmem:[%s260 + $0x420] sm:$0xf]
        %v656 = vld [vmem:[%s260 + $0x424] sm:$0xf]
        %v657 = vld [vmem:[%s260 + $0x428] sm:$0xf]
        %v658 = vld [vmem:[%s260 + $0x42c] sm:$0xf]
        %v659 = vld [vmem:[%s260 + $0x430] sm:$0xf]
        %v660 = vld [vmem:[%s260 + $0x434] sm:$0xf]
        %v661 = vld [vmem:[%s260 + $0x438] sm:$0xf]
        %v662 = vld [vmem:[%s260 + $0x43c] sm:$0xf]
        %v663 = vld [vmem:[%s260 + $0x440] sm:$0xf]
        %v664 = vld [vmem:[%s260 + $0x444] sm:$0xf]
        %v665 = vld [vmem:[%s260 + $0x448] sm:$0xf]
        %v666 = vld [vmem:[%s260 + $0x44c] sm:$0xf]
        %v667 = vld [vmem:[%s260 + $0x450] sm:$0xf]
        %v668 = vld [vmem:[%s260 + $0x454] sm:$0xf]
        %v669 = vld [vmem:[%s260 + $0x458] sm:$0xf]
        %v670 = vld [vmem:[%s260 + $0x45c] sm:$0xf]
        %v671 = vld [vmem:[%s260 + $0x460] sm:$0xf]
        %v672 = vld [vmem:[%s260 + $0x464] sm:$0xf]
        %v673 = vld [vmem:[%s260 + $0x468] sm:$0xf]
        %v674 = vld [vmem:[%s260 + $0x46c] sm:$0xf]
        %v675 = vld [vmem:[%s260 + $0x470] sm:$0xf]
        %v676 = vld [vmem:[%s260 + $0x474] sm:$0xf]
        %v677 = vld [vmem:[%s260 + $0x478] sm:$0xf]
        %v678 = vld [vmem:[%s260 + $0x47c] sm:$0xf]
        %v679 = vld [vmem:[%s260 + $0x480] sm:$0xf]
        %v680 = vld [vmem:[%s260 + $0x484] sm:$0xf]
        %v681 = vld [vmem:[%s260 + $0x488] sm:$0xf]
        %v682 = vld [vmem:[%s260 + $0x48c] sm:$0xf]
        %v683 = vld [vmem:[%s260 + $0x490] sm:$0xf]
        %v684 = vld [vmem:[%s260 + $0x494] sm:$0xf]
        %v685 = vld [vmem:[%s260 + $0x498] sm:$0xf]
        %v686 = vld [vmem:[%s260 + $0x49c] sm:$0xf]
        %v687 = vld [vmem:[%s260 + $0x4a0] sm:$0xf]
        %v688 = vld [vmem:[%s260 + $0x4a4] sm:$0xf]
        %v689 = vld [vmem:[%s260 + $0x4a8] sm:$0xf]
        %v690 = vld [vmem:[%s260 + $0x4ac] sm:$0xf]
        %v691 = vld [vmem:[%s260 + $0x4b0] sm:$0xf]
        %v692 = vld [vmem:[%s260 + $0x4b4] sm:$0xf]
        %v693 = vld [vmem:[%s260 + $0x4b8] sm:$0xf]
        %v694 = vld [vmem:[%s260 + $0x4bc] sm:$0xf]
        %v695 = vld [vmem:[%s260 + $0x4c0] sm:$0xf]
        %v696 = vld [vmem:[%s260 + $0x4c4] sm:$0xf]
        %v697 = vld [vmem:[%s260 + $0x4c8] sm:$0xf]
        %v698 = vld [vmem:[%s260 + $0x4cc] sm:$0xf]
        %v699 = vld [vmem:[%s260 + $0x4d0] sm:$0xf]
        %v700 = vld [vmem:[%s260 + $0x4d4] sm:$0xf]
        %v701 = vld [vmem:[%s260 + $0x4d8] sm:$0xf]
        %v702 = vld [vmem:[%s260 + $0x4dc] sm:$0xf]
        %v703 = vld [vmem:[%s260 + $0x4e0] sm:$0xf]
        %v704 = vld [vmem:[%s260 + $0x4e4] sm:$0xf]
        %v705 = vld [vmem:[%s260 + $0x4e8] sm:$0xf]
        %v706 = vld [vmem:[%s260 + $0x4ec] sm:$0xf]
        %v707 = vld [vmem:[%s260 + $0x4f0] sm:$0xf]
        %v708 = vld [vmem:[%s260 + $0x4f4] sm:$0xf]
        %v709 = vld [vmem:[%s260 + $0x4f8] sm:$0xf]
        %v710 = vld [vmem:[%s260 + $0x4fc] sm:$0xf]
        %v711 = vld [vmem:[%s260 + $0x500] sm:$0xf]
        %v712 = vld [vmem:[%s260 + $0x504] sm:$0xf]
        %v713 = vld [vmem:[%s260 + $0x508] sm:$0xf]
        %v714 = vld [vmem:[%s260 + $0x50c] sm:$0xf]
        %v715 = vld [vmem:[%s260 + $0x510] sm:$0xf]
        %v716 = vld [vmem:[%s260 + $0x514] sm:$0xf]
        %v717 = vld [vmem:[%s260 + $0x518] sm:$0xf]
        %v718 = vld [vmem:[%s260 + $0x51c] sm:$0xf]
        %v719 = vld [vmem:[%s260 + $0x520] sm:$0xf]
        %v720 = vld [vmem:[%s260 + $0x524] sm:$0xf]
        %v721 = vld [vmem:[%s260 + $0x528] sm:$0xf]
        %v722 = vld [vmem:[%s260 + $0x52c] sm:$0xf]
        %v723 = vld [vmem:[%s260 + $0x530] sm:$0xf]
        %v724 = vld [vmem:[%s260 + $0x534] sm:$0xf]
        %v725 = vld [vmem:[%s260 + $0x538] sm:$0xf]
        %v726 = vld [vmem:[%s260 + $0x53c] sm:$0xf]
        %v727 = vld [vmem:[%s260 + $0x540] sm:$0xf]
        %v728 = vld [vmem:[%s260 + $0x544] sm:$0xf]
        %v729 = vld [vmem:[%s260 + $0x548] sm:$0xf]
        %v730 = vld [vmem:[%s260 + $0x54c] sm:$0xf]
        %v731 = vld [vmem:[%s260 + $0x550] sm:$0xf]
        %v732 = vld [vmem:[%s260 + $0x554] sm:$0xf]
        %v733 = vld [vmem:[%s260 + $0x558] sm:$0xf]
        %v734 = vld [vmem:[%s260 + $0x55c] sm:$0xf]
        %v735 = vld [vmem:[%s260 + $0x560] sm:$0xf]
        %v736 = vld [vmem:[%s260 + $0x564] sm:$0xf]
        %v737 = vld [vmem:[%s260 + $0x568] sm:$0xf]
        %v738 = vld [vmem:[%s260 + $0x56c] sm:$0xf]
        %v739 = vld [vmem:[%s260 + $0x570] sm:$0xf]
        %v740 = vld [vmem:[%s260 + $0x574] sm:$0xf]
        %v741 = vld [vmem:[%s260 + $0x578] sm:$0xf]
        %v742 = vld [vmem:[%s260 + $0x57c] sm:$0xf]
        %v743 = vld [vmem:[%s260 + $0x580] sm:$0xf]
        %v744 = vld [vmem:[%s260 + $0x584] sm:$0xf]
        %v745 = vld [vmem:[%s260 + $0x588] sm:$0xf]
        %v746 = vld [vmem:[%s260 + $0x58c] sm:$0xf]
        %v747 = vld [vmem:[%s260 + $0x590] sm:$0xf]
        %v748 = vld [vmem:[%s260 + $0x594] sm:$0xf]
        %v749 = vld [vmem:[%s260 + $0x598] sm:$0xf]
        %v750 = vld [vmem:[%s260 + $0x59c] sm:$0xf]
        %v751 = vld [vmem:[%s260 + $0x5a0] sm:$0xf]
        %v752 = vld [vmem:[%s260 + $0x5a4] sm:$0xf]
        %v753 = vld [vmem:[%s260 + $0x5a8] sm:$0xf]
        %v754 = vld [vmem:[%s260 + $0x5ac] sm:$0xf]
        %v755 = vld [vmem:[%s260 + $0x5b0] sm:$0xf]
        %v756 = vld [vmem:[%s260 + $0x5b4] sm:$0xf]
        %v757 = vld [vmem:[%s260 + $0x5b8] sm:$0xf]
        %v758 = vld [vmem:[%s260 + $0x5bc] sm:$0xf]
        %v759 = vld [vmem:[%s260 + $0x5c0] sm:$0xf]
        %v760 = vld [vmem:[%s260 + $0x5c4] sm:$0xf]
        %v761 = vld [vmem:[%s260 + $0x5c8] sm:$0xf]
        %v762 = vld [vmem:[%s260 + $0x5cc] sm:$0xf]
        %v763 = vld [vmem:[%s260 + $0x5d0] sm:$0xf]
        %v764 = vld [vmem:[%s260 + $0x5d4] sm:$0xf]
        %v765 = vld [vmem:[%s260 + $0x5d8] sm:$0xf]
        %v766 = vld [vmem:[%s260 + $0x5dc] sm:$0xf]
        %v767 = vld [vmem:[%s260 + $0x5e0] sm:$0xf]
        %v768 = vld [vmem:[%s260 + $0x5e4] sm:$0xf]
        %v769 = vld [vmem:[%s260 + $0x5e8] sm:$0xf]
        %v770 = vld [vmem:[%s260 + $0x5ec] sm:$0xf]
        %v771 = vld [vmem:[%s260 + $0x5f0] sm:$0xf]
        %v772 = vld [vmem:[%s260 + $0x5f4] sm:$0xf]
        %v773 = vld [vmem:[%s260 + $0x5f8] sm:$0xf]
        %v774 = vld [vmem:[%s260 + $0x5fc] sm:$0xf]
        %v775 = vld [vmem:[%s260 + $0x600] sm:$0xf]
        %v776 = vld [vmem:[%s260 + $0x604] sm:$0xf]
        %v777 = vld [vmem:[%s260 + $0x608] sm:$0xf]
        %v778 = vld [vmem:[%s260 + $0x60c] sm:$0xf]
        %v779 = vld [vmem:[%s260 + $0x610] sm:$0xf]
        %v780 = vld [vmem:[%s260 + $0x614] sm:$0xf]
        %v781 = vld [vmem:[%s260 + $0x618] sm:$0xf]
        %v782 = vld [vmem:[%s260 + $0x61c] sm:$0xf]
        %v783 = vld [vmem:[%s260 + $0x620] sm:$0xf]
        %v784 = vld [vmem:[%s260 + $0x624] sm:$0xf]
        %v785 = vld [vmem:[%s260 + $0x628] sm:$0xf]
        %v786 = vld [vmem:[%s260 + $0x62c] sm:$0xf]
        %v787 = vld [vmem:[%s260 + $0x630] sm:$0xf]
        %v788 = vld [vmem:[%s260 + $0x634] sm:$0xf]
        %v789 = vld [vmem:[%s260 + $0x638] sm:$0xf]
        %v790 = vld [vmem:[%s260 + $0x63c] sm:$0xf]
        %v791 = vld [vmem:[%s260 + $0x640] sm:$0xf]
        %v792 = vld [vmem:[%s260 + $0x644] sm:$0xf]
        %v793 = vld [vmem:[%s260 + $0x648] sm:$0xf]
        %v794 = vld [vmem:[%s260 + $0x64c] sm:$0xf]
        %v795 = vld [vmem:[%s260 + $0x650] sm:$0xf]
        %v796 = vld [vmem:[%s260 + $0x654] sm:$0xf]
        %v797 = vld [vmem:[%s260 + $0x658] sm:$0xf]
        %v798 = vld [vmem:[%s260 + $0x65c] sm:$0xf]
        %v799 = vld [vmem:[%s260 + $0x660] sm:$0xf]
        %v800 = vld [vmem:[%s260 + $0x664] sm:$0xf]
        %v801 = vld [vmem:[%s260 + $0x668] sm:$0xf]
        %v802 = vld [vmem:[%s260 + $0x66c] sm:$0xf]
        %v803 = vld [vmem:[%s260 + $0x670] sm:$0xf]
        %v804 = vld [vmem:[%s260 + $0x674] sm:$0xf]
        %v805 = vld [vmem:[%s260 + $0x678] sm:$0xf]
        %v806 = vld [vmem:[%s260 + $0x67c] sm:$0xf]
        %v807 = vld [vmem:[%s260 + $0x680] sm:$0xf]
        %v808 = vld [vmem:[%s260 + $0x684] sm:$0xf]
        %v809 = vld [vmem:[%s260 + $0x688] sm:$0xf]
        %v810 = vld [vmem:[%s260 + $0x68c] sm:$0xf]
        %v811 = vld [vmem:[%s260 + $0x690] sm:$0xf]
        %v812 = vld [vmem:[%s260 + $0x694] sm:$0xf]
        %v813 = vld [vmem:[%s260 + $0x698] sm:$0xf]
        %v814 = vld [vmem:[%s260 + $0x69c] sm:$0xf]
        %v815 = vld [vmem:[%s260 + $0x6a0] sm:$0xf]
        %v816 = vld [vmem:[%s260 + $0x6a4] sm:$0xf]
        %v817 = vld [vmem:[%s260 + $0x6a8] sm:$0xf]
        %v818 = vld [vmem:[%s260 + $0x6ac] sm:$0xf]
        %v819 = vld [vmem:[%s260 + $0x6b0] sm:$0xf]
        %v820 = vld [vmem:[%s260 + $0x6b4] sm:$0xf]
        %v821 = vld [vmem:[%s260 + $0x6b8] sm:$0xf]
        %v822 = vld [vmem:[%s260 + $0x6bc] sm:$0xf]
        %v823 = vld [vmem:[%s260 + $0x6c0] sm:$0xf]
        %v824 = vld [vmem:[%s260 + $0x6c4] sm:$0xf]
        %v825 = vld [vmem:[%s260 + $0x6c8] sm:$0xf]
        %v826 = vld [vmem:[%s260 + $0x6cc] sm:$0xf]
        %v827 = vld [vmem:[%s260 + $0x6d0] sm:$0xf]
        %v828 = vld [vmem:[%s260 + $0x6d4] sm:$0xf]
        %v829 = vld [vmem:[%s260 + $0x6d8] sm:$0xf]
        %v830 = vld [vmem:[%s260 + $0x6dc] sm:$0xf]
        %v831 = vld [vmem:[%s260 + $0x6e0] sm:$0xf]
        %v832 = vld [vmem:[%s260 + $0x6e4] sm:$0xf]
        %v833 = vld [vmem:[%s260 + $0x6e8] sm:$0xf]
        %v834 = vld [vmem:[%s260 + $0x6ec] sm:$0xf]
        %v835 = vld [vmem:[%s260 + $0x6f0] sm:$0xf]
        %v836 = vld [vmem:[%s260 + $0x6f4] sm:$0xf]
        %v837 = vld [vmem:[%s260 + $0x6f8] sm:$0xf]
        %v838 = vld [vmem:[%s260 + $0x6fc] sm:$0xf]
        %v839 = vld [vmem:[%s260 + $0x700] sm:$0xf]
        %v840 = vld [vmem:[%s260 + $0x704] sm:$0xf]
        %v841 = vld [vmem:[%s260 + $0x708] sm:$0xf]
        %v842 = vld [vmem:[%s260 + $0x70c] sm:$0xf]
        %v843 = vld [vmem:[%s260 + $0x710] sm:$0xf]
        %v844 = vld [vmem:[%s260 + $0x714] sm:$0xf]
        %v845 = vld [vmem:[%s260 + $0x718] sm:$0xf]
        %v846 = vld [vmem:[%s260 + $0x71c] sm:$0xf]
        %v847 = vld [vmem:[%s260 + $0x720] sm:$0xf]
        %v848 = vld [vmem:[%s260 + $0x724] sm:$0xf]
        %v849 = vld [vmem:[%s260 + $0x728] sm:$0xf]
        %v850 = vld [vmem:[%s260 + $0x72c] sm:$0xf]
        %v851 = vld [vmem:[%s260 + $0x730] sm:$0xf]
        %v852 = vld [vmem:[%s260 + $0x734] sm:$0xf]
        %v853 = vld [vmem:[%s260 + $0x738] sm:$0xf]
        %v854 = vld [vmem:[%s260 + $0x73c] sm:$0xf]
        %v855 = vld [vmem:[%s260 + $0x740] sm:$0xf]
        %v856 = vld [vmem:[%s260 + $0x744] sm:$0xf]
        %v857 = vld [vmem:[%s260 + $0x748] sm:$0xf]
        %v858 = vld [vmem:[%s260 + $0x74c] sm:$0xf]
        %v859 = vld [vmem:[%s260 + $0x750] sm:$0xf]
        %v860 = vld [vmem:[%s260 + $0x754] sm:$0xf]
        %v861 = vld [vmem:[%s260 + $0x758] sm:$0xf]
        %v862 = vld [vmem:[%s260 + $0x75c] sm:$0xf]
        %v863 = vld [vmem:[%s260 + $0x760] sm:$0xf]
        %v864 = vld [vmem:[%s260 + $0x764] sm:$0xf]
        %v865 = vld [vmem:[%s260 + $0x768] sm:$0xf]
        %v866 = vld [vmem:[%s260 + $0x76c] sm:$0xf]
        %v867 = vld [vmem:[%s260 + $0x770] sm:$0xf]
        %v868 = vld [vmem:[%s260 + $0x774] sm:$0xf]
        %v869 = vld [vmem:[%s260 + $0x778] sm:$0xf]
        %v870 = vld [vmem:[%s260 + $0x77c] sm:$0xf]
        %v871 = vld [vmem:[%s260 + $0x780] sm:$0xf]
        %v872 = vld [vmem:[%s260 + $0x784] sm:$0xf]
        %v873 = vld [vmem:[%s260 + $0x788] sm:$0xf]
        %v874 = vld [vmem:[%s260 + $0x78c] sm:$0xf]
        %v875 = vld [vmem:[%s260 + $0x790] sm:$0xf]
        %v876 = vld [vmem:[%s260 + $0x794] sm:$0xf]
        %v877 = vld [vmem:[%s260 + $0x798] sm:$0xf]
        %v878 = vld [vmem:[%s260 + $0x79c] sm:$0xf]
        %v879 = vld [vmem:[%s260 + $0x7a0] sm:$0xf]
        %v880 = vld [vmem:[%s260 + $0x7a4] sm:$0xf]
        %v881 = vld [vmem:[%s260 + $0x7a8] sm:$0xf]
        %v882 = vld [vmem:[%s260 + $0x7ac] sm:$0xf]
        %v883 = vld [vmem:[%s260 + $0x7b0] sm:$0xf]
        %v884 = vld [vmem:[%s260 + $0x7b4] sm:$0xf]
        %v885 = vld [vmem:[%s260 + $0x7b8] sm:$0xf]
        %v886 = vld [vmem:[%s260 + $0x7bc] sm:$0xf]
        %v887 = vld [vmem:[%s260 + $0x7c0] sm:$0xf]
        %v888 = vld [vmem:[%s260 + $0x7c4] sm:$0xf]
        %v889 = vld [vmem:[%s260 + $0x7c8] sm:$0xf]
        %v890 = vld [vmem:[%s260 + $0x7cc] sm:$0xf]
        %v891 = vld [vmem:[%s260 + $0x7d0] sm:$0xf]
        %v892 = vld [vmem:[%s260 + $0x7d4] sm:$0xf]
        %v893 = vld [vmem:[%s260 + $0x7d8] sm:$0xf]
        %v894 = vld [vmem:[%s260 + $0x7dc] sm:$0xf]
        %v895 = vld [vmem:[%s260 + $0x7e0] sm:$0xf]
        %v896 = vld [vmem:[%s260 + $0x7e4] sm:$0xf]
        %v897 = vld [vmem:[%s260 + $0x7e8] sm:$0xf]
        %v898 = vld [vmem:[%s260 + $0x7ec] sm:$0xf]
        %v899 = vld [vmem:[%s260 + $0x7f0] sm:$0xf]
        %v900 = vld [vmem:[%s260 + $0x7f4] sm:$0xf]
        %v901 = vld [vmem:[%s260 + $0x7f8] sm:$0xf]
        %v902 = vld [vmem:[%s260 + $0x7fc] sm:$0xf]
        %v903 = vld [vmem:[%s260 + $0x800] sm:$0xf]
        %v904 = vld [vmem:[%s260 + $0x804] sm:$0xf]
        %v905 = vld [vmem:[%s260 + $0x808] sm:$0xf]
        %v906 = vld [vmem:[%s260 + $0x80c] sm:$0xf]
        %v907 = vld [vmem:[%s260 + $0x810] sm:$0xf]
        %v908 = vld [vmem:[%s260 + $0x814] sm:$0xf]
        %v909 = vld [vmem:[%s260 + $0x818] sm:$0xf]
        %v910 = vld [vmem:[%s260 + $0x81c] sm:$0xf]
        %v911 = vld [vmem:[%s260 + $0x820] sm:$0xf]
        %v912 = vld [vmem:[%s260 + $0x824] sm:$0xf]
        %v913 = vld [vmem:[%s260 + $0x828] sm:$0xf]
        %v914 = vld [vmem:[%s260 + $0x82c] sm:$0xf]
        %v915 = vld [vmem:[%s260 + $0x830] sm:$0xf]
        %v916 = vld [vmem:[%s260 + $0x834] sm:$0xf]
        %v917 = vld [vmem:[%s260 + $0x838] sm:$0xf]
        %v918 = vld [vmem:[%s260 + $0x83c] sm:$0xf]
        %v919 = vld [vmem:[%s260 + $0x840] sm:$0xf]
        %v920 = vld [vmem:[%s260 + $0x844] sm:$0xf]
        %v921 = vld [vmem:[%s260 + $0x848] sm:$0xf]
        %v922 = vld [vmem:[%s260 + $0x84c] sm:$0xf]
        %v923 = vld [vmem:[%s260 + $0x850] sm:$0xf]
        %v924 = vld [vmem:[%s260 + $0x854] sm:$0xf]
        %v925 = vld [vmem:[%s260 + $0x858] sm:$0xf]
        %v926 = vld [vmem:[%s260 + $0x85c] sm:$0xf]
        %v927 = vld [vmem:[%s260 + $0x860] sm:$0xf]
        %v928 = vld [vmem:[%s260 + $0x864] sm:$0xf]
        %v929 = vld [vmem:[%s260 + $0x868] sm:$0xf]
        %v930 = vld [vmem:[%s260 + $0x86c] sm:$0xf]
        %v931 = vld [vmem:[%s260 + $0x870] sm:$0xf]
        %v932 = vld [vmem:[%s260 + $0x874] sm:$0xf]
        %v933 = vld [vmem:[%s260 + $0x878] sm:$0xf]
        %v934 = vld [vmem:[%s260 + $0x87c] sm:$0xf]
        %v935 = vld [vmem:[%s260 + $0x880] sm:$0xf]
        %v936 = vld [vmem:[%s260 + $0x884] sm:$0xf]
        %v937 = vld [vmem:[%s260 + $0x888] sm:$0xf]
        %v938 = vld [vmem:[%s260 + $0x88c] sm:$0xf]
        %v939 = vld [vmem:[%s260 + $0x890] sm:$0xf]
        %v940 = vld [vmem:[%s260 + $0x894] sm:$0xf]
        %v941 = vld [vmem:[%s260 + $0x898] sm:$0xf]
        %v942 = vld [vmem:[%s260 + $0x89c] sm:$0xf]
        %v943 = vld [vmem:[%s260 + $0x8a0] sm:$0xf]
        %v944 = vld [vmem:[%s260 + $0x8a4] sm:$0xf]
        %v945 = vld [vmem:[%s260 + $0x8a8] sm:$0xf]
        %v946 = vld [vmem:[%s260 + $0x8ac] sm:$0xf]
        %v947 = vld [vmem:[%s260 + $0x8b0] sm:$0xf]
        %v948 = vld [vmem:[%s260 + $0x8b4] sm:$0xf]
        %v949 = vld [vmem:[%s260 + $0x8b8] sm:$0xf]
        %v950 = vld [vmem:[%s260 + $0x8bc] sm:$0xf]
        %v951 = vld [vmem:[%s260 + $0x8c0] sm:$0xf]
        %v952 = vld [vmem:[%s260 + $0x8c4] sm:$0xf]
        %v953 = vld [vmem:[%s260 + $0x8c8] sm:$0xf]
        %v954 = vld [vmem:[%s260 + $0x8cc] sm:$0xf]
        %v955 = vld [vmem:[%s260 + $0x8d0] sm:$0xf]
        %v956 = vld [vmem:[%s260 + $0x8d4] sm:$0xf]
        %v957 = vld [vmem:[%s260 + $0x8d8] sm:$0xf]
        %v958 = vld [vmem:[%s260 + $0x8dc] sm:$0xf]
        %v959 = vld [vmem:[%s260 + $0x8e0] sm:$0xf]
        %v960 = vld [vmem:[%s260 + $0x8e4] sm:$0xf]
        %v961 = vld [vmem:[%s260 + $0x8e8] sm:$0xf]
        %v962 = vld [vmem:[%s260 + $0x8ec] sm:$0xf]
        %v963 = vld [vmem:[%s260 + $0x8f0] sm:$0xf]
        %v964 = vld [vmem:[%s260 + $0x8f4] sm:$0xf]
        %v965 = vld [vmem:[%s260 + $0x8f8] sm:$0xf]
        %v966 = vld [vmem:[%s260 + $0x8fc] sm:$0xf]
        %v967 = vld [vmem:[%s260 + $0x900] sm:$0xf]
        %v968 = vld [vmem:[%s260 + $0x904] sm:$0xf]
        %v969 = vld [vmem:[%s260 + $0x908] sm:$0xf]
        %v970 = vld [vmem:[%s260 + $0x90c] sm:$0xf]
        %v971 = vld [vmem:[%s260 + $0x910] sm:$0xf]
        %v972 = vld [vmem:[%s260 + $0x914] sm:$0xf]
        %v973 = vld [vmem:[%s260 + $0x918] sm:$0xf]
        %v974 = vld [vmem:[%s260 + $0x91c] sm:$0xf]
        %v975 = vld [vmem:[%s260 + $0x920] sm:$0xf]
        %v976 = vld [vmem:[%s260 + $0x924] sm:$0xf]
        %v977 = vld [vmem:[%s260 + $0x928] sm:$0xf]
        %v978 = vld [vmem:[%s260 + $0x92c] sm:$0xf]
        %v979 = vld [vmem:[%s260 + $0x930] sm:$0xf]
        %v980 = vld [vmem:[%s260 + $0x934] sm:$0xf]
        %v981 = vld [vmem:[%s260 + $0x938] sm:$0xf]
        %v982 = vld [vmem:[%s260 + $0x93c] sm:$0xf]
        %v983 = vld [vmem:[%s260 + $0x940] sm:$0xf]
        %v984 = vld [vmem:[%s260 + $0x944] sm:$0xf]
        %v985 = vld [vmem:[%s260 + $0x948] sm:$0xf]
        %v986 = vld [vmem:[%s260 + $0x94c] sm:$0xf]
        %v987 = vld [vmem:[%s260 + $0x950] sm:$0xf]
        %v988 = vld [vmem:[%s260 + $0x954] sm:$0xf]
        %v989 = vld [vmem:[%s260 + $0x958] sm:$0xf]
        %v990 = vld [vmem:[%s260 + $0x95c] sm:$0xf]
        %v991 = vld [vmem:[%s260 + $0x960] sm:$0xf]
        %v992 = vld [vmem:[%s260 + $0x964] sm:$0xf]
        %v993 = vld [vmem:[%s260 + $0x968] sm:$0xf]
        %v994 = vld [vmem:[%s260 + $0x96c] sm:$0xf]
        %v995 = vld [vmem:[%s260 + $0x970] sm:$0xf]
        %v996 = vld [vmem:[%s260 + $0x974] sm:$0xf]
        %v997 = vld [vmem:[%s260 + $0x978] sm:$0xf]
        %v998 = vld [vmem:[%s260 + $0x97c] sm:$0xf]
        %v999 = vld [vmem:[%s260 + $0x980] sm:$0xf]
        %v1000 = vld [vmem:[%s260 + $0x984] sm:$0xf]
        %v1001 = vld [vmem:[%s260 + $0x988] sm:$0xf]
        %v1002 = vld [vmem:[%s260 + $0x98c] sm:$0xf]
        %v1003 = vld [vmem:[%s260 + $0x990] sm:$0xf]
        %v1004 = vld [vmem:[%s260 + $0x994] sm:$0xf]
        %v1005 = vld [vmem:[%s260 + $0x998] sm:$0xf]
        %v1006 = vld [vmem:[%s260 + $0x99c] sm:$0xf]
        %v1007 = vld [vmem:[%s260 + $0x9a0] sm:$0xf]
        %v1008 = vld [vmem:[%s260 + $0x9a4] sm:$0xf]
        %v1009 = vld [vmem:[%s260 + $0x9a8] sm:$0xf]
        %v1010 = vld [vmem:[%s260 + $0x9ac] sm:$0xf]
        %v1011 = vld [vmem:[%s260 + $0x9b0] sm:$0xf]
        %v1012 = vld [vmem:[%s260 + $0x9b4] sm:$0xf]
        %v1013 = vld [vmem:[%s260 + $0x9b8] sm:$0xf]
        %v1014 = vld [vmem:[%s260 + $0x9bc] sm:$0xf]
        %v1015 = vld [vmem:[%s260 + $0x9c0] sm:$0xf]
        %v1016 = vld [vmem:[%s260 + $0x9c4] sm:$0xf]
        %v1017 = vld [vmem:[%s260 + $0x9c8] sm:$0xf]
        %v1018 = vld [vmem:[%s260 + $0x9cc] sm:$0xf]
        %v1019 = vld [vmem:[%s260 + $0x9d0] sm:$0xf]
        %v1020 = vld [vmem:[%s260 + $0x9d4] sm:$0xf]
        %v1021 = vld [vmem:[%s260 + $0x9d8] sm:$0xf]
        %v1022 = vld [vmem:[%s260 + $0x9dc] sm:$0xf]
        %v1023 = vld [vmem:[%s260 + $0x9e0] sm:$0xf]
        %v1024 = vld [vmem:[%s260 + $0x9e4] sm:$0xf]
        %v1025 = vld [vmem:[%s260 + $0x9e8] sm:$0xf]
        %v1026 = vld [vmem:[%s260 + $0x9ec] sm:$0xf]
        %v1027 = vld [vmem:[%s260 + $0x9f0] sm:$0xf]
        %v1028 = vld [vmem:[%s260 + $0x9f4] sm:$0xf]
        %v1029 = vld [vmem:[%s260 + $0x9f8] sm:$0xf]
        %v1030 = vld [vmem:[%s260 + $0x9fc] sm:$0xf]
        %v1031 = vld [vmem:[%s260 + $0xa00] sm:$0xf]
        %v1032 = vld [vmem:[%s260 + $0xa04] sm:$0xf]
        %v1033 = vld [vmem:[%s260 + $0xa08] sm:$0xf]
        %v1034 = vld [vmem:[%s260 + $0xa0c] sm:$0xf]
        %v1035 = vld [vmem:[%s260 + $0xa10] sm:$0xf]
        %v1036 = vld [vmem:[%s260 + $0xa14] sm:$0xf]
        %v1037 = vld [vmem:[%s260 + $0xa18] sm:$0xf]
        %v1038 = vld [vmem:[%s260 + $0xa1c] sm:$0xf]
        %v1039 = vld [vmem:[%s260 + $0xa20] sm:$0xf]
        %v1040 = vld [vmem:[%s260 + $0xa24] sm:$0xf]
        %v1041 = vld [vmem:[%s260 + $0xa28] sm:$0xf]
        %v1042 = vld [vmem:[%s260 + $0xa2c] sm:$0xf]
        %v1043 = vld [vmem:[%s260 + $0xa30] sm:$0xf]
        %v1044 = vld [vmem:[%s260 + $0xa34] sm:$0xf]
        %v1045 = vld [vmem:[%s260 + $0xa38] sm:$0xf]
        %v1046 = vld [vmem:[%s260 + $0xa3c] sm:$0xf]
        %v1047 = vld [vmem:[%s260 + $0xa40] sm:$0xf]
        %v1048 = vld [vmem:[%s260 + $0xa44] sm:$0xf]
        %v1049 = vld [vmem:[%s260 + $0xa48] sm:$0xf]
        %v1050 = vld [vmem:[%s260 + $0xa4c] sm:$0xf]
        %v1051 = vld [vmem:[%s260 + $0xa50] sm:$0xf]
        %v1052 = vld [vmem:[%s260 + $0xa54] sm:$0xf]
        %v1053 = vld [vmem:[%s260 + $0xa58] sm:$0xf]
        %v1054 = vld [vmem:[%s260 + $0xa5c] sm:$0xf]
        %v1055 = vld [vmem:[%s260 + $0xa60] sm:$0xf]
        %v1056 = vld [vmem:[%s260 + $0xa64] sm:$0xf]
        %v1057 = vld [vmem:[%s260 + $0xa68] sm:$0xf]
        %v1058 = vld [vmem:[%s260 + $0xa6c] sm:$0xf]
        %v1059 = vld [vmem:[%s260 + $0xa70] sm:$0xf]
        %v1060 = vld [vmem:[%s260 + $0xa74] sm:$0xf]
        %v1061 = vld [vmem:[%s260 + $0xa78] sm:$0xf]
        %v1062 = vld [vmem:[%s260 + $0xa7c] sm:$0xf]
        %v1063 = vld [vmem:[%s260 + $0xa80] sm:$0xf]
        %v1064 = vld [vmem:[%s260 + $0xa84] sm:$0xf]
        %v1065 = vld [vmem:[%s260 + $0xa88] sm:$0xf]
        %v1066 = vld [vmem:[%s260 + $0xa8c] sm:$0xf]
        %v1067 = vld [vmem:[%s260 + $0xa90] sm:$0xf]
        %v1068 = vld [vmem:[%s260 + $0xa94] sm:$0xf]
        %v1069 = vld [vmem:[%s260 + $0xa98] sm:$0xf]
        %v1070 = vld [vmem:[%s260 + $0xa9c] sm:$0xf]
        %v1071 = vld [vmem:[%s260 + $0xaa0] sm:$0xf]
        %v1072 = vld [vmem:[%s260 + $0xaa4] sm:$0xf]
        %v1073 = vld [vmem:[%s260 + $0xaa8] sm:$0xf]
        %v1074 = vld [vmem:[%s260 + $0xaac] sm:$0xf]
        %v1075 = vld [vmem:[%s260 + $0xab0] sm:$0xf]
        %v1076 = vld [vmem:[%s260 + $0xab4] sm:$0xf]
        %v1077 = vld [vmem:[%s260 + $0xab8] sm:$0xf]
        %v1078 = vld [vmem:[%s260 + $0xabc] sm:$0xf]
        %v1079 = vld [vmem:[%s260 + $0xac0] sm:$0xf]
        %v1080 = vld [vmem:[%s260 + $0xac4] sm:$0xf]
        %v1081 = vld [vmem:[%s260 + $0xac8] sm:$0xf]
        %v1082 = vld [vmem:[%s260 + $0xacc] sm:$0xf]
        %v1083 = vld [vmem:[%s260 + $0xad0] sm:$0xf]
        %v1084 = vld [vmem:[%s260 + $0xad4] sm:$0xf]
        %v1085 = vld [vmem:[%s260 + $0xad8] sm:$0xf]
        %v1086 = vld [vmem:[%s260 + $0xadc] sm:$0xf]
        %v1087 = vld [vmem:[%s260 + $0xae0] sm:$0xf]
        %v1088 = vld [vmem:[%s260 + $0xae4] sm:$0xf]
        %v1089 = vld [vmem:[%s260 + $0xae8] sm:$0xf]
        %v1090 = vld [vmem:[%s260 + $0xaec] sm:$0xf]
        %v1091 = vld [vmem:[%s260 + $0xaf0] sm:$0xf]
        %v1092 = vld [vmem:[%s260 + $0xaf4] sm:$0xf]
        %v1093 = vld [vmem:[%s260 + $0xaf8] sm:$0xf]
        %v1094 = vld [vmem:[%s260 + $0xafc] sm:$0xf]
        %v1095 = vld [vmem:[%s260 + $0xb00] sm:$0xf]
        %v1096 = vld [vmem:[%s260 + $0xb04] sm:$0xf]
        %v1097 = vld [vmem:[%s260 + $0xb08] sm:$0xf]
        %v1098 = vld [vmem:[%s260 + $0xb0c] sm:$0xf]
        %v1099 = vld [vmem:[%s260 + $0xb10] sm:$0xf]
        %v1100 = vld [vmem:[%s260 + $0xb14] sm:$0xf]
        %v1101 = vld [vmem:[%s260 + $0xb18] sm:$0xf]
        %v1102 = vld [vmem:[%s260 + $0xb1c] sm:$0xf]
        %v1103 = vld [vmem:[%s260 + $0xb20] sm:$0xf]
        %v1104 = vld [vmem:[%s260 + $0xb24] sm:$0xf]
        %v1105 = vld [vmem:[%s260 + $0xb28] sm:$0xf]
        %v1106 = vld [vmem:[%s260 + $0xb2c] sm:$0xf]
        %v1107 = vld [vmem:[%s260 + $0xb30] sm:$0xf]
        %v1108 = vld [vmem:[%s260 + $0xb34] sm:$0xf]
        %v1109 = vld [vmem:[%s260 + $0xb38] sm:$0xf]
        %v1110 = vld [vmem:[%s260 + $0xb3c] sm:$0xf]
        %v1111 = vld [vmem:[%s260 + $0xb40] sm:$0xf]
        %v1112 = vld [vmem:[%s260 + $0xb44] sm:$0xf]
        %v1113 = vld [vmem:[%s260 + $0xb48] sm:$0xf]
        %v1114 = vld [vmem:[%s260 + $0xb4c] sm:$0xf]
        %v1115 = vld [vmem:[%s260 + $0xb50] sm:$0xf]
        %v1116 = vld [vmem:[%s260 + $0xb54] sm:$0xf]
        %v1117 = vld [vmem:[%s260 + $0xb58] sm:$0xf]
        %v1118 = vld [vmem:[%s260 + $0xb5c] sm:$0xf]
        %v1119 = vld [vmem:[%s260 + $0xb60] sm:$0xf]
        %v1120 = vld [vmem:[%s260 + $0xb64] sm:$0xf]
        %v1121 = vld [vmem:[%s260 + $0xb68] sm:$0xf]
        %v1122 = vld [vmem:[%s260 + $0xb6c] sm:$0xf]
        %v1123 = vld [vmem:[%s260 + $0xb70] sm:$0xf]
        %v1124 = vld [vmem:[%s260 + $0xb74] sm:$0xf]
        %v1125 = vld [vmem:[%s260 + $0xb78] sm:$0xf]
        %v1126 = vld [vmem:[%s260 + $0xb7c] sm:$0xf]
        %v1127 = vld [vmem:[%s260 + $0xb80] sm:$0xf]
        %v1128 = vld [vmem:[%s260 + $0xb84] sm:$0xf]
        %v1129 = vld [vmem:[%s260 + $0xb88] sm:$0xf]
        %v1130 = vld [vmem:[%s260 + $0xb8c] sm:$0xf]
        %v1131 = vld [vmem:[%s260 + $0xb90] sm:$0xf]
        %v1132 = vld [vmem:[%s260 + $0xb94] sm:$0xf]
        %v1133 = vld [vmem:[%s260 + $0xb98] sm:$0xf]
        %v1134 = vld [vmem:[%s260 + $0xb9c] sm:$0xf]
        %v1135 = vld [vmem:[%s260 + $0xba0] sm:$0xf]
        %v1136 = vld [vmem:[%s260 + $0xba4] sm:$0xf]
        %v1137 = vld [vmem:[%s260 + $0xba8] sm:$0xf]
        %v1138 = vld [vmem:[%s260 + $0xbac] sm:$0xf]
        %v1139 = vld [vmem:[%s260 + $0xbb0] sm:$0xf]
        %v1140 = vld [vmem:[%s260 + $0xbb4] sm:$0xf]
        %v1141 = vld [vmem:[%s260 + $0xbb8] sm:$0xf]
        %v1142 = vld [vmem:[%s260 + $0xbbc] sm:$0xf]
        %v1143 = vld [vmem:[%s260 + $0xbc0] sm:$0xf]
        %v1144 = vld [vmem:[%s260 + $0xbc4] sm:$0xf]
        %v1145 = vld [vmem:[%s260 + $0xbc8] sm:$0xf]
        %v1146 = vld [vmem:[%s260 + $0xbcc] sm:$0xf]
        %v1147 = vld [vmem:[%s260 + $0xbd0] sm:$0xf]
        %v1148 = vld [vmem:[%s260 + $0xbd4] sm:$0xf]
        %v1149 = vld [vmem:[%s260 + $0xbd8] sm:$0xf]
        %v1150 = vld [vmem:[%s260 + $0xbdc] sm:$0xf]
        %v1151 = vld [vmem:[%s260 + $0xbe0] sm:$0xf]
        %v1152 = vld [vmem:[%s260 + $0xbe4] sm:$0xf]
        %v1153 = vld [vmem:[%s260 + $0xbe8] sm:$0xf]
        %v1154 = vld [vmem:[%s260 + $0xbec] sm:$0xf]
        %v1155 = vld [vmem:[%s260 + $0xbf0] sm:$0xf]
        %v1156 = vld [vmem:[%s260 + $0xbf4] sm:$0xf]
        %v1157 = vld [vmem:[%s260 + $0xbf8] sm:$0xf]
        %v1158 = vld [vmem:[%s260 + $0xbfc] sm:$0xf]
        %v1159 = vld [vmem:[%s260 + $0xc00] sm:$0xf]
        %v1160 = vld [vmem:[%s260 + $0xc04] sm:$0xf]
        %v1161 = vld [vmem:[%s260 + $0xc08] sm:$0xf]
        %v1162 = vld [vmem:[%s260 + $0xc0c] sm:$0xf]
        %v1163 = vld [vmem:[%s260 + $0xc10] sm:$0xf]
        %v1164 = vld [vmem:[%s260 + $0xc14] sm:$0xf]
        %v1165 = vld [vmem:[%s260 + $0xc18] sm:$0xf]
        %v1166 = vld [vmem:[%s260 + $0xc1c] sm:$0xf]
        %v1167 = vld [vmem:[%s260 + $0xc20] sm:$0xf]
        %v1168 = vld [vmem:[%s260 + $0xc24] sm:$0xf]
        %v1169 = vld [vmem:[%s260 + $0xc28] sm:$0xf]
        %v1170 = vld [vmem:[%s260 + $0xc2c] sm:$0xf]
        %v1171 = vld [vmem:[%s260 + $0xc30] sm:$0xf]
        %v1172 = vld [vmem:[%s260 + $0xc34] sm:$0xf]
        %v1173 = vld [vmem:[%s260 + $0xc38] sm:$0xf]
        %v1174 = vld [vmem:[%s260 + $0xc3c] sm:$0xf]
        %v1175 = vld [vmem:[%s260 + $0xc40] sm:$0xf]
        %v1176 = vld [vmem:[%s260 + $0xc44] sm:$0xf]
        %v1177 = vld [vmem:[%s260 + $0xc48] sm:$0xf]
        %v1178 = vld [vmem:[%s260 + $0xc4c] sm:$0xf]
        %v1179 = vld [vmem:[%s260 + $0xc50] sm:$0xf]
        %v1180 = vld [vmem:[%s260 + $0xc54] sm:$0xf]
        %v1181 = vld [vmem:[%s260 + $0xc58] sm:$0xf]
        %v1182 = vld [vmem:[%s260 + $0xc5c] sm:$0xf]
        %v1183 = vld [vmem:[%s260 + $0xc60] sm:$0xf]
        %v1184 = vld [vmem:[%s260 + $0xc64] sm:$0xf]
        %v1185 = vld [vmem:[%s260 + $0xc68] sm:$0xf]
        %v1186 = vld [vmem:[%s260 + $0xc6c] sm:$0xf]
        %v1187 = vld [vmem:[%s260 + $0xc70] sm:$0xf]
        %v1188 = vld [vmem:[%s260 + $0xc74] sm:$0xf]
        %v1189 = vld [vmem:[%s260 + $0xc78] sm:$0xf]
        %v1190 = vld [vmem:[%s260 + $0xc7c] sm:$0xf]
        %v1191 = vld [vmem:[%s260 + $0xc80] sm:$0xf]
        %v1192 = vld [vmem:[%s260 + $0xc84] sm:$0xf]
        %v1193 = vld [vmem:[%s260 + $0xc88] sm:$0xf]
        %v1194 = vld [vmem:[%s260 + $0xc8c] sm:$0xf]
        %v1195 = vld [vmem:[%s260 + $0xc90] sm:$0xf]
        %v1196 = vld [vmem:[%s260 + $0xc94] sm:$0xf]
        %v1197 = vld [vmem:[%s260 + $0xc98] sm:$0xf]
        %v1198 = vld [vmem:[%s260 + $0xc9c] sm:$0xf]
        %v1199 = vld [vmem:[%s260 + $0xca0] sm:$0xf]
        %v1200 = vld [vmem:[%s260 + $0xca4] sm:$0xf]
        %v1201 = vld [vmem:[%s260 + $0xca8] sm:$0xf]
        %v1202 = vld [vmem:[%s260 + $0xcac] sm:$0xf]
        %v1203 = vld [vmem:[%s260 + $0xcb0] sm:$0xf]
        %v1204 = vld [vmem:[%s260 + $0xcb4] sm:$0xf]
        %v1205 = vld [vmem:[%s260 + $0xcb8] sm:$0xf]
        %v1206 = vld [vmem:[%s260 + $0xcbc] sm:$0xf]
        %v1207 = vld [vmem:[%s260 + $0xcc0] sm:$0xf]
        %v1208 = vld [vmem:[%s260 + $0xcc4] sm:$0xf]
        %v1209 = vld [vmem:[%s260 + $0xcc8] sm:$0xf]
        %v1210 = vld [vmem:[%s260 + $0xccc] sm:$0xf]
        %v1211 = vld [vmem:[%s260 + $0xcd0] sm:$0xf]
        %v1212 = vld [vmem:[%s260 + $0xcd4] sm:$0xf]
        %v1213 = vld [vmem:[%s260 + $0xcd8] sm:$0xf]
        %v1214 = vld [vmem:[%s260 + $0xcdc] sm:$0xf]
        %v1215 = vld [vmem:[%s260 + $0xce0] sm:$0xf]
        %v1216 = vld [vmem:[%s260 + $0xce4] sm:$0xf]
        %v1217 = vld [vmem:[%s260 + $0xce8] sm:$0xf]
        %v1218 = vld [vmem:[%s260 + $0xcec] sm:$0xf]
        %v1219 = vld [vmem:[%s260 + $0xcf0] sm:$0xf]
        %v1220 = vld [vmem:[%s260 + $0xcf4] sm:$0xf]
        %v1221 = vld [vmem:[%s260 + $0xcf8] sm:$0xf]
        %v1222 = vld [vmem:[%s260 + $0xcfc] sm:$0xf]
        %v1223 = vld [vmem:[%s260 + $0xd00] sm:$0xf]
        %v1224 = vld [vmem:[%s260 + $0xd04] sm:$0xf]
        %v1225 = vld [vmem:[%s260 + $0xd08] sm:$0xf]
        %v1226 = vld [vmem:[%s260 + $0xd0c] sm:$0xf]
        %v1227 = vld [vmem:[%s260 + $0xd10] sm:$0xf]
        %v1228 = vld [vmem:[%s260 + $0xd14] sm:$0xf]
        %v1229 = vld [vmem:[%s260 + $0xd18] sm:$0xf]
        %v1230 = vld [vmem:[%s260 + $0xd1c] sm:$0xf]
        %v1231 = vld [vmem:[%s260 + $0xd20] sm:$0xf]
        %v1232 = vld [vmem:[%s260 + $0xd24] sm:$0xf]
        %v1233 = vld [vmem:[%s260 + $0xd28] sm:$0xf]
        %v1234 = vld [vmem:[%s260 + $0xd2c] sm:$0xf]
        %v1235 = vld [vmem:[%s260 + $0xd30] sm:$0xf]
        %v1236 = vld [vmem:[%s260 + $0xd34] sm:$0xf]
        %v1237 = vld [vmem:[%s260 + $0xd38] sm:$0xf]
        %v1238 = vld [vmem:[%s260 + $0xd3c] sm:$0xf]
        %v1239 = vld [vmem:[%s260 + $0xd40] sm:$0xf]
        %v1240 = vld [vmem:[%s260 + $0xd44] sm:$0xf]
        %v1241 = vld [vmem:[%s260 + $0xd48] sm:$0xf]
        %v1242 = vld [vmem:[%s260 + $0xd4c] sm:$0xf]
        %v1243 = vld [vmem:[%s260 + $0xd50] sm:$0xf]
        %v1244 = vld [vmem:[%s260 + $0xd54] sm:$0xf]
        %v1245 = vld [vmem:[%s260 + $0xd58] sm:$0xf]
        %v1246 = vld [vmem:[%s260 + $0xd5c] sm:$0xf]
        %v1247 = vld [vmem:[%s260 + $0xd60] sm:$0xf]
        %v1248 = vld [vmem:[%s260 + $0xd64] sm:$0xf]
        %v1249 = vld [vmem:[%s260 + $0xd68] sm:$0xf]
        %v1250 = vld [vmem:[%s260 + $0xd6c] sm:$0xf]
        %v1251 = vld [vmem:[%s260 + $0xd70] sm:$0xf]
        %v1252 = vld [vmem:[%s260 + $0xd74] sm:$0xf]
        %v1253 = vld [vmem:[%s260 + $0xd78] sm:$0xf]
        %v1254 = vld [vmem:[%s260 + $0xd7c] sm:$0xf]
        %v1255 = vld [vmem:[%s260 + $0xd80] sm:$0xf]
        %v1256 = vld [vmem:[%s260 + $0xd84] sm:$0xf]
        %v1257 = vld [vmem:[%s260 + $0xd88] sm:$0xf]
        %v1258 = vld [vmem:[%s260 + $0xd8c] sm:$0xf]
        %v1259 = vld [vmem:[%s260 + $0xd90] sm:$0xf]
        %v1260 = vld [vmem:[%s260 + $0xd94] sm:$0xf]
        %v1261 = vld [vmem:[%s260 + $0xd98] sm:$0xf]
        %v1262 = vld [vmem:[%s260 + $0xd9c] sm:$0xf]
        %v1263 = vld [vmem:[%s260 + $0xda0] sm:$0xf]
        %v1264 = vld [vmem:[%s260 + $0xda4] sm:$0xf]
        %v1265 = vld [vmem:[%s260 + $0xda8] sm:$0xf]
        %v1266 = vld [vmem:[%s260 + $0xdac] sm:$0xf]
        %v1267 = vld [vmem:[%s260 + $0xdb0] sm:$0xf]
        %v1268 = vld [vmem:[%s260 + $0xdb4] sm:$0xf]
        %v1269 = vld [vmem:[%s260 + $0xdb8] sm:$0xf]
        %v1270 = vld [vmem:[%s260 + $0xdbc] sm:$0xf]
        %v1271 = vld [vmem:[%s260 + $0xdc0] sm:$0xf]
        %v1272 = vld [vmem:[%s260 + $0xdc4] sm:$0xf]
        %v1273 = vld [vmem:[%s260 + $0xdc8] sm:$0xf]
        %v1274 = vld [vmem:[%s260 + $0xdcc] sm:$0xf]
        %v1275 = vld [vmem:[%s260 + $0xdd0] sm:$0xf]
        %v1276 = vld [vmem:[%s260 + $0xdd4] sm:$0xf]
        %v1277 = vld [vmem:[%s260 + $0xdd8] sm:$0xf]
        %v1278 = vld [vmem:[%s260 + $0xddc] sm:$0xf]
        %v1279 = vld [vmem:[%s260 + $0xde0] sm:$0xf]
        %v1280 = vld [vmem:[%s260 + $0xde4] sm:$0xf]
        %v1281 = vld [vmem:[%s260 + $0xde8] sm:$0xf]
        %v1282 = vld [vmem:[%s260 + $0xdec] sm:$0xf]
        %v1283 = vld [vmem:[%s260 + $0xdf0] sm:$0xf]
        %v1284 = vld [vmem:[%s260 + $0xdf4] sm:$0xf]
        %v1285 = vld [vmem:[%s260 + $0xdf8] sm:$0xf]
        %v1286 = vld [vmem:[%s260 + $0xdfc] sm:$0xf]
        %v1287 = vld [vmem:[%s260 + $0xe00] sm:$0xf]
        %v1288 = vld [vmem:[%s260 + $0xe04] sm:$0xf]
        %v1289 = vld [vmem:[%s260 + $0xe08] sm:$0xf]
        %v1290 = vld [vmem:[%s260 + $0xe0c] sm:$0xf]
        %v1291 = vld [vmem:[%s260 + $0xe10] sm:$0xf]
        %v1292 = vld [vmem:[%s260 + $0xe14] sm:$0xf]
        %v1293 = vld [vmem:[%s260 + $0xe18] sm:$0xf]
        %v1294 = vld [vmem:[%s260 + $0xe1c] sm:$0xf]
        %v1295 = vld [vmem:[%s260 + $0xe20] sm:$0xf]
        %v1296 = vld [vmem:[%s260 + $0xe24] sm:$0xf]
        %v1297 = vld [vmem:[%s260 + $0xe28] sm:$0xf]
        %v1298 = vld [vmem:[%s260 + $0xe2c] sm:$0xf]
        %v1299 = vld [vmem:[%s260 + $0xe30] sm:$0xf]
        %v1300 = vld [vmem:[%s260 + $0xe34] sm:$0xf]
        %v1301 = vld [vmem:[%s260 + $0xe38] sm:$0xf]
        %v1302 = vld [vmem:[%s260 + $0xe3c] sm:$0xf]
        %v1303 = vld [vmem:[%s260 + $0xe40] sm:$0xf]
        %v1304 = vld [vmem:[%s260 + $0xe44] sm:$0xf]
        %v1305 = vld [vmem:[%s260 + $0xe48] sm:$0xf]
        %v1306 = vld [vmem:[%s260 + $0xe4c] sm:$0xf]
        %v1307 = vld [vmem:[%s260 + $0xe50] sm:$0xf]
        %v1308 = vld [vmem:[%s260 + $0xe54] sm:$0xf]
        %v1309 = vld [vmem:[%s260 + $0xe58] sm:$0xf]
        %v1310 = vld [vmem:[%s260 + $0xe5c] sm:$0xf]
        %v1311 = vld [vmem:[%s260 + $0xe60] sm:$0xf]
        %v1312 = vld [vmem:[%s260 + $0xe64] sm:$0xf]
        %v1313 = vld [vmem:[%s260 + $0xe68] sm:$0xf]
        %v1314 = vld [vmem:[%s260 + $0xe6c] sm:$0xf]
        %v1315 = vld [vmem:[%s260 + $0xe70] sm:$0xf]
        %v1316 = vld [vmem:[%s260 + $0xe74] sm:$0xf]
        %v1317 = vld [vmem:[%s260 + $0xe78] sm:$0xf]
        %v1318 = vld [vmem:[%s260 + $0xe7c] sm:$0xf]
        %v1319 = vld [vmem:[%s260 + $0xe80] sm:$0xf]
        %v1320 = vld [vmem:[%s260 + $0xe84] sm:$0xf]
        %v1321 = vld [vmem:[%s260 + $0xe88] sm:$0xf]
        %v1322 = vld [vmem:[%s260 + $0xe8c] sm:$0xf]
        %v1323 = vld [vmem:[%s260 + $0xe90] sm:$0xf]
        %v1324 = vld [vmem:[%s260 + $0xe94] sm:$0xf]
        %v1325 = vld [vmem:[%s260 + $0xe98] sm:$0xf]
        %v1326 = vld [vmem:[%s260 + $0xe9c] sm:$0xf]
        %v1327 = vld [vmem:[%s260 + $0xea0] sm:$0xf]
        %v1328 = vld [vmem:[%s260 + $0xea4] sm:$0xf]
        %v1329 = vld [vmem:[%s260 + $0xea8] sm:$0xf]
        %v1330 = vld [vmem:[%s260 + $0xeac] sm:$0xf]
        %v1331 = vld [vmem:[%s260 + $0xeb0] sm:$0xf]
        %v1332 = vld [vmem:[%s260 + $0xeb4] sm:$0xf]
        %v1333 = vld [vmem:[%s260 + $0xeb8] sm:$0xf]
        %v1334 = vld [vmem:[%s260 + $0xebc] sm:$0xf]
        %v1335 = vld [vmem:[%s260 + $0xec0] sm:$0xf]
        %v1336 = vld [vmem:[%s260 + $0xec4] sm:$0xf]
        %v1337 = vld [vmem:[%s260 + $0xec8] sm:$0xf]
        %v1338 = vld [vmem:[%s260 + $0xecc] sm:$0xf]
        %v1339 = vld [vmem:[%s260 + $0xed0] sm:$0xf]
        %v1340 = vld [vmem:[%s260 + $0xed4] sm:$0xf]
        %v1341 = vld [vmem:[%s260 + $0xed8] sm:$0xf]
        %v1342 = vld [vmem:[%s260 + $0xedc] sm:$0xf]
        %v1343 = vld [vmem:[%s260 + $0xee0] sm:$0xf]
        %v1344 = vld [vmem:[%s260 + $0xee4] sm:$0xf]
        %v1345 = vld [vmem:[%s260 + $0xee8] sm:$0xf]
        %v1346 = vld [vmem:[%s260 + $0xeec] sm:$0xf]
        %v1347 = vld [vmem:[%s260 + $0xef0] sm:$0xf]
        %v1348 = vld [vmem:[%s260 + $0xef4] sm:$0xf]
        %v1349 = vld [vmem:[%s260 + $0xef8] sm:$0xf]
        %v1350 = vld [vmem:[%s260 + $0xefc] sm:$0xf]
        %v1351 = vld [vmem:[%s260 + $0xf00] sm:$0xf]
        %v1352 = vld [vmem:[%s260 + $0xf04] sm:$0xf]
        %v1353 = vld [vmem:[%s260 + $0xf08] sm:$0xf]
        %v1354 = vld [vmem:[%s260 + $0xf0c] sm:$0xf]
        %v1355 = vld [vmem:[%s260 + $0xf10] sm:$0xf]
        %v1356 = vld [vmem:[%s260 + $0xf14] sm:$0xf]
        %v1357 = vld [vmem:[%s260 + $0xf18] sm:$0xf]
        %v1358 = vld [vmem:[%s260 + $0xf1c] sm:$0xf]
        %v1359 = vld [vmem:[%s260 + $0xf20] sm:$0xf]
        %v1360 = vld [vmem:[%s260 + $0xf24] sm:$0xf]
        %v1361 = vld [vmem:[%s260 + $0xf28] sm:$0xf]
        %v1362 = vld [vmem:[%s260 + $0xf2c] sm:$0xf]
        %v1363 = vld [vmem:[%s260 + $0xf30] sm:$0xf]
        %v1364 = vld [vmem:[%s260 + $0xf34] sm:$0xf]
        %v1365 = vld [vmem:[%s260 + $0xf38] sm:$0xf]
        %v1366 = vld [vmem:[%s260 + $0xf3c] sm:$0xf]
        %v1367 = vld [vmem:[%s260 + $0xf40] sm:$0xf]
        %v1368 = vld [vmem:[%s260 + $0xf44] sm:$0xf]
        %v1369 = vld [vmem:[%s260 + $0xf48] sm:$0xf]
        %v1370 = vld [vmem:[%s260 + $0xf4c] sm:$0xf]
        %v1371 = vld [vmem:[%s260 + $0xf50] sm:$0xf]
        %v1372 = vld [vmem:[%s260 + $0xf54] sm:$0xf]
        %v1373 = vld [vmem:[%s260 + $0xf58] sm:$0xf]
        %v1374 = vld [vmem:[%s260 + $0xf5c] sm:$0xf]
        %v1375 = vld [vmem:[%s260 + $0xf60] sm:$0xf]
        %v1376 = vld [vmem:[%s260 + $0xf64] sm:$0xf]
        %v1377 = vld [vmem:[%s260 + $0xf68] sm:$0xf]
        %v1378 = vld [vmem:[%s260 + $0xf6c] sm:$0xf]
        %v1379 = vld [vmem:[%s260 + $0xf70] sm:$0xf]
        %v1380 = vld [vmem:[%s260 + $0xf74] sm:$0xf]
        %v1381 = vld [vmem:[%s260 + $0xf78] sm:$0xf]
        %v1382 = vld [vmem:[%s260 + $0xf7c] sm:$0xf]
        %v1383 = vld [vmem:[%s260 + $0xf80] sm:$0xf]
        %v1384 = vld [vmem:[%s260 + $0xf84] sm:$0xf]
        %v1385 = vld [vmem:[%s260 + $0xf88] sm:$0xf]
        %v1386 = vld [vmem:[%s260 + $0xf8c] sm:$0xf]
        %v1387 = vld [vmem:[%s260 + $0xf90] sm:$0xf]
        %v1388 = vld [vmem:[%s260 + $0xf94] sm:$0xf]
        %v1389 = vld [vmem:[%s260 + $0xf98] sm:$0xf]
        %v1390 = vld [vmem:[%s260 + $0xf9c] sm:$0xf]
        %v1391 = vld [vmem:[%s260 + $0xfa0] sm:$0xf]
        %v1392 = vld [vmem:[%s260 + $0xfa4] sm:$0xf]
        %v1393 = vld [vmem:[%s260 + $0xfa8] sm:$0xf]
        %v1394 = vld [vmem:[%s260 + $0xfac] sm:$0xf]
        %v1395 = vld [vmem:[%s260 + $0xfb0] sm:$0xf]
        %v1396 = vld [vmem:[%s260 + $0xfb4] sm:$0xf]
        %v1397 = vld [vmem:[%s260 + $0xfb8] sm:$0xf]
        %v1398 = vld [vmem:[%s260 + $0xfbc] sm:$0xf]
        %v1399 = vld [vmem:[%s260 + $0xfc0] sm:$0xf]
        %v1400 = vld [vmem:[%s260 + $0xfc4] sm:$0xf]
        %v1401 = vld [vmem:[%s260 + $0xfc8] sm:$0xf]
        %v1402 = vld [vmem:[%s260 + $0xfcc] sm:$0xf]
        %v1403 = vld [vmem:[%s260 + $0xfd0] sm:$0xf]
        %v1404 = vld [vmem:[%s260 + $0xfd4] sm:$0xf]
        %v1405 = vld [vmem:[%s260 + $0xfd8] sm:$0xf]
        %v1406 = vld [vmem:[%s260 + $0xfdc] sm:$0xf]
        %v1407 = vld [vmem:[%s260 + $0xfe0] sm:$0xf]
        %v1408 = vld [vmem:[%s260 + $0xfe4] sm:$0xf]
        %v1409 = vld [vmem:[%s260 + $0xfe8] sm:$0xf]
        %v1410 = vld [vmem:[%s260 + $0xfec] sm:$0xf]
        %v1411 = vld [vmem:[%s260 + $0xff0] sm:$0xf]
        %v1412 = vld [vmem:[%s260 + $0xff4] sm:$0xf]
        %v1413 = vld [vmem:[%s260 + $0xff8] sm:$0xf]
        %v1414 = vld [vmem:[%s260 + $0xffc] sm:$0xf]
        %v1415 = vld [vmem:[%s260 + $0x1000] sm:$0xf]
        %v1416 = vld [vmem:[%s260 + $0x1004] sm:$0xf]
        %v1417 = vld [vmem:[%s260 + $0x1008] sm:$0xf]
        %v1418 = vld [vmem:[%s260 + $0x100c] sm:$0xf]
        %v1419 = vld [vmem:[%s260 + $0x1010] sm:$0xf]
        %v1420 = vld [vmem:[%s260 + $0x1014] sm:$0xf]
        %v1421 = vld [vmem:[%s260 + $0x1018] sm:$0xf]
        %v1422 = vld [vmem:[%s260 + $0x101c] sm:$0xf]
        %v1423 = vld [vmem:[%s260 + $0x1020] sm:$0xf]
        %v1424 = vld [vmem:[%s260 + $0x1024] sm:$0xf]
        %v1425 = vld [vmem:[%s260 + $0x1028] sm:$0xf]
        %v1426 = vld [vmem:[%s260 + $0x102c] sm:$0xf]
        %v1427 = vld [vmem:[%s260 + $0x1030] sm:$0xf]
        %v1428 = vld [vmem:[%s260 + $0x1034] sm:$0xf]
        %v1429 = vld [vmem:[%s260 + $0x1038] sm:$0xf]
        %v1430 = vld [vmem:[%s260 + $0x103c] sm:$0xf]
        %v1431 = vld [vmem:[%s260 + $0x1040] sm:$0xf]
        %v1432 = vld [vmem:[%s260 + $0x1044] sm:$0xf]
        %v1433 = vld [vmem:[%s260 + $0x1048] sm:$0xf]
        %v1434 = vld [vmem:[%s260 + $0x104c] sm:$0xf]
        %v1435 = vld [vmem:[%s260 + $0x1050] sm:$0xf]
        %v1436 = vld [vmem:[%s260 + $0x1054] sm:$0xf]
        %v1437 = vld [vmem:[%s260 + $0x1058] sm:$0xf]
        %v1438 = vld [vmem:[%s260 + $0x105c] sm:$0xf]
        %v1439 = vld [vmem:[%s260 + $0x1060] sm:$0xf]
        %v1440 = vld [vmem:[%s260 + $0x1064] sm:$0xf]
        %v1441 = vld [vmem:[%s260 + $0x1068] sm:$0xf]
        %v1442 = vld [vmem:[%s260 + $0x106c] sm:$0xf]
        %v1443 = vld [vmem:[%s260 + $0x1070] sm:$0xf]
        %v1444 = vld [vmem:[%s260 + $0x1074] sm:$0xf]
        %v1445 = vld [vmem:[%s260 + $0x1078] sm:$0xf]
        %v1446 = vld [vmem:[%s260 + $0x107c] sm:$0xf]
        %v1447 = vld [vmem:[%s260 + $0x1080] sm:$0xf]
        %v1448 = vld [vmem:[%s260 + $0x1084] sm:$0xf]
        %v1449 = vld [vmem:[%s260 + $0x1088] sm:$0xf]
        %v1450 = vld [vmem:[%s260 + $0x108c] sm:$0xf]
        %v1451 = vld [vmem:[%s260 + $0x1090] sm:$0xf]
        %v1452 = vld [vmem:[%s260 + $0x1094] sm:$0xf]
        %v1453 = vld [vmem:[%s260 + $0x1098] sm:$0xf]
        %v1454 = vld [vmem:[%s260 + $0x109c] sm:$0xf]
        %v1455 = vld [vmem:[%s260 + $0x10a0] sm:$0xf]
        %v1456 = vld [vmem:[%s260 + $0x10a4] sm:$0xf]
        %v1457 = vld [vmem:[%s260 + $0x10a8] sm:$0xf]
        %v1458 = vld [vmem:[%s260 + $0x10ac] sm:$0xf]
        %v1459 = vld [vmem:[%s260 + $0x10b0] sm:$0xf]
        %v1460 = vld [vmem:[%s260 + $0x10b4] sm:$0xf]
        %v1461 = vld [vmem:[%s260 + $0x10b8] sm:$0xf]
        %v1462 = vld [vmem:[%s260 + $0x10bc] sm:$0xf]
        %v1463 = vld [vmem:[%s260 + $0x10c0] sm:$0xf]
        %v1464 = vld [vmem:[%s260 + $0x10c4] sm:$0xf]
        %v1465 = vld [vmem:[%s260 + $0x10c8] sm:$0xf]
        %v1466 = vld [vmem:[%s260 + $0x10cc] sm:$0xf]
        %v1467 = vld [vmem:[%s260 + $0x10d0] sm:$0xf]
        %v1468 = vld [vmem:[%s260 + $0x10d4] sm:$0xf]
        %v1469 = vld [vmem:[%s260 + $0x10d8] sm:$0xf]
        %v1470 = vld [vmem:[%s260 + $0x10dc] sm:$0xf]
        %v1471 = vld [vmem:[%s260 + $0x10e0] sm:$0xf]
        %v1472 = vld [vmem:[%s260 + $0x10e4] sm:$0xf]
        %v1473 = vld [vmem:[%s260 + $0x10e8] sm:$0xf]
        %v1474 = vld [vmem:[%s260 + $0x10ec] sm:$0xf]
        %v1475 = vld [vmem:[%s260 + $0x10f0] sm:$0xf]
        %v1476 = vld [vmem:[%s260 + $0x10f4] sm:$0xf]
        %v1477 = vld [vmem:[%s260 + $0x10f8] sm:$0xf]
        %v1478 = vld [vmem:[%s260 + $0x10fc] sm:$0xf]
        %v1479 = vld [vmem:[%s260 + $0x1100] sm:$0xf]
        %v1480 = vld [vmem:[%s260 + $0x1104] sm:$0xf]
        %v1481 = vld [vmem:[%s260 + $0x1108] sm:$0xf]
        %v1482 = vld [vmem:[%s260 + $0x110c] sm:$0xf]
        %v1483 = vld [vmem:[%s260 + $0x1110] sm:$0xf]
        %v1484 = vld [vmem:[%s260 + $0x1114] sm:$0xf]
        %v1485 = vld [vmem:[%s260 + $0x1118] sm:$0xf]
        %v1486 = vld [vmem:[%s260 + $0x111c] sm:$0xf]
        %v1487 = vld [vmem:[%s260 + $0x1120] sm:$0xf]
        %v1488 = vld [vmem:[%s260 + $0x1124] sm:$0xf]
        %v1489 = vld [vmem:[%s260 + $0x1128] sm:$0xf]
        %v1490 = vld [vmem:[%s260 + $0x112c] sm:$0xf]
        %v1491 = vld [vmem:[%s260 + $0x1130] sm:$0xf]
        %v1492 = vld [vmem:[%s260 + $0x1134] sm:$0xf]
        %v1493 = vld [vmem:[%s260 + $0x1138] sm:$0xf]
        %v1494 = vld [vmem:[%s260 + $0x113c] sm:$0xf]
        %v1495 = vld [vmem:[%s260 + $0x1140] sm:$0xf]
        %v1496 = vld [vmem:[%s260 + $0x1144] sm:$0xf]
        %v1497 = vld [vmem:[%s260 + $0x1148] sm:$0xf]
        %v1498 = vld [vmem:[%s260 + $0x114c] sm:$0xf]
        %v1499 = vld [vmem:[%s260 + $0x1150] sm:$0xf]
        %v1500 = vld [vmem:[%s260 + $0x1154] sm:$0xf]
        %v1501 = vld [vmem:[%s260 + $0x1158] sm:$0xf]
        %v1502 = vld [vmem:[%s260 + $0x115c] sm:$0xf]
        %v1503 = vld [vmem:[%s260 + $0x1160] sm:$0xf]
        %v1504 = vld [vmem:[%s260 + $0x1164] sm:$0xf]
        %v1505 = vld [vmem:[%s260 + $0x1168] sm:$0xf]
        %v1506 = vld [vmem:[%s260 + $0x116c] sm:$0xf]
        %v1507 = vld [vmem:[%s260 + $0x1170] sm:$0xf]
        %v1508 = vld [vmem:[%s260 + $0x1174] sm:$0xf]
        %v1509 = vld [vmem:[%s260 + $0x1178] sm:$0xf]
        %v1510 = vld [vmem:[%s260 + $0x117c] sm:$0xf]
        %v1511 = vld [vmem:[%s260 + $0x1180] sm:$0xf]
        %v1512 = vld [vmem:[%s260 + $0x1184] sm:$0xf]
        %v1513 = vld [vmem:[%s260 + $0x1188] sm:$0xf]
        %v1514 = vld [vmem:[%s260 + $0x118c] sm:$0xf]
        %v1515 = vld [vmem:[%s260 + $0x1190] sm:$0xf]
        %v1516 = vld [vmem:[%s260 + $0x1194] sm:$0xf]
        %v1517 = vld [vmem:[%s260 + $0x1198] sm:$0xf]
        %v1518 = vld [vmem:[%s260 + $0x119c] sm:$0xf]
        %v1519 = vld [vmem:[%s260 + $0x11a0] sm:$0xf]
        %v1520 = vld [vmem:[%s260 + $0x11a4] sm:$0xf]
        %v1521 = vld [vmem:[%s260 + $0x11a8] sm:$0xf]
        %v1522 = vld [vmem:[%s260 + $0x11ac] sm:$0xf]
        %v1523 = vld [vmem:[%s260 + $0x11b0] sm:$0xf]
        %v1524 = vld [vmem:[%s260 + $0x11b4] sm:$0xf]
        %v1525 = vld [vmem:[%s260 + $0x11b8] sm:$0xf]
        %v1526 = vld [vmem:[%s260 + $0x11bc] sm:$0xf]
        %v1527 = vld [vmem:[%s260 + $0x11c0] sm:$0xf]
        %v1528 = vld [vmem:[%s260 + $0x11c4] sm:$0xf]
        %v1529 = vld [vmem:[%s260 + $0x11c8] sm:$0xf]
        %v1530 = vld [vmem:[%s260 + $0x11cc] sm:$0xf]
        %v1531 = vld [vmem:[%s260 + $0x11d0] sm:$0xf]
        %v1532 = vld [vmem:[%s260 + $0x11d4] sm:$0xf]
        %v1533 = vld [vmem:[%s260 + $0x11d8] sm:$0xf]
        %v1534 = vld [vmem:[%s260 + $0x11dc] sm:$0xf]
        %v1535 = vld [vmem:[%s260 + $0x11e0] sm:$0xf]
        %v1536 = vld [vmem:[%s260 + $0x11e4] sm:$0xf]
        %v1537 = vld [vmem:[%s260 + $0x11e8] sm:$0xf]
        %v1538 = vld [vmem:[%s260 + $0x11ec] sm:$0xf]
        %v1539 = vld [vmem:[%s260 + $0x11f0] sm:$0xf]
        %v1540 = vld [vmem:[%s260 + $0x11f4] sm:$0xf]
        %v1541 = vld [vmem:[%s260 + $0x11f8] sm:$0xf]
        %v1542 = vld [vmem:[%s260 + $0x11fc] sm:$0xf]
        %v1543 = vld [vmem:[%s260 + $0x1200] sm:$0xf]
        %v1544 = vld [vmem:[%s260 + $0x1204] sm:$0xf]
        %v1545 = vld [vmem:[%s260 + $0x1208] sm:$0xf]
        %v1546 = vld [vmem:[%s260 + $0x120c] sm:$0xf]
        %v1547 = vld [vmem:[%s260 + $0x1210] sm:$0xf]
        %v1548 = vld [vmem:[%s260 + $0x1214] sm:$0xf]
        %v1549 = vld [vmem:[%s260 + $0x1218] sm:$0xf]
        %v1550 = vld [vmem:[%s260 + $0x121c] sm:$0xf]
        %v1551 = vld [vmem:[%s260 + $0x1220] sm:$0xf]
        %v1552 = vld [vmem:[%s260 + $0x1224] sm:$0xf]
        %v1553 = vld [vmem:[%s260 + $0x1228] sm:$0xf]
        %v1554 = vld [vmem:[%s260 + $0x122c] sm:$0xf]
        %v1555 = vld [vmem:[%s260 + $0x1230] sm:$0xf]
        %v1556 = vld [vmem:[%s260 + $0x1234] sm:$0xf]
        %v1557 = vld [vmem:[%s260 + $0x1238] sm:$0xf]
        %v1558 = vld [vmem:[%s260 + $0x123c] sm:$0xf]
        %v1559 = vld [vmem:[%s260 + $0x1240] sm:$0xf]
        %v1560 = vld [vmem:[%s260 + $0x1244] sm:$0xf]
        %v1561 = vld [vmem:[%s260 + $0x1248] sm:$0xf]
        %v1562 = vld [vmem:[%s260 + $0x124c] sm:$0xf]
        %v1563 = vld [vmem:[%s260 + $0x1250] sm:$0xf]
        %v1564 = vld [vmem:[%s260 + $0x1254] sm:$0xf]
        %v1565 = vld [vmem:[%s260 + $0x1258] sm:$0xf]
        %v1566 = vld [vmem:[%s260 + $0x125c] sm:$0xf]
        %v1567 = vld [vmem:[%s260 + $0x1260] sm:$0xf]
        %v1568 = vld [vmem:[%s260 + $0x1264] sm:$0xf]
        %v1569 = vld [vmem:[%s260 + $0x1268] sm:$0xf]
        %v1570 = vld [vmem:[%s260 + $0x126c] sm:$0xf]
        %v1571 = vld [vmem:[%s260 + $0x1270] sm:$0xf]
        %v1572 = vld [vmem:[%s260 + $0x1274] sm:$0xf]
        %v1573 = vld [vmem:[%s260 + $0x1278] sm:$0xf]
        %v1574 = vld [vmem:[%s260 + $0x127c] sm:$0xf]
        %v1575 = vld [vmem:[%s260 + $0x1280] sm:$0xf]
        %v1576 = vld [vmem:[%s260 + $0x1284] sm:$0xf]
        %v1577 = vld [vmem:[%s260 + $0x1288] sm:$0xf]
        %v1578 = vld [vmem:[%s260 + $0x128c] sm:$0xf]
        %v1579 = vld [vmem:[%s260 + $0x1290] sm:$0xf]
        %v1580 = vld [vmem:[%s260 + $0x1294] sm:$0xf]
        %v1581 = vld [vmem:[%s260 + $0x1298] sm:$0xf]
        %v1582 = vld [vmem:[%s260 + $0x129c] sm:$0xf]
        %v1583 = vld [vmem:[%s260 + $0x12a0] sm:$0xf]
        %v1584 = vld [vmem:[%s260 + $0x12a4] sm:$0xf]
        %v1585 = vld [vmem:[%s260 + $0x12a8] sm:$0xf]
        %v1586 = vld [vmem:[%s260 + $0x12ac] sm:$0xf]
        %v1587 = vld [vmem:[%s260 + $0x12b0] sm:$0xf]
        %v1588 = vld [vmem:[%s260 + $0x12b4] sm:$0xf]
        %v1589 = vld [vmem:[%s260 + $0x12b8] sm:$0xf]
        %v1590 = vld [vmem:[%s260 + $0x12bc] sm:$0xf]
        %v1591 = vld [vmem:[%s260 + $0x12c0] sm:$0xf]
        %v1592 = vld [vmem:[%s260 + $0x12c4] sm:$0xf]
        %v1593 = vld [vmem:[%s260 + $0x12c8] sm:$0xf]
        %v1594 = vld [vmem:[%s260 + $0x12cc] sm:$0xf]
        %v1595 = vld [vmem:[%s260 + $0x12d0] sm:$0xf]
        %v1596 = vld [vmem:[%s260 + $0x12d4] sm:$0xf]
        %v1597 = vld [vmem:[%s260 + $0x12d8] sm:$0xf]
        %v1598 = vld [vmem:[%s260 + $0x12dc] sm:$0xf]
        %v1599 = vld [vmem:[%s260 + $0x12e0] sm:$0xf]
        %v1600 = vld [vmem:[%s260 + $0x12e4] sm:$0xf]
        %v1601 = vld [vmem:[%s260 + $0x12e8] sm:$0xf]
        %v1602 = vld [vmem:[%s260 + $0x12ec] sm:$0xf]
        %v1603 = vld [vmem:[%s260 + $0x12f0] sm:$0xf]
        %v1604 = vld [vmem:[%s260 + $0x12f4] sm:$0xf]
        %v1605 = vld [vmem:[%s260 + $0x12f8] sm:$0xf]
        %v1606 = vld [vmem:[%s260 + $0x12fc] sm:$0xf]
        %v1607 = vld [vmem:[%s260 + $0x1300] sm:$0xf]
        %v1608 = vld [vmem:[%s260 + $0x1304] sm:$0xf]
        %v1609 = vld [vmem:[%s260 + $0x1308] sm:$0xf]
        %v1610 = vld [vmem:[%s260 + $0x130c] sm:$0xf]
        %v1611 = vld [vmem:[%s260 + $0x1310] sm:$0xf]
        %v1612 = vld [vmem:[%s260 + $0x1314] sm:$0xf]
        %v1613 = vld [vmem:[%s260 + $0x1318] sm:$0xf]
        %v1614 = vld [vmem:[%s260 + $0x131c] sm:$0xf]
        %v1615 = vld [vmem:[%s260 + $0x1320] sm:$0xf]
        %v1616 = vld [vmem:[%s260 + $0x1324] sm:$0xf]
        %v1617 = vld [vmem:[%s260 + $0x1328] sm:$0xf]
        %v1618 = vld [vmem:[%s260 + $0x132c] sm:$0xf]
        %v1619 = vld [vmem:[%s260 + $0x1330] sm:$0xf]
        %v1620 = vld [vmem:[%s260 + $0x1334] sm:$0xf]
        %v1621 = vld [vmem:[%s260 + $0x1338] sm:$0xf]
        %v1622 = vld [vmem:[%s260 + $0x133c] sm:$0xf]
        %v1623 = vld [vmem:[%s260 + $0x1340] sm:$0xf]
        %v1624 = vld [vmem:[%s260 + $0x1344] sm:$0xf]
        %v1625 = vld [vmem:[%s260 + $0x1348] sm:$0xf]
        %v1626 = vld [vmem:[%s260 + $0x134c] sm:$0xf]
        %v1627 = vld [vmem:[%s260 + $0x1350] sm:$0xf]
        %v1628 = vld [vmem:[%s260 + $0x1354] sm:$0xf]
        %v1629 = vld [vmem:[%s260 + $0x1358] sm:$0xf]
        %v1630 = vld [vmem:[%s260 + $0x135c] sm:$0xf]
        %v1631 = vld [vmem:[%s260 + $0x1360] sm:$0xf]
        %v1632 = vld [vmem:[%s260 + $0x1364] sm:$0xf]
        %v1633 = vld [vmem:[%s260 + $0x1368] sm:$0xf]
        %v1634 = vld [vmem:[%s260 + $0x136c] sm:$0xf]
        %v1635 = vld [vmem:[%s260 + $0x1370] sm:$0xf]
        %v1636 = vld [vmem:[%s260 + $0x1374] sm:$0xf]
        %v1637 = vld [vmem:[%s260 + $0x1378] sm:$0xf]
        %v1638 = vld [vmem:[%s260 + $0x137c] sm:$0xf]
        %v1639 = vld [vmem:[%s260 + $0x1380] sm:$0xf]
        %v1640 = vld [vmem:[%s260 + $0x1384] sm:$0xf]
        %v1641 = vld [vmem:[%s260 + $0x1388] sm:$0xf]
        %v1642 = vld [vmem:[%s260 + $0x138c] sm:$0xf]
        %v1643 = vld [vmem:[%s260 + $0x1390] sm:$0xf]
        %v1644 = vld [vmem:[%s260 + $0x1394] sm:$0xf]
        %v1645 = vld [vmem:[%s260 + $0x1398] sm:$0xf]
        %v1646 = vld [vmem:[%s260 + $0x139c] sm:$0xf]
        %v1647 = vld [vmem:[%s260 + $0x13a0] sm:$0xf]
        %v1648 = vld [vmem:[%s260 + $0x13a4] sm:$0xf]
        %v1649 = vld [vmem:[%s260 + $0x13a8] sm:$0xf]
        %v1650 = vld [vmem:[%s260 + $0x13ac] sm:$0xf]
        %v1651 = vld [vmem:[%s260 + $0x13b0] sm:$0xf]
        %v1652 = vld [vmem:[%s260 + $0x13b4] sm:$0xf]
        %v1653 = vld [vmem:[%s260 + $0x13b8] sm:$0xf]
        %v1654 = vld [vmem:[%s260 + $0x13bc] sm:$0xf]
        %v1655 = vld [vmem:[%s260 + $0x13c0] sm:$0xf]
        %v1656 = vld [vmem:[%s260 + $0x13c4] sm:$0xf]
        %v1657 = vld [vmem:[%s260 + $0x13c8] sm:$0xf]
        %v1658 = vld [vmem:[%s260 + $0x13cc] sm:$0xf]
        %v1659 = vld [vmem:[%s260 + $0x13d0] sm:$0xf]
        %v1660 = vld [vmem:[%s260 + $0x13d4] sm:$0xf]
        %v1661 = vld [vmem:[%s260 + $0x13d8] sm:$0xf]
        %v1662 = vld [vmem:[%s260 + $0x13dc] sm:$0xf]
        %v1663 = vld [vmem:[%s260 + $0x13e0] sm:$0xf]
        %v1664 = vld [vmem:[%s260 + $0x13e4] sm:$0xf]
        %v1665 = vld [vmem:[%s260 + $0x13e8] sm:$0xf]
        %v1666 = vld [vmem:[%s260 + $0x13ec] sm:$0xf]
        %v1667 = vld [vmem:[%s260 + $0x13f0] sm:$0xf]
        %v1668 = vld [vmem:[%s260 + $0x13f4] sm:$0xf]
        %v1669 = vld [vmem:[%s260 + $0x13f8] sm:$0xf]
        %v1670 = vld [vmem:[%s260 + $0x13fc] sm:$0xf]
        %v1671 = vld [vmem:[%s260 + $0x1400] sm:$0xf]
        %v1672 = vld [vmem:[%s260 + $0x1404] sm:$0xf]
        %v1673 = vld [vmem:[%s260 + $0x1408] sm:$0xf]
        %v1674 = vld [vmem:[%s260 + $0x140c] sm:$0xf]
        %v1675 = vld [vmem:[%s260 + $0x1410] sm:$0xf]
        %v1676 = vld [vmem:[%s260 + $0x1414] sm:$0xf]
        %v1677 = vld [vmem:[%s260 + $0x1418] sm:$0xf]
        %v1678 = vld [vmem:[%s260 + $0x141c] sm:$0xf]
        %v1679 = vld [vmem:[%s260 + $0x1420] sm:$0xf]
        %v1680 = vld [vmem:[%s260 + $0x1424] sm:$0xf]
        %v1681 = vld [vmem:[%s260 + $0x1428] sm:$0xf]
        %v1682 = vld [vmem:[%s260 + $0x142c] sm:$0xf]
        %v1683 = vld [vmem:[%s260 + $0x1430] sm:$0xf]
        %v1684 = vld [vmem:[%s260 + $0x1434] sm:$0xf]
        %v1685 = vld [vmem:[%s260 + $0x1438] sm:$0xf]
        %v1686 = vld [vmem:[%s260 + $0x143c] sm:$0xf]
        %v1687 = vld [vmem:[%s260 + $0x1440] sm:$0xf]
        %v1688 = vld [vmem:[%s260 + $0x1444] sm:$0xf]
        %v1689 = vld [vmem:[%s260 + $0x1448] sm:$0xf]
        %v1690 = vld [vmem:[%s260 + $0x144c] sm:$0xf]
        %v1691 = vld [vmem:[%s260 + $0x1450] sm:$0xf]
        %v1692 = vld [vmem:[%s260 + $0x1454] sm:$0xf]
        %v1693 = vld [vmem:[%s260 + $0x1458] sm:$0xf]
        %v1694 = vld [vmem:[%s260 + $0x145c] sm:$0xf]
        %v1695 = vld [vmem:[%s260 + $0x1460] sm:$0xf]
        %v1696 = vld [vmem:[%s260 + $0x1464] sm:$0xf]
        %v1697 = vld [vmem:[%s260 + $0x1468] sm:$0xf]
        %v1698 = vld [vmem:[%s260 + $0x146c] sm:$0xf]
        %v1699 = vld [vmem:[%s260 + $0x1470] sm:$0xf]
        %v1700 = vld [vmem:[%s260 + $0x1474] sm:$0xf]
        %v1701 = vld [vmem:[%s260 + $0x1478] sm:$0xf]
        %v1702 = vld [vmem:[%s260 + $0x147c] sm:$0xf]
        %v1703 = vld [vmem:[%s260 + $0x1480] sm:$0xf]
        %v1704 = vld [vmem:[%s260 + $0x1484] sm:$0xf]
        %v1705 = vld [vmem:[%s260 + $0x1488] sm:$0xf]
        %v1706 = vld [vmem:[%s260 + $0x148c] sm:$0xf]
        %v1707 = vld [vmem:[%s260 + $0x1490] sm:$0xf]
        %v1708 = vld [vmem:[%s260 + $0x1494] sm:$0xf]
        %v1709 = vld [vmem:[%s260 + $0x1498] sm:$0xf]
        %v1710 = vld [vmem:[%s260 + $0x149c] sm:$0xf]
        %v1711 = vld [vmem:[%s260 + $0x14a0] sm:$0xf]
        %v1712 = vld [vmem:[%s260 + $0x14a4] sm:$0xf]
        %v1713 = vld [vmem:[%s260 + $0x14a8] sm:$0xf]
        %v1714 = vld [vmem:[%s260 + $0x14ac] sm:$0xf]
        %v1715 = vld [vmem:[%s260 + $0x14b0] sm:$0xf]
        %v1716 = vld [vmem:[%s260 + $0x14b4] sm:$0xf]
        %v1717 = vld [vmem:[%s260 + $0x14b8] sm:$0xf]
        %v1718 = vld [vmem:[%s260 + $0x14bc] sm:$0xf]
        %v1719 = vld [vmem:[%s260 + $0x14c0] sm:$0xf]
        %v1720 = vld [vmem:[%s260 + $0x14c4] sm:$0xf]
        %v1721 = vld [vmem:[%s260 + $0x14c8] sm:$0xf]
        %v1722 = vld [vmem:[%s260 + $0x14cc] sm:$0xf]
        %v1723 = vld [vmem:[%s260 + $0x14d0] sm:$0xf]
        %v1724 = vld [vmem:[%s260 + $0x14d4] sm:$0xf]
        %v1725 = vld [vmem:[%s260 + $0x14d8] sm:$0xf]
        %v1726 = vld [vmem:[%s260 + $0x14dc] sm:$0xf]
        %v1727 = vld [vmem:[%s260 + $0x14e0] sm:$0xf]
        %v1728 = vld [vmem:[%s260 + $0x14e4] sm:$0xf]
        %v1729 = vld [vmem:[%s260 + $0x14e8] sm:$0xf]
        %v1730 = vld [vmem:[%s260 + $0x14ec] sm:$0xf]
        %v1731 = vld [vmem:[%s260 + $0x14f0] sm:$0xf]
        %v1732 = vld [vmem:[%s260 + $0x14f4] sm:$0xf]
        %v1733 = vld [vmem:[%s260 + $0x14f8] sm:$0xf]
        %v1734 = vld [vmem:[%s260 + $0x14fc] sm:$0xf]
        %v1735 = vld [vmem:[%s260 + $0x1500] sm:$0xf]
        %v1736 = vld [vmem:[%s260 + $0x1504] sm:$0xf]
        %v1737 = vld [vmem:[%s260 + $0x1508] sm:$0xf]
        %v1738 = vld [vmem:[%s260 + $0x150c] sm:$0xf]
        %v1739 = vld [vmem:[%s260 + $0x1510] sm:$0xf]
        %v1740 = vld [vmem:[%s260 + $0x1514] sm:$0xf]
        %v1741 = vld [vmem:[%s260 + $0x1518] sm:$0xf]
        %v1742 = vld [vmem:[%s260 + $0x151c] sm:$0xf]
        %v1743 = vld [vmem:[%s260 + $0x1520] sm:$0xf]
        %v1744 = vld [vmem:[%s260 + $0x1524] sm:$0xf]
        %v1745 = vld [vmem:[%s260 + $0x1528] sm:$0xf]
        %v1746 = vld [vmem:[%s260 + $0x152c] sm:$0xf]
        %v1747 = vld [vmem:[%s260 + $0x1530] sm:$0xf]
        %v1748 = vld [vmem:[%s260 + $0x1534] sm:$0xf]
        %v1749 = vld [vmem:[%s260 + $0x1538] sm:$0xf]
        %v1750 = vld [vmem:[%s260 + $0x153c] sm:$0xf]
        %v1751 = vld [vmem:[%s260 + $0x1540] sm:$0xf]
        %v1752 = vld [vmem:[%s260 + $0x1544] sm:$0xf]
        %v1753 = vld [vmem:[%s260 + $0x1548] sm:$0xf]
        %v1754 = vld [vmem:[%s260 + $0x154c] sm:$0xf]
        %v1755 = vld [vmem:[%s260 + $0x1550] sm:$0xf]
        %v1756 = vld [vmem:[%s260 + $0x1554] sm:$0xf]
        %v1757 = vld [vmem:[%s260 + $0x1558] sm:$0xf]
        %v1758 = vld [vmem:[%s260 + $0x155c] sm:$0xf]
        %v1759 = vld [vmem:[%s260 + $0x1560] sm:$0xf]
        %v1760 = vld [vmem:[%s260 + $0x1564] sm:$0xf]
        %v1761 = vld [vmem:[%s260 + $0x1568] sm:$0xf]
        %v1762 = vld [vmem:[%s260 + $0x156c] sm:$0xf]
        %v1763 = vld [vmem:[%s260 + $0x1570] sm:$0xf]
        %v1764 = vld [vmem:[%s260 + $0x1574] sm:$0xf]
        %v1765 = vld [vmem:[%s260 + $0x1578] sm:$0xf]
        %v1766 = vld [vmem:[%s260 + $0x157c] sm:$0xf]
        %v1767 = vld [vmem:[%s260 + $0x1580] sm:$0xf]
        %v1768 = vld [vmem:[%s260 + $0x1584] sm:$0xf]
        %v1769 = vld [vmem:[%s260 + $0x1588] sm:$0xf]
        %v1770 = vld [vmem:[%s260 + $0x158c] sm:$0xf]
        %v1771 = vld [vmem:[%s260 + $0x1590] sm:$0xf]
        %v1772 = vld [vmem:[%s260 + $0x1594] sm:$0xf]
        %v1773 = vld [vmem:[%s260 + $0x1598] sm:$0xf]
        %v1774 = vld [vmem:[%s260 + $0x159c] sm:$0xf]
        %v1775 = vld [vmem:[%s260 + $0x15a0] sm:$0xf]
        %v1776 = vld [vmem:[%s260 + $0x15a4] sm:$0xf]
        %v1777 = vld [vmem:[%s260 + $0x15a8] sm:$0xf]
        %v1778 = vld [vmem:[%s260 + $0x15ac] sm:$0xf]
        %v1779 = vld [vmem:[%s260 + $0x15b0] sm:$0xf]
        %v1780 = vld [vmem:[%s260 + $0x15b4] sm:$0xf]
        %v1781 = vld [vmem:[%s260 + $0x15b8] sm:$0xf]
        %v1782 = vld [vmem:[%s260 + $0x15bc] sm:$0xf]
        %v1783 = vld [vmem:[%s260 + $0x15c0] sm:$0xf]
        %v1784 = vld [vmem:[%s260 + $0x15c4] sm:$0xf]
        %v1785 = vld [vmem:[%s260 + $0x15c8] sm:$0xf]
        %v1786 = vld [vmem:[%s260 + $0x15cc] sm:$0xf]
        %v1787 = vld [vmem:[%s260 + $0x15d0] sm:$0xf]
        %v1788 = vld [vmem:[%s260 + $0x15d4] sm:$0xf]
        %v1789 = vld [vmem:[%s260 + $0x15d8] sm:$0xf]
        %v1790 = vld [vmem:[%s260 + $0x15dc] sm:$0xf]
        %v1791 = vld [vmem:[%s260 + $0x15e0] sm:$0xf]
        %v1792 = vld [vmem:[%s260 + $0x15e4] sm:$0xf]
        %v1793 = vld [vmem:[%s260 + $0x15e8] sm:$0xf]
        %v1794 = vld [vmem:[%s260 + $0x15ec] sm:$0xf]
        %v1795 = vld [vmem:[%s260 + $0x15f0] sm:$0xf]
        %v1796 = vld [vmem:[%s260 + $0x15f4] sm:$0xf]
        %v1797 = vld [vmem:[%s260 + $0x15f8] sm:$0xf]
        %v1798 = vld [vmem:[%s260 + $0x15fc] sm:$0xf]
        %v1799 = vld [vmem:[%s260 + $0x1600] sm:$0xf]
        %v1800 = vld [vmem:[%s260 + $0x1604] sm:$0xf]
        %v1801 = vld [vmem:[%s260 + $0x1608] sm:$0xf]
        %v1802 = vld [vmem:[%s260 + $0x160c] sm:$0xf]
        %v1803 = vld [vmem:[%s260 + $0x1610] sm:$0xf]
        %v1804 = vld [vmem:[%s260 + $0x1614] sm:$0xf]
        %v1805 = vld [vmem:[%s260 + $0x1618] sm:$0xf]
        %v1806 = vld [vmem:[%s260 + $0x161c] sm:$0xf]
        %v1807 = vld [vmem:[%s260 + $0x1620] sm:$0xf]
        %v1808 = vld [vmem:[%s260 + $0x1624] sm:$0xf]
        %v1809 = vld [vmem:[%s260 + $0x1628] sm:$0xf]
        %v1810 = vld [vmem:[%s260 + $0x162c] sm:$0xf]
        %v1811 = vld [vmem:[%s260 + $0x1630] sm:$0xf]
        %v1812 = vld [vmem:[%s260 + $0x1634] sm:$0xf]
        %v1813 = vld [vmem:[%s260 + $0x1638] sm:$0xf]
        %v1814 = vld [vmem:[%s260 + $0x163c] sm:$0xf]
        %v1815 = vld [vmem:[%s260 + $0x1640] sm:$0xf]
        %v1816 = vld [vmem:[%s260 + $0x1644] sm:$0xf]
        %v1817 = vld [vmem:[%s260 + $0x1648] sm:$0xf]
        %v1818 = vld [vmem:[%s260 + $0x164c] sm:$0xf]
        %v1819 = vld [vmem:[%s260 + $0x1650] sm:$0xf]
        %v1820 = vld [vmem:[%s260 + $0x1654] sm:$0xf]
        %v1821 = vld [vmem:[%s260 + $0x1658] sm:$0xf]
        %v1822 = vld [vmem:[%s260 + $0x165c] sm:$0xf]
        %v1823 = vld [vmem:[%s260 + $0x1660] sm:$0xf]
        %v1824 = vld [vmem:[%s260 + $0x1664] sm:$0xf]
        %v1825 = vld [vmem:[%s260 + $0x1668] sm:$0xf]
        %v1826 = vld [vmem:[%s260 + $0x166c] sm:$0xf]
        %v1827 = vld [vmem:[%s260 + $0x1670] sm:$0xf]
        %v1828 = vld [vmem:[%s260 + $0x1674] sm:$0xf]
        %v1829 = vld [vmem:[%s260 + $0x1678] sm:$0xf]
        %v1830 = vld [vmem:[%s260 + $0x167c] sm:$0xf]
        %v1831 = vld [vmem:[%s260 + $0x1680] sm:$0xf]
        %v1832 = vld [vmem:[%s260 + $0x1684] sm:$0xf]
        %v1833 = vld [vmem:[%s260 + $0x1688] sm:$0xf]
        %v1834 = vld [vmem:[%s260 + $0x168c] sm:$0xf]
        %v1835 = vld [vmem:[%s260 + $0x1690] sm:$0xf]
        %v1836 = vld [vmem:[%s260 + $0x1694] sm:$0xf]
        %v1837 = vld [vmem:[%s260 + $0x1698] sm:$0xf]
        %v1838 = vld [vmem:[%s260 + $0x169c] sm:$0xf]
        %v1839 = vld [vmem:[%s260 + $0x16a0] sm:$0xf]
        %v1840 = vld [vmem:[%s260 + $0x16a4] sm:$0xf]
        %v1841 = vld [vmem:[%s260 + $0x16a8] sm:$0xf]
        %v1842 = vld [vmem:[%s260 + $0x16ac] sm:$0xf]
        %v1843 = vld [vmem:[%s260 + $0x16b0] sm:$0xf]
        %v1844 = vld [vmem:[%s260 + $0x16b4] sm:$0xf]
        %v1845 = vld [vmem:[%s260 + $0x16b8] sm:$0xf]
        %v1846 = vld [vmem:[%s260 + $0x16bc] sm:$0xf]
        %v1847 = vld [vmem:[%s260 + $0x16c0] sm:$0xf]
        %v1848 = vld [vmem:[%s260 + $0x16c4] sm:$0xf]
        %v1849 = vld [vmem:[%s260 + $0x16c8] sm:$0xf]
        %v1850 = vld [vmem:[%s260 + $0x16cc] sm:$0xf]
        %v1851 = vld [vmem:[%s260 + $0x16d0] sm:$0xf]
        %v1852 = vld [vmem:[%s260 + $0x16d4] sm:$0xf]
        %v1853 = vld [vmem:[%s260 + $0x16d8] sm:$0xf]
        %v1854 = vld [vmem:[%s260 + $0x16dc] sm:$0xf]
        %v1855 = vld [vmem:[%s260 + $0x16e0] sm:$0xf]
        %v1856 = vld [vmem:[%s260 + $0x16e4] sm:$0xf]
        %v1857 = vld [vmem:[%s260 + $0x16e8] sm:$0xf]
        %v1858 = vld [vmem:[%s260 + $0x16ec] sm:$0xf]
        %v1859 = vld [vmem:[%s260 + $0x16f0] sm:$0xf]
        %v1860 = vld [vmem:[%s260 + $0x16f4] sm:$0xf]
        %v1861 = vld [vmem:[%s260 + $0x16f8] sm:$0xf]
        %v1862 = vld [vmem:[%s260 + $0x16fc] sm:$0xf]
        %v1863 = vld [vmem:[%s260 + $0x1700] sm:$0xf]
        %v1864 = vld [vmem:[%s260 + $0x1704] sm:$0xf]
        %v1865 = vld [vmem:[%s260 + $0x1708] sm:$0xf]
        %v1866 = vld [vmem:[%s260 + $0x170c] sm:$0xf]
        %v1867 = vld [vmem:[%s260 + $0x1710] sm:$0xf]
        %v1868 = vld [vmem:[%s260 + $0x1714] sm:$0xf]
        %v1869 = vld [vmem:[%s260 + $0x1718] sm:$0xf]
        %v1870 = vld [vmem:[%s260 + $0x171c] sm:$0xf]
        %v1871 = vld [vmem:[%s260 + $0x1720] sm:$0xf]
        %v1872 = vld [vmem:[%s260 + $0x1724] sm:$0xf]
        %v1873 = vld [vmem:[%s260 + $0x1728] sm:$0xf]
        %v1874 = vld [vmem:[%s260 + $0x172c] sm:$0xf]
        %v1875 = vld [vmem:[%s260 + $0x1730] sm:$0xf]
        %v1876 = vld [vmem:[%s260 + $0x1734] sm:$0xf]
        %v1877 = vld [vmem:[%s260 + $0x1738] sm:$0xf]
        %v1878 = vld [vmem:[%s260 + $0x173c] sm:$0xf]
        %v1879 = vld [vmem:[%s260 + $0x1740] sm:$0xf]
        %v1880 = vld [vmem:[%s260 + $0x1744] sm:$0xf]
        %v1881 = vld [vmem:[%s260 + $0x1748] sm:$0xf]
        %v1882 = vld [vmem:[%s260 + $0x174c] sm:$0xf]
        %v1883 = vld [vmem:[%s260 + $0x1750] sm:$0xf]
        %v1884 = vld [vmem:[%s260 + $0x1754] sm:$0xf]
        %v1885 = vld [vmem:[%s260 + $0x1758] sm:$0xf]
        %v1886 = vld [vmem:[%s260 + $0x175c] sm:$0xf]
        %v1887 = vld [vmem:[%s260 + $0x1760] sm:$0xf]
        %v1888 = vld [vmem:[%s260 + $0x1764] sm:$0xf]
        %v1889 = vld [vmem:[%s260 + $0x1768] sm:$0xf]
        %v1890 = vld [vmem:[%s260 + $0x176c] sm:$0xf]
        %v1891 = vld [vmem:[%s260 + $0x1770] sm:$0xf]
        %v1892 = vld [vmem:[%s260 + $0x1774] sm:$0xf]
        %v1893 = vld [vmem:[%s260 + $0x1778] sm:$0xf]
        %v1894 = vld [vmem:[%s260 + $0x177c] sm:$0xf]
        %v1895 = vld [vmem:[%s260 + $0x1780] sm:$0xf]
        %v1896 = vld [vmem:[%s260 + $0x1784] sm:$0xf]
        %v1897 = vld [vmem:[%s260 + $0x1788] sm:$0xf]
        %v1898 = vld [vmem:[%s260 + $0x178c] sm:$0xf]
        %v1899 = vld [vmem:[%s260 + $0x1790] sm:$0xf]
        %v1900 = vld [vmem:[%s260 + $0x1794] sm:$0xf]
        %v1901 = vld [vmem:[%s260 + $0x1798] sm:$0xf]
        %v1902 = vld [vmem:[%s260 + $0x179c] sm:$0xf]
        %v1903 = vld [vmem:[%s260 + $0x17a0] sm:$0xf]
        %v1904 = vld [vmem:[%s260 + $0x17a4] sm:$0xf]
        %v1905 = vld [vmem:[%s260 + $0x17a8] sm:$0xf]
        %v1906 = vld [vmem:[%s260 + $0x17ac] sm:$0xf]
        %v1907 = vld [vmem:[%s260 + $0x17b0] sm:$0xf]
        %v1908 = vld [vmem:[%s260 + $0x17b4] sm:$0xf]
        %v1909 = vld [vmem:[%s260 + $0x17b8] sm:$0xf]
        %v1910 = vld [vmem:[%s260 + $0x17bc] sm:$0xf]
        %v1911 = vld [vmem:[%s260 + $0x17c0] sm:$0xf]
        %v1912 = vld [vmem:[%s260 + $0x17c4] sm:$0xf]
        %v1913 = vld [vmem:[%s260 + $0x17c8] sm:$0xf]
        %v1914 = vld [vmem:[%s260 + $0x17cc] sm:$0xf]
        %v1915 = vld [vmem:[%s260 + $0x17d0] sm:$0xf]
        %v1916 = vld [vmem:[%s260 + $0x17d4] sm:$0xf]
        %v1917 = vld [vmem:[%s260 + $0x17d8] sm:$0xf]
        %v1918 = vld [vmem:[%s260 + $0x17dc] sm:$0xf]
        %v1919 = vld [vmem:[%s260 + $0x17e0] sm:$0xf]
        %v1920 = vld [vmem:[%s260 + $0x17e4] sm:$0xf]
        %v1921 = vld [vmem:[%s260 + $0x17e8] sm:$0xf]
        %v1922 = vld [vmem:[%s260 + $0x17ec] sm:$0xf]
        %v1923 = vld [vmem:[%s260 + $0x17f0] sm:$0xf]
        %v1924 = vld [vmem:[%s260 + $0x17f4] sm:$0xf]
        %v1925 = vld [vmem:[%s260 + $0x17f8] sm:$0xf]
        %v1926 = vld [vmem:[%s260 + $0x17fc] sm:$0xf]
        %v1927 = vld [vmem:[%s260 + $0x1800] sm:$0xf]
        %v1928 = vld [vmem:[%s260 + $0x1804] sm:$0xf]
        %v1929 = vld [vmem:[%s260 + $0x1808] sm:$0xf]
        %v1930 = vld [vmem:[%s260 + $0x180c] sm:$0xf]
        %v1931 = vld [vmem:[%s260 + $0x1810] sm:$0xf]
        %v1932 = vld [vmem:[%s260 + $0x1814] sm:$0xf]
        %v1933 = vld [vmem:[%s260 + $0x1818] sm:$0xf]
        %v1934 = vld [vmem:[%s260 + $0x181c] sm:$0xf]
        %v1935 = vld [vmem:[%s260 + $0x1820] sm:$0xf]
        %v1936 = vld [vmem:[%s260 + $0x1824] sm:$0xf]
        %v1937 = vld [vmem:[%s260 + $0x1828] sm:$0xf]
        %v1938 = vld [vmem:[%s260 + $0x182c] sm:$0xf]
        %v1939 = vld [vmem:[%s260 + $0x1830] sm:$0xf]
        %v1940 = vld [vmem:[%s260 + $0x1834] sm:$0xf]
        %v1941 = vld [vmem:[%s260 + $0x1838] sm:$0xf]
        %v1942 = vld [vmem:[%s260 + $0x183c] sm:$0xf]
        %v1943 = vld [vmem:[%s260 + $0x1840] sm:$0xf]
        %v1944 = vld [vmem:[%s260 + $0x1844] sm:$0xf]
        %v1945 = vld [vmem:[%s260 + $0x1848] sm:$0xf]
        %v1946 = vld [vmem:[%s260 + $0x184c] sm:$0xf]
        %v1947 = vld [vmem:[%s260 + $0x1850] sm:$0xf]
        %v1948 = vld [vmem:[%s260 + $0x1854] sm:$0xf]
        %v1949 = vld [vmem:[%s260 + $0x1858] sm:$0xf]
        %v1950 = vld [vmem:[%s260 + $0x185c] sm:$0xf]
        %v1951 = vld [vmem:[%s260 + $0x1860] sm:$0xf]
        %v1952 = vld [vmem:[%s260 + $0x1864] sm:$0xf]
        %v1953 = vld [vmem:[%s260 + $0x1868] sm:$0xf]
        %v1954 = vld [vmem:[%s260 + $0x186c] sm:$0xf]
        %v1955 = vld [vmem:[%s260 + $0x1870] sm:$0xf]
        %v1956 = vld [vmem:[%s260 + $0x1874] sm:$0xf]
        %v1957 = vld [vmem:[%s260 + $0x1878] sm:$0xf]
        %v1958 = vld [vmem:[%s260 + $0x187c] sm:$0xf]
        %v1959 = vld [vmem:[%s260 + $0x1880] sm:$0xf]
        %v1960 = vld [vmem:[%s260 + $0x1884] sm:$0xf]
        %v1961 = vld [vmem:[%s260 + $0x1888] sm:$0xf]
        %v1962 = vld [vmem:[%s260 + $0x188c] sm:$0xf]
        %v1963 = vld [vmem:[%s260 + $0x1890] sm:$0xf]
        %v1964 = vld [vmem:[%s260 + $0x1894] sm:$0xf]
        %v1965 = vld [vmem:[%s260 + $0x1898] sm:$0xf]
        %v1966 = vld [vmem:[%s260 + $0x189c] sm:$0xf]
        %v1967 = vld [vmem:[%s260 + $0x18a0] sm:$0xf]
        %v1968 = vld [vmem:[%s260 + $0x18a4] sm:$0xf]
        %v1969 = vld [vmem:[%s260 + $0x18a8] sm:$0xf]
        %v1970 = vld [vmem:[%s260 + $0x18ac] sm:$0xf]
        %v1971 = vld [vmem:[%s260 + $0x18b0] sm:$0xf]
        %v1972 = vld [vmem:[%s260 + $0x18b4] sm:$0xf]
        %v1973 = vld [vmem:[%s260 + $0x18b8] sm:$0xf]
        %v1974 = vld [vmem:[%s260 + $0x18bc] sm:$0xf]
        %v1975 = vld [vmem:[%s260 + $0x18c0] sm:$0xf]
        %v1976 = vld [vmem:[%s260 + $0x18c4] sm:$0xf]
        %v1977 = vld [vmem:[%s260 + $0x18c8] sm:$0xf]
        %v1978 = vld [vmem:[%s260 + $0x18cc] sm:$0xf]
        %v1979 = vld [vmem:[%s260 + $0x18d0] sm:$0xf]
        %v1980 = vld [vmem:[%s260 + $0x18d4] sm:$0xf]
        %v1981 = vld [vmem:[%s260 + $0x18d8] sm:$0xf]
        %v1982 = vld [vmem:[%s260 + $0x18dc] sm:$0xf]
        %v1983 = vld [vmem:[%s260 + $0x18e0] sm:$0xf]
        %v1984 = vld [vmem:[%s260 + $0x18e4] sm:$0xf]
        %v1985 = vld [vmem:[%s260 + $0x18e8] sm:$0xf]
        %v1986 = vld [vmem:[%s260 + $0x18ec] sm:$0xf]
        %v1987 = vld [vmem:[%s260 + $0x18f0] sm:$0xf]
        %v1988 = vld [vmem:[%s260 + $0x18f4] sm:$0xf]
        %v1989 = vld [vmem:[%s260 + $0x18f8] sm:$0xf]
        %v1990 = vld [vmem:[%s260 + $0x18fc] sm:$0xf]
        %v1991 = vld [vmem:[%s260 + $0x1900] sm:$0xf]
        %v1992 = vld [vmem:[%s260 + $0x1904] sm:$0xf]
        %v1993 = vld [vmem:[%s260 + $0x1908] sm:$0xf]
        %v1994 = vld [vmem:[%s260 + $0x190c] sm:$0xf]
        %v1995 = vld [vmem:[%s260 + $0x1910] sm:$0xf]
        %v1996 = vld [vmem:[%s260 + $0x1914] sm:$0xf]
        %v1997 = vld [vmem:[%s260 + $0x1918] sm:$0xf]
        %v1998 = vld [vmem:[%s260 + $0x191c] sm:$0xf]
        %v1999 = vld [vmem:[%s260 + $0x1920] sm:$0xf]
        %v2000 = vld [vmem:[%s260 + $0x1924] sm:$0xf]
        %v2001 = vld [vmem:[%s260 + $0x1928] sm:$0xf]
        %v2002 = vld [vmem:[%s260 + $0x192c] sm:$0xf]
        %v2003 = vld [vmem:[%s260 + $0x1930] sm:$0xf]
        %v2004 = vld [vmem:[%s260 + $0x1934] sm:$0xf]
        %v2005 = vld [vmem:[%s260 + $0x1938] sm:$0xf]
        %v2006 = vld [vmem:[%s260 + $0x193c] sm:$0xf]
        %v2007 = vld [vmem:[%s260 + $0x1940] sm:$0xf]
        %v2008 = vld [vmem:[%s260 + $0x1944] sm:$0xf]
        %v2009 = vld [vmem:[%s260 + $0x1948] sm:$0xf]
        %v2010 = vld [vmem:[%s260 + $0x194c] sm:$0xf]
        %v2011 = vld [vmem:[%s260 + $0x1950] sm:$0xf]
        %v2012 = vld [vmem:[%s260 + $0x1954] sm:$0xf]
        %v2013 = vld [vmem:[%s260 + $0x1958] sm:$0xf]
        %v2014 = vld [vmem:[%s260 + $0x195c] sm:$0xf]
        %v2015 = vld [vmem:[%s260 + $0x1960] sm:$0xf]
        %v2016 = vld [vmem:[%s260 + $0x1964] sm:$0xf]
        %v2017 = vld [vmem:[%s260 + $0x1968] sm:$0xf]
        %v2018 = vld [vmem:[%s260 + $0x196c] sm:$0xf]
        %v2019 = vld [vmem:[%s260 + $0x1970] sm:$0xf]
        %v2020 = vld [vmem:[%s260 + $0x1974] sm:$0xf]
        %v2021 = vld [vmem:[%s260 + $0x1978] sm:$0xf]
        %v2022 = vld [vmem:[%s260 + $0x197c] sm:$0xf]
        %v2023 = vld [vmem:[%s260 + $0x1980] sm:$0xf]
        %v2024 = vld [vmem:[%s260 + $0x1984] sm:$0xf]
        %v2025 = vld [vmem:[%s260 + $0x1988] sm:$0xf]
        %v2026 = vld [vmem:[%s260 + $0x198c] sm:$0xf]
        %v2027 = vld [vmem:[%s260 + $0x1990] sm:$0xf]
        %v2028 = vld [vmem:[%s260 + $0x1994] sm:$0xf]
        %v2029 = vld [vmem:[%s260 + $0x1998] sm:$0xf]
        %v2030 = vld [vmem:[%s260 + $0x199c] sm:$0xf]
        %v2031 = vld [vmem:[%s260 + $0x19a0] sm:$0xf]
        %v2032 = vld [vmem:[%s260 + $0x19a4] sm:$0xf]
        %v2033 = vld [vmem:[%s260 + $0x19a8] sm:$0xf]
        %v2034 = vld [vmem:[%s260 + $0x19ac] sm:$0xf]
        %v2035 = vld [vmem:[%s260 + $0x19b0] sm:$0xf]
        %v2036 = vld [vmem:[%s260 + $0x19b4] sm:$0xf]
        %v2037 = vld [vmem:[%s260 + $0x19b8] sm:$0xf]
        %v2038 = vld [vmem:[%s260 + $0x19bc] sm:$0xf]
        %v2039 = vld [vmem:[%s260 + $0x19c0] sm:$0xf]
        %v2040 = vld [vmem:[%s260 + $0x19c4] sm:$0xf]
        %v2041 = vld [vmem:[%s260 + $0x19c8] sm:$0xf]
        %v2042 = vld [vmem:[%s260 + $0x19cc] sm:$0xf]
        %v2043 = vld [vmem:[%s260 + $0x19d0] sm:$0xf]
        %v2044 = vld [vmem:[%s260 + $0x19d4] sm:$0xf]
        %v2045 = vld [vmem:[%s260 + $0x19d8] sm:$0xf]
        %v2046 = vld [vmem:[%s260 + $0x19dc] sm:$0xf]
        %v2047 = vld [vmem:[%s260 + $0x19e0] sm:$0xf]
        %v2048 = vld [vmem:[%s260 + $0x19e4] sm:$0xf]
        %v2049 = vld [vmem:[%s260 + $0x19e8] sm:$0xf]
        %v2050 = vld [vmem:[%s260 + $0x19ec] sm:$0xf]
        %v2051 = vld [vmem:[%s260 + $0x19f0] sm:$0xf]
        %v2052 = vld [vmem:[%s260 + $0x19f4] sm:$0xf]
        %v2053 = vld [vmem:[%s260 + $0x19f8] sm:$0xf]
        %v2054 = vld [vmem:[%s260 + $0x19fc] sm:$0xf]
        %v2055 = vld [vmem:[%s260 + $0x1a00] sm:$0xf]
        %v2056 = vld [vmem:[%s260 + $0x1a04] sm:$0xf]
        %v2057 = vld [vmem:[%s260 + $0x1a08] sm:$0xf]
        %v2058 = vld [vmem:[%s260 + $0x1a0c] sm:$0xf]
        %v2059 = vld [vmem:[%s260 + $0x1a10] sm:$0xf]
        %v2060 = vld [vmem:[%s260 + $0x1a14] sm:$0xf]
        %v2061 = vld [vmem:[%s260 + $0x1a18] sm:$0xf]
        %v2062 = vld [vmem:[%s260 + $0x1a1c] sm:$0xf]
        %v2063 = vld [vmem:[%s260 + $0x1a20] sm:$0xf]
        %v2064 = vld [vmem:[%s260 + $0x1a24] sm:$0xf]
        %v2065 = vld [vmem:[%s260 + $0x1a28] sm:$0xf]
        %v2066 = vld [vmem:[%s260 + $0x1a2c] sm:$0xf]
        %v2067 = vld [vmem:[%s260 + $0x1a30] sm:$0xf]
        %v2068 = vld [vmem:[%s260 + $0x1a34] sm:$0xf]
        %v2069 = vld [vmem:[%s260 + $0x1a38] sm:$0xf]
        %v2070 = vld [vmem:[%s260 + $0x1a3c] sm:$0xf]
        %v2071 = vld [vmem:[%s260 + $0x1a40] sm:$0xf]
        %v2072 = vld [vmem:[%s260 + $0x1a44] sm:$0xf]
        %v2073 = vld [vmem:[%s260 + $0x1a48] sm:$0xf]
        %v2074 = vld [vmem:[%s260 + $0x1a4c] sm:$0xf]
        %v2075 = vld [vmem:[%s260 + $0x1a50] sm:$0xf]
        %v2076 = vld [vmem:[%s260 + $0x1a54] sm:$0xf]
        %v2077 = vld [vmem:[%s260 + $0x1a58] sm:$0xf]
        %v2078 = vld [vmem:[%s260 + $0x1a5c] sm:$0xf]
        %v2079 = vld [vmem:[%s260 + $0x1a60] sm:$0xf]
        %v2080 = vld [vmem:[%s260 + $0x1a64] sm:$0xf]
        %v2081 = vld [vmem:[%s260 + $0x1a68] sm:$0xf]
        %v2082 = vld [vmem:[%s260 + $0x1a6c] sm:$0xf]
        %v2083 = vld [vmem:[%s260 + $0x1a70] sm:$0xf]
        %v2084 = vld [vmem:[%s260 + $0x1a74] sm:$0xf]
        %v2085 = vld [vmem:[%s260 + $0x1a78] sm:$0xf]
        %v2086 = vld [vmem:[%s260 + $0x1a7c] sm:$0xf]
        %v2087 = vld [vmem:[%s260 + $0x1a80] sm:$0xf]
        %v2088 = vld [vmem:[%s260 + $0x1a84] sm:$0xf]
        %v2089 = vld [vmem:[%s260 + $0x1a88] sm:$0xf]
        %v2090 = vld [vmem:[%s260 + $0x1a8c] sm:$0xf]
        %v2091 = vld [vmem:[%s260 + $0x1a90] sm:$0xf]
        %v2092 = vld [vmem:[%s260 + $0x1a94] sm:$0xf]
        %v2093 = vld [vmem:[%s260 + $0x1a98] sm:$0xf]
        %v2094 = vld [vmem:[%s260 + $0x1a9c] sm:$0xf]
        %v2095 = vld [vmem:[%s260 + $0x1aa0] sm:$0xf]
        %v2096 = vld [vmem:[%s260 + $0x1aa4] sm:$0xf]
        %v2097 = vld [vmem:[%s260 + $0x1aa8] sm:$0xf]
        %v2098 = vld [vmem:[%s260 + $0x1aac] sm:$0xf]
        %v2099 = vld [vmem:[%s260 + $0x1ab0] sm:$0xf]
        %v2100 = vld [vmem:[%s260 + $0x1ab4] sm:$0xf]
        %v2101 = vld [vmem:[%s260 + $0x1ab8] sm:$0xf]
        %v2102 = vld [vmem:[%s260 + $0x1abc] sm:$0xf]
        %v2103 = vld [vmem:[%s260 + $0x1ac0] sm:$0xf]
        %v2104 = vld [vmem:[%s260 + $0x1ac4] sm:$0xf]
        %v2105 = vld [vmem:[%s260 + $0x1ac8] sm:$0xf]
        %v2106 = vld [vmem:[%s260 + $0x1acc] sm:$0xf]
        %v2107 = vld [vmem:[%s260 + $0x1ad0] sm:$0xf]
        %v2108 = vld [vmem:[%s260 + $0x1ad4] sm:$0xf]
        %v2109 = vld [vmem:[%s260 + $0x1ad8] sm:$0xf]
        %v2110 = vld [vmem:[%s260 + $0x1adc] sm:$0xf]
        %v2111 = vld [vmem:[%s260 + $0x1ae0] sm:$0xf]
        %v2112 = vld [vmem:[%s260 + $0x1ae4] sm:$0xf]
        %v2113 = vld [vmem:[%s260 + $0x1ae8] sm:$0xf]
        %v2114 = vld [vmem:[%s260 + $0x1aec] sm:$0xf]
        %v2115 = vld [vmem:[%s260 + $0x1af0] sm:$0xf]
        %v2116 = vld [vmem:[%s260 + $0x1af4] sm:$0xf]
        %v2117 = vld [vmem:[%s260 + $0x1af8] sm:$0xf]
        %v2118 = vld [vmem:[%s260 + $0x1afc] sm:$0xf]
        %v2119 = vld [vmem:[%s260 + $0x1b00] sm:$0xf]
        %v2120 = vld [vmem:[%s260 + $0x1b04] sm:$0xf]
        %v2121 = vld [vmem:[%s260 + $0x1b08] sm:$0xf]
        %v2122 = vld [vmem:[%s260 + $0x1b0c] sm:$0xf]
        %v2123 = vld [vmem:[%s260 + $0x1b10] sm:$0xf]
        %v2124 = vld [vmem:[%s260 + $0x1b14] sm:$0xf]
        %v2125 = vld [vmem:[%s260 + $0x1b18] sm:$0xf]
        %v2126 = vld [vmem:[%s260 + $0x1b1c] sm:$0xf]
        %v2127 = vld [vmem:[%s260 + $0x1b20] sm:$0xf]
        %v2128 = vld [vmem:[%s260 + $0x1b24] sm:$0xf]
        %v2129 = vld [vmem:[%s260 + $0x1b28] sm:$0xf]
        %v2130 = vld [vmem:[%s260 + $0x1b2c] sm:$0xf]
        %v2131 = vld [vmem:[%s260 + $0x1b30] sm:$0xf]
        %v2132 = vld [vmem:[%s260 + $0x1b34] sm:$0xf]
        %v2133 = vld [vmem:[%s260 + $0x1b38] sm:$0xf]
        %v2134 = vld [vmem:[%s260 + $0x1b3c] sm:$0xf]
        %v2135 = vld [vmem:[%s260 + $0x1b40] sm:$0xf]
        %v2136 = vld [vmem:[%s260 + $0x1b44] sm:$0xf]
        %v2137 = vld [vmem:[%s260 + $0x1b48] sm:$0xf]
        %v2138 = vld [vmem:[%s260 + $0x1b4c] sm:$0xf]
        %v2139 = vld [vmem:[%s260 + $0x1b50] sm:$0xf]
        %v2140 = vld [vmem:[%s260 + $0x1b54] sm:$0xf]
        %v2141 = vld [vmem:[%s260 + $0x1b58] sm:$0xf]
        %v2142 = vld [vmem:[%s260 + $0x1b5c] sm:$0xf]
        %v2143 = vld [vmem:[%s260 + $0x1b60] sm:$0xf]
        %v2144 = vld [vmem:[%s260 + $0x1b64] sm:$0xf]
        %v2145 = vld [vmem:[%s260 + $0x1b68] sm:$0xf]
        %v2146 = vld [vmem:[%s260 + $0x1b6c] sm:$0xf]
        %v2147 = vld [vmem:[%s260 + $0x1b70] sm:$0xf]
        %v2148 = vld [vmem:[%s260 + $0x1b74] sm:$0xf]
        %v2149 = vld [vmem:[%s260 + $0x1b78] sm:$0xf]
        %v2150 = vld [vmem:[%s260 + $0x1b7c] sm:$0xf]
        %v2151 = vld [vmem:[%s260 + $0x1b80] sm:$0xf]
        %v2152 = vld [vmem:[%s260 + $0x1b84] sm:$0xf]
        %v2153 = vld [vmem:[%s260 + $0x1b88] sm:$0xf]
        %v2154 = vld [vmem:[%s260 + $0x1b8c] sm:$0xf]
        %v2155 = vld [vmem:[%s260 + $0x1b90] sm:$0xf]
        %v2156 = vld [vmem:[%s260 + $0x1b94] sm:$0xf]
        %v2157 = vld [vmem:[%s260 + $0x1b98] sm:$0xf]
        %v2158 = vld [vmem:[%s260 + $0x1b9c] sm:$0xf]
        %v2159 = vld [vmem:[%s260 + $0x1ba0] sm:$0xf]
        %v2160 = vld [vmem:[%s260 + $0x1ba4] sm:$0xf]
        %v2161 = vld [vmem:[%s260 + $0x1ba8] sm:$0xf]
        %v2162 = vld [vmem:[%s260 + $0x1bac] sm:$0xf]
        %v2163 = vld [vmem:[%s260 + $0x1bb0] sm:$0xf]
        %v2164 = vld [vmem:[%s260 + $0x1bb4] sm:$0xf]
        %v2165 = vld [vmem:[%s260 + $0x1bb8] sm:$0xf]
        %v2166 = vld [vmem:[%s260 + $0x1bbc] sm:$0xf]
        %v2167 = vld [vmem:[%s260 + $0x1bc0] sm:$0xf]
        %v2168 = vld [vmem:[%s260 + $0x1bc4] sm:$0xf]
        %v2169 = vld [vmem:[%s260 + $0x1bc8] sm:$0xf]
        %v2170 = vld [vmem:[%s260 + $0x1bcc] sm:$0xf]
        %v2171 = vld [vmem:[%s260 + $0x1bd0] sm:$0xf]
        %v2172 = vld [vmem:[%s260 + $0x1bd4] sm:$0xf]
        %v2173 = vld [vmem:[%s260 + $0x1bd8] sm:$0xf]
        %v2174 = vld [vmem:[%s260 + $0x1bdc] sm:$0xf]
        %v2175 = vld [vmem:[%s260 + $0x1be0] sm:$0xf]
        %v2176 = vld [vmem:[%s260 + $0x1be4] sm:$0xf]
        %v2177 = vld [vmem:[%s260 + $0x1be8] sm:$0xf]
        %v2178 = vld [vmem:[%s260 + $0x1bec] sm:$0xf]
        %v2179 = vld [vmem:[%s260 + $0x1bf0] sm:$0xf]
        %v2180 = vld [vmem:[%s260 + $0x1bf4] sm:$0xf]
        %v2181 = vld [vmem:[%s260 + $0x1bf8] sm:$0xf]
        %v2182 = vld [vmem:[%s260 + $0x1bfc] sm:$0xf]
        %v2183 = vld [vmem:[%s260 + $0x1c00] sm:$0xf]
        %v2184 = vld [vmem:[%s260 + $0x1c04] sm:$0xf]
        %v2185 = vld [vmem:[%s260 + $0x1c08] sm:$0xf]
        %v2186 = vld [vmem:[%s260 + $0x1c0c] sm:$0xf]
        %v2187 = vld [vmem:[%s260 + $0x1c10] sm:$0xf]
        %v2188 = vld [vmem:[%s260 + $0x1c14] sm:$0xf]
        %v2189 = vld [vmem:[%s260 + $0x1c18] sm:$0xf]
        %v2190 = vld [vmem:[%s260 + $0x1c1c] sm:$0xf]
        %v2191 = vld [vmem:[%s260 + $0x1c20] sm:$0xf]
        %v2192 = vld [vmem:[%s260 + $0x1c24] sm:$0xf]
        %v2193 = vld [vmem:[%s260 + $0x1c28] sm:$0xf]
        %v2194 = vld [vmem:[%s260 + $0x1c2c] sm:$0xf]
        %v2195 = vld [vmem:[%s260 + $0x1c30] sm:$0xf]
        %v2196 = vld [vmem:[%s260 + $0x1c34] sm:$0xf]
        %v2197 = vld [vmem:[%s260 + $0x1c38] sm:$0xf]
        %v2198 = vld [vmem:[%s260 + $0x1c3c] sm:$0xf]
        %v2256 = vunpack.c.l.b16 %v334
        %v2257 = vunpack.c.h.b16 %v334
        %v2258 = vunpack.c.l.b16 %v335
        %v2259 = vunpack.c.h.b16 %v335
        %v2260 = vunpack.c.l.b16 %v336
        %v2261 = vunpack.c.h.b16 %v336
        %v2262 = vunpack.c.l.b16 %v337
        %v2263 = vunpack.c.h.b16 %v337
        %v2264 = vunpack.c.l.b16 %v338
        %v2265 = vunpack.c.h.b16 %v338
        %v2266 = vunpack.c.l.b16 %v339
        %v2267 = vunpack.c.h.b16 %v339
        %v2268 = vunpack.c.l.b16 %v340
        %v2269 = vunpack.c.h.b16 %v340
        %v2270 = vunpack.c.l.b16 %v341
        %v2271 = vunpack.c.h.b16 %v341
        %v2272 = vunpack.c.l.b16 %v342
        %v2273 = vunpack.c.h.b16 %v342
        %v2274 = vunpack.c.l.b16 %v343
        %v2275 = vunpack.c.h.b16 %v343
        %v2276 = vunpack.c.l.b16 %v344
        %v2277 = vunpack.c.h.b16 %v344
        %v2278 = vunpack.c.l.b16 %v345
        %v2279 = vunpack.c.h.b16 %v345
        %v2280 = vunpack.c.l.b16 %v346
        %v2281 = vunpack.c.h.b16 %v346
        %v2282 = vunpack.c.l.b16 %v347
        %v2283 = vunpack.c.h.b16 %v347
        %v2284 = vunpack.c.l.b16 %v348
        %v2285 = vunpack.c.h.b16 %v348
        %v2286 = vunpack.c.l.b16 %v349
        %v2287 = vunpack.c.h.b16 %v349
        %v2288 = vunpack.c.l.b16 %v350
        %v2289 = vunpack.c.h.b16 %v350
        %v2290 = vunpack.c.l.b16 %v351
        %v2291 = vunpack.c.h.b16 %v351
        %v2292 = vunpack.c.l.b16 %v352
        %v2293 = vunpack.c.h.b16 %v352
        %v2294 = vunpack.c.l.b16 %v353
        %v2295 = vunpack.c.h.b16 %v353
        %v2296 = vunpack.c.l.b16 %v354
        %v2297 = vunpack.c.h.b16 %v354
        %v2298 = vunpack.c.l.b16 %v355
        %v2299 = vunpack.c.h.b16 %v355
        %v2300 = vunpack.c.l.b16 %v356
        %v2301 = vunpack.c.h.b16 %v356
        %v2302 = vunpack.c.l.b16 %v357
        %v2303 = vunpack.c.h.b16 %v357
        %v2304 = vunpack.c.l.b16 %v358
        %v2305 = vunpack.c.h.b16 %v358
        %v2306 = vunpack.c.l.b16 %v359
        %v2307 = vunpack.c.h.b16 %v359
        %v2308 = vunpack.c.l.b16 %v360
        %v2309 = vunpack.c.h.b16 %v360
        %v2310 = vunpack.c.l.b16 %v361
        %v2311 = vunpack.c.h.b16 %v361
        %v2312 = vunpack.c.l.b16 %v362
        %v2313 = vunpack.c.h.b16 %v362
        %v2314 = vunpack.c.l.b16 %v363
        %v2315 = vunpack.c.h.b16 %v363
        %v2316 = vunpack.c.l.b16 %v364
        %v2317 = vunpack.c.h.b16 %v364
        %v2318 = vunpack.c.l.b16 %v365
        %v2319 = vunpack.c.h.b16 %v365
        %v2320 = vunpack.c.l.b16 %v366
        %v2321 = vunpack.c.h.b16 %v366
        %v2322 = vunpack.c.l.b16 %v367
        %v2323 = vunpack.c.h.b16 %v367
        %v2324 = vunpack.c.l.b16 %v368
        %v2325 = vunpack.c.h.b16 %v368
        %v2326 = vunpack.c.l.b16 %v369
        %v2327 = vunpack.c.h.b16 %v369
        %v2328 = vunpack.c.l.b16 %v370
        %v2329 = vunpack.c.h.b16 %v370
        %v2330 = vunpack.c.l.b16 %v371
        %v2331 = vunpack.c.h.b16 %v371
        %v2332 = vunpack.c.l.b16 %v372
        %v2333 = vunpack.c.h.b16 %v372
        %v2334 = vunpack.c.l.b16 %v373
        %v2335 = vunpack.c.h.b16 %v373
        %v2336 = vunpack.c.l.b16 %v374
        %v2337 = vunpack.c.h.b16 %v374
        %v2338 = vunpack.c.l.b16 %v375
        %v2339 = vunpack.c.h.b16 %v375
        %v2340 = vunpack.c.l.b16 %v376
        %v2341 = vunpack.c.h.b16 %v376
        %v2342 = vunpack.c.l.b16 %v377
        %v2343 = vunpack.c.h.b16 %v377
        %v2344 = vunpack.c.l.b16 %v378
        %v2345 = vunpack.c.h.b16 %v378
        %v2346 = vunpack.c.l.b16 %v379
        %v2347 = vunpack.c.h.b16 %v379
        %v2348 = vunpack.c.l.b16 %v380
        %v2349 = vunpack.c.h.b16 %v380
        %v2350 = vunpack.c.l.b16 %v381
        %v2351 = vunpack.c.h.b16 %v381
        %v2352 = vunpack.c.l.b16 %v382
        %v2353 = vunpack.c.h.b16 %v382
        %v2354 = vunpack.c.l.b16 %v383
        %v2355 = vunpack.c.h.b16 %v383
        %v2356 = vunpack.c.l.b16 %v384
        %v2357 = vunpack.c.h.b16 %v384
        %v2358 = vunpack.c.l.b16 %v385
        %v2359 = vunpack.c.h.b16 %v385
        %v2360 = vunpack.c.l.b16 %v386
        %v2361 = vunpack.c.h.b16 %v386
        %v2362 = vunpack.c.l.b16 %v387
        %v2363 = vunpack.c.h.b16 %v387
        %v2364 = vunpack.c.l.b16 %v388
        %v2365 = vunpack.c.h.b16 %v388
        %v2366 = vunpack.c.l.b16 %v389
        %v2367 = vunpack.c.h.b16 %v389
        %v2368 = vunpack.c.l.b16 %v390
        %v2369 = vpack.c.b16 %v2256, %v2256
        %v2370 = vpack.c.b16 %v2257, %v2257
        %v2371 = vpack.c.b16 %v2258, %v2258
        %v2372 = vpack.c.b16 %v2259, %v2259
        %v2373 = vpack.c.b16 %v2260, %v2260
        %v2374 = vpack.c.b16 %v2261, %v2261
        %v2375 = vpack.c.b16 %v2262, %v2262
        %v2376 = vpack.c.b16 %v2263, %v2263
        %v2377 = vpack.c.b16 %v2264, %v2264
        %v2378 = vpack.c.b16 %v2265, %v2265
        %v2379 = vpack.c.b16 %v2266, %v2266
        %v2380 = vpack.c.b16 %v2267, %v2267
        %v2381 = vpack.c.b16 %v2268, %v2268
        %v2382 = vpack.c.b16 %v2269, %v2269
        %v2383 = vpack.c.b16 %v2270, %v2270
        %v2384 = vpack.c.b16 %v2271, %v2271
        %v2385 = vpack.c.b16 %v2272, %v2272
        %v2386 = vpack.c.b16 %v2273, %v2273
        %v2387 = vpack.c.b16 %v2274, %v2274
        %v2388 = vpack.c.b16 %v2275, %v2275
        %v2389 = vpack.c.b16 %v2276, %v2276
        %v2390 = vpack.c.b16 %v2277, %v2277
        %v2391 = vpack.c.b16 %v2278, %v2278
        %v2392 = vpack.c.b16 %v2279, %v2279
        %v2393 = vpack.c.b16 %v2280, %v2280
        %v2394 = vpack.c.b16 %v2281, %v2281
        %v2395 = vpack.c.b16 %v2282, %v2282
        %v2396 = vpack.c.b16 %v2283, %v2283
        %v2397 = vpack.c.b16 %v2284, %v2284
        %v2398 = vpack.c.b16 %v2285, %v2285
        %v2399 = vpack.c.b16 %v2286, %v2286
        %v2400 = vpack.c.b16 %v2287, %v2287
        %v2401 = vpack.c.b16 %v2288, %v2288
        %v2402 = vpack.c.b16 %v2289, %v2289
        %v2403 = vpack.c.b16 %v2290, %v2290
        %v2404 = vpack.c.b16 %v2291, %v2291
        %v2405 = vpack.c.b16 %v2292, %v2292
        %v2406 = vpack.c.b16 %v2293, %v2293
        %v2407 = vpack.c.b16 %v2294, %v2294
        %v2408 = vpack.c.b16 %v2295, %v2295
        %v2409 = vpack.c.b16 %v2296, %v2296
        %v2410 = vpack.c.b16 %v2297, %v2297
        %v2411 = vpack.c.b16 %v2298, %v2298
        %v2412 = vpack.c.b16 %v2299, %v2299
        %v2413 = vpack.c.b16 %v2300, %v2300
        %v2414 = vpack.c.b16 %v2301, %v2301
        %v2415 = vpack.c.b16 %v2302, %v2302
        %v2416 = vpack.c.b16 %v2303, %v2303
        %v2417 = vpack.c.b16 %v2304, %v2304
        %v2418 = vpack.c.b16 %v2305, %v2305
        %v2419 = vpack.c.b16 %v2306, %v2306
        %v2420 = vpack.c.b16 %v2307, %v2307
        %v2421 = vpack.c.b16 %v2308, %v2308
        %v2422 = vpack.c.b16 %v2309, %v2309
        %v2423 = vpack.c.b16 %v2310, %v2310
        %v2424 = vpack.c.b16 %v2311, %v2311
        %v2425 = vpack.c.b16 %v2312, %v2312
        %v2426 = vpack.c.b16 %v2313, %v2313
        %v2427 = vpack.c.b16 %v2314, %v2314
        %v2428 = vpack.c.b16 %v2315, %v2315
        %v2429 = vpack.c.b16 %v2316, %v2316
        %v2430 = vpack.c.b16 %v2317, %v2317
        %v2431 = vpack.c.b16 %v2318, %v2318
        %v2432 = vpack.c.b16 %v2319, %v2319
        %v2433 = vpack.c.b16 %v2320, %v2320
        %v2434 = vpack.c.b16 %v2321, %v2321
        %v2435 = vpack.c.b16 %v2322, %v2322
        %v2436 = vpack.c.b16 %v2323, %v2323
        %v2437 = vpack.c.b16 %v2324, %v2324
        %v2438 = vpack.c.b16 %v2325, %v2325
        %v2439 = vpack.c.b16 %v2326, %v2326
        %v2440 = vpack.c.b16 %v2327, %v2327
        %v2441 = vpack.c.b16 %v2328, %v2328
        %v2442 = vpack.c.b16 %v2329, %v2329
        %v2443 = vpack.c.b16 %v2330, %v2330
        %v2444 = vpack.c.b16 %v2331, %v2331
        %v2445 = vpack.c.b16 %v2332, %v2332
        %v2446 = vpack.c.b16 %v2333, %v2333
        %v2447 = vpack.c.b16 %v2334, %v2334
        %v2448 = vpack.c.b16 %v2335, %v2335
        %v2449 = vpack.c.b16 %v2336, %v2336
        %v2450 = vpack.c.b16 %v2337, %v2337
        %v2451 = vpack.c.b16 %v2338, %v2338
        %v2452 = vpack.c.b16 %v2339, %v2339
        %v2453 = vpack.c.b16 %v2340, %v2340
        %v2454 = vpack.c.b16 %v2341, %v2341
        %v2455 = vpack.c.b16 %v2342, %v2342
        %v2456 = vpack.c.b16 %v2343, %v2343
        %v2457 = vpack.c.b16 %v2344, %v2344
        %v2458 = vpack.c.b16 %v2345, %v2345
        %v2459 = vpack.c.b16 %v2346, %v2346
        %v2460 = vpack.c.b16 %v2347, %v2347
        %v2461 = vpack.c.b16 %v2348, %v2348
        %v2462 = vpack.c.b16 %v2349, %v2349
        %v2463 = vpack.c.b16 %v2350, %v2350
        %v2464 = vpack.c.b16 %v2351, %v2351
        %v2465 = vpack.c.b16 %v2352, %v2352
        %v2466 = vpack.c.b16 %v2353, %v2353
        %v2467 = vpack.c.b16 %v2354, %v2354
        %v2468 = vpack.c.b16 %v2355, %v2355
        %v2469 = vpack.c.b16 %v2356, %v2356
        %v2470 = vpack.c.b16 %v2357, %v2357
        %v2471 = vpack.c.b16 %v2358, %v2358
        %v2472 = vpack.c.b16 %v2359, %v2359
        %v2473 = vpack.c.b16 %v2360, %v2360
        %v2474 = vpack.c.b16 %v2361, %v2361
        %v2475 = vpack.c.b16 %v2362, %v2362
        %v2476 = vpack.c.b16 %v2363, %v2363
        %v2477 = vpack.c.b16 %v2364, %v2364
        %v2478 = vpack.c.b16 %v2365, %v2365
        %v2479 = vpack.c.b16 %v2366, %v2366
        %v2480 = vpack.c.b16 %v2367, %v2367
        %v2481 = vpack.c.b16 %v2368, %v2368
        %v4403 = vunpack.c.l.b16 %v391
        %v4404 = vunpack.c.l.b16 %v392
        %v4405 = vunpack.c.l.b16 %v393
        %v4406 = vunpack.c.l.b16 %v394
        %v4407 = vunpack.c.l.b16 %v395
        %v4408 = vunpack.c.l.b16 %v396
        %v4409 = vunpack.c.l.b16 %v397
        %v4410 = vunpack.c.l.b16 %v398
        %v4411 = vunpack.c.l.b16 %v399
        %v4412 = vunpack.c.l.b16 %v400
        %v4413 = vunpack.c.l.b16 %v401
        %v4414 = vunpack.c.l.b16 %v402
        %v4415 = vunpack.c.l.b16 %v403
        %v4416 = vunpack.c.l.b16 %v404
        %v4417 = vunpack.c.l.b16 %v405
        %v4418 = vunpack.c.l.b16 %v406
        %v4419 = vunpack.c.l.b16 %v407
        %v4420 = vunpack.c.l.b16 %v408
        %v4421 = vunpack.c.l.b16 %v409
        %v4422 = vunpack.c.l.b16 %v410
        %v4423 = vunpack.c.l.b16 %v411
        %v4424 = vunpack.c.l.b16 %v412
        %v4425 = vunpack.c.l.b16 %v413
        %v4426 = vunpack.c.l.b16 %v414
        %v4427 = vunpack.c.l.b16 %v415
        %v4428 = vunpack.c.l.b16 %v416
        %v4429 = vunpack.c.l.b16 %v417
        %v4430 = vunpack.c.l.b16 %v418
        %v4431 = vunpack.c.l.b16 %v419
        %v4432 = vunpack.c.l.b16 %v420
        %v4433 = vunpack.c.l.b16 %v421
        %v4434 = vunpack.c.l.b16 %v422
        %v4435 = vunpack.c.l.b16 %v423
        %v4436 = vunpack.c.l.b16 %v424
        %v4437 = vunpack.c.l.b16 %v425
        %v4438 = vunpack.c.l.b16 %v426
        %v4439 = vunpack.c.l.b16 %v427
        %v4440 = vunpack.c.l.b16 %v428
        %v4441 = vunpack.c.l.b16 %v429
        %v4442 = vunpack.c.l.b16 %v430
        %v4443 = vunpack.c.l.b16 %v431
        %v4444 = vunpack.c.l.b16 %v432
        %v4445 = vunpack.c.l.b16 %v433
        %v4446 = vunpack.c.l.b16 %v434
        %v4447 = vunpack.c.l.b16 %v435
        %v4448 = vunpack.c.l.b16 %v436
        %v4449 = vunpack.c.l.b16 %v437
        %v4450 = vunpack.c.l.b16 %v438
        %v4451 = vunpack.c.l.b16 %v439
        %v4452 = vunpack.c.l.b16 %v440
        %v4453 = vunpack.c.l.b16 %v441
        %v4454 = vunpack.c.l.b16 %v442
        %v4455 = vunpack.c.l.b16 %v443
        %v4456 = vunpack.c.l.b16 %v444
        %v4457 = vunpack.c.l.b16 %v445
        %v4458 = vunpack.c.l.b16 %v446
        %v4459 = vunpack.c.l.b16 %v447
        %v4460 = vunpack.c.l.b16 %v448
        %v4461 = vunpack.c.l.b16 %v449
        %v4462 = vunpack.c.l.b16 %v450
        %v4463 = vunpack.c.l.b16 %v451
        %v4464 = vunpack.c.l.b16 %v452
        %v4465 = vunpack.c.l.b16 %v453
        %v4466 = vunpack.c.l.b16 %v454
        %v4467 = vunpack.c.l.b16 %v455
        %v4468 = vunpack.c.l.b16 %v456
        %v4469 = vunpack.c.l.b16 %v457
        %v4470 = vunpack.c.l.b16 %v458
        %v4471 = vunpack.c.l.b16 %v459
        %v4472 = vunpack.c.l.b16 %v460
        %v4473 = vunpack.c.l.b16 %v461
        %v4474 = vunpack.c.l.b16 %v462
        %v4475 = vunpack.c.l.b16 %v463
        %v4476 = vunpack.c.l.b16 %v464
        %v4477 = vunpack.c.l.b16 %v465
        %v4478 = vunpack.c.l.b16 %v466
        %v4479 = vunpack.c.l.b16 %v467
        %v4480 = vunpack.c.l.b16 %v468
        %v4481 = vunpack.c.l.b16 %v469
        %v4482 = vunpack.c.l.b16 %v470
        %v4483 = vunpack.c.l.b16 %v471
        %v4484 = vunpack.c.l.b16 %v472
        %v4485 = vunpack.c.l.b16 %v473
        %v4486 = vunpack.c.l.b16 %v474
        %v4487 = vunpack.c.l.b16 %v475
        %v4488 = vunpack.c.l.b16 %v476
        %v4489 = vunpack.c.l.b16 %v477
        %v4490 = vunpack.c.l.b16 %v478
        %v4491 = vunpack.c.l.b16 %v479
        %v4492 = vunpack.c.l.b16 %v480
        %v4493 = vunpack.c.l.b16 %v481
        %v4494 = vunpack.c.l.b16 %v482
        %v4495 = vunpack.c.l.b16 %v483
        %v4496 = vunpack.c.l.b16 %v484
        %v4497 = vunpack.c.l.b16 %v485
        %v4498 = vunpack.c.l.b16 %v486
        %v4499 = vunpack.c.l.b16 %v487
        %v4500 = vunpack.c.l.b16 %v488
        %v4501 = vunpack.c.l.b16 %v489
        %v4502 = vunpack.c.l.b16 %v490
        %v4503 = vunpack.c.l.b16 %v491
        %v4504 = vunpack.c.l.b16 %v492
        %v4505 = vunpack.c.l.b16 %v493
        %v4506 = vunpack.c.l.b16 %v494
        %v4507 = vunpack.c.l.b16 %v495
        %v4508 = vunpack.c.l.b16 %v496
        %v4509 = vunpack.c.l.b16 %v497
        %v4510 = vunpack.c.l.b16 %v498
        %v4511 = vunpack.c.l.b16 %v499
        %v4512 = vunpack.c.l.b16 %v500
        %v4513 = vunpack.c.l.b16 %v501
        %v4514 = vunpack.c.l.b16 %v502
        %v4515 = vunpack.c.l.b16 %v503
        %v4516 = vunpack.c.l.b16 %v504
        %v4517 = vunpack.c.l.b16 %v505
        %v4518 = vunpack.c.l.b16 %v506
        %v4519 = vunpack.c.l.b16 %v507
        %v4520 = vunpack.c.l.b16 %v508
        %v4521 = vunpack.c.l.b16 %v509
        %v4522 = vunpack.c.l.b16 %v510
        %v4523 = vunpack.c.l.b16 %v511
        %v4524 = vunpack.c.l.b16 %v512
        %v4525 = vunpack.c.l.b16 %v513
        %v4526 = vunpack.c.l.b16 %v514
        %v4527 = vunpack.c.l.b16 %v515
        %v4528 = vunpack.c.l.b16 %v516
        %v4529 = vunpack.c.l.b16 %v517
        %v4530 = vunpack.c.l.b16 %v518
        %v4531 = vunpack.c.l.b16 %v519
        %v4532 = vunpack.c.l.b16 %v520
        %v4533 = vunpack.c.l.b16 %v521
        %v4534 = vunpack.c.l.b16 %v522
        %v4535 = vunpack.c.l.b16 %v523
        %v4536 = vunpack.c.l.b16 %v524
        %v4537 = vunpack.c.l.b16 %v525
        %v4538 = vunpack.c.l.b16 %v526
        %v4539 = vunpack.c.l.b16 %v527
        %v4540 = vunpack.c.l.b16 %v528
        %v4541 = vunpack.c.l.b16 %v529
        %v4542 = vunpack.c.l.b16 %v530
        %v4543 = vunpack.c.l.b16 %v531
        %v4544 = vunpack.c.l.b16 %v532
        %v4545 = vunpack.c.l.b16 %v533
        %v4546 = vunpack.c.l.b16 %v534
        %v4547 = vunpack.c.l.b16 %v535
        %v4548 = vunpack.c.l.b16 %v536
        %v4549 = vunpack.c.l.b16 %v537
        %v4550 = vunpack.c.l.b16 %v538
        %v4551 = vunpack.c.l.b16 %v539
        %v4552 = vunpack.c.l.b16 %v540
        %v4553 = vunpack.c.l.b16 %v541
        %v4554 = vunpack.c.l.b16 %v542
        %v4555 = vunpack.c.l.b16 %v543
        %v4556 = vunpack.c.l.b16 %v544
        %v4557 = vunpack.c.l.b16 %v545
        %v4558 = vunpack.c.l.b16 %v546
        %v4559 = vunpack.c.l.b16 %v547
        %v4560 = vunpack.c.l.b16 %v548
        %v4561 = vunpack.c.l.b16 %v549
        %v4562 = vunpack.c.l.b16 %v550
        %v4563 = vunpack.c.l.b16 %v551
        %v4564 = vunpack.c.l.b16 %v552
        %v4565 = vunpack.c.l.b16 %v553
        %v4566 = vunpack.c.l.b16 %v554
        %v4567 = vunpack.c.l.b16 %v555
        %v4568 = vunpack.c.l.b16 %v556
        %v4569 = vunpack.c.l.b16 %v557
        %v4570 = vunpack.c.l.b16 %v558
        %v4571 = vunpack.c.l.b16 %v559
        %v4572 = vunpack.c.l.b16 %v560
        %v4573 = vunpack.c.l.b16 %v561
        %v4574 = vunpack.c.l.b16 %v562
        %v4575 = vunpack.c.l.b16 %v563
        %v4576 = vunpack.c.l.b16 %v564
        %v4577 = vunpack.c.l.b16 %v565
        %v4578 = vunpack.c.l.b16 %v566
        %v4579 = vunpack.c.l.b16 %v567
        %v4580 = vunpack.c.l.b16 %v568
        %v4581 = vunpack.c.l.b16 %v569
        %v4582 = vunpack.c.l.b16 %v570
        %v4583 = vunpack.c.l.b16 %v571
        %v4584 = vunpack.c.l.b16 %v572
        %v4585 = vunpack.c.l.b16 %v573
        %v4586 = vunpack.c.l.b16 %v574
        %v4587 = vunpack.c.l.b16 %v575
        %v4588 = vunpack.c.l.b16 %v576
        %v4589 = vunpack.c.l.b16 %v577
        %v4590 = vunpack.c.l.b16 %v578
        %v4591 = vunpack.c.l.b16 %v579
        %v4592 = vunpack.c.l.b16 %v580
        %v4593 = vunpack.c.l.b16 %v581
        %v4594 = vunpack.c.l.b16 %v582
        %v4595 = vunpack.c.l.b16 %v583
        %v4596 = vunpack.c.l.b16 %v584
        %v4597 = vunpack.c.l.b16 %v585
        %v4598 = vunpack.c.l.b16 %v586
        %v4599 = vunpack.c.l.b16 %v587
        %v4600 = vunpack.c.l.b16 %v588
        %v4601 = vunpack.c.l.b16 %v589
        %v4602 = vunpack.c.l.b16 %v590
        %v4603 = vunpack.c.l.b16 %v591
        %v4604 = vunpack.c.l.b16 %v592
        %v4605 = vunpack.c.l.b16 %v593
        %v4606 = vunpack.c.l.b16 %v594
        %v4607 = vunpack.c.l.b16 %v595
        %v4608 = vunpack.c.l.b16 %v596
        %v4609 = vunpack.c.l.b16 %v597
        %v4610 = vunpack.c.l.b16 %v598
        %v4611 = vunpack.c.l.b16 %v599
        %v4612 = vunpack.c.l.b16 %v600
        %v4613 = vunpack.c.l.b16 %v601
        %v4614 = vunpack.c.l.b16 %v602
        %v4615 = vunpack.c.l.b16 %v603
        %v4616 = vunpack.c.l.b16 %v604
        %v4617 = vunpack.c.l.b16 %v605
        %v4618 = vunpack.c.l.b16 %v606
        %v4619 = vunpack.c.l.b16 %v607
        %v4620 = vunpack.c.l.b16 %v608
        %v4621 = vunpack.c.l.b16 %v609
        %v4622 = vunpack.c.l.b16 %v610
        %v4623 = vunpack.c.l.b16 %v611
        %v4624 = vunpack.c.l.b16 %v612
        %v4625 = vunpack.c.l.b16 %v613
        %v4626 = vunpack.c.l.b16 %v614
        %v4627 = vunpack.c.l.b16 %v615
        %v4628 = vunpack.c.l.b16 %v616
        %v4629 = vunpack.c.l.b16 %v617
        %v4630 = vunpack.c.l.b16 %v618
        %v4631 = vunpack.c.l.b16 %v619
        %v4632 = vunpack.c.l.b16 %v620
        %v4633 = vunpack.c.l.b16 %v621
        %v4634 = vunpack.c.l.b16 %v622
        %v4635 = vunpack.c.l.b16 %v623
        %v4636 = vunpack.c.l.b16 %v624
        %v4637 = vunpack.c.l.b16 %v625
        %v4638 = vunpack.c.l.b16 %v626
        %v4639 = vunpack.c.l.b16 %v627
        %v4640 = vunpack.c.l.b16 %v628
        %v4641 = vunpack.c.l.b16 %v629
        %v4642 = vunpack.c.l.b16 %v630
        %v4643 = vunpack.c.l.b16 %v631
        %v4644 = vunpack.c.l.b16 %v632
        %v4645 = vunpack.c.l.b16 %v633
        %v4646 = vunpack.c.l.b16 %v634
        %v4647 = vunpack.c.l.b16 %v635
        %v4648 = vunpack.c.l.b16 %v636
        %v4649 = vunpack.c.l.b16 %v637
        %v4650 = vunpack.c.l.b16 %v638
        %v4651 = vunpack.c.l.b16 %v639
        %v4652 = vunpack.c.l.b16 %v640
        %v4653 = vunpack.c.l.b16 %v641
        %v4654 = vunpack.c.l.b16 %v642
        %v4655 = vunpack.c.l.b16 %v643
        %v4656 = vunpack.c.l.b16 %v644
        %v4657 = vunpack.c.l.b16 %v645
        %v4658 = vunpack.c.l.b16 %v646
        %v4659 = vunpack.c.l.b16 %v647
        %v4660 = vunpack.c.l.b16 %v648
        %v4661 = vunpack.c.l.b16 %v649
        %v4662 = vunpack.c.l.b16 %v650
        %v4663 = vunpack.c.l.b16 %v651
        %v4664 = vunpack.c.l.b16 %v652
        %v4665 = vunpack.c.l.b16 %v653
        %v4666 = vunpack.c.l.b16 %v654
        %v4667 = vunpack.c.l.b16 %v655
        %v4668 = vunpack.c.l.b16 %v656
        %v4669 = vunpack.c.l.b16 %v657
        %v4670 = vunpack.c.l.b16 %v658
        %v4671 = vunpack.c.l.b16 %v659
        %v4672 = vunpack.c.l.b16 %v660
        %v4673 = vunpack.c.l.b16 %v661
        %v4674 = vunpack.c.l.b16 %v662
        %v4675 = vunpack.c.l.b16 %v663
        %v4676 = vunpack.c.l.b16 %v664
        %v4677 = vunpack.c.l.b16 %v665
        %v4678 = vunpack.c.l.b16 %v666
        %v4679 = vunpack.c.l.b16 %v667
        %v4680 = vunpack.c.l.b16 %v668
        %v4681 = vunpack.c.l.b16 %v669
        %v4682 = vunpack.c.l.b16 %v670
        %v4683 = vunpack.c.l.b16 %v671
        %v4684 = vunpack.c.l.b16 %v672
        %v4685 = vunpack.c.l.b16 %v673
        %v4686 = vunpack.c.l.b16 %v674
        %v4687 = vunpack.c.l.b16 %v675
        %v4688 = vunpack.c.l.b16 %v676
        %v4689 = vunpack.c.l.b16 %v677
        %v4690 = vunpack.c.l.b16 %v678
        %v4691 = vunpack.c.l.b16 %v679
        %v4692 = vunpack.c.l.b16 %v680
        %v4693 = vunpack.c.l.b16 %v681
        %v4694 = vunpack.c.l.b16 %v682
        %v4695 = vunpack.c.l.b16 %v683
        %v4696 = vunpack.c.l.b16 %v684
        %v4697 = vunpack.c.l.b16 %v685
        %v4698 = vunpack.c.l.b16 %v686
        %v4699 = vunpack.c.l.b16 %v687
        %v4700 = vunpack.c.l.b16 %v688
        %v4701 = vunpack.c.l.b16 %v689
        %v4702 = vunpack.c.l.b16 %v690
        %v4703 = vunpack.c.l.b16 %v691
        %v4704 = vunpack.c.l.b16 %v692
        %v4705 = vunpack.c.l.b16 %v693
        %v4706 = vunpack.c.l.b16 %v694
        %v4707 = vunpack.c.l.b16 %v695
        %v4708 = vunpack.c.l.b16 %v696
        %v4709 = vunpack.c.l.b16 %v697
        %v4710 = vunpack.c.l.b16 %v698
        %v4711 = vunpack.c.l.b16 %v699
        %v4712 = vunpack.c.l.b16 %v700
        %v4713 = vunpack.c.l.b16 %v701
        %v4714 = vunpack.c.l.b16 %v702
        %v4715 = vunpack.c.l.b16 %v703
        %v4716 = vunpack.c.l.b16 %v704
        %v4717 = vunpack.c.l.b16 %v705
        %v4718 = vunpack.c.l.b16 %v706
        %v4719 = vunpack.c.l.b16 %v707
        %v4720 = vunpack.c.l.b16 %v708
        %v4721 = vunpack.c.l.b16 %v709
        %v4722 = vunpack.c.l.b16 %v710
        %v4723 = vunpack.c.l.b16 %v711
        %v4724 = vunpack.c.l.b16 %v712
        %v4725 = vunpack.c.l.b16 %v713
        %v4726 = vunpack.c.l.b16 %v714
        %v4727 = vunpack.c.l.b16 %v715
        %v4728 = vunpack.c.l.b16 %v716
        %v4729 = vunpack.c.l.b16 %v717
        %v4730 = vunpack.c.l.b16 %v718
        %v4731 = vunpack.c.l.b16 %v719
        %v4732 = vunpack.c.l.b16 %v720
        %v4733 = vunpack.c.l.b16 %v721
        %v4734 = vunpack.c.l.b16 %v722
        %v4735 = vunpack.c.l.b16 %v723
        %v4736 = vunpack.c.l.b16 %v724
        %v4737 = vunpack.c.l.b16 %v725
        %v4738 = vunpack.c.l.b16 %v726
        %v4739 = vunpack.c.l.b16 %v727
        %v4740 = vunpack.c.l.b16 %v728
        %v4741 = vunpack.c.l.b16 %v729
        %v4742 = vunpack.c.l.b16 %v730
        %v4743 = vunpack.c.l.b16 %v731
        %v4744 = vunpack.c.l.b16 %v732
        %v4745 = vunpack.c.l.b16 %v733
        %v4746 = vunpack.c.l.b16 %v734
        %v4747 = vunpack.c.l.b16 %v735
        %v4748 = vunpack.c.l.b16 %v736
        %v4749 = vunpack.c.l.b16 %v737
        %v4750 = vunpack.c.l.b16 %v738
        %v4751 = vunpack.c.l.b16 %v739
        %v4752 = vunpack.c.l.b16 %v740
        %v4753 = vunpack.c.l.b16 %v741
        %v4754 = vunpack.c.l.b16 %v742
        %v4755 = vunpack.c.l.b16 %v743
        %v4756 = vunpack.c.l.b16 %v744
        %v4757 = vunpack.c.l.b16 %v745
        %v4758 = vunpack.c.l.b16 %v746
        %v4759 = vunpack.c.l.b16 %v747
        %v4760 = vunpack.c.l.b16 %v748
        %v4761 = vunpack.c.l.b16 %v749
        %v4762 = vunpack.c.l.b16 %v750
        %v4763 = vunpack.c.l.b16 %v751
        %v4764 = vunpack.c.l.b16 %v752
        %v4765 = vunpack.c.l.b16 %v753
        %v4766 = vunpack.c.l.b16 %v754
        %v4767 = vunpack.c.l.b16 %v755
        %v4768 = vunpack.c.l.b16 %v756
        %v4769 = vunpack.c.l.b16 %v757
        %v4770 = vunpack.c.l.b16 %v758
        %v4771 = vunpack.c.l.b16 %v759
        %v4772 = vunpack.c.l.b16 %v760
        %v4773 = vunpack.c.l.b16 %v761
        %v4774 = vunpack.c.l.b16 %v762
        %v4775 = vunpack.c.l.b16 %v763
        %v4776 = vunpack.c.l.b16 %v764
        %v4777 = vunpack.c.l.b16 %v765
        %v4778 = vunpack.c.l.b16 %v766
        %v4779 = vunpack.c.l.b16 %v767
        %v4780 = vunpack.c.l.b16 %v768
        %v4781 = vunpack.c.l.b16 %v769
        %v4782 = vunpack.c.l.b16 %v770
        %v4783 = vunpack.c.l.b16 %v771
        %v4784 = vunpack.c.l.b16 %v772
        %v4785 = vunpack.c.l.b16 %v773
        %v4786 = vunpack.c.l.b16 %v774
        %v4787 = vunpack.c.l.b16 %v775
        %v4788 = vunpack.c.l.b16 %v776
        %v4789 = vunpack.c.l.b16 %v777
        %v4790 = vunpack.c.l.b16 %v778
        %v4791 = vunpack.c.l.b16 %v779
        %v4792 = vunpack.c.l.b16 %v780
        %v4793 = vunpack.c.l.b16 %v781
        %v4794 = vunpack.c.l.b16 %v782
        %v4795 = vunpack.c.l.b16 %v783
        %v4796 = vunpack.c.l.b16 %v784
        %v4797 = vunpack.c.l.b16 %v785
        %v4798 = vunpack.c.l.b16 %v786
        %v4799 = vunpack.c.l.b16 %v787
        %v4800 = vunpack.c.l.b16 %v788
        %v4801 = vunpack.c.l.b16 %v789
        %v4802 = vunpack.c.l.b16 %v790
        %v4803 = vunpack.c.l.b16 %v791
        %v4804 = vunpack.c.l.b16 %v792
        %v4805 = vunpack.c.l.b16 %v793
        %v4806 = vunpack.c.l.b16 %v794
        %v4807 = vunpack.c.l.b16 %v795
        %v4808 = vunpack.c.l.b16 %v796
        %v4809 = vunpack.c.l.b16 %v797
        %v4810 = vunpack.c.l.b16 %v798
        %v4811 = vunpack.c.l.b16 %v799
        %v4812 = vunpack.c.l.b16 %v800
        %v4813 = vunpack.c.l.b16 %v801
        %v4814 = vunpack.c.l.b16 %v802
        %v4815 = vunpack.c.l.b16 %v803
        %v4816 = vunpack.c.l.b16 %v804
        %v4817 = vunpack.c.l.b16 %v805
        %v4818 = vunpack.c.l.b16 %v806
        %v4819 = vunpack.c.l.b16 %v807
        %v4820 = vunpack.c.l.b16 %v808
        %v4821 = vunpack.c.l.b16 %v809
        %v4822 = vunpack.c.l.b16 %v810
        %v4823 = vunpack.c.l.b16 %v811
        %v4824 = vunpack.c.l.b16 %v812
        %v4825 = vunpack.c.l.b16 %v813
        %v4826 = vunpack.c.l.b16 %v814
        %v4827 = vunpack.c.l.b16 %v815
        %v4828 = vunpack.c.l.b16 %v816
        %v4829 = vunpack.c.l.b16 %v817
        %v4830 = vunpack.c.l.b16 %v818
        %v4831 = vunpack.c.l.b16 %v819
        %v4832 = vunpack.c.l.b16 %v820
        %v4833 = vunpack.c.l.b16 %v821
        %v4834 = vunpack.c.l.b16 %v822
        %v4835 = vunpack.c.l.b16 %v823
        %v4836 = vunpack.c.l.b16 %v824
        %v4837 = vunpack.c.l.b16 %v825
        %v4838 = vunpack.c.l.b16 %v826
        %v4839 = vunpack.c.l.b16 %v827
        %v4840 = vunpack.c.l.b16 %v828
        %v4841 = vunpack.c.l.b16 %v829
        %v4842 = vunpack.c.l.b16 %v830
        %v4843 = vunpack.c.l.b16 %v831
        %v4844 = vunpack.c.l.b16 %v832
        %v4845 = vunpack.c.l.b16 %v833
        %v4846 = vunpack.c.l.b16 %v834
        %v4847 = vunpack.c.l.b16 %v835
        %v4848 = vunpack.c.l.b16 %v836
        %v4849 = vunpack.c.l.b16 %v837
        %v4850 = vunpack.c.l.b16 %v838
        %v4851 = vunpack.c.l.b16 %v839
        %v4852 = vunpack.c.l.b16 %v840
        %v4853 = vunpack.c.l.b16 %v841
        %v4854 = vunpack.c.l.b16 %v842
        %v4855 = vunpack.c.l.b16 %v843
        %v4856 = vunpack.c.l.b16 %v844
        %v4857 = vunpack.c.l.b16 %v845
        %v4858 = vunpack.c.l.b16 %v846
        %v4859 = vunpack.c.l.b16 %v847
        %v4860 = vunpack.c.l.b16 %v848
        %v4861 = vunpack.c.l.b16 %v849
        %v4862 = vunpack.c.l.b16 %v850
        %v4863 = vunpack.c.l.b16 %v851
        %v4864 = vunpack.c.l.b16 %v852
        %v4865 = vunpack.c.l.b16 %v853
        %v4866 = vunpack.c.l.b16 %v854
        %v4867 = vunpack.c.l.b16 %v855
        %v4868 = vunpack.c.l.b16 %v856
        %v4869 = vunpack.c.l.b16 %v857
        %v4870 = vunpack.c.l.b16 %v858
        %v4871 = vunpack.c.l.b16 %v859
        %v4872 = vunpack.c.l.b16 %v860
        %v4873 = vunpack.c.l.b16 %v861
        %v4874 = vunpack.c.l.b16 %v862
        %v4875 = vunpack.c.l.b16 %v863
        %v4876 = vunpack.c.l.b16 %v864
        %v4877 = vunpack.c.l.b16 %v865
        %v4878 = vunpack.c.l.b16 %v866
        %v4879 = vunpack.c.l.b16 %v867
        %v4880 = vunpack.c.l.b16 %v868
        %v4881 = vunpack.c.l.b16 %v869
        %v4882 = vunpack.c.l.b16 %v870
        %v4883 = vunpack.c.l.b16 %v871
        %v4884 = vunpack.c.l.b16 %v872
        %v4885 = vunpack.c.l.b16 %v873
        %v4886 = vunpack.c.l.b16 %v874
        %v4887 = vunpack.c.l.b16 %v875
        %v4888 = vunpack.c.l.b16 %v876
        %v4889 = vunpack.c.l.b16 %v877
        %v4890 = vunpack.c.l.b16 %v878
        %v4891 = vunpack.c.l.b16 %v879
        %v4892 = vunpack.c.l.b16 %v880
        %v4893 = vunpack.c.l.b16 %v881
        %v4894 = vunpack.c.l.b16 %v882
        %v4895 = vunpack.c.l.b16 %v883
        %v4896 = vunpack.c.l.b16 %v884
        %v4897 = vunpack.c.l.b16 %v885
        %v4898 = vunpack.c.l.b16 %v886
        %v4899 = vunpack.c.l.b16 %v887
        %v4900 = vunpack.c.l.b16 %v888
        %v4901 = vunpack.c.l.b16 %v889
        %v4902 = vunpack.c.l.b16 %v890
        %v4903 = vunpack.c.l.b16 %v891
        %v4904 = vunpack.c.l.b16 %v892
        %v4905 = vunpack.c.l.b16 %v893
        %v4906 = vunpack.c.l.b16 %v894
        %v4907 = vunpack.c.l.b16 %v895
        %v4908 = vunpack.c.l.b16 %v896
        %v4909 = vunpack.c.l.b16 %v897
        %v4910 = vunpack.c.l.b16 %v898
        %v4911 = vunpack.c.l.b16 %v899
        %v4912 = vunpack.c.l.b16 %v900
        %v4913 = vunpack.c.l.b16 %v901
        %v4914 = vunpack.c.l.b16 %v902
        %v4915 = vunpack.c.l.b16 %v903
        %v4916 = vunpack.c.l.b16 %v904
        %v4917 = vunpack.c.l.b16 %v905
        %v4918 = vunpack.c.l.b16 %v906
        %v4919 = vunpack.c.l.b16 %v907
        %v4920 = vunpack.c.l.b16 %v908
        %v4921 = vunpack.c.l.b16 %v909
        %v4922 = vunpack.c.l.b16 %v910
        %v4923 = vunpack.c.l.b16 %v911
        %v4924 = vunpack.c.l.b16 %v912
        %v4925 = vunpack.c.l.b16 %v913
        %v4926 = vunpack.c.l.b16 %v914
        %v4927 = vunpack.c.l.b16 %v915
        %v4928 = vunpack.c.l.b16 %v916
        %v4929 = vunpack.c.l.b16 %v917
        %v4930 = vunpack.c.l.b16 %v918
        %v4931 = vunpack.c.l.b16 %v919
        %v4932 = vunpack.c.l.b16 %v920
        %v4933 = vunpack.c.l.b16 %v921
        %v4934 = vunpack.c.l.b16 %v922
        %v4935 = vunpack.c.l.b16 %v923
        %v4936 = vunpack.c.l.b16 %v924
        %v4937 = vunpack.c.l.b16 %v925
        %v4938 = vunpack.c.l.b16 %v926
        %v4939 = vunpack.c.l.b16 %v927
        %v4940 = vunpack.c.l.b16 %v928
        %v4941 = vunpack.c.l.b16 %v929
        %v4942 = vunpack.c.l.b16 %v930
        %v4943 = vunpack.c.l.b16 %v931
        %v4944 = vunpack.c.l.b16 %v932
        %v4945 = vunpack.c.l.b16 %v933
        %v4946 = vunpack.c.l.b16 %v934
        %v4947 = vunpack.c.l.b16 %v935
        %v4948 = vunpack.c.l.b16 %v936
        %v4949 = vunpack.c.l.b16 %v937
        %v4950 = vunpack.c.l.b16 %v938
        %v4951 = vunpack.c.l.b16 %v939
        %v4952 = vunpack.c.l.b16 %v940
        %v4953 = vunpack.c.l.b16 %v941
        %v4954 = vunpack.c.l.b16 %v942
        %v4955 = vunpack.c.l.b16 %v943
        %v4956 = vunpack.c.l.b16 %v944
        %v4957 = vunpack.c.l.b16 %v945
        %v4958 = vunpack.c.l.b16 %v946
        %v4959 = vunpack.c.l.b16 %v947
        %v4960 = vunpack.c.l.b16 %v948
        %v4961 = vunpack.c.l.b16 %v949
        %v4962 = vunpack.c.l.b16 %v950
        %v4963 = vunpack.c.l.b16 %v951
        %v4964 = vunpack.c.l.b16 %v952
        %v4965 = vunpack.c.l.b16 %v953
        %v4966 = vunpack.c.l.b16 %v954
        %v4967 = vunpack.c.l.b16 %v955
        %v4968 = vunpack.c.l.b16 %v956
        %v4969 = vunpack.c.l.b16 %v957
        %v4970 = vunpack.c.l.b16 %v958
        %v4971 = vunpack.c.l.b16 %v959
        %v4972 = vunpack.c.l.b16 %v960
        %v4973 = vunpack.c.l.b16 %v961
        %v4974 = vunpack.c.l.b16 %v962
        %v4975 = vunpack.c.l.b16 %v963
        %v4976 = vunpack.c.l.b16 %v964
        %v4977 = vunpack.c.l.b16 %v965
        %v4978 = vunpack.c.l.b16 %v966
        %v4979 = vunpack.c.l.b16 %v967
        %v4980 = vunpack.c.l.b16 %v968
        %v4981 = vunpack.c.l.b16 %v969
        %v4982 = vunpack.c.l.b16 %v970
        %v4983 = vunpack.c.l.b16 %v971
        %v4984 = vunpack.c.l.b16 %v972
        %v4985 = vunpack.c.l.b16 %v973
        %v4986 = vunpack.c.l.b16 %v974
        %v4987 = vunpack.c.l.b16 %v975
        %v4988 = vunpack.c.l.b16 %v976
        %v4989 = vunpack.c.l.b16 %v977
        %v4990 = vunpack.c.l.b16 %v978
        %v4991 = vunpack.c.l.b16 %v979
        %v4992 = vunpack.c.l.b16 %v980
        %v4993 = vunpack.c.l.b16 %v981
        %v4994 = vunpack.c.l.b16 %v982
        %v4995 = vunpack.c.l.b16 %v983
        %v4996 = vunpack.c.l.b16 %v984
        %v4997 = vunpack.c.l.b16 %v985
        %v4998 = vunpack.c.l.b16 %v986
        %v4999 = vunpack.c.l.b16 %v987
        %v5000 = vunpack.c.l.b16 %v988
        %v5001 = vunpack.c.l.b16 %v989
        %v5002 = vunpack.c.l.b16 %v990
        %v5003 = vunpack.c.l.b16 %v991
        %v5004 = vunpack.c.l.b16 %v992
        %v5005 = vunpack.c.l.b16 %v993
        %v5006 = vunpack.c.l.b16 %v994
        %v5007 = vunpack.c.l.b16 %v995
        %v5008 = vunpack.c.l.b16 %v996
        %v5009 = vunpack.c.l.b16 %v997
        %v5010 = vunpack.c.l.b16 %v998
        %v5011 = vunpack.c.l.b16 %v999
        %v5012 = vunpack.c.l.b16 %v1000
        %v5013 = vunpack.c.l.b16 %v1001
        %v5014 = vunpack.c.l.b16 %v1002
        %v5015 = vunpack.c.l.b16 %v1003
        %v5016 = vunpack.c.l.b16 %v1004
        %v5017 = vunpack.c.l.b16 %v1005
        %v5018 = vunpack.c.l.b16 %v1006
        %v5019 = vunpack.c.l.b16 %v1007
        %v5020 = vunpack.c.l.b16 %v1008
        %v5021 = vunpack.c.l.b16 %v1009
        %v5022 = vunpack.c.l.b16 %v1010
        %v5023 = vunpack.c.l.b16 %v1011
        %v5024 = vunpack.c.l.b16 %v1012
        %v5025 = vunpack.c.l.b16 %v1013
        %v5026 = vunpack.c.l.b16 %v1014
        %v5027 = vunpack.c.l.b16 %v1015
        %v5028 = vunpack.c.l.b16 %v1016
        %v5029 = vunpack.c.l.b16 %v1017
        %v5030 = vunpack.c.l.b16 %v1018
        %v5031 = vunpack.c.l.b16 %v1019
        %v5032 = vunpack.c.l.b16 %v1020
        %v5033 = vunpack.c.l.b16 %v1021
        %v5034 = vunpack.c.l.b16 %v1022
        %v5035 = vunpack.c.l.b16 %v1023
        %v5036 = vunpack.c.l.b16 %v1024
        %v5037 = vunpack.c.l.b16 %v1025
        %v5038 = vunpack.c.l.b16 %v1026
        %v5039 = vunpack.c.l.b16 %v1027
        %v5040 = vunpack.c.l.b16 %v1028
        %v5041 = vunpack.c.l.b16 %v1029
        %v5042 = vunpack.c.l.b16 %v1030
        %v5043 = vunpack.c.l.b16 %v1031
        %v5044 = vunpack.c.l.b16 %v1032
        %v5045 = vunpack.c.l.b16 %v1033
        %v5046 = vunpack.c.l.b16 %v1034
        %v5047 = vunpack.c.l.b16 %v1035
        %v5048 = vunpack.c.l.b16 %v1036
        %v5049 = vunpack.c.l.b16 %v1037
        %v5050 = vunpack.c.l.b16 %v1038
        %v5051 = vunpack.c.l.b16 %v1039
        %v5052 = vunpack.c.l.b16 %v1040
        %v5053 = vunpack.c.l.b16 %v1041
        %v5054 = vunpack.c.l.b16 %v1042
        %v5055 = vunpack.c.l.b16 %v1043
        %v5056 = vunpack.c.l.b16 %v1044
        %v5057 = vunpack.c.l.b16 %v1045
        %v5058 = vunpack.c.l.b16 %v1046
        %v5059 = vunpack.c.l.b16 %v1047
        %v5060 = vunpack.c.l.b16 %v1048
        %v5061 = vunpack.c.l.b16 %v1049
        %v5062 = vunpack.c.l.b16 %v1050
        %v5063 = vunpack.c.l.b16 %v1051
        %v5064 = vunpack.c.l.b16 %v1052
        %v5065 = vunpack.c.l.b16 %v1053
        %v5066 = vunpack.c.l.b16 %v1054
        %v5067 = vunpack.c.l.b16 %v1055
        %v5068 = vunpack.c.l.b16 %v1056
        %v5069 = vunpack.c.l.b16 %v1057
        %v5070 = vunpack.c.l.b16 %v1058
        %v5071 = vunpack.c.l.b16 %v1059
        %v5072 = vunpack.c.l.b16 %v1060
        %v5073 = vunpack.c.l.b16 %v1061
        %v5074 = vunpack.c.l.b16 %v1062
        %v5075 = vunpack.c.l.b16 %v1063
        %v5076 = vunpack.c.l.b16 %v1064
        %v5077 = vunpack.c.l.b16 %v1065
        %v5078 = vunpack.c.l.b16 %v1066
        %v5079 = vunpack.c.l.b16 %v1067
        %v5080 = vunpack.c.l.b16 %v1068
        %v5081 = vunpack.c.l.b16 %v1069
        %v5082 = vunpack.c.l.b16 %v1070
        %v5083 = vunpack.c.l.b16 %v1071
        %v5084 = vunpack.c.l.b16 %v1072
        %v5085 = vunpack.c.l.b16 %v1073
        %v5086 = vunpack.c.l.b16 %v1074
        %v5087 = vunpack.c.l.b16 %v1075
        %v5088 = vunpack.c.l.b16 %v1076
        %v5089 = vunpack.c.l.b16 %v1077
        %v5090 = vunpack.c.l.b16 %v1078
        %v5091 = vunpack.c.l.b16 %v1079
        %v5092 = vunpack.c.l.b16 %v1080
        %v5093 = vunpack.c.l.b16 %v1081
        %v5094 = vunpack.c.l.b16 %v1082
        %v5095 = vunpack.c.l.b16 %v1083
        %v5096 = vunpack.c.l.b16 %v1084
        %v5097 = vunpack.c.l.b16 %v1085
        %v5098 = vunpack.c.l.b16 %v1086
        %v5099 = vunpack.c.l.b16 %v1087
        %v5100 = vunpack.c.l.b16 %v1088
        %v5101 = vunpack.c.l.b16 %v1089
        %v5102 = vunpack.c.l.b16 %v1090
        %v5103 = vunpack.c.l.b16 %v1091
        %v5104 = vunpack.c.l.b16 %v1092
        %v5105 = vunpack.c.l.b16 %v1093
        %v5106 = vunpack.c.l.b16 %v1094
        %v5107 = vunpack.c.l.b16 %v1095
        %v5108 = vunpack.c.l.b16 %v1096
        %v5109 = vunpack.c.l.b16 %v1097
        %v5110 = vunpack.c.l.b16 %v1098
        %v5111 = vunpack.c.l.b16 %v1099
        %v5112 = vunpack.c.l.b16 %v1100
        %v5113 = vunpack.c.l.b16 %v1101
        %v5114 = vunpack.c.l.b16 %v1102
        %v5115 = vunpack.c.l.b16 %v1103
        %v5116 = vunpack.c.l.b16 %v1104
        %v5117 = vunpack.c.l.b16 %v1105
        %v5118 = vunpack.c.l.b16 %v1106
        %v5119 = vunpack.c.l.b16 %v1107
        %v5120 = vunpack.c.l.b16 %v1108
        %v5121 = vunpack.c.l.b16 %v1109
        %v5122 = vunpack.c.l.b16 %v1110
        %v5123 = vunpack.c.l.b16 %v1111
        %v5124 = vunpack.c.l.b16 %v1112
        %v5125 = vunpack.c.l.b16 %v1113
        %v5126 = vunpack.c.l.b16 %v1114
        %v5127 = vunpack.c.l.b16 %v1115
        %v5128 = vunpack.c.l.b16 %v1116
        %v5129 = vunpack.c.l.b16 %v1117
        %v5130 = vunpack.c.l.b16 %v1118
        %v5131 = vunpack.c.l.b16 %v1119
        %v5132 = vunpack.c.l.b16 %v1120
        %v5133 = vunpack.c.l.b16 %v1121
        %v5134 = vunpack.c.l.b16 %v1122
        %v5135 = vunpack.c.l.b16 %v1123
        %v5136 = vunpack.c.l.b16 %v1124
        %v5137 = vunpack.c.l.b16 %v1125
        %v5138 = vunpack.c.l.b16 %v1126
        %v5139 = vunpack.c.l.b16 %v1127
        %v5140 = vunpack.c.l.b16 %v1128
        %v5141 = vunpack.c.l.b16 %v1129
        %v5142 = vunpack.c.l.b16 %v1130
        %v5143 = vunpack.c.l.b16 %v1131
        %v5144 = vunpack.c.l.b16 %v1132
        %v5145 = vunpack.c.l.b16 %v1133
        %v5146 = vunpack.c.l.b16 %v1134
        %v5147 = vunpack.c.l.b16 %v1135
        %v5148 = vunpack.c.l.b16 %v1136
        %v5149 = vunpack.c.l.b16 %v1137
        %v5150 = vunpack.c.l.b16 %v1138
        %v5151 = vunpack.c.l.b16 %v1139
        %v5152 = vunpack.c.l.b16 %v1140
        %v5153 = vunpack.c.l.b16 %v1141
        %v5154 = vunpack.c.l.b16 %v1142
        %v5155 = vunpack.c.l.b16 %v1143
        %v5156 = vunpack.c.l.b16 %v1144
        %v5157 = vunpack.c.l.b16 %v1145
        %v5158 = vunpack.c.l.b16 %v1146
        %v5159 = vunpack.c.l.b16 %v1147
        %v5160 = vunpack.c.l.b16 %v1148
        %v5161 = vunpack.c.l.b16 %v1149
        %v5162 = vunpack.c.l.b16 %v1150
        %v5163 = vunpack.c.l.b16 %v1151
        %v5164 = vunpack.c.l.b16 %v1152
        %v5165 = vunpack.c.l.b16 %v1153
        %v5166 = vunpack.c.l.b16 %v1154
        %v5167 = vunpack.c.l.b16 %v1155
        %v5168 = vunpack.c.l.b16 %v1156
        %v5169 = vunpack.c.l.b16 %v1157
        %v5170 = vunpack.c.l.b16 %v1158
        %v5171 = vunpack.c.l.b16 %v1159
        %v5172 = vunpack.c.l.b16 %v1160
        %v5173 = vunpack.c.l.b16 %v1161
        %v5174 = vunpack.c.l.b16 %v1162
        %v5175 = vunpack.c.l.b16 %v1163
        %v5176 = vunpack.c.l.b16 %v1164
        %v5177 = vunpack.c.l.b16 %v1165
        %v5178 = vunpack.c.l.b16 %v1166
        %v5179 = vunpack.c.l.b16 %v1167
        %v5180 = vunpack.c.l.b16 %v1168
        %v5181 = vunpack.c.l.b16 %v1169
        %v5182 = vunpack.c.l.b16 %v1170
        %v5183 = vunpack.c.l.b16 %v1171
        %v5184 = vunpack.c.l.b16 %v1172
        %v5185 = vunpack.c.l.b16 %v1173
        %v5186 = vunpack.c.l.b16 %v1174
        %v5187 = vunpack.c.l.b16 %v1175
        %v5188 = vunpack.c.l.b16 %v1176
        %v5189 = vunpack.c.l.b16 %v1177
        %v5190 = vunpack.c.l.b16 %v1178
        %v5191 = vunpack.c.l.b16 %v1179
        %v5192 = vunpack.c.l.b16 %v1180
        %v5193 = vunpack.c.l.b16 %v1181
        %v5194 = vunpack.c.l.b16 %v1182
        %v5195 = vunpack.c.l.b16 %v1183
        %v5196 = vunpack.c.l.b16 %v1184
        %v5197 = vunpack.c.l.b16 %v1185
        %v5198 = vunpack.c.l.b16 %v1186
        %v5199 = vunpack.c.l.b16 %v1187
        %v5200 = vunpack.c.l.b16 %v1188
        %v5201 = vunpack.c.l.b16 %v1189
        %v5202 = vunpack.c.l.b16 %v1190
        %v5203 = vunpack.c.l.b16 %v1191
        %v5204 = vunpack.c.l.b16 %v1192
        %v5205 = vunpack.c.l.b16 %v1193
        %v5206 = vunpack.c.l.b16 %v1194
        %v5207 = vunpack.c.l.b16 %v1195
        %v5208 = vunpack.c.l.b16 %v1196
        %v5209 = vunpack.c.l.b16 %v1197
        %v5210 = vunpack.c.l.b16 %v1198
        %v5211 = vunpack.c.l.b16 %v1199
        %v5212 = vunpack.c.l.b16 %v1200
        %v5213 = vunpack.c.l.b16 %v1201
        %v5214 = vunpack.c.l.b16 %v1202
        %v5215 = vunpack.c.l.b16 %v1203
        %v5216 = vunpack.c.l.b16 %v1204
        %v5217 = vunpack.c.l.b16 %v1205
        %v5218 = vunpack.c.l.b16 %v1206
        %v5219 = vunpack.c.l.b16 %v1207
        %v5220 = vunpack.c.l.b16 %v1208
        %v5221 = vunpack.c.l.b16 %v1209
        %v5222 = vunpack.c.l.b16 %v1210
        %v5223 = vunpack.c.l.b16 %v1211
        %v5224 = vunpack.c.l.b16 %v1212
        %v5225 = vunpack.c.l.b16 %v1213
        %v5226 = vunpack.c.l.b16 %v1214
        %v5227 = vunpack.c.l.b16 %v1215
        %v5228 = vunpack.c.l.b16 %v1216
        %v5229 = vunpack.c.l.b16 %v1217
        %v5230 = vunpack.c.l.b16 %v1218
        %v5231 = vunpack.c.l.b16 %v1219
        %v5232 = vunpack.c.l.b16 %v1220
        %v5233 = vunpack.c.l.b16 %v1221
        %v5234 = vunpack.c.l.b16 %v1222
        %v5235 = vunpack.c.l.b16 %v1223
        %v5236 = vunpack.c.l.b16 %v1224
        %v5237 = vunpack.c.l.b16 %v1225
        %v5238 = vunpack.c.l.b16 %v1226
        %v5239 = vunpack.c.l.b16 %v1227
        %v5240 = vunpack.c.l.b16 %v1228
        %v5241 = vunpack.c.l.b16 %v1229
        %v5242 = vunpack.c.l.b16 %v1230
        %v5243 = vunpack.c.l.b16 %v1231
        %v5244 = vunpack.c.l.b16 %v1232
        %v5245 = vunpack.c.l.b16 %v1233
        %v5246 = vunpack.c.l.b16 %v1234
        %v5247 = vunpack.c.l.b16 %v1235
        %v5248 = vunpack.c.l.b16 %v1236
        %v5249 = vunpack.c.l.b16 %v1237
        %v5250 = vunpack.c.l.b16 %v1238
        %v5251 = vunpack.c.l.b16 %v1239
        %v5252 = vunpack.c.l.b16 %v1240
        %v5253 = vunpack.c.l.b16 %v1241
        %v5254 = vunpack.c.l.b16 %v1242
        %v5255 = vunpack.c.l.b16 %v1243
        %v5256 = vunpack.c.l.b16 %v1244
        %v5257 = vunpack.c.l.b16 %v1245
        %v5258 = vunpack.c.l.b16 %v1246
        %v5259 = vunpack.c.l.b16 %v1247
        %v5260 = vunpack.c.l.b16 %v1248
        %v5261 = vunpack.c.l.b16 %v1249
        %v5262 = vunpack.c.l.b16 %v1250
        %v5263 = vunpack.c.l.b16 %v1251
        %v5264 = vunpack.c.l.b16 %v1252
        %v5265 = vunpack.c.l.b16 %v1253
        %v5266 = vunpack.c.l.b16 %v1254
        %v5267 = vunpack.c.l.b16 %v1255
        %v5268 = vunpack.c.l.b16 %v1256
        %v5269 = vunpack.c.l.b16 %v1257
        %v5270 = vunpack.c.l.b16 %v1258
        %v5271 = vunpack.c.l.b16 %v1259
        %v5272 = vunpack.c.l.b16 %v1260
        %v5273 = vunpack.c.l.b16 %v1261
        %v5274 = vunpack.c.l.b16 %v1262
        %v5275 = vunpack.c.l.b16 %v1263
        %v5276 = vunpack.c.l.b16 %v1264
        %v5277 = vunpack.c.l.b16 %v1265
        %v5278 = vunpack.c.l.b16 %v1266
        %v5279 = vunpack.c.l.b16 %v1267
        %v5280 = vunpack.c.l.b16 %v1268
        %v5281 = vunpack.c.l.b16 %v1269
        %v5282 = vunpack.c.l.b16 %v1270
        %v5283 = vunpack.c.l.b16 %v1271
        %v5284 = vunpack.c.l.b16 %v1272
        %v5285 = vunpack.c.l.b16 %v1273
        %v5286 = vunpack.c.l.b16 %v1274
        %v5287 = vunpack.c.l.b16 %v1275
        %v5288 = vunpack.c.l.b16 %v1276
        %v5289 = vunpack.c.l.b16 %v1277
        %v5290 = vunpack.c.l.b16 %v1278
        %v5291 = vunpack.c.l.b16 %v1279
        %v5292 = vunpack.c.l.b16 %v1280
        %v5293 = vunpack.c.l.b16 %v1281
        %v5294 = vunpack.c.l.b16 %v1282
        %v5295 = vunpack.c.l.b16 %v1283
        %v5296 = vunpack.c.l.b16 %v1284
        %v5297 = vunpack.c.l.b16 %v1285
        %v5298 = vunpack.c.l.b16 %v1286
        %v5299 = vunpack.c.l.b16 %v1287
        %v5300 = vunpack.c.l.b16 %v1288
        %v5301 = vunpack.c.l.b16 %v1289
        %v5302 = vunpack.c.l.b16 %v1290
        %v5303 = vunpack.c.l.b16 %v1291
        %v5304 = vunpack.c.l.b16 %v1292
        %v5305 = vunpack.c.l.b16 %v1293
        %v5306 = vunpack.c.l.b16 %v1294
        %v5307 = vunpack.c.l.b16 %v1295
        %v5308 = vunpack.c.l.b16 %v1296
        %v5309 = vunpack.c.l.b16 %v1297
        %v5310 = vunpack.c.l.b16 %v1298
        %v5311 = vunpack.c.l.b16 %v1299
        %v5312 = vunpack.c.l.b16 %v1300
        %v5313 = vunpack.c.l.b16 %v1301
        %v5314 = vunpack.c.l.b16 %v1302
        %v5315 = vunpack.c.l.b16 %v1303
        %v5316 = vunpack.c.l.b16 %v1304
        %v5317 = vunpack.c.l.b16 %v1305
        %v5318 = vunpack.c.l.b16 %v1306
        %v5319 = vunpack.c.l.b16 %v1307
        %v5320 = vunpack.c.l.b16 %v1308
        %v5321 = vunpack.c.l.b16 %v1309
        %v5322 = vunpack.c.l.b16 %v1310
        %v5323 = vunpack.c.l.b16 %v1311
        %v5324 = vunpack.c.l.b16 %v1312
        %v5325 = vunpack.c.l.b16 %v1313
        %v5326 = vunpack.c.l.b16 %v1314
        %v5327 = vunpack.c.l.b16 %v1315
        %v5328 = vunpack.c.l.b16 %v1316
        %v5329 = vunpack.c.l.b16 %v1317
        %v5330 = vunpack.c.l.b16 %v1318
        %v5331 = vunpack.c.l.b16 %v1319
        %v5332 = vunpack.c.l.b16 %v1320
        %v5333 = vunpack.c.l.b16 %v1321
        %v5334 = vunpack.c.l.b16 %v1322
        %v5335 = vunpack.c.l.b16 %v1323
        %v5336 = vunpack.c.l.b16 %v1324
        %v5337 = vunpack.c.l.b16 %v1325
        %v5338 = vunpack.c.l.b16 %v1326
        %v5339 = vunpack.c.l.b16 %v1327
        %v5340 = vunpack.c.l.b16 %v1328
        %v5341 = vunpack.c.l.b16 %v1329
        %v5342 = vunpack.c.l.b16 %v1330
        %v5343 = vunpack.c.l.b16 %v1331
        %v5344 = vunpack.c.l.b16 %v1332
        %v5345 = vunpack.c.l.b16 %v1333
        %v5346 = vunpack.c.l.b16 %v1334
        %v5347 = vunpack.c.l.b16 %v1335
        %v5348 = vunpack.c.l.b16 %v1336
        %v5349 = vunpack.c.l.b16 %v1337
        %v5350 = vunpack.c.l.b16 %v1338
        %v5351 = vunpack.c.l.b16 %v1339
        %v5352 = vunpack.c.l.b16 %v1340
        %v5353 = vunpack.c.l.b16 %v1341
        %v5354 = vunpack.c.l.b16 %v1342
        %v5355 = vunpack.c.l.b16 %v1343
        %v5356 = vunpack.c.l.b16 %v1344
        %v5357 = vunpack.c.l.b16 %v1345
        %v5358 = vunpack.c.l.b16 %v1346
        %v5359 = vunpack.c.l.b16 %v1347
        %v5360 = vunpack.c.l.b16 %v1348
        %v5361 = vunpack.c.l.b16 %v1349
        %v5362 = vunpack.c.l.b16 %v1350
        %v5363 = vunpack.c.l.b16 %v1351
        %v5364 = vunpack.c.l.b16 %v1352
        %v5365 = vunpack.c.l.b16 %v1353
        %v5366 = vunpack.c.l.b16 %v1354
        %v5367 = vunpack.c.l.b16 %v1355
        %v5368 = vunpack.c.l.b16 %v1356
        %v5369 = vunpack.c.l.b16 %v1357
        %v5370 = vunpack.c.l.b16 %v1358
        %v5371 = vunpack.c.l.b16 %v1359
        %v5372 = vunpack.c.l.b16 %v1360
        %v5373 = vunpack.c.l.b16 %v1361
        %v5374 = vunpack.c.l.b16 %v1362
        %v5375 = vunpack.c.l.b16 %v1363
        %v5376 = vunpack.c.l.b16 %v1364
        %v5377 = vunpack.c.l.b16 %v1365
        %v5378 = vunpack.c.l.b16 %v1366
        %v5379 = vunpack.c.l.b16 %v1367
        %v5380 = vunpack.c.l.b16 %v1368
        %v5381 = vunpack.c.l.b16 %v1369
        %v5382 = vunpack.c.l.b16 %v1370
        %v5383 = vunpack.c.l.b16 %v1371
        %v5384 = vunpack.c.l.b16 %v1372
        %v5385 = vunpack.c.l.b16 %v1373
        %v5386 = vunpack.c.l.b16 %v1374
        %v5387 = vunpack.c.l.b16 %v1375
        %v5388 = vunpack.c.l.b16 %v1376
        %v5389 = vunpack.c.l.b16 %v1377
        %v5390 = vunpack.c.l.b16 %v1378
        %v5391 = vunpack.c.l.b16 %v1379
        %v5392 = vunpack.c.l.b16 %v1380
        %v5393 = vunpack.c.l.b16 %v1381
        %v5394 = vunpack.c.l.b16 %v1382
        %v5395 = vunpack.c.l.b16 %v1383
        %v5396 = vunpack.c.l.b16 %v1384
        %v5397 = vunpack.c.l.b16 %v1385
        %v5398 = vunpack.c.l.b16 %v1386
        %v5399 = vunpack.c.l.b16 %v1387
        %v5400 = vunpack.c.l.b16 %v1388
        %v5401 = vunpack.c.l.b16 %v1389
        %v5402 = vunpack.c.l.b16 %v1390
        %v5403 = vunpack.c.l.b16 %v1391
        %v5404 = vunpack.c.l.b16 %v1392
        %v5405 = vunpack.c.l.b16 %v1393
        %v5406 = vunpack.c.l.b16 %v1394
        %v5407 = vunpack.c.l.b16 %v1395
        %v5408 = vunpack.c.l.b16 %v1396
        %v5409 = vunpack.c.l.b16 %v1397
        %v5410 = vunpack.c.l.b16 %v1398
        %v5411 = vunpack.c.l.b16 %v1399
        %v5412 = vunpack.c.l.b16 %v1400
        %v5413 = vunpack.c.l.b16 %v1401
        %v5414 = vunpack.c.l.b16 %v1402
        %v5415 = vunpack.c.l.b16 %v1403
        %v5416 = vunpack.c.l.b16 %v1404
        %v5417 = vunpack.c.l.b16 %v1405
        %v5418 = vunpack.c.l.b16 %v1406
        %v5419 = vunpack.c.l.b16 %v1407
        %v5420 = vunpack.c.l.b16 %v1408
        %v5421 = vunpack.c.l.b16 %v1409
        %v5422 = vunpack.c.l.b16 %v1410
        %v5423 = vunpack.c.l.b16 %v1411
        %v5424 = vunpack.c.l.b16 %v1412
        %v5425 = vunpack.c.l.b16 %v1413
        %v5426 = vunpack.c.l.b16 %v1414
        %v5427 = vunpack.c.l.b16 %v1415
        %v5428 = vunpack.c.l.b16 %v1416
        %v5429 = vunpack.c.l.b16 %v1417
        %v5430 = vunpack.c.l.b16 %v1418
        %v5431 = vunpack.c.l.b16 %v1419
        %v5432 = vunpack.c.l.b16 %v1420
        %v5433 = vunpack.c.l.b16 %v1421
        %v5434 = vunpack.c.l.b16 %v1422
        %v5435 = vunpack.c.l.b16 %v1423
        %v5436 = vunpack.c.l.b16 %v1424
        %v5437 = vunpack.c.l.b16 %v1425
        %v5438 = vunpack.c.l.b16 %v1426
        %v5439 = vunpack.c.l.b16 %v1427
        %v5440 = vunpack.c.l.b16 %v1428
        %v5441 = vunpack.c.l.b16 %v1429
        %v5442 = vunpack.c.l.b16 %v1430
        %v5443 = vunpack.c.l.b16 %v1431
        %v5444 = vunpack.c.l.b16 %v1432
        %v5445 = vunpack.c.l.b16 %v1433
        %v5446 = vunpack.c.l.b16 %v1434
        %v5447 = vunpack.c.l.b16 %v1435
        %v5448 = vunpack.c.l.b16 %v1436
        %v5449 = vunpack.c.l.b16 %v1437
        %v5450 = vunpack.c.l.b16 %v1438
        %v5451 = vunpack.c.l.b16 %v1439
        %v5452 = vunpack.c.l.b16 %v1440
        %v5453 = vunpack.c.l.b16 %v1441
        %v5454 = vunpack.c.l.b16 %v1442
        %v5455 = vunpack.c.l.b16 %v1443
        %v5456 = vunpack.c.l.b16 %v1444
        %v5457 = vunpack.c.l.b16 %v1445
        %v5458 = vunpack.c.l.b16 %v1446
        %v5459 = vunpack.c.l.b16 %v1447
        %v5460 = vunpack.c.l.b16 %v1448
        %v5461 = vunpack.c.l.b16 %v1449
        %v5462 = vunpack.c.l.b16 %v1450
        %v5463 = vunpack.c.l.b16 %v1451
        %v5464 = vunpack.c.l.b16 %v1452
        %v5465 = vunpack.c.l.b16 %v1453
        %v5466 = vunpack.c.l.b16 %v1454
        %v5467 = vunpack.c.l.b16 %v1455
        %v5468 = vunpack.c.l.b16 %v1456
        %v5469 = vunpack.c.l.b16 %v1457
        %v5470 = vunpack.c.l.b16 %v1458
        %v5471 = vunpack.c.l.b16 %v1459
        %v5472 = vunpack.c.l.b16 %v1460
        %v5473 = vunpack.c.l.b16 %v1461
        %v5474 = vunpack.c.l.b16 %v1462
        %v5475 = vunpack.c.l.b16 %v1463
        %v5476 = vunpack.c.l.b16 %v1464
        %v5477 = vunpack.c.l.b16 %v1465
        %v5478 = vunpack.c.l.b16 %v1466
        %v5479 = vunpack.c.l.b16 %v1467
        %v5480 = vunpack.c.l.b16 %v1468
        %v5481 = vunpack.c.l.b16 %v1469
        %v5482 = vunpack.c.l.b16 %v1470
        %v5483 = vunpack.c.l.b16 %v1471
        %v5484 = vunpack.c.l.b16 %v1472
        %v5485 = vunpack.c.l.b16 %v1473
        %v5486 = vunpack.c.l.b16 %v1474
        %v5487 = vunpack.c.l.b16 %v1475
        %v5488 = vunpack.c.l.b16 %v1476
        %v5489 = vunpack.c.l.b16 %v1477
        %v5490 = vunpack.c.l.b16 %v1478
        %v5491 = vunpack.c.l.b16 %v1479
        %v5492 = vunpack.c.l.b16 %v1480
        %v5493 = vunpack.c.l.b16 %v1481
        %v5494 = vunpack.c.l.b16 %v1482
        %v5495 = vunpack.c.l.b16 %v1483
        %v5496 = vunpack.c.l.b16 %v1484
        %v5497 = vunpack.c.l.b16 %v1485
        %v5498 = vunpack.c.l.b16 %v1486
        %v5499 = vunpack.c.l.b16 %v1487
        %v5500 = vunpack.c.l.b16 %v1488
        %v5501 = vunpack.c.l.b16 %v1489
        %v5502 = vunpack.c.l.b16 %v1490
        %v5503 = vunpack.c.l.b16 %v1491
        %v5504 = vunpack.c.l.b16 %v1492
        %v5505 = vunpack.c.l.b16 %v1493
        %v5506 = vunpack.c.l.b16 %v1494
        %v5507 = vunpack.c.l.b16 %v1495
        %v5508 = vunpack.c.l.b16 %v1496
        %v5509 = vunpack.c.l.b16 %v1497
        %v5510 = vunpack.c.l.b16 %v1498
        %v5511 = vunpack.c.l.b16 %v1499
        %v5512 = vunpack.c.l.b16 %v1500
        %v5513 = vunpack.c.l.b16 %v1501
        %v5514 = vunpack.c.l.b16 %v1502
        %v5515 = vunpack.c.l.b16 %v1503
        %v5516 = vunpack.c.l.b16 %v1504
        %v5517 = vunpack.c.l.b16 %v1505
        %v5518 = vunpack.c.l.b16 %v1506
        %v5519 = vunpack.c.l.b16 %v1507
        %v5520 = vunpack.c.l.b16 %v1508
        %v5521 = vunpack.c.l.b16 %v1509
        %v5522 = vunpack.c.l.b16 %v1510
        %v5523 = vunpack.c.l.b16 %v1511
        %v5524 = vunpack.c.l.b16 %v1512
        %v5525 = vunpack.c.l.b16 %v1513
        %v5526 = vunpack.c.l.b16 %v1514
        %v5527 = vunpack.c.l.b16 %v1515
        %v5528 = vunpack.c.l.b16 %v1516
        %v5529 = vunpack.c.l.b16 %v1517
        %v5530 = vunpack.c.l.b16 %v1518
        %v5531 = vunpack.c.l.b16 %v1519
        %v5532 = vunpack.c.l.b16 %v1520
        %v5533 = vunpack.c.l.b16 %v1521
        %v5534 = vunpack.c.l.b16 %v1522
        %v5535 = vunpack.c.l.b16 %v1523
        %v5536 = vunpack.c.l.b16 %v1524
        %v5537 = vunpack.c.l.b16 %v1525
        %v5538 = vunpack.c.l.b16 %v1526
        %v5539 = vunpack.c.l.b16 %v1527
        %v5540 = vunpack.c.l.b16 %v1528
        %v5541 = vunpack.c.l.b16 %v1529
        %v5542 = vunpack.c.l.b16 %v1530
        %v5543 = vunpack.c.l.b16 %v1531
        %v5544 = vunpack.c.l.b16 %v1532
        %v5545 = vunpack.c.l.b16 %v1533
        %v5546 = vunpack.c.l.b16 %v1534
        %v5547 = vunpack.c.l.b16 %v1535
        %v5548 = vunpack.c.l.b16 %v1536
        %v5549 = vunpack.c.l.b16 %v1537
        %v5550 = vunpack.c.l.b16 %v1538
        %v5551 = vunpack.c.l.b16 %v1539
        %v5552 = vunpack.c.l.b16 %v1540
        %v5553 = vunpack.c.l.b16 %v1541
        %v5554 = vunpack.c.l.b16 %v1542
        %v5555 = vunpack.c.l.b16 %v1543
        %v5556 = vunpack.c.l.b16 %v1544
        %v5557 = vunpack.c.l.b16 %v1545
        %v5558 = vunpack.c.l.b16 %v1546
        %v5559 = vunpack.c.l.b16 %v1547
        %v5560 = vunpack.c.l.b16 %v1548
        %v5561 = vunpack.c.l.b16 %v1549
        %v5562 = vunpack.c.l.b16 %v1550
        %v5563 = vunpack.c.l.b16 %v1551
        %v5564 = vunpack.c.l.b16 %v1552
        %v5565 = vunpack.c.l.b16 %v1553
        %v5566 = vunpack.c.l.b16 %v1554
        %v5567 = vunpack.c.l.b16 %v1555
        %v5568 = vunpack.c.l.b16 %v1556
        %v5569 = vunpack.c.l.b16 %v1557
        %v5570 = vunpack.c.l.b16 %v1558
        %v5571 = vunpack.c.l.b16 %v1559
        %v5572 = vunpack.c.l.b16 %v1560
        %v5573 = vunpack.c.l.b16 %v1561
        %v5574 = vunpack.c.l.b16 %v1562
        %v5575 = vunpack.c.l.b16 %v1563
        %v5576 = vunpack.c.l.b16 %v1564
        %v5577 = vunpack.c.l.b16 %v1565
        %v5578 = vunpack.c.l.b16 %v1566
        %v5579 = vunpack.c.l.b16 %v1567
        %v5580 = vunpack.c.l.b16 %v1568
        %v5581 = vunpack.c.l.b16 %v1569
        %v5582 = vunpack.c.l.b16 %v1570
        %v5583 = vunpack.c.l.b16 %v1571
        %v5584 = vunpack.c.l.b16 %v1572
        %v5585 = vunpack.c.l.b16 %v1573
        %v5586 = vunpack.c.l.b16 %v1574
        %v5587 = vunpack.c.l.b16 %v1575
        %v5588 = vunpack.c.l.b16 %v1576
        %v5589 = vunpack.c.l.b16 %v1577
        %v5590 = vunpack.c.l.b16 %v1578
        %v5591 = vunpack.c.l.b16 %v1579
        %v5592 = vunpack.c.l.b16 %v1580
        %v5593 = vunpack.c.l.b16 %v1581
        %v5594 = vunpack.c.l.b16 %v1582
        %v5595 = vunpack.c.l.b16 %v1583
        %v5596 = vunpack.c.l.b16 %v1584
        %v5597 = vunpack.c.l.b16 %v1585
        %v5598 = vunpack.c.l.b16 %v1586
        %v5599 = vunpack.c.l.b16 %v1587
        %v5600 = vunpack.c.l.b16 %v1588
        %v5601 = vunpack.c.l.b16 %v1589
        %v5602 = vunpack.c.l.b16 %v1590
        %v5603 = vunpack.c.l.b16 %v1591
        %v5604 = vunpack.c.l.b16 %v1592
        %v5605 = vunpack.c.l.b16 %v1593
        %v5606 = vunpack.c.l.b16 %v1594
        %v5607 = vunpack.c.l.b16 %v1595
        %v5608 = vunpack.c.l.b16 %v1596
        %v5609 = vunpack.c.l.b16 %v1597
        %v5610 = vunpack.c.l.b16 %v1598
        %v5611 = vunpack.c.l.b16 %v1599
        %v5612 = vunpack.c.l.b16 %v1600
        %v5613 = vunpack.c.l.b16 %v1601
        %v5614 = vunpack.c.l.b16 %v1602
        %v5615 = vunpack.c.l.b16 %v1603
        %v5616 = vunpack.c.l.b16 %v1604
        %v5617 = vunpack.c.l.b16 %v1605
        %v5618 = vunpack.c.l.b16 %v1606
        %v5619 = vunpack.c.l.b16 %v1607
        %v5620 = vunpack.c.l.b16 %v1608
        %v5621 = vunpack.c.l.b16 %v1609
        %v5622 = vunpack.c.l.b16 %v1610
        %v5623 = vunpack.c.l.b16 %v1611
        %v5624 = vunpack.c.l.b16 %v1612
        %v5625 = vunpack.c.l.b16 %v1613
        %v5626 = vunpack.c.l.b16 %v1614
        %v5627 = vunpack.c.l.b16 %v1615
        %v5628 = vunpack.c.l.b16 %v1616
        %v5629 = vunpack.c.l.b16 %v1617
        %v5630 = vunpack.c.l.b16 %v1618
        %v5631 = vunpack.c.l.b16 %v1619
        %v5632 = vunpack.c.l.b16 %v1620
        %v5633 = vunpack.c.l.b16 %v1621
        %v5634 = vunpack.c.l.b16 %v1622
        %v5635 = vunpack.c.l.b16 %v1623
        %v5636 = vunpack.c.l.b16 %v1624
        %v5637 = vunpack.c.l.b16 %v1625
        %v5638 = vunpack.c.l.b16 %v1626
        %v5639 = vunpack.c.l.b16 %v1627
        %v5640 = vunpack.c.l.b16 %v1628
        %v5641 = vunpack.c.l.b16 %v1629
        %v5642 = vunpack.c.l.b16 %v1630
        %v5643 = vunpack.c.l.b16 %v1631
        %v5644 = vunpack.c.l.b16 %v1632
        %v5645 = vunpack.c.l.b16 %v1633
        %v5646 = vunpack.c.l.b16 %v1634
        %v5647 = vunpack.c.l.b16 %v1635
        %v5648 = vunpack.c.l.b16 %v1636
        %v5649 = vunpack.c.l.b16 %v1637
        %v5650 = vunpack.c.l.b16 %v1638
        %v5651 = vunpack.c.l.b16 %v1639
        %v5652 = vunpack.c.l.b16 %v1640
        %v5653 = vunpack.c.l.b16 %v1641
        %v5654 = vunpack.c.l.b16 %v1642
        %v5655 = vunpack.c.l.b16 %v1643
        %v5656 = vunpack.c.l.b16 %v1644
        %v5657 = vunpack.c.l.b16 %v1645
        %v5658 = vunpack.c.l.b16 %v1646
        %v5659 = vunpack.c.l.b16 %v1647
        %v5660 = vunpack.c.l.b16 %v1648
        %v5661 = vunpack.c.l.b16 %v1649
        %v5662 = vunpack.c.l.b16 %v1650
        %v5663 = vunpack.c.l.b16 %v1651
        %v5664 = vunpack.c.l.b16 %v1652
        %v5665 = vunpack.c.l.b16 %v1653
        %v5666 = vunpack.c.l.b16 %v1654
        %v5667 = vunpack.c.l.b16 %v1655
        %v5668 = vunpack.c.l.b16 %v1656
        %v5669 = vunpack.c.l.b16 %v1657
        %v5670 = vunpack.c.l.b16 %v1658
        %v5671 = vunpack.c.l.b16 %v1659
        %v5672 = vunpack.c.l.b16 %v1660
        %v5673 = vunpack.c.l.b16 %v1661
        %v5674 = vunpack.c.l.b16 %v1662
        %v5675 = vunpack.c.l.b16 %v1663
        %v5676 = vunpack.c.l.b16 %v1664
        %v5677 = vunpack.c.l.b16 %v1665
        %v5678 = vunpack.c.l.b16 %v1666
        %v5679 = vunpack.c.l.b16 %v1667
        %v5680 = vunpack.c.l.b16 %v1668
        %v5681 = vunpack.c.l.b16 %v1669
        %v5682 = vunpack.c.l.b16 %v1670
        %v5683 = vunpack.c.l.b16 %v1671
        %v5684 = vunpack.c.l.b16 %v1672
        %v5685 = vunpack.c.l.b16 %v1673
        %v5686 = vunpack.c.l.b16 %v1674
        %v5687 = vunpack.c.l.b16 %v1675
        %v5688 = vunpack.c.l.b16 %v1676
        %v5689 = vunpack.c.l.b16 %v1677
        %v5690 = vunpack.c.l.b16 %v1678
        %v5691 = vunpack.c.l.b16 %v1679
        %v5692 = vunpack.c.l.b16 %v1680
        %v5693 = vunpack.c.l.b16 %v1681
        %v5694 = vunpack.c.l.b16 %v1682
        %v5695 = vunpack.c.l.b16 %v1683
        %v5696 = vunpack.c.l.b16 %v1684
        %v5697 = vunpack.c.l.b16 %v1685
        %v5698 = vunpack.c.l.b16 %v1686
        %v5699 = vunpack.c.l.b16 %v1687
        %v5700 = vunpack.c.l.b16 %v1688
        %v5701 = vunpack.c.l.b16 %v1689
        %v5702 = vunpack.c.l.b16 %v1690
        %v5703 = vunpack.c.l.b16 %v1691
        %v5704 = vunpack.c.l.b16 %v1692
        %v5705 = vunpack.c.l.b16 %v1693
        %v5706 = vunpack.c.l.b16 %v1694
        %v5707 = vunpack.c.l.b16 %v1695
        %v5708 = vunpack.c.l.b16 %v1696
        %v5709 = vunpack.c.l.b16 %v1697
        %v5710 = vunpack.c.l.b16 %v1698
        %v5711 = vunpack.c.l.b16 %v1699
        %v5712 = vunpack.c.l.b16 %v1700
        %v5713 = vunpack.c.l.b16 %v1701
        %v5714 = vunpack.c.l.b16 %v1702
        %v5715 = vunpack.c.l.b16 %v1703
        %v5716 = vunpack.c.l.b16 %v1704
        %v5717 = vunpack.c.l.b16 %v1705
        %v5718 = vunpack.c.l.b16 %v1706
        %v5719 = vunpack.c.l.b16 %v1707
        %v5720 = vunpack.c.l.b16 %v1708
        %v5721 = vunpack.c.l.b16 %v1709
        %v5722 = vunpack.c.l.b16 %v1710
        %v5723 = vunpack.c.l.b16 %v1711
        %v5724 = vunpack.c.l.b16 %v1712
        %v5725 = vunpack.c.l.b16 %v1713
        %v5726 = vunpack.c.l.b16 %v1714
        %v5727 = vunpack.c.l.b16 %v1715
        %v5728 = vunpack.c.l.b16 %v1716
        %v5729 = vunpack.c.l.b16 %v1717
        %v5730 = vunpack.c.l.b16 %v1718
        %v5731 = vunpack.c.l.b16 %v1719
        %v5732 = vunpack.c.l.b16 %v1720
        %v5733 = vunpack.c.l.b16 %v1721
        %v5734 = vunpack.c.l.b16 %v1722
        %v5735 = vunpack.c.l.b16 %v1723
        %v5736 = vunpack.c.l.b16 %v1724
        %v5737 = vunpack.c.l.b16 %v1725
        %v5738 = vunpack.c.l.b16 %v1726
        %v5739 = vunpack.c.l.b16 %v1727
        %v5740 = vunpack.c.l.b16 %v1728
        %v5741 = vunpack.c.l.b16 %v1729
        %v5742 = vunpack.c.l.b16 %v1730
        %v5743 = vunpack.c.l.b16 %v1731
        %v5744 = vunpack.c.l.b16 %v1732
        %v5745 = vunpack.c.l.b16 %v1733
        %v5746 = vunpack.c.l.b16 %v1734
        %v5747 = vunpack.c.l.b16 %v1735
        %v5748 = vunpack.c.l.b16 %v1736
        %v5749 = vunpack.c.l.b16 %v1737
        %v5750 = vunpack.c.l.b16 %v1738
        %v5751 = vunpack.c.l.b16 %v1739
        %v5752 = vunpack.c.l.b16 %v1740
        %v5753 = vunpack.c.l.b16 %v1741
        %v5754 = vunpack.c.l.b16 %v1742
        %v5755 = vunpack.c.l.b16 %v1743
        %v5756 = vunpack.c.l.b16 %v1744
        %v5757 = vunpack.c.l.b16 %v1745
        %v5758 = vunpack.c.l.b16 %v1746
        %v5759 = vunpack.c.l.b16 %v1747
        %v5760 = vunpack.c.l.b16 %v1748
        %v5761 = vunpack.c.l.b16 %v1749
        %v5762 = vunpack.c.l.b16 %v1750
        %v5763 = vunpack.c.l.b16 %v1751
        %v5764 = vunpack.c.l.b16 %v1752
        %v5765 = vunpack.c.l.b16 %v1753
        %v5766 = vunpack.c.l.b16 %v1754
        %v5767 = vunpack.c.l.b16 %v1755
        %v5768 = vunpack.c.l.b16 %v1756
        %v5769 = vunpack.c.l.b16 %v1757
        %v5770 = vunpack.c.l.b16 %v1758
        %v5771 = vunpack.c.l.b16 %v1759
        %v5772 = vunpack.c.l.b16 %v1760
        %v5773 = vunpack.c.l.b16 %v1761
        %v5774 = vunpack.c.l.b16 %v1762
        %v5775 = vunpack.c.l.b16 %v1763
        %v5776 = vunpack.c.l.b16 %v1764
        %v5777 = vunpack.c.l.b16 %v1765
        %v5778 = vunpack.c.l.b16 %v1766
        %v5779 = vunpack.c.l.b16 %v1767
        %v5780 = vunpack.c.l.b16 %v1768
        %v5781 = vunpack.c.l.b16 %v1769
        %v5782 = vunpack.c.l.b16 %v1770
        %v5783 = vunpack.c.l.b16 %v1771
        %v5784 = vunpack.c.l.b16 %v1772
        %v5785 = vunpack.c.l.b16 %v1773
        %v5786 = vunpack.c.l.b16 %v1774
        %v5787 = vunpack.c.l.b16 %v1775
        %v5788 = vunpack.c.l.b16 %v1776
        %v5789 = vunpack.c.l.b16 %v1777
        %v5790 = vunpack.c.l.b16 %v1778
        %v5791 = vunpack.c.l.b16 %v1779
        %v5792 = vunpack.c.l.b16 %v1780
        %v5793 = vunpack.c.l.b16 %v1781
        %v5794 = vunpack.c.l.b16 %v1782
        %v5795 = vunpack.c.l.b16 %v1783
        %v5796 = vunpack.c.l.b16 %v1784
        %v5797 = vunpack.c.l.b16 %v1785
        %v5798 = vunpack.c.l.b16 %v1786
        %v5799 = vunpack.c.l.b16 %v1787
        %v5800 = vunpack.c.l.b16 %v1788
        %v5801 = vunpack.c.l.b16 %v1789
        %v5802 = vunpack.c.l.b16 %v1790
        %v5803 = vunpack.c.l.b16 %v1791
        %v5804 = vunpack.c.l.b16 %v1792
        %v5805 = vunpack.c.l.b16 %v1793
        %v5806 = vunpack.c.l.b16 %v1794
        %v5807 = vunpack.c.l.b16 %v1795
        %v5808 = vunpack.c.l.b16 %v1796
        %v5809 = vunpack.c.l.b16 %v1797
        %v5810 = vunpack.c.l.b16 %v1798
        %v5811 = vunpack.c.l.b16 %v1799
        %v5812 = vunpack.c.l.b16 %v1800
        %v5813 = vunpack.c.l.b16 %v1801
        %v5814 = vunpack.c.l.b16 %v1802
        %v5815 = vunpack.c.l.b16 %v1803
        %v5816 = vunpack.c.l.b16 %v1804
        %v5817 = vunpack.c.l.b16 %v1805
        %v5818 = vunpack.c.l.b16 %v1806
        %v5819 = vunpack.c.l.b16 %v1807
        %v5820 = vunpack.c.l.b16 %v1808
        %v5821 = vunpack.c.l.b16 %v1809
        %v5822 = vunpack.c.l.b16 %v1810
        %v5823 = vunpack.c.l.b16 %v1811
        %v5824 = vunpack.c.l.b16 %v1812
        %v5825 = vunpack.c.l.b16 %v1813
        %v5826 = vunpack.c.l.b16 %v1814
        %v5827 = vunpack.c.l.b16 %v1815
        %v5828 = vunpack.c.l.b16 %v1816
        %v5829 = vunpack.c.l.b16 %v1817
        %v5830 = vunpack.c.l.b16 %v1818
        %v5831 = vunpack.c.l.b16 %v1819
        %v5832 = vunpack.c.l.b16 %v1820
        %v5833 = vunpack.c.l.b16 %v1821
        %v5834 = vunpack.c.l.b16 %v1822
        %v5835 = vunpack.c.l.b16 %v1823
        %v5836 = vunpack.c.l.b16 %v1824
        %v5837 = vunpack.c.l.b16 %v1825
        %v5838 = vunpack.c.l.b16 %v1826
        %v5839 = vunpack.c.l.b16 %v1827
        %v5840 = vunpack.c.l.b16 %v1828
        %v5841 = vunpack.c.l.b16 %v1829
        %v5842 = vunpack.c.l.b16 %v1830
        %v5843 = vunpack.c.l.b16 %v1831
        %v5844 = vunpack.c.l.b16 %v1832
        %v5845 = vunpack.c.l.b16 %v1833
        %v5846 = vunpack.c.l.b16 %v1834
        %v5847 = vunpack.c.l.b16 %v1835
        %v5848 = vunpack.c.l.b16 %v1836
        %v5849 = vunpack.c.l.b16 %v1837
        %v5850 = vunpack.c.l.b16 %v1838
        %v5851 = vunpack.c.l.b16 %v1839
        %v5852 = vunpack.c.l.b16 %v1840
        %v5853 = vunpack.c.l.b16 %v1841
        %v5854 = vunpack.c.l.b16 %v1842
        %v5855 = vunpack.c.l.b16 %v1843
        %v5856 = vunpack.c.l.b16 %v1844
        %v5857 = vunpack.c.l.b16 %v1845
        %v5858 = vunpack.c.l.b16 %v1846
        %v5859 = vunpack.c.l.b16 %v1847
        %v5860 = vunpack.c.l.b16 %v1848
        %v5861 = vunpack.c.l.b16 %v1849
        %v5862 = vunpack.c.l.b16 %v1850
        %v5863 = vunpack.c.l.b16 %v1851
        %v5864 = vunpack.c.l.b16 %v1852
        %v5865 = vunpack.c.l.b16 %v1853
        %v5866 = vunpack.c.l.b16 %v1854
        %v5867 = vunpack.c.l.b16 %v1855
        %v5868 = vunpack.c.l.b16 %v1856
        %v5869 = vunpack.c.l.b16 %v1857
        %v5870 = vunpack.c.l.b16 %v1858
        %v5871 = vunpack.c.l.b16 %v1859
        %v5872 = vunpack.c.l.b16 %v1860
        %v5873 = vunpack.c.l.b16 %v1861
        %v5874 = vunpack.c.l.b16 %v1862
        %v5875 = vunpack.c.l.b16 %v1863
        %v5876 = vunpack.c.l.b16 %v1864
        %v5877 = vunpack.c.l.b16 %v1865
        %v5878 = vunpack.c.l.b16 %v1866
        %v5879 = vunpack.c.l.b16 %v1867
        %v5880 = vunpack.c.l.b16 %v1868
        %v5881 = vunpack.c.l.b16 %v1869
        %v5882 = vunpack.c.l.b16 %v1870
        %v5883 = vunpack.c.l.b16 %v1871
        %v5884 = vunpack.c.l.b16 %v1872
        %v5885 = vunpack.c.l.b16 %v1873
        %v5886 = vunpack.c.l.b16 %v1874
        %v5887 = vunpack.c.l.b16 %v1875
        %v5888 = vunpack.c.l.b16 %v1876
        %v5889 = vunpack.c.l.b16 %v1877
        %v5890 = vunpack.c.l.b16 %v1878
        %v5891 = vunpack.c.l.b16 %v1879
        %v5892 = vunpack.c.l.b16 %v1880
        %v5893 = vunpack.c.l.b16 %v1881
        %v5894 = vunpack.c.l.b16 %v1882
        %v5895 = vunpack.c.l.b16 %v1883
        %v5896 = vunpack.c.l.b16 %v1884
        %v5897 = vunpack.c.l.b16 %v1885
        %v5898 = vunpack.c.l.b16 %v1886
        %v5899 = vunpack.c.l.b16 %v1887
        %v5900 = vunpack.c.l.b16 %v1888
        %v5901 = vunpack.c.l.b16 %v1889
        %v5902 = vunpack.c.l.b16 %v1890
        %v5903 = vunpack.c.l.b16 %v1891
        %v5904 = vunpack.c.l.b16 %v1892
        %v5905 = vunpack.c.l.b16 %v1893
        %v5906 = vunpack.c.l.b16 %v1894
        %v5907 = vunpack.c.l.b16 %v1895
        %v5908 = vunpack.c.l.b16 %v1896
        %v5909 = vunpack.c.l.b16 %v1897
        %v5910 = vunpack.c.l.b16 %v1898
        %v5911 = vunpack.c.l.b16 %v1899
        %v5912 = vunpack.c.l.b16 %v1900
        %v5913 = vunpack.c.l.b16 %v1901
        %v5914 = vunpack.c.l.b16 %v1902
        %v5915 = vunpack.c.l.b16 %v1903
        %v5916 = vunpack.c.l.b16 %v1904
        %v5917 = vunpack.c.l.b16 %v1905
        %v5918 = vunpack.c.l.b16 %v1906
        %v5919 = vunpack.c.l.b16 %v1907
        %v5920 = vunpack.c.l.b16 %v1908
        %v5921 = vunpack.c.l.b16 %v1909
        %v5922 = vunpack.c.l.b16 %v1910
        %v5923 = vunpack.c.l.b16 %v1911
        %v5924 = vunpack.c.l.b16 %v1912
        %v5925 = vunpack.c.l.b16 %v1913
        %v5926 = vunpack.c.l.b16 %v1914
        %v5927 = vunpack.c.l.b16 %v1915
        %v5928 = vunpack.c.l.b16 %v1916
        %v5929 = vunpack.c.l.b16 %v1917
        %v5930 = vunpack.c.l.b16 %v1918
        %v5931 = vunpack.c.l.b16 %v1919
        %v5932 = vunpack.c.l.b16 %v1920
        %v5933 = vunpack.c.l.b16 %v1921
        %v5934 = vunpack.c.l.b16 %v1922
        %v5935 = vunpack.c.l.b16 %v1923
        %v5936 = vunpack.c.l.b16 %v1924
        %v5937 = vunpack.c.l.b16 %v1925
        %v5938 = vunpack.c.l.b16 %v1926
        %v5939 = vunpack.c.l.b16 %v1927
        %v5940 = vunpack.c.l.b16 %v1928
        %v5941 = vunpack.c.l.b16 %v1929
        %v5942 = vunpack.c.l.b16 %v1930
        %v5943 = vunpack.c.l.b16 %v1931
        %v5944 = vunpack.c.l.b16 %v1932
        %v5945 = vunpack.c.l.b16 %v1933
        %v5946 = vunpack.c.l.b16 %v1934
        %v5947 = vunpack.c.l.b16 %v1935
        %v5948 = vunpack.c.l.b16 %v1936
        %v5949 = vunpack.c.l.b16 %v1937
        %v5950 = vunpack.c.l.b16 %v1938
        %v5951 = vunpack.c.l.b16 %v1939
        %v5952 = vunpack.c.l.b16 %v1940
        %v5953 = vunpack.c.l.b16 %v1941
        %v5954 = vunpack.c.l.b16 %v1942
        %v5955 = vunpack.c.l.b16 %v1943
        %v5956 = vunpack.c.l.b16 %v1944
        %v5957 = vunpack.c.l.b16 %v1945
        %v5958 = vunpack.c.l.b16 %v1946
        %v5959 = vunpack.c.l.b16 %v1947
        %v5960 = vunpack.c.l.b16 %v1948
        %v5961 = vunpack.c.l.b16 %v1949
        %v5962 = vunpack.c.l.b16 %v1950
        %v5963 = vunpack.c.l.b16 %v1951
        %v5964 = vunpack.c.l.b16 %v1952
        %v5965 = vunpack.c.l.b16 %v1953
        %v5966 = vunpack.c.l.b16 %v1954
        %v5967 = vunpack.c.l.b16 %v1955
        %v5968 = vunpack.c.l.b16 %v1956
        %v5969 = vunpack.c.l.b16 %v1957
        %v5970 = vunpack.c.l.b16 %v1958
        %v5971 = vunpack.c.l.b16 %v1959
        %v5972 = vunpack.c.l.b16 %v1960
        %v5973 = vunpack.c.l.b16 %v1961
        %v5974 = vunpack.c.l.b16 %v1962
        %v5975 = vunpack.c.l.b16 %v1963
        %v5976 = vunpack.c.l.b16 %v1964
        %v5977 = vunpack.c.l.b16 %v1965
        %v5978 = vunpack.c.l.b16 %v1966
        %v5979 = vunpack.c.l.b16 %v1967
        %v5980 = vunpack.c.l.b16 %v1968
        %v5981 = vunpack.c.l.b16 %v1969
        %v5982 = vunpack.c.l.b16 %v1970
        %v5983 = vunpack.c.l.b16 %v1971
        %v5984 = vunpack.c.l.b16 %v1972
        %v5985 = vunpack.c.l.b16 %v1973
        %v5986 = vunpack.c.l.b16 %v1974
        %v5987 = vunpack.c.l.b16 %v1975
        %v5988 = vunpack.c.l.b16 %v1976
        %v5989 = vunpack.c.l.b16 %v1977
        %v5990 = vunpack.c.l.b16 %v1978
        %v5991 = vunpack.c.l.b16 %v1979
        %v5992 = vunpack.c.l.b16 %v1980
        %v5993 = vunpack.c.l.b16 %v1981
        %v5994 = vunpack.c.l.b16 %v1982
        %v5995 = vunpack.c.l.b16 %v1983
        %v5996 = vunpack.c.l.b16 %v1984
        %v5997 = vunpack.c.l.b16 %v1985
        %v5998 = vunpack.c.l.b16 %v1986
        %v5999 = vunpack.c.l.b16 %v1987
        %v6000 = vunpack.c.l.b16 %v1988
        %v6001 = vunpack.c.l.b16 %v1989
        %v6002 = vunpack.c.l.b16 %v1990
        %v6003 = vunpack.c.l.b16 %v1991
        %v6004 = vunpack.c.l.b16 %v1992
        %v6005 = vunpack.c.l.b16 %v1993
        %v6006 = vunpack.c.l.b16 %v1994
        %v6007 = vunpack.c.l.b16 %v1995
        %v6008 = vunpack.c.l.b16 %v1996
        %v6009 = vunpack.c.l.b16 %v1997
        %v6010 = vunpack.c.l.b16 %v1998
        %v6011 = vunpack.c.l.b16 %v1999
        %v6012 = vunpack.c.l.b16 %v2000
        %v6013 = vunpack.c.l.b16 %v2001
        %v6014 = vunpack.c.l.b16 %v2002
        %v6015 = vunpack.c.l.b16 %v2003
        %v6016 = vunpack.c.l.b16 %v2004
        %v6017 = vunpack.c.l.b16 %v2005
        %v6018 = vunpack.c.l.b16 %v2006
        %v6019 = vunpack.c.l.b16 %v2007
        %v6020 = vunpack.c.l.b16 %v2008
        %v6021 = vunpack.c.l.b16 %v2009
        %v6022 = vunpack.c.l.b16 %v2010
        %v6023 = vunpack.c.l.b16 %v2011
        %v6024 = vunpack.c.l.b16 %v2012
        %v6025 = vunpack.c.l.b16 %v2013
        %v6026 = vunpack.c.l.b16 %v2014
        %v6027 = vunpack.c.l.b16 %v2015
        %v6028 = vunpack.c.l.b16 %v2016
        %v6029 = vunpack.c.l.b16 %v2017
        %v6030 = vunpack.c.l.b16 %v2018
        %v6031 = vunpack.c.l.b16 %v2019
        %v6032 = vunpack.c.l.b16 %v2020
        %v6033 = vunpack.c.l.b16 %v2021
        %v6034 = vunpack.c.l.b16 %v2022
        %v6035 = vunpack.c.l.b16 %v2023
        %v6036 = vunpack.c.l.b16 %v2024
        %v6037 = vunpack.c.l.b16 %v2025
        %v6038 = vunpack.c.l.b16 %v2026
        %v6039 = vunpack.c.l.b16 %v2027
        %v6040 = vunpack.c.l.b16 %v2028
        %v6041 = vunpack.c.l.b16 %v2029
        %v6042 = vunpack.c.l.b16 %v2030
        %v6043 = vunpack.c.l.b16 %v2031
        %v6044 = vunpack.c.l.b16 %v2032
        %v6045 = vunpack.c.l.b16 %v2033
        %v6046 = vunpack.c.l.b16 %v2034
        %v6047 = vunpack.c.l.b16 %v2035
        %v6048 = vunpack.c.l.b16 %v2036
        %v6049 = vunpack.c.l.b16 %v2037
        %v6050 = vunpack.c.l.b16 %v2038
        %v6051 = vunpack.c.l.b16 %v2039
        %v6052 = vunpack.c.l.b16 %v2040
        %v6053 = vunpack.c.l.b16 %v2041
        %v6054 = vunpack.c.l.b16 %v2042
        %v6055 = vunpack.c.l.b16 %v2043
        %v6056 = vunpack.c.l.b16 %v2044
        %v6057 = vunpack.c.l.b16 %v2045
        %v6058 = vunpack.c.l.b16 %v2046
        %v6059 = vunpack.c.l.b16 %v2047
        %v6060 = vunpack.c.l.b16 %v2048
        %v6061 = vunpack.c.l.b16 %v2049
        %v6062 = vunpack.c.l.b16 %v2050
        %v6063 = vunpack.c.l.b16 %v2051
        %v6064 = vunpack.c.l.b16 %v2052
        %v6065 = vunpack.c.l.b16 %v2053
        %v6066 = vunpack.c.l.b16 %v2054
        %v6067 = vunpack.c.l.b16 %v2055
        %v6068 = vunpack.c.l.b16 %v2056
        %v6069 = vunpack.c.l.b16 %v2057
        %v6070 = vunpack.c.l.b16 %v2058
        %v6071 = vunpack.c.l.b16 %v2059
        %v6072 = vunpack.c.l.b16 %v2060
        %v6073 = vunpack.c.l.b16 %v2061
        %v6074 = vunpack.c.l.b16 %v2062
        %v6075 = vunpack.c.l.b16 %v2063
        %v6076 = vunpack.c.l.b16 %v2064
        %v6077 = vunpack.c.l.b16 %v2065
        %v6078 = vunpack.c.l.b16 %v2066
        %v6079 = vunpack.c.l.b16 %v2067
        %v6080 = vunpack.c.l.b16 %v2068
        %v6081 = vunpack.c.l.b16 %v2069
        %v6082 = vunpack.c.l.b16 %v2070
        %v6083 = vunpack.c.l.b16 %v2071
        %v6084 = vunpack.c.l.b16 %v2072
        %v6085 = vunpack.c.l.b16 %v2073
        %v6086 = vunpack.c.l.b16 %v2074
        %v6087 = vunpack.c.l.b16 %v2075
        %v6088 = vunpack.c.l.b16 %v2076
        %v6089 = vunpack.c.l.b16 %v2077
        %v6090 = vunpack.c.l.b16 %v2078
        %v6091 = vunpack.c.l.b16 %v2079
        %v6092 = vunpack.c.l.b16 %v2080
        %v6093 = vunpack.c.l.b16 %v2081
        %v6094 = vunpack.c.l.b16 %v2082
        %v6095 = vunpack.c.l.b16 %v2083
        %v6096 = vunpack.c.l.b16 %v2084
        %v6097 = vunpack.c.l.b16 %v2085
        %v6098 = vunpack.c.l.b16 %v2086
        %v6099 = vunpack.c.l.b16 %v2087
        %v6100 = vunpack.c.l.b16 %v2088
        %v6101 = vunpack.c.l.b16 %v2089
        %v6102 = vunpack.c.l.b16 %v2090
        %v6103 = vunpack.c.l.b16 %v2091
        %v6104 = vunpack.c.l.b16 %v2092
        %v6105 = vunpack.c.l.b16 %v2093
        %v6106 = vunpack.c.l.b16 %v2094
        %v6107 = vunpack.c.l.b16 %v2095
        %v6108 = vunpack.c.l.b16 %v2096
        %v6109 = vunpack.c.l.b16 %v2097
        %v6110 = vunpack.c.l.b16 %v2098
        %v6111 = vunpack.c.l.b16 %v2099
        %v6112 = vunpack.c.l.b16 %v2100
        %v6113 = vunpack.c.l.b16 %v2101
        %v6114 = vunpack.c.l.b16 %v2102
        %v6115 = vunpack.c.l.b16 %v2103
        %v6116 = vunpack.c.l.b16 %v2104
        %v6117 = vunpack.c.l.b16 %v2105
        %v6118 = vunpack.c.l.b16 %v2106
        %v6119 = vunpack.c.l.b16 %v2107
        %v6120 = vunpack.c.l.b16 %v2108
        %v6121 = vunpack.c.l.b16 %v2109
        %v6122 = vunpack.c.l.b16 %v2110
        %v6123 = vunpack.c.l.b16 %v2111
        %v6124 = vunpack.c.l.b16 %v2112
        %v6125 = vunpack.c.l.b16 %v2113
        %v6126 = vunpack.c.l.b16 %v2114
        %v6127 = vunpack.c.l.b16 %v2115
        %v6128 = vunpack.c.l.b16 %v2116
        %v6129 = vunpack.c.l.b16 %v2117
        %v6130 = vunpack.c.l.b16 %v2118
        %v6131 = vunpack.c.l.b16 %v2119
        %v6132 = vunpack.c.l.b16 %v2120
        %v6133 = vunpack.c.l.b16 %v2121
        %v6134 = vunpack.c.l.b16 %v2122
        %v6135 = vunpack.c.l.b16 %v2123
        %v6136 = vunpack.c.l.b16 %v2124
        %v6137 = vunpack.c.l.b16 %v2125
        %v6138 = vunpack.c.l.b16 %v2126
        %v6139 = vunpack.c.l.b16 %v2127
        %v6140 = vunpack.c.l.b16 %v2128
        %v6141 = vunpack.c.l.b16 %v2129
        %v6142 = vunpack.c.l.b16 %v2130
        %v6143 = vunpack.c.l.b16 %v2131
        %v6144 = vunpack.c.l.b16 %v2132
        %v6145 = vunpack.c.l.b16 %v2133
        %v6146 = vunpack.c.l.b16 %v2134
        %v6147 = vunpack.c.l.b16 %v2135
        %v6148 = vunpack.c.l.b16 %v2136
        %v6149 = vunpack.c.l.b16 %v2137
        %v6150 = vunpack.c.l.b16 %v2138
        %v6151 = vunpack.c.l.b16 %v2139
        %v6152 = vunpack.c.l.b16 %v2140
        %v6153 = vunpack.c.l.b16 %v2141
        %v6154 = vunpack.c.l.b16 %v2142
        %v6155 = vunpack.c.l.b16 %v2143
        %v6156 = vunpack.c.l.b16 %v2144
        %v6157 = vunpack.c.l.b16 %v2145
        %v6158 = vunpack.c.l.b16 %v2146
        %v6159 = vunpack.c.l.b16 %v2147
        %v6160 = vunpack.c.l.b16 %v2148
        %v6161 = vunpack.c.l.b16 %v2149
        %v6162 = vunpack.c.l.b16 %v2150
        %v6163 = vunpack.c.l.b16 %v2151
        %v6164 = vunpack.c.l.b16 %v2152
        %v6165 = vunpack.c.l.b16 %v2153
        %v6166 = vunpack.c.l.b16 %v2154
        %v6167 = vunpack.c.l.b16 %v2155
        %v6168 = vunpack.c.l.b16 %v2156
        %v6169 = vunpack.c.l.b16 %v2157
        %v6170 = vunpack.c.l.b16 %v2158
        %v6171 = vunpack.c.l.b16 %v2159
        %v6172 = vunpack.c.l.b16 %v2160
        %v6173 = vunpack.c.l.b16 %v2161
        %v6174 = vunpack.c.l.b16 %v2162
        %v6175 = vunpack.c.l.b16 %v2163
        %v6176 = vunpack.c.l.b16 %v2164
        %v6177 = vunpack.c.l.b16 %v2165
        %v6178 = vunpack.c.l.b16 %v2166
        %v6179 = vunpack.c.l.b16 %v2167
        %v6180 = vunpack.c.l.b16 %v2168
        %v6181 = vunpack.c.l.b16 %v2169
        %v6182 = vunpack.c.l.b16 %v2170
        %v6183 = vunpack.c.l.b16 %v2171
        %v6184 = vunpack.c.l.b16 %v2172
        %v6185 = vunpack.c.l.b16 %v2173
        %v6186 = vunpack.c.l.b16 %v2174
        %v6187 = vunpack.c.l.b16 %v2175
        %v6188 = vunpack.c.l.b16 %v2176
        %v6189 = vunpack.c.l.b16 %v2177
        %v6190 = vunpack.c.l.b16 %v2178
        %v6191 = vunpack.c.l.b16 %v2179
        %v6192 = vunpack.c.l.b16 %v2180
        %v6193 = vunpack.c.l.b16 %v2181
        %v6194 = vunpack.c.l.b16 %v2182
        %v6195 = vunpack.c.l.b16 %v2183
        %v6196 = vunpack.c.l.b16 %v2184
        %v6197 = vunpack.c.l.b16 %v2185
        %v6198 = vunpack.c.l.b16 %v2186
        %v6199 = vunpack.c.l.b16 %v2187
        %v6200 = vunpack.c.l.b16 %v2188
        %v6201 = vunpack.c.l.b16 %v2189
        %v6202 = vunpack.c.l.b16 %v2190
        %v6203 = vunpack.c.l.b16 %v2191
        %v6204 = vunpack.c.l.b16 %v2192
        %v6205 = vunpack.c.l.b16 %v2193
        %v6206 = vunpack.c.l.b16 %v2194
        %v6207 = vunpack.c.l.b16 %v2195
        %v6208 = vunpack.c.l.b16 %v2196
        %v6209 = vunpack.c.l.b16 %v2197
        %v6210 = vunpack.c.l.b16 %v2198
        %v6211 = vpack.c.b16 %v4404, %v4403
        %v6212 = vpack.c.b16 %v4406, %v4405
        %v6213 = vpack.c.b16 %v4408, %v4407
        %v6214 = vpack.c.b16 %v4410, %v4409
        %v6215 = vpack.c.b16 %v4412, %v4411
        %v6216 = vpack.c.b16 %v4414, %v4413
        %v6217 = vpack.c.b16 %v4416, %v4415
        %v6218 = vpack.c.b16 %v4418, %v4417
        %v6219 = vpack.c.b16 %v4420, %v4419
        %v6220 = vpack.c.b16 %v4422, %v4421
        %v6221 = vpack.c.b16 %v4424, %v4423
        %v6222 = vpack.c.b16 %v4426, %v4425
        %v6223 = vpack.c.b16 %v4428, %v4427
        %v6224 = vpack.c.b16 %v4430, %v4429
        %v6225 = vpack.c.b16 %v4432, %v4431
        %v6226 = vpack.c.b16 %v4434, %v4433
        %v6227 = vpack.c.b16 %v4436, %v4435
        %v6228 = vpack.c.b16 %v4438, %v4437
        %v6229 = vpack.c.b16 %v4440, %v4439
        %v6230 = vpack.c.b16 %v4442, %v4441
        %v6231 = vpack.c.b16 %v4444, %v4443
        %v6232 = vpack.c.b16 %v4446, %v4445
        %v6233 = vpack.c.b16 %v4448, %v4447
        %v6234 = vpack.c.b16 %v4450, %v4449
        %v6235 = vpack.c.b16 %v4452, %v4451
        %v6236 = vpack.c.b16 %v4454, %v4453
        %v6237 = vpack.c.b16 %v4456, %v4455
        %v6238 = vpack.c.b16 %v4458, %v4457
        %v6239 = vpack.c.b16 %v4460, %v4459
        %v6240 = vpack.c.b16 %v4462, %v4461
        %v6241 = vpack.c.b16 %v4464, %v4463
        %v6242 = vpack.c.b16 %v4466, %v4465
        %v6243 = vpack.c.b16 %v4468, %v4467
        %v6244 = vpack.c.b16 %v4470, %v4469
        %v6245 = vpack.c.b16 %v4472, %v4471
        %v6246 = vpack.c.b16 %v4474, %v4473
        %v6247 = vpack.c.b16 %v4476, %v4475
        %v6248 = vpack.c.b16 %v4478, %v4477
        %v6249 = vpack.c.b16 %v4480, %v4479
        %v6250 = vpack.c.b16 %v4482, %v4481
        %v6251 = vpack.c.b16 %v4484, %v4483
        %v6252 = vpack.c.b16 %v4486, %v4485
        %v6253 = vpack.c.b16 %v4488, %v4487
        %v6254 = vpack.c.b16 %v4490, %v4489
        %v6255 = vpack.c.b16 %v4492, %v4491
        %v6256 = vpack.c.b16 %v4494, %v4493
        %v6257 = vpack.c.b16 %v4496, %v4495
        %v6258 = vpack.c.b16 %v4498, %v4497
        %v6259 = vpack.c.b16 %v4500, %v4499
        %v6260 = vpack.c.b16 %v4502, %v4501
        %v6261 = vpack.c.b16 %v4504, %v4503
        %v6262 = vpack.c.b16 %v4506, %v4505
        %v6263 = vpack.c.b16 %v4508, %v4507
        %v6264 = vpack.c.b16 %v4510, %v4509
        %v6265 = vpack.c.b16 %v4512, %v4511
        %v6266 = vpack.c.b16 %v4514, %v4513
        %v6267 = vpack.c.b16 %v4516, %v4515
        %v6268 = vpack.c.b16 %v4518, %v4517
        %v6269 = vpack.c.b16 %v4520, %v4519
        %v6270 = vpack.c.b16 %v4522, %v4521
        %v6271 = vpack.c.b16 %v4524, %v4523
        %v6272 = vpack.c.b16 %v4526, %v4525
        %v6273 = vpack.c.b16 %v4528, %v4527
        %v6274 = vpack.c.b16 %v4530, %v4529
        %v6275 = vpack.c.b16 %v4532, %v4531
        %v6276 = vpack.c.b16 %v4534, %v4533
        %v6277 = vpack.c.b16 %v4536, %v4535
        %v6278 = vpack.c.b16 %v4538, %v4537
        %v6279 = vpack.c.b16 %v4540, %v4539
        %v6280 = vpack.c.b16 %v4542, %v4541
        %v6281 = vpack.c.b16 %v4544, %v4543
        %v6282 = vpack.c.b16 %v4546, %v4545
        %v6283 = vpack.c.b16 %v4548, %v4547
        %v6284 = vpack.c.b16 %v4550, %v4549
        %v6285 = vpack.c.b16 %v4552, %v4551
        %v6286 = vpack.c.b16 %v4554, %v4553
        %v6287 = vpack.c.b16 %v4556, %v4555
        %v6288 = vpack.c.b16 %v4558, %v4557
        %v6289 = vpack.c.b16 %v4560, %v4559
        %v6290 = vpack.c.b16 %v4562, %v4561
        %v6291 = vpack.c.b16 %v4564, %v4563
        %v6292 = vpack.c.b16 %v4566, %v4565
        %v6293 = vpack.c.b16 %v4568, %v4567
        %v6294 = vpack.c.b16 %v4570, %v4569
        %v6295 = vpack.c.b16 %v4572, %v4571
        %v6296 = vpack.c.b16 %v4574, %v4573
        %v6297 = vpack.c.b16 %v4576, %v4575
        %v6298 = vpack.c.b16 %v4578, %v4577
        %v6299 = vpack.c.b16 %v4580, %v4579
        %v6300 = vpack.c.b16 %v4582, %v4581
        %v6301 = vpack.c.b16 %v4584, %v4583
        %v6302 = vpack.c.b16 %v4586, %v4585
        %v6303 = vpack.c.b16 %v4588, %v4587
        %v6304 = vpack.c.b16 %v4590, %v4589
        %v6305 = vpack.c.b16 %v4592, %v4591
        %v6306 = vpack.c.b16 %v4594, %v4593
        %v6307 = vpack.c.b16 %v4596, %v4595
        %v6308 = vpack.c.b16 %v4598, %v4597
        %v6309 = vpack.c.b16 %v4600, %v4599
        %v6310 = vpack.c.b16 %v4602, %v4601
        %v6311 = vpack.c.b16 %v4604, %v4603
        %v6312 = vpack.c.b16 %v4606, %v4605
        %v6313 = vpack.c.b16 %v4608, %v4607
        %v6314 = vpack.c.b16 %v4610, %v4609
        %v6315 = vpack.c.b16 %v4612, %v4611
        %v6316 = vpack.c.b16 %v4614, %v4613
        %v6317 = vpack.c.b16 %v4616, %v4615
        %v6318 = vpack.c.b16 %v4618, %v4617
        %v6319 = vpack.c.b16 %v4620, %v4619
        %v6320 = vpack.c.b16 %v4622, %v4621
        %v6321 = vpack.c.b16 %v4624, %v4623
        %v6322 = vpack.c.b16 %v4626, %v4625
        %v6323 = vpack.c.b16 %v4628, %v4627
        %v6324 = vpack.c.b16 %v4630, %v4629
        %v6325 = vpack.c.b16 %v4632, %v4631
        %v6326 = vpack.c.b16 %v4634, %v4633
        %v6327 = vpack.c.b16 %v4636, %v4635
        %v6328 = vpack.c.b16 %v4638, %v4637
        %v6329 = vpack.c.b16 %v4640, %v4639
        %v6330 = vpack.c.b16 %v4642, %v4641
        %v6331 = vpack.c.b16 %v4644, %v4643
        %v6332 = vpack.c.b16 %v4646, %v4645
        %v6333 = vpack.c.b16 %v4648, %v4647
        %v6334 = vpack.c.b16 %v4650, %v4649
        %v6335 = vpack.c.b16 %v4652, %v4651
        %v6336 = vpack.c.b16 %v4654, %v4653
        %v6337 = vpack.c.b16 %v4656, %v4655
        %v6338 = vpack.c.b16 %v4658, %v4657
        %v6339 = vpack.c.b16 %v4660, %v4659
        %v6340 = vpack.c.b16 %v4662, %v4661
        %v6341 = vpack.c.b16 %v4664, %v4663
        %v6342 = vpack.c.b16 %v4666, %v4665
        %v6343 = vpack.c.b16 %v4668, %v4667
        %v6344 = vpack.c.b16 %v4670, %v4669
        %v6345 = vpack.c.b16 %v4672, %v4671
        %v6346 = vpack.c.b16 %v4674, %v4673
        %v6347 = vpack.c.b16 %v4676, %v4675
        %v6348 = vpack.c.b16 %v4678, %v4677
        %v6349 = vpack.c.b16 %v4680, %v4679
        %v6350 = vpack.c.b16 %v4682, %v4681
        %v6351 = vpack.c.b16 %v4684, %v4683
        %v6352 = vpack.c.b16 %v4686, %v4685
        %v6353 = vpack.c.b16 %v4688, %v4687
        %v6354 = vpack.c.b16 %v4690, %v4689
        %v6355 = vpack.c.b16 %v4692, %v4691
        %v6356 = vpack.c.b16 %v4694, %v4693
        %v6357 = vpack.c.b16 %v4696, %v4695
        %v6358 = vpack.c.b16 %v4698, %v4697
        %v6359 = vpack.c.b16 %v4700, %v4699
        %v6360 = vpack.c.b16 %v4702, %v4701
        %v6361 = vpack.c.b16 %v4704, %v4703
        %v6362 = vpack.c.b16 %v4706, %v4705
        %v6363 = vpack.c.b16 %v4708, %v4707
        %v6364 = vpack.c.b16 %v4710, %v4709
        %v6365 = vpack.c.b16 %v4712, %v4711
        %v6366 = vpack.c.b16 %v4714, %v4713
        %v6367 = vpack.c.b16 %v4716, %v4715
        %v6368 = vpack.c.b16 %v4718, %v4717
        %v6369 = vpack.c.b16 %v4720, %v4719
        %v6370 = vpack.c.b16 %v4722, %v4721
        %v6371 = vpack.c.b16 %v4724, %v4723
        %v6372 = vpack.c.b16 %v4726, %v4725
        %v6373 = vpack.c.b16 %v4728, %v4727
        %v6374 = vpack.c.b16 %v4730, %v4729
        %v6375 = vpack.c.b16 %v4732, %v4731
        %v6376 = vpack.c.b16 %v4734, %v4733
        %v6377 = vpack.c.b16 %v4736, %v4735
        %v6378 = vpack.c.b16 %v4738, %v4737
        %v6379 = vpack.c.b16 %v4740, %v4739
        %v6380 = vpack.c.b16 %v4742, %v4741
        %v6381 = vpack.c.b16 %v4744, %v4743
        %v6382 = vpack.c.b16 %v4746, %v4745
        %v6383 = vpack.c.b16 %v4748, %v4747
        %v6384 = vpack.c.b16 %v4750, %v4749
        %v6385 = vpack.c.b16 %v4752, %v4751
        %v6386 = vpack.c.b16 %v4754, %v4753
        %v6387 = vpack.c.b16 %v4756, %v4755
        %v6388 = vpack.c.b16 %v4758, %v4757
        %v6389 = vpack.c.b16 %v4760, %v4759
        %v6390 = vpack.c.b16 %v4762, %v4761
        %v6391 = vpack.c.b16 %v4764, %v4763
        %v6392 = vpack.c.b16 %v4766, %v4765
        %v6393 = vpack.c.b16 %v4768, %v4767
        %v6394 = vpack.c.b16 %v4770, %v4769
        %v6395 = vpack.c.b16 %v4772, %v4771
        %v6396 = vpack.c.b16 %v4774, %v4773
        %v6397 = vpack.c.b16 %v4776, %v4775
        %v6398 = vpack.c.b16 %v4778, %v4777
        %v6399 = vpack.c.b16 %v4780, %v4779
        %v6400 = vpack.c.b16 %v4782, %v4781
        %v6401 = vpack.c.b16 %v4784, %v4783
        %v6402 = vpack.c.b16 %v4786, %v4785
        %v6403 = vpack.c.b16 %v4788, %v4787
        %v6404 = vpack.c.b16 %v4790, %v4789
        %v6405 = vpack.c.b16 %v4792, %v4791
        %v6406 = vpack.c.b16 %v4794, %v4793
        %v6407 = vpack.c.b16 %v4796, %v4795
        %v6408 = vpack.c.b16 %v4798, %v4797
        %v6409 = vpack.c.b16 %v4800, %v4799
        %v6410 = vpack.c.b16 %v4802, %v4801
        %v6411 = vpack.c.b16 %v4804, %v4803
        %v6412 = vpack.c.b16 %v4806, %v4805
        %v6413 = vpack.c.b16 %v4808, %v4807
        %v6414 = vpack.c.b16 %v4810, %v4809
        %v6415 = vpack.c.b16 %v4812, %v4811
        %v6416 = vpack.c.b16 %v4814, %v4813
        %v6417 = vpack.c.b16 %v4816, %v4815
        %v6418 = vpack.c.b16 %v4818, %v4817
        %v6419 = vpack.c.b16 %v4820, %v4819
        %v6420 = vpack.c.b16 %v4822, %v4821
        %v6421 = vpack.c.b16 %v4824, %v4823
        %v6422 = vpack.c.b16 %v4826, %v4825
        %v6423 = vpack.c.b16 %v4828, %v4827
        %v6424 = vpack.c.b16 %v4830, %v4829
        %v6425 = vpack.c.b16 %v4832, %v4831
        %v6426 = vpack.c.b16 %v4834, %v4833
        %v6427 = vpack.c.b16 %v4836, %v4835
        %v6428 = vpack.c.b16 %v4838, %v4837
        %v6429 = vpack.c.b16 %v4840, %v4839
        %v6430 = vpack.c.b16 %v4842, %v4841
        %v6431 = vpack.c.b16 %v4844, %v4843
        %v6432 = vpack.c.b16 %v4846, %v4845
        %v6433 = vpack.c.b16 %v4848, %v4847
        %v6434 = vpack.c.b16 %v4850, %v4849
        %v6435 = vpack.c.b16 %v4852, %v4851
        %v6436 = vpack.c.b16 %v4854, %v4853
        %v6437 = vpack.c.b16 %v4856, %v4855
        %v6438 = vpack.c.b16 %v4858, %v4857
        %v6439 = vpack.c.b16 %v4860, %v4859
        %v6440 = vpack.c.b16 %v4862, %v4861
        %v6441 = vpack.c.b16 %v4864, %v4863
        %v6442 = vpack.c.b16 %v4866, %v4865
        %v6443 = vpack.c.b16 %v4868, %v4867
        %v6444 = vpack.c.b16 %v4870, %v4869
        %v6445 = vpack.c.b16 %v4872, %v4871
        %v6446 = vpack.c.b16 %v4874, %v4873
        %v6447 = vpack.c.b16 %v4876, %v4875
        %v6448 = vpack.c.b16 %v4878, %v4877
        %v6449 = vpack.c.b16 %v4880, %v4879
        %v6450 = vpack.c.b16 %v4882, %v4881
        %v6451 = vpack.c.b16 %v4884, %v4883
        %v6452 = vpack.c.b16 %v4886, %v4885
        %v6453 = vpack.c.b16 %v4888, %v4887
        %v6454 = vpack.c.b16 %v4890, %v4889
        %v6455 = vpack.c.b16 %v4892, %v4891
        %v6456 = vpack.c.b16 %v4894, %v4893
        %v6457 = vpack.c.b16 %v4896, %v4895
        %v6458 = vpack.c.b16 %v4898, %v4897
        %v6459 = vpack.c.b16 %v4900, %v4899
        %v6460 = vpack.c.b16 %v4902, %v4901
        %v6461 = vpack.c.b16 %v4904, %v4903
        %v6462 = vpack.c.b16 %v4906, %v4905
        %v6463 = vpack.c.b16 %v4908, %v4907
        %v6464 = vpack.c.b16 %v4910, %v4909
        %v6465 = vpack.c.b16 %v4912, %v4911
        %v6466 = vpack.c.b16 %v4914, %v4913
        %v6467 = vpack.c.b16 %v4916, %v4915
        %v6468 = vpack.c.b16 %v4918, %v4917
        %v6469 = vpack.c.b16 %v4920, %v4919
        %v6470 = vpack.c.b16 %v4922, %v4921
        %v6471 = vpack.c.b16 %v4924, %v4923
        %v6472 = vpack.c.b16 %v4926, %v4925
        %v6473 = vpack.c.b16 %v4928, %v4927
        %v6474 = vpack.c.b16 %v4930, %v4929
        %v6475 = vpack.c.b16 %v4932, %v4931
        %v6476 = vpack.c.b16 %v4934, %v4933
        %v6477 = vpack.c.b16 %v4936, %v4935
        %v6478 = vpack.c.b16 %v4938, %v4937
        %v6479 = vpack.c.b16 %v4940, %v4939
        %v6480 = vpack.c.b16 %v4942, %v4941
        %v6481 = vpack.c.b16 %v4944, %v4943
        %v6482 = vpack.c.b16 %v4946, %v4945
        %v6483 = vpack.c.b16 %v4948, %v4947
        %v6484 = vpack.c.b16 %v4950, %v4949
        %v6485 = vpack.c.b16 %v4952, %v4951
        %v6486 = vpack.c.b16 %v4954, %v4953
        %v6487 = vpack.c.b16 %v4956, %v4955
        %v6488 = vpack.c.b16 %v4958, %v4957
        %v6489 = vpack.c.b16 %v4960, %v4959
        %v6490 = vpack.c.b16 %v4962, %v4961
        %v6491 = vpack.c.b16 %v4964, %v4963
        %v6492 = vpack.c.b16 %v4966, %v4965
        %v6493 = vpack.c.b16 %v4968, %v4967
        %v6494 = vpack.c.b16 %v4970, %v4969
        %v6495 = vpack.c.b16 %v4972, %v4971
        %v6496 = vpack.c.b16 %v4974, %v4973
        %v6497 = vpack.c.b16 %v4976, %v4975
        %v6498 = vpack.c.b16 %v4978, %v4977
        %v6499 = vpack.c.b16 %v4980, %v4979
        %v6500 = vpack.c.b16 %v4982, %v4981
        %v6501 = vpack.c.b16 %v4984, %v4983
        %v6502 = vpack.c.b16 %v4986, %v4985
        %v6503 = vpack.c.b16 %v4988, %v4987
        %v6504 = vpack.c.b16 %v4990, %v4989
        %v6505 = vpack.c.b16 %v4992, %v4991
        %v6506 = vpack.c.b16 %v4994, %v4993
        %v6507 = vpack.c.b16 %v4996, %v4995
        %v6508 = vpack.c.b16 %v4998, %v4997
        %v6509 = vpack.c.b16 %v5000, %v4999
        %v6510 = vpack.c.b16 %v5002, %v5001
        %v6511 = vpack.c.b16 %v5004, %v5003
        %v6512 = vpack.c.b16 %v5006, %v5005
        %v6513 = vpack.c.b16 %v5008, %v5007
        %v6514 = vpack.c.b16 %v5010, %v5009
        %v6515 = vpack.c.b16 %v5012, %v5011
        %v6516 = vpack.c.b16 %v5014, %v5013
        %v6517 = vpack.c.b16 %v5016, %v5015
        %v6518 = vpack.c.b16 %v5018, %v5017
        %v6519 = vpack.c.b16 %v5020, %v5019
        %v6520 = vpack.c.b16 %v5022, %v5021
        %v6521 = vpack.c.b16 %v5024, %v5023
        %v6522 = vpack.c.b16 %v5026, %v5025
        %v6523 = vpack.c.b16 %v5028, %v5027
        %v6524 = vpack.c.b16 %v5030, %v5029
        %v6525 = vpack.c.b16 %v5032, %v5031
        %v6526 = vpack.c.b16 %v5034, %v5033
        %v6527 = vpack.c.b16 %v5036, %v5035
        %v6528 = vpack.c.b16 %v5038, %v5037
        %v6529 = vpack.c.b16 %v5040, %v5039
        %v6530 = vpack.c.b16 %v5042, %v5041
        %v6531 = vpack.c.b16 %v5044, %v5043
        %v6532 = vpack.c.b16 %v5046, %v5045
        %v6533 = vpack.c.b16 %v5048, %v5047
        %v6534 = vpack.c.b16 %v5050, %v5049
        %v6535 = vpack.c.b16 %v5052, %v5051
        %v6536 = vpack.c.b16 %v5054, %v5053
        %v6537 = vpack.c.b16 %v5056, %v5055
        %v6538 = vpack.c.b16 %v5058, %v5057
        %v6539 = vpack.c.b16 %v5060, %v5059
        %v6540 = vpack.c.b16 %v5062, %v5061
        %v6541 = vpack.c.b16 %v5064, %v5063
        %v6542 = vpack.c.b16 %v5066, %v5065
        %v6543 = vpack.c.b16 %v5068, %v5067
        %v6544 = vpack.c.b16 %v5070, %v5069
        %v6545 = vpack.c.b16 %v5072, %v5071
        %v6546 = vpack.c.b16 %v5074, %v5073
        %v6547 = vpack.c.b16 %v5076, %v5075
        %v6548 = vpack.c.b16 %v5078, %v5077
        %v6549 = vpack.c.b16 %v5080, %v5079
        %v6550 = vpack.c.b16 %v5082, %v5081
        %v6551 = vpack.c.b16 %v5084, %v5083
        %v6552 = vpack.c.b16 %v5086, %v5085
        %v6553 = vpack.c.b16 %v5088, %v5087
        %v6554 = vpack.c.b16 %v5090, %v5089
        %v6555 = vpack.c.b16 %v5092, %v5091
        %v6556 = vpack.c.b16 %v5094, %v5093
        %v6557 = vpack.c.b16 %v5096, %v5095
        %v6558 = vpack.c.b16 %v5098, %v5097
        %v6559 = vpack.c.b16 %v5100, %v5099
        %v6560 = vpack.c.b16 %v5102, %v5101
        %v6561 = vpack.c.b16 %v5104, %v5103
        %v6562 = vpack.c.b16 %v5106, %v5105
        %v6563 = vpack.c.b16 %v5108, %v5107
        %v6564 = vpack.c.b16 %v5110, %v5109
        %v6565 = vpack.c.b16 %v5112, %v5111
        %v6566 = vpack.c.b16 %v5114, %v5113
        %v6567 = vpack.c.b16 %v5116, %v5115
        %v6568 = vpack.c.b16 %v5118, %v5117
        %v6569 = vpack.c.b16 %v5120, %v5119
        %v6570 = vpack.c.b16 %v5122, %v5121
        %v6571 = vpack.c.b16 %v5124, %v5123
        %v6572 = vpack.c.b16 %v5126, %v5125
        %v6573 = vpack.c.b16 %v5128, %v5127
        %v6574 = vpack.c.b16 %v5130, %v5129
        %v6575 = vpack.c.b16 %v5132, %v5131
        %v6576 = vpack.c.b16 %v5134, %v5133
        %v6577 = vpack.c.b16 %v5136, %v5135
        %v6578 = vpack.c.b16 %v5138, %v5137
        %v6579 = vpack.c.b16 %v5140, %v5139
        %v6580 = vpack.c.b16 %v5142, %v5141
        %v6581 = vpack.c.b16 %v5144, %v5143
        %v6582 = vpack.c.b16 %v5146, %v5145
        %v6583 = vpack.c.b16 %v5148, %v5147
        %v6584 = vpack.c.b16 %v5150, %v5149
        %v6585 = vpack.c.b16 %v5152, %v5151
        %v6586 = vpack.c.b16 %v5154, %v5153
        %v6587 = vpack.c.b16 %v5156, %v5155
        %v6588 = vpack.c.b16 %v5158, %v5157
        %v6589 = vpack.c.b16 %v5160, %v5159
        %v6590 = vpack.c.b16 %v5162, %v5161
        %v6591 = vpack.c.b16 %v5164, %v5163
        %v6592 = vpack.c.b16 %v5166, %v5165
        %v6593 = vpack.c.b16 %v5168, %v5167
        %v6594 = vpack.c.b16 %v5170, %v5169
        %v6595 = vpack.c.b16 %v5172, %v5171
        %v6596 = vpack.c.b16 %v5174, %v5173
        %v6597 = vpack.c.b16 %v5176, %v5175
        %v6598 = vpack.c.b16 %v5178, %v5177
        %v6599 = vpack.c.b16 %v5180, %v5179
        %v6600 = vpack.c.b16 %v5182, %v5181
        %v6601 = vpack.c.b16 %v5184, %v5183
        %v6602 = vpack.c.b16 %v5186, %v5185
        %v6603 = vpack.c.b16 %v5188, %v5187
        %v6604 = vpack.c.b16 %v5190, %v5189
        %v6605 = vpack.c.b16 %v5192, %v5191
        %v6606 = vpack.c.b16 %v5194, %v5193
        %v6607 = vpack.c.b16 %v5196, %v5195
        %v6608 = vpack.c.b16 %v5198, %v5197
        %v6609 = vpack.c.b16 %v5200, %v5199
        %v6610 = vpack.c.b16 %v5202, %v5201
        %v6611 = vpack.c.b16 %v5204, %v5203
        %v6612 = vpack.c.b16 %v5206, %v5205
        %v6613 = vpack.c.b16 %v5208, %v5207
        %v6614 = vpack.c.b16 %v5210, %v5209
        %v6615 = vpack.c.b16 %v5212, %v5211
        %v6616 = vpack.c.b16 %v5214, %v5213
        %v6617 = vpack.c.b16 %v5216, %v5215
        %v6618 = vpack.c.b16 %v5218, %v5217
        %v6619 = vpack.c.b16 %v5220, %v5219
        %v6620 = vpack.c.b16 %v5222, %v5221
        %v6621 = vpack.c.b16 %v5224, %v5223
        %v6622 = vpack.c.b16 %v5226, %v5225
        %v6623 = vpack.c.b16 %v5228, %v5227
        %v6624 = vpack.c.b16 %v5230, %v5229
        %v6625 = vpack.c.b16 %v5232, %v5231
        %v6626 = vpack.c.b16 %v5234, %v5233
        %v6627 = vpack.c.b16 %v5236, %v5235
        %v6628 = vpack.c.b16 %v5238, %v5237
        %v6629 = vpack.c.b16 %v5240, %v5239
        %v6630 = vpack.c.b16 %v5242, %v5241
        %v6631 = vpack.c.b16 %v5244, %v5243
        %v6632 = vpack.c.b16 %v5246, %v5245
        %v6633 = vpack.c.b16 %v5248, %v5247
        %v6634 = vpack.c.b16 %v5250, %v5249
        %v6635 = vpack.c.b16 %v5252, %v5251
        %v6636 = vpack.c.b16 %v5254, %v5253
        %v6637 = vpack.c.b16 %v5256, %v5255
        %v6638 = vpack.c.b16 %v5258, %v5257
        %v6639 = vpack.c.b16 %v5260, %v5259
        %v6640 = vpack.c.b16 %v5262, %v5261
        %v6641 = vpack.c.b16 %v5264, %v5263
        %v6642 = vpack.c.b16 %v5266, %v5265
        %v6643 = vpack.c.b16 %v5268, %v5267
        %v6644 = vpack.c.b16 %v5270, %v5269
        %v6645 = vpack.c.b16 %v5272, %v5271
        %v6646 = vpack.c.b16 %v5274, %v5273
        %v6647 = vpack.c.b16 %v5276, %v5275
        %v6648 = vpack.c.b16 %v5278, %v5277
        %v6649 = vpack.c.b16 %v5280, %v5279
        %v6650 = vpack.c.b16 %v5282, %v5281
        %v6651 = vpack.c.b16 %v5284, %v5283
        %v6652 = vpack.c.b16 %v5286, %v5285
        %v6653 = vpack.c.b16 %v5288, %v5287
        %v6654 = vpack.c.b16 %v5290, %v5289
        %v6655 = vpack.c.b16 %v5292, %v5291
        %v6656 = vpack.c.b16 %v5294, %v5293
        %v6657 = vpack.c.b16 %v5296, %v5295
        %v6658 = vpack.c.b16 %v5298, %v5297
        %v6659 = vpack.c.b16 %v5300, %v5299
        %v6660 = vpack.c.b16 %v5302, %v5301
        %v6661 = vpack.c.b16 %v5304, %v5303
        %v6662 = vpack.c.b16 %v5306, %v5305
        %v6663 = vpack.c.b16 %v5308, %v5307
        %v6664 = vpack.c.b16 %v5310, %v5309
        %v6665 = vpack.c.b16 %v5312, %v5311
        %v6666 = vpack.c.b16 %v5314, %v5313
        %v6667 = vpack.c.b16 %v5316, %v5315
        %v6668 = vpack.c.b16 %v5318, %v5317
        %v6669 = vpack.c.b16 %v5320, %v5319
        %v6670 = vpack.c.b16 %v5322, %v5321
        %v6671 = vpack.c.b16 %v5324, %v5323
        %v6672 = vpack.c.b16 %v5326, %v5325
        %v6673 = vpack.c.b16 %v5328, %v5327
        %v6674 = vpack.c.b16 %v5330, %v5329
        %v6675 = vpack.c.b16 %v5332, %v5331
        %v6676 = vpack.c.b16 %v5334, %v5333
        %v6677 = vpack.c.b16 %v5336, %v5335
        %v6678 = vpack.c.b16 %v5338, %v5337
        %v6679 = vpack.c.b16 %v5340, %v5339
        %v6680 = vpack.c.b16 %v5342, %v5341
        %v6681 = vpack.c.b16 %v5344, %v5343
        %v6682 = vpack.c.b16 %v5346, %v5345
        %v6683 = vpack.c.b16 %v5348, %v5347
        %v6684 = vpack.c.b16 %v5350, %v5349
        %v6685 = vpack.c.b16 %v5352, %v5351
        %v6686 = vpack.c.b16 %v5354, %v5353
        %v6687 = vpack.c.b16 %v5356, %v5355
        %v6688 = vpack.c.b16 %v5358, %v5357
        %v6689 = vpack.c.b16 %v5360, %v5359
        %v6690 = vpack.c.b16 %v5362, %v5361
        %v6691 = vpack.c.b16 %v5364, %v5363
        %v6692 = vpack.c.b16 %v5366, %v5365
        %v6693 = vpack.c.b16 %v5368, %v5367
        %v6694 = vpack.c.b16 %v5370, %v5369
        %v6695 = vpack.c.b16 %v5372, %v5371
        %v6696 = vpack.c.b16 %v5374, %v5373
        %v6697 = vpack.c.b16 %v5376, %v5375
        %v6698 = vpack.c.b16 %v5378, %v5377
        %v6699 = vpack.c.b16 %v5380, %v5379
        %v6700 = vpack.c.b16 %v5382, %v5381
        %v6701 = vpack.c.b16 %v5384, %v5383
        %v6702 = vpack.c.b16 %v5386, %v5385
        %v6703 = vpack.c.b16 %v5388, %v5387
        %v6704 = vpack.c.b16 %v5390, %v5389
        %v6705 = vpack.c.b16 %v5392, %v5391
        %v6706 = vpack.c.b16 %v5394, %v5393
        %v6707 = vpack.c.b16 %v5396, %v5395
        %v6708 = vpack.c.b16 %v5398, %v5397
        %v6709 = vpack.c.b16 %v5400, %v5399
        %v6710 = vpack.c.b16 %v5402, %v5401
        %v6711 = vpack.c.b16 %v5404, %v5403
        %v6712 = vpack.c.b16 %v5406, %v5405
        %v6713 = vpack.c.b16 %v5408, %v5407
        %v6714 = vpack.c.b16 %v5410, %v5409
        %v6715 = vpack.c.b16 %v5412, %v5411
        %v6716 = vpack.c.b16 %v5414, %v5413
        %v6717 = vpack.c.b16 %v5416, %v5415
        %v6718 = vpack.c.b16 %v5418, %v5417
        %v6719 = vpack.c.b16 %v5420, %v5419
        %v6720 = vpack.c.b16 %v5422, %v5421
        %v6721 = vpack.c.b16 %v5424, %v5423
        %v6722 = vpack.c.b16 %v5426, %v5425
        %v6723 = vpack.c.b16 %v5428, %v5427
        %v6724 = vpack.c.b16 %v5430, %v5429
        %v6725 = vpack.c.b16 %v5432, %v5431
        %v6726 = vpack.c.b16 %v5434, %v5433
        %v6727 = vpack.c.b16 %v5436, %v5435
        %v6728 = vpack.c.b16 %v5438, %v5437
        %v6729 = vpack.c.b16 %v5440, %v5439
        %v6730 = vpack.c.b16 %v5442, %v5441
        %v6731 = vpack.c.b16 %v5444, %v5443
        %v6732 = vpack.c.b16 %v5446, %v5445
        %v6733 = vpack.c.b16 %v5448, %v5447
        %v6734 = vpack.c.b16 %v5450, %v5449
        %v6735 = vpack.c.b16 %v5452, %v5451
        %v6736 = vpack.c.b16 %v5454, %v5453
        %v6737 = vpack.c.b16 %v5456, %v5455
        %v6738 = vpack.c.b16 %v5458, %v5457
        %v6739 = vpack.c.b16 %v5460, %v5459
        %v6740 = vpack.c.b16 %v5462, %v5461
        %v6741 = vpack.c.b16 %v5464, %v5463
        %v6742 = vpack.c.b16 %v5466, %v5465
        %v6743 = vpack.c.b16 %v5468, %v5467
        %v6744 = vpack.c.b16 %v5470, %v5469
        %v6745 = vpack.c.b16 %v5472, %v5471
        %v6746 = vpack.c.b16 %v5474, %v5473
        %v6747 = vpack.c.b16 %v5476, %v5475
        %v6748 = vpack.c.b16 %v5478, %v5477
        %v6749 = vpack.c.b16 %v5480, %v5479
        %v6750 = vpack.c.b16 %v5482, %v5481
        %v6751 = vpack.c.b16 %v5484, %v5483
        %v6752 = vpack.c.b16 %v5486, %v5485
        %v6753 = vpack.c.b16 %v5488, %v5487
        %v6754 = vpack.c.b16 %v5490, %v5489
        %v6755 = vpack.c.b16 %v5492, %v5491
        %v6756 = vpack.c.b16 %v5494, %v5493
        %v6757 = vpack.c.b16 %v5496, %v5495
        %v6758 = vpack.c.b16 %v5498, %v5497
        %v6759 = vpack.c.b16 %v5500, %v5499
        %v6760 = vpack.c.b16 %v5502, %v5501
        %v6761 = vpack.c.b16 %v5504, %v5503
        %v6762 = vpack.c.b16 %v5506, %v5505
        %v6763 = vpack.c.b16 %v5508, %v5507
        %v6764 = vpack.c.b16 %v5510, %v5509
        %v6765 = vpack.c.b16 %v5512, %v5511
        %v6766 = vpack.c.b16 %v5514, %v5513
        %v6767 = vpack.c.b16 %v5516, %v5515
        %v6768 = vpack.c.b16 %v5518, %v5517
        %v6769 = vpack.c.b16 %v5520, %v5519
        %v6770 = vpack.c.b16 %v5522, %v5521
        %v6771 = vpack.c.b16 %v5524, %v5523
        %v6772 = vpack.c.b16 %v5526, %v5525
        %v6773 = vpack.c.b16 %v5528, %v5527
        %v6774 = vpack.c.b16 %v5530, %v5529
        %v6775 = vpack.c.b16 %v5532, %v5531
        %v6776 = vpack.c.b16 %v5534, %v5533
        %v6777 = vpack.c.b16 %v5536, %v5535
        %v6778 = vpack.c.b16 %v5538, %v5537
        %v6779 = vpack.c.b16 %v5540, %v5539
        %v6780 = vpack.c.b16 %v5542, %v5541
        %v6781 = vpack.c.b16 %v5544, %v5543
        %v6782 = vpack.c.b16 %v5546, %v5545
        %v6783 = vpack.c.b16 %v5548, %v5547
        %v6784 = vpack.c.b16 %v5550, %v5549
        %v6785 = vpack.c.b16 %v5552, %v5551
        %v6786 = vpack.c.b16 %v5554, %v5553
        %v6787 = vpack.c.b16 %v5556, %v5555
        %v6788 = vpack.c.b16 %v5558, %v5557
        %v6789 = vpack.c.b16 %v5560, %v5559
        %v6790 = vpack.c.b16 %v5562, %v5561
        %v6791 = vpack.c.b16 %v5564, %v5563
        %v6792 = vpack.c.b16 %v5566, %v5565
        %v6793 = vpack.c.b16 %v5568, %v5567
        %v6794 = vpack.c.b16 %v5570, %v5569
        %v6795 = vpack.c.b16 %v5572, %v5571
        %v6796 = vpack.c.b16 %v5574, %v5573
        %v6797 = vpack.c.b16 %v5576, %v5575
        %v6798 = vpack.c.b16 %v5578, %v5577
        %v6799 = vpack.c.b16 %v5580, %v5579
        %v6800 = vpack.c.b16 %v5582, %v5581
        %v6801 = vpack.c.b16 %v5584, %v5583
        %v6802 = vpack.c.b16 %v5586, %v5585
        %v6803 = vpack.c.b16 %v5588, %v5587
        %v6804 = vpack.c.b16 %v5590, %v5589
        %v6805 = vpack.c.b16 %v5592, %v5591
        %v6806 = vpack.c.b16 %v5594, %v5593
        %v6807 = vpack.c.b16 %v5596, %v5595
        %v6808 = vpack.c.b16 %v5598, %v5597
        %v6809 = vpack.c.b16 %v5600, %v5599
        %v6810 = vpack.c.b16 %v5602, %v5601
        %v6811 = vpack.c.b16 %v5604, %v5603
        %v6812 = vpack.c.b16 %v5606, %v5605
        %v6813 = vpack.c.b16 %v5608, %v5607
        %v6814 = vpack.c.b16 %v5610, %v5609
        %v6815 = vpack.c.b16 %v5612, %v5611
        %v6816 = vpack.c.b16 %v5614, %v5613
        %v6817 = vpack.c.b16 %v5616, %v5615
        %v6818 = vpack.c.b16 %v5618, %v5617
        %v6819 = vpack.c.b16 %v5620, %v5619
        %v6820 = vpack.c.b16 %v5622, %v5621
        %v6821 = vpack.c.b16 %v5624, %v5623
        %v6822 = vpack.c.b16 %v5626, %v5625
        %v6823 = vpack.c.b16 %v5628, %v5627
        %v6824 = vpack.c.b16 %v5630, %v5629
        %v6825 = vpack.c.b16 %v5632, %v5631
        %v6826 = vpack.c.b16 %v5634, %v5633
        %v6827 = vpack.c.b16 %v5636, %v5635
        %v6828 = vpack.c.b16 %v5638, %v5637
        %v6829 = vpack.c.b16 %v5640, %v5639
        %v6830 = vpack.c.b16 %v5642, %v5641
        %v6831 = vpack.c.b16 %v5644, %v5643
        %v6832 = vpack.c.b16 %v5646, %v5645
        %v6833 = vpack.c.b16 %v5648, %v5647
        %v6834 = vpack.c.b16 %v5650, %v5649
        %v6835 = vpack.c.b16 %v5652, %v5651
        %v6836 = vpack.c.b16 %v5654, %v5653
        %v6837 = vpack.c.b16 %v5656, %v5655
        %v6838 = vpack.c.b16 %v5658, %v5657
        %v6839 = vpack.c.b16 %v5660, %v5659
        %v6840 = vpack.c.b16 %v5662, %v5661
        %v6841 = vpack.c.b16 %v5664, %v5663
        %v6842 = vpack.c.b16 %v5666, %v5665
        %v6843 = vpack.c.b16 %v5668, %v5667
        %v6844 = vpack.c.b16 %v5670, %v5669
        %v6845 = vpack.c.b16 %v5672, %v5671
        %v6846 = vpack.c.b16 %v5674, %v5673
        %v6847 = vpack.c.b16 %v5676, %v5675
        %v6848 = vpack.c.b16 %v5678, %v5677
        %v6849 = vpack.c.b16 %v5680, %v5679
        %v6850 = vpack.c.b16 %v5682, %v5681
        %v6851 = vpack.c.b16 %v5684, %v5683
        %v6852 = vpack.c.b16 %v5686, %v5685
        %v6853 = vpack.c.b16 %v5688, %v5687
        %v6854 = vpack.c.b16 %v5690, %v5689
        %v6855 = vpack.c.b16 %v5692, %v5691
        %v6856 = vpack.c.b16 %v5694, %v5693
        %v6857 = vpack.c.b16 %v5696, %v5695
        %v6858 = vpack.c.b16 %v5698, %v5697
        %v6859 = vpack.c.b16 %v5700, %v5699
        %v6860 = vpack.c.b16 %v5702, %v5701
        %v6861 = vpack.c.b16 %v5704, %v5703
        %v6862 = vpack.c.b16 %v5706, %v5705
        %v6863 = vpack.c.b16 %v5708, %v5707
        %v6864 = vpack.c.b16 %v5710, %v5709
        %v6865 = vpack.c.b16 %v5712, %v5711
        %v6866 = vpack.c.b16 %v5714, %v5713
        %v6867 = vpack.c.b16 %v5716, %v5715
        %v6868 = vpack.c.b16 %v5718, %v5717
        %v6869 = vpack.c.b16 %v5720, %v5719
        %v6870 = vpack.c.b16 %v5722, %v5721
        %v6871 = vpack.c.b16 %v5724, %v5723
        %v6872 = vpack.c.b16 %v5726, %v5725
        %v6873 = vpack.c.b16 %v5728, %v5727
        %v6874 = vpack.c.b16 %v5730, %v5729
        %v6875 = vpack.c.b16 %v5732, %v5731
        %v6876 = vpack.c.b16 %v5734, %v5733
        %v6877 = vpack.c.b16 %v5736, %v5735
        %v6878 = vpack.c.b16 %v5738, %v5737
        %v6879 = vpack.c.b16 %v5740, %v5739
        %v6880 = vpack.c.b16 %v5742, %v5741
        %v6881 = vpack.c.b16 %v5744, %v5743
        %v6882 = vpack.c.b16 %v5746, %v5745
        %v6883 = vpack.c.b16 %v5748, %v5747
        %v6884 = vpack.c.b16 %v5750, %v5749
        %v6885 = vpack.c.b16 %v5752, %v5751
        %v6886 = vpack.c.b16 %v5754, %v5753
        %v6887 = vpack.c.b16 %v5756, %v5755
        %v6888 = vpack.c.b16 %v5758, %v5757
        %v6889 = vpack.c.b16 %v5760, %v5759
        %v6890 = vpack.c.b16 %v5762, %v5761
        %v6891 = vpack.c.b16 %v5764, %v5763
        %v6892 = vpack.c.b16 %v5766, %v5765
        %v6893 = vpack.c.b16 %v5768, %v5767
        %v6894 = vpack.c.b16 %v5770, %v5769
        %v6895 = vpack.c.b16 %v5772, %v5771
        %v6896 = vpack.c.b16 %v5774, %v5773
        %v6897 = vpack.c.b16 %v5776, %v5775
        %v6898 = vpack.c.b16 %v5778, %v5777
        %v6899 = vpack.c.b16 %v5780, %v5779
        %v6900 = vpack.c.b16 %v5782, %v5781
        %v6901 = vpack.c.b16 %v5784, %v5783
        %v6902 = vpack.c.b16 %v5786, %v5785
        %v6903 = vpack.c.b16 %v5788, %v5787
        %v6904 = vpack.c.b16 %v5790, %v5789
        %v6905 = vpack.c.b16 %v5792, %v5791
        %v6906 = vpack.c.b16 %v5794, %v5793
        %v6907 = vpack.c.b16 %v5796, %v5795
        %v6908 = vpack.c.b16 %v5798, %v5797
        %v6909 = vpack.c.b16 %v5800, %v5799
        %v6910 = vpack.c.b16 %v5802, %v5801
        %v6911 = vpack.c.b16 %v5804, %v5803
        %v6912 = vpack.c.b16 %v5806, %v5805
        %v6913 = vpack.c.b16 %v5808, %v5807
        %v6914 = vpack.c.b16 %v5810, %v5809
        %v6915 = vpack.c.b16 %v5812, %v5811
        %v6916 = vpack.c.b16 %v5814, %v5813
        %v6917 = vpack.c.b16 %v5816, %v5815
        %v6918 = vpack.c.b16 %v5818, %v5817
        %v6919 = vpack.c.b16 %v5820, %v5819
        %v6920 = vpack.c.b16 %v5822, %v5821
        %v6921 = vpack.c.b16 %v5824, %v5823
        %v6922 = vpack.c.b16 %v5826, %v5825
        %v6923 = vpack.c.b16 %v5828, %v5827
        %v6924 = vpack.c.b16 %v5830, %v5829
        %v6925 = vpack.c.b16 %v5832, %v5831
        %v6926 = vpack.c.b16 %v5834, %v5833
        %v6927 = vpack.c.b16 %v5836, %v5835
        %v6928 = vpack.c.b16 %v5838, %v5837
        %v6929 = vpack.c.b16 %v5840, %v5839
        %v6930 = vpack.c.b16 %v5842, %v5841
        %v6931 = vpack.c.b16 %v5844, %v5843
        %v6932 = vpack.c.b16 %v5846, %v5845
        %v6933 = vpack.c.b16 %v5848, %v5847
        %v6934 = vpack.c.b16 %v5850, %v5849
        %v6935 = vpack.c.b16 %v5852, %v5851
        %v6936 = vpack.c.b16 %v5854, %v5853
        %v6937 = vpack.c.b16 %v5856, %v5855
        %v6938 = vpack.c.b16 %v5858, %v5857
        %v6939 = vpack.c.b16 %v5860, %v5859
        %v6940 = vpack.c.b16 %v5862, %v5861
        %v6941 = vpack.c.b16 %v5864, %v5863
        %v6942 = vpack.c.b16 %v5866, %v5865
        %v6943 = vpack.c.b16 %v5868, %v5867
        %v6944 = vpack.c.b16 %v5870, %v5869
        %v6945 = vpack.c.b16 %v5872, %v5871
        %v6946 = vpack.c.b16 %v5874, %v5873
        %v6947 = vpack.c.b16 %v5876, %v5875
        %v6948 = vpack.c.b16 %v5878, %v5877
        %v6949 = vpack.c.b16 %v5880, %v5879
        %v6950 = vpack.c.b16 %v5882, %v5881
        %v6951 = vpack.c.b16 %v5884, %v5883
        %v6952 = vpack.c.b16 %v5886, %v5885
        %v6953 = vpack.c.b16 %v5888, %v5887
        %v6954 = vpack.c.b16 %v5890, %v5889
        %v6955 = vpack.c.b16 %v5892, %v5891
        %v6956 = vpack.c.b16 %v5894, %v5893
        %v6957 = vpack.c.b16 %v5896, %v5895
        %v6958 = vpack.c.b16 %v5898, %v5897
        %v6959 = vpack.c.b16 %v5900, %v5899
        %v6960 = vpack.c.b16 %v5902, %v5901
        %v6961 = vpack.c.b16 %v5904, %v5903
        %v6962 = vpack.c.b16 %v5906, %v5905
        %v6963 = vpack.c.b16 %v5908, %v5907
        %v6964 = vpack.c.b16 %v5910, %v5909
        %v6965 = vpack.c.b16 %v5912, %v5911
        %v6966 = vpack.c.b16 %v5914, %v5913
        %v6967 = vpack.c.b16 %v5916, %v5915
        %v6968 = vpack.c.b16 %v5918, %v5917
        %v6969 = vpack.c.b16 %v5920, %v5919
        %v6970 = vpack.c.b16 %v5922, %v5921
        %v6971 = vpack.c.b16 %v5924, %v5923
        %v6972 = vpack.c.b16 %v5926, %v5925
        %v6973 = vpack.c.b16 %v5928, %v5927
        %v6974 = vpack.c.b16 %v5930, %v5929
        %v6975 = vpack.c.b16 %v5932, %v5931
        %v6976 = vpack.c.b16 %v5934, %v5933
        %v6977 = vpack.c.b16 %v5936, %v5935
        %v6978 = vpack.c.b16 %v5938, %v5937
        %v6979 = vpack.c.b16 %v5940, %v5939
        %v6980 = vpack.c.b16 %v5942, %v5941
        %v6981 = vpack.c.b16 %v5944, %v5943
        %v6982 = vpack.c.b16 %v5946, %v5945
        %v6983 = vpack.c.b16 %v5948, %v5947
        %v6984 = vpack.c.b16 %v5950, %v5949
        %v6985 = vpack.c.b16 %v5952, %v5951
        %v6986 = vpack.c.b16 %v5954, %v5953
        %v6987 = vpack.c.b16 %v5956, %v5955
        %v6988 = vpack.c.b16 %v5958, %v5957
        %v6989 = vpack.c.b16 %v5960, %v5959
        %v6990 = vpack.c.b16 %v5962, %v5961
        %v6991 = vpack.c.b16 %v5964, %v5963
        %v6992 = vpack.c.b16 %v5966, %v5965
        %v6993 = vpack.c.b16 %v5968, %v5967
        %v6994 = vpack.c.b16 %v5970, %v5969
        %v6995 = vpack.c.b16 %v5972, %v5971
        %v6996 = vpack.c.b16 %v5974, %v5973
        %v6997 = vpack.c.b16 %v5976, %v5975
        %v6998 = vpack.c.b16 %v5978, %v5977
        %v6999 = vpack.c.b16 %v5980, %v5979
        %v7000 = vpack.c.b16 %v5982, %v5981
        %v7001 = vpack.c.b16 %v5984, %v5983
        %v7002 = vpack.c.b16 %v5986, %v5985
        %v7003 = vpack.c.b16 %v5988, %v5987
        %v7004 = vpack.c.b16 %v5990, %v5989
        %v7005 = vpack.c.b16 %v5992, %v5991
        %v7006 = vpack.c.b16 %v5994, %v5993
        %v7007 = vpack.c.b16 %v5996, %v5995
        %v7008 = vpack.c.b16 %v5998, %v5997
        %v7009 = vpack.c.b16 %v6000, %v5999
        %v7010 = vpack.c.b16 %v6002, %v6001
        %v7011 = vpack.c.b16 %v6004, %v6003
        %v7012 = vpack.c.b16 %v6006, %v6005
        %v7013 = vpack.c.b16 %v6008, %v6007
        %v7014 = vpack.c.b16 %v6010, %v6009
        %v7015 = vpack.c.b16 %v6012, %v6011
        %v7016 = vpack.c.b16 %v6014, %v6013
        %v7017 = vpack.c.b16 %v6016, %v6015
        %v7018 = vpack.c.b16 %v6018, %v6017
        %v7019 = vpack.c.b16 %v6020, %v6019
        %v7020 = vpack.c.b16 %v6022, %v6021
        %v7021 = vpack.c.b16 %v6024, %v6023
        %v7022 = vpack.c.b16 %v6026, %v6025
        %v7023 = vpack.c.b16 %v6028, %v6027
        %v7024 = vpack.c.b16 %v6030, %v6029
        %v7025 = vpack.c.b16 %v6032, %v6031
        %v7026 = vpack.c.b16 %v6034, %v6033
        %v7027 = vpack.c.b16 %v6036, %v6035
        %v7028 = vpack.c.b16 %v6038, %v6037
        %v7029 = vpack.c.b16 %v6040, %v6039
        %v7030 = vpack.c.b16 %v6042, %v6041
        %v7031 = vpack.c.b16 %v6044, %v6043
        %v7032 = vpack.c.b16 %v6046, %v6045
        %v7033 = vpack.c.b16 %v6048, %v6047
        %v7034 = vpack.c.b16 %v6050, %v6049
        %v7035 = vpack.c.b16 %v6052, %v6051
        %v7036 = vpack.c.b16 %v6054, %v6053
        %v7037 = vpack.c.b16 %v6056, %v6055
        %v7038 = vpack.c.b16 %v6058, %v6057
        %v7039 = vpack.c.b16 %v6060, %v6059
        %v7040 = vpack.c.b16 %v6062, %v6061
        %v7041 = vpack.c.b16 %v6064, %v6063
        %v7042 = vpack.c.b16 %v6066, %v6065
        %v7043 = vpack.c.b16 %v6068, %v6067
        %v7044 = vpack.c.b16 %v6070, %v6069
        %v7045 = vpack.c.b16 %v6072, %v6071
        %v7046 = vpack.c.b16 %v6074, %v6073
        %v7047 = vpack.c.b16 %v6076, %v6075
        %v7048 = vpack.c.b16 %v6078, %v6077
        %v7049 = vpack.c.b16 %v6080, %v6079
        %v7050 = vpack.c.b16 %v6082, %v6081
        %v7051 = vpack.c.b16 %v6084, %v6083
        %v7052 = vpack.c.b16 %v6086, %v6085
        %v7053 = vpack.c.b16 %v6088, %v6087
        %v7054 = vpack.c.b16 %v6090, %v6089
        %v7055 = vpack.c.b16 %v6092, %v6091
        %v7056 = vpack.c.b16 %v6094, %v6093
        %v7057 = vpack.c.b16 %v6096, %v6095
        %v7058 = vpack.c.b16 %v6098, %v6097
        %v7059 = vpack.c.b16 %v6100, %v6099
        %v7060 = vpack.c.b16 %v6102, %v6101
        %v7061 = vpack.c.b16 %v6104, %v6103
        %v7062 = vpack.c.b16 %v6106, %v6105
        %v7063 = vpack.c.b16 %v6108, %v6107
        %v7064 = vpack.c.b16 %v6110, %v6109
        %v7065 = vpack.c.b16 %v6112, %v6111
        %v7066 = vpack.c.b16 %v6114, %v6113
        %v7067 = vpack.c.b16 %v6116, %v6115
        %v7068 = vpack.c.b16 %v6118, %v6117
        %v7069 = vpack.c.b16 %v6120, %v6119
        %v7070 = vpack.c.b16 %v6122, %v6121
        %v7071 = vpack.c.b16 %v6124, %v6123
        %v7072 = vpack.c.b16 %v6126, %v6125
        %v7073 = vpack.c.b16 %v6128, %v6127
        %v7074 = vpack.c.b16 %v6130, %v6129
        %v7075 = vpack.c.b16 %v6132, %v6131
        %v7076 = vpack.c.b16 %v6134, %v6133
        %v7077 = vpack.c.b16 %v6136, %v6135
        %v7078 = vpack.c.b16 %v6138, %v6137
        %v7079 = vpack.c.b16 %v6140, %v6139
        %v7080 = vpack.c.b16 %v6142, %v6141
        %v7081 = vpack.c.b16 %v6144, %v6143
        %v7082 = vpack.c.b16 %v6146, %v6145
        %v7083 = vpack.c.b16 %v6148, %v6147
        %v7084 = vpack.c.b16 %v6150, %v6149
        %v7085 = vpack.c.b16 %v6152, %v6151
        %v7086 = vpack.c.b16 %v6154, %v6153
        %v7087 = vpack.c.b16 %v6156, %v6155
        %v7088 = vpack.c.b16 %v6158, %v6157
        %v7089 = vpack.c.b16 %v6160, %v6159
        %v7090 = vpack.c.b16 %v6162, %v6161
        %v7091 = vpack.c.b16 %v6164, %v6163
        %v7092 = vpack.c.b16 %v6166, %v6165
        %v7093 = vpack.c.b16 %v6168, %v6167
        %v7094 = vpack.c.b16 %v6170, %v6169
        %v7095 = vpack.c.b16 %v6172, %v6171
        %v7096 = vpack.c.b16 %v6174, %v6173
        %v7097 = vpack.c.b16 %v6176, %v6175
        %v7098 = vpack.c.b16 %v6178, %v6177
        %v7099 = vpack.c.b16 %v6180, %v6179
        %v7100 = vpack.c.b16 %v6182, %v6181
        %v7101 = vpack.c.b16 %v6184, %v6183
        %v7102 = vpack.c.b16 %v6186, %v6185
        %v7103 = vpack.c.b16 %v6188, %v6187
        %v7104 = vpack.c.b16 %v6190, %v6189
        %v7105 = vpack.c.b16 %v6192, %v6191
        %v7106 = vpack.c.b16 %v6194, %v6193
        %v7107 = vpack.c.b16 %v6196, %v6195
        %v7108 = vpack.c.b16 %v6198, %v6197
        %v7109 = vpack.c.b16 %v6200, %v6199
        %v7110 = vpack.c.b16 %v6202, %v6201
        %v7111 = vpack.c.b16 %v6204, %v6203
        %v7112 = vpack.c.b16 %v6206, %v6205
        %v7113 = vpack.c.b16 %v6208, %v6207
        %v7114 = vpack.c.b16 %v6210, %v6209
        %8019 = vmatprep.subr.bf16.mxu0 0
        %8020 = vmatpush1.bf16.msra.mxu0 %v6218
        %8021 = vmatprep.subr.bf16.mxu0 0
        %8022 = vmatpush1.bf16.msra.mxu0 %v6217
        %8023 = vmatprep.subr.bf16.mxu0 0
        %8024 = vmatpush1.bf16.msra.mxu0 %v6216
        %8025 = vmatprep.subr.bf16.mxu0 0
        %8026 = vmatpush1.bf16.msra.mxu0 %v6215
        %8027 = vmatprep.subr.bf16.mxu0 0
        %8028 = vmatpush1.bf16.msra.mxu0 %v6214
        %8029 = vmatprep.subr.bf16.mxu0 0
        %8030 = vmatpush1.bf16.msra.mxu0 %v6213
        %8031 = vmatprep.subr.bf16.mxu0 0
        %8032 = vmatpush1.bf16.msra.mxu0 %v6212
        %8033 = vmatprep.subr.bf16.mxu0 0
        %8034 = vmatpush1.bf16.msra.mxu0 %v6211
        %8035 = vmatprep.subr.bf16.mxu0 0
        %8036 = vmatpush2.bf16.msra.mxu0 %v6226
        %8037 = vmatprep.subr.bf16.mxu0 0
        %8038 = vmatpush2.bf16.msra.mxu0 %v6225
        %8039 = vmatprep.subr.bf16.mxu0 0
        %8040 = vmatpush2.bf16.msra.mxu0 %v6224
        %8041 = vmatprep.subr.bf16.mxu0 0
        %8042 = vmatpush2.bf16.msra.mxu0 %v6223
        %8043 = vmatprep.subr.bf16.mxu0 0
        %8044 = vmatpush2.bf16.msra.mxu0 %v6222
        %8045 = vmatprep.subr.bf16.mxu0 0
        %8046 = vmatpush2.bf16.msra.mxu0 %v6221
        %8047 = vmatprep.subr.bf16.mxu0 0
        %8048 = vmatpush2.bf16.msra.mxu0 %v6220
        %8049 = vmatprep.subr.bf16.mxu0 0
        %8050 = vmatpush2.bf16.msra.mxu0 %v6219
        %8051 = vmatprep.mubr.bf16.mxu0 %v2370
        %8052 = vmatmul.mubr.bf16.gmra.mxu0 %v2369
        %v8053 = vpop.f32.mrf.mxu0
        %v8054 = vadd.f32 0.0, %v8053
        %v8055 = vpop.f32.mrf.mxu0
        %v8056 = vpop.f32.mrf.mxu0
        %v8057 = vpop.f32.mrf.mxu0
        %8058 = vdwg.mxu0
        %8059 = vmatprep.subr.bf16.mxu0 0
        %8060 = vmatpush1.bf16.msra.mxu0 %v6234
        %8061 = vmatprep.subr.bf16.mxu0 0
        %8062 = vmatpush1.bf16.msra.mxu0 %v6233
        %8063 = vmatprep.subr.bf16.mxu0 0
        %8064 = vmatpush1.bf16.msra.mxu0 %v6232
        %8065 = vmatprep.subr.bf16.mxu0 0
        %8066 = vmatpush1.bf16.msra.mxu0 %v6231
        %8067 = vmatprep.subr.bf16.mxu0 0
        %8068 = vmatpush1.bf16.msra.mxu0 %v6230
        %8069 = vmatprep.subr.bf16.mxu0 0
        %8070 = vmatpush1.bf16.msra.mxu0 %v6229
        %8071 = vmatprep.subr.bf16.mxu0 0
        %8072 = vmatpush1.bf16.msra.mxu0 %v6228
        %8073 = vmatprep.subr.bf16.mxu0 0
        %8074 = vmatpush1.bf16.msra.mxu0 %v6227
        %8075 = vmatprep.subr.bf16.mxu0 0
        %8076 = vmatpush2.bf16.msra.mxu0 %v6242
        %8077 = vmatprep.subr.bf16.mxu0 0
        %8078 = vmatpush2.bf16.msra.mxu0 %v6241
        %8079 = vmatprep.subr.bf16.mxu0 0
        %8080 = vmatpush2.bf16.msra.mxu0 %v6240
        %8081 = vmatprep.subr.bf16.mxu0 0
        %8082 = vmatpush2.bf16.msra.mxu0 %v6239
        %8083 = vmatprep.subr.bf16.mxu0 0
        %8084 = vmatpush2.bf16.msra.mxu0 %v6238
        %8085 = vmatprep.subr.bf16.mxu0 0
        %8086 = vmatpush2.bf16.msra.mxu0 %v6237
        %8087 = vmatprep.subr.bf16.mxu0 0
        %8088 = vmatpush2.bf16.msra.mxu0 %v6236
        %8089 = vmatprep.subr.bf16.mxu0 0
        %8090 = vmatpush2.bf16.msra.mxu0 %v6235
        %8091 = vmatprep.mubr.bf16.mxu0 %v2372
        %8092 = vmatmul.mubr.bf16.gmra.mxu0 %v2371
        %v8093 = vpop.f32.mrf.mxu0
        %v8094 = vadd.f32 %v8054, %v8093
        %v8095 = vpop.f32.mrf.mxu0
        %v8096 = vpop.f32.mrf.mxu0
        %v8097 = vpop.f32.mrf.mxu0
        %8098 = vdwg.mxu0
        %8099 = vmatprep.subr.bf16.mxu0 0
        %8100 = vmatpush1.bf16.msra.mxu0 %v6250
        %8101 = vmatprep.subr.bf16.mxu0 0
        %8102 = vmatpush1.bf16.msra.mxu0 %v6249
        %8103 = vmatprep.subr.bf16.mxu0 0
        %8104 = vmatpush1.bf16.msra.mxu0 %v6248
        %8105 = vmatprep.subr.bf16.mxu0 0
        %8106 = vmatpush1.bf16.msra.mxu0 %v6247
        %8107 = vmatprep.subr.bf16.mxu0 0
        %8108 = vmatpush1.bf16.msra.mxu0 %v6246
        %8109 = vmatprep.subr.bf16.mxu0 0
        %8110 = vmatpush1.bf16.msra.mxu0 %v6245
        %8111 = vmatprep.subr.bf16.mxu0 0
        %8112 = vmatpush1.bf16.msra.mxu0 %v6244
        %8113 = vmatprep.subr.bf16.mxu0 0
        %8114 = vmatpush1.bf16.msra.mxu0 %v6243
        %8115 = vmatprep.subr.bf16.mxu0 0
        %8116 = vmatpush2.bf16.msra.mxu0 %v6258
        %8117 = vmatprep.subr.bf16.mxu0 0
        %8118 = vmatpush2.bf16.msra.mxu0 %v6257
        %8119 = vmatprep.subr.bf16.mxu0 0
        %8120 = vmatpush2.bf16.msra.mxu0 %v6256
        %8121 = vmatprep.subr.bf16.mxu0 0
        %8122 = vmatpush2.bf16.msra.mxu0 %v6255
        %8123 = vmatprep.subr.bf16.mxu0 0
        %8124 = vmatpush2.bf16.msra.mxu0 %v6254
        %8125 = vmatprep.subr.bf16.mxu0 0
        %8126 = vmatpush2.bf16.msra.mxu0 %v6253
        %8127 = vmatprep.subr.bf16.mxu0 0
        %8128 = vmatpush2.bf16.msra.mxu0 %v6252
        %8129 = vmatprep.subr.bf16.mxu0 0
        %8130 = vmatpush2.bf16.msra.mxu0 %v6251
        %8131 = vmatprep.mubr.bf16.mxu0 %v2374
        %8132 = vmatmul.mubr.bf16.gmra.mxu0 %v2373
        %v8133 = vpop.f32.mrf.mxu0
        %v8134 = vadd.f32 %v8094, %v8133
        %v8135 = vpop.f32.mrf.mxu0
        %v8136 = vpop.f32.mrf.mxu0
        %v8137 = vpop.f32.mrf.mxu0
        %8138 = vdwg.mxu0
        %8139 = vmatprep.subr.bf16.mxu0 0
        %8140 = vmatpush1.bf16.msra.mxu0 %v6266
        %8141 = vmatprep.subr.bf16.mxu0 0
        %8142 = vmatpush1.bf16.msra.mxu0 %v6265
        %8143 = vmatprep.subr.bf16.mxu0 0
        %8144 = vmatpush1.bf16.msra.mxu0 %v6264
        %8145 = vmatprep.subr.bf16.mxu0 0
        %8146 = vmatpush1.bf16.msra.mxu0 %v6263
        %8147 = vmatprep.subr.bf16.mxu0 0
        %8148 = vmatpush1.bf16.msra.mxu0 %v6262
        %8149 = vmatprep.subr.bf16.mxu0 0
        %8150 = vmatpush1.bf16.msra.mxu0 %v6261
        %8151 = vmatprep.subr.bf16.mxu0 0
        %8152 = vmatpush1.bf16.msra.mxu0 %v6260
        %8153 = vmatprep.subr.bf16.mxu0 0
        %8154 = vmatpush1.bf16.msra.mxu0 %v6259
        %8155 = vmatprep.subr.bf16.mxu0 0
        %8156 = vmatpush2.bf16.msra.mxu0 %v6274
        %8157 = vmatprep.subr.bf16.mxu0 0
        %8158 = vmatpush2.bf16.msra.mxu0 %v6273
        %8159 = vmatprep.subr.bf16.mxu0 0
        %8160 = vmatpush2.bf16.msra.mxu0 %v6272
        %8161 = vmatprep.subr.bf16.mxu0 0
        %8162 = vmatpush2.bf16.msra.mxu0 %v6271
        %8163 = vmatprep.subr.bf16.mxu0 0
        %8164 = vmatpush2.bf16.msra.mxu0 %v6270
        %8165 = vmatprep.subr.bf16.mxu0 0
        %8166 = vmatpush2.bf16.msra.mxu0 %v6269
        %8167 = vmatprep.subr.bf16.mxu0 0
        %8168 = vmatpush2.bf16.msra.mxu0 %v6268
        %8169 = vmatprep.subr.bf16.mxu0 0
        %8170 = vmatpush2.bf16.msra.mxu0 %v6267
        %8171 = vmatprep.mubr.bf16.mxu0 %v2376
        %8172 = vmatmul.mubr.bf16.gmra.mxu0 %v2375
        %v8173 = vpop.f32.mrf.mxu0
        %v8174 = vadd.f32 %v8134, %v8173
        %v8175 = vpop.f32.mrf.mxu0
        %v8176 = vpop.f32.mrf.mxu0
        %v8177 = vpop.f32.mrf.mxu0
        %8178 = vdwg.mxu0
        %8179 = vmatprep.subr.bf16.mxu0 0
        %8180 = vmatpush1.bf16.msra.mxu0 %v6282
        %8181 = vmatprep.subr.bf16.mxu0 0
        %8182 = vmatpush1.bf16.msra.mxu0 %v6281
        %8183 = vmatprep.subr.bf16.mxu0 0
        %8184 = vmatpush1.bf16.msra.mxu0 %v6280
        %8185 = vmatprep.subr.bf16.mxu0 0
        %8186 = vmatpush1.bf16.msra.mxu0 %v6279
        %8187 = vmatprep.subr.bf16.mxu0 0
        %8188 = vmatpush1.bf16.msra.mxu0 %v6278
        %8189 = vmatprep.subr.bf16.mxu0 0
        %8190 = vmatpush1.bf16.msra.mxu0 %v6277
        %8191 = vmatprep.subr.bf16.mxu0 0
        %8192 = vmatpush1.bf16.msra.mxu0 %v6276
        %8193 = vmatprep.subr.bf16.mxu0 0
        %8194 = vmatpush1.bf16.msra.mxu0 %v6275
        %8195 = vmatprep.subr.bf16.mxu0 0
        %8196 = vmatpush2.bf16.msra.mxu0 %v6290
        %8197 = vmatprep.subr.bf16.mxu0 0
        %8198 = vmatpush2.bf16.msra.mxu0 %v6289
        %8199 = vmatprep.subr.bf16.mxu0 0
        %8200 = vmatpush2.bf16.msra.mxu0 %v6288
        %8201 = vmatprep.subr.bf16.mxu0 0
        %8202 = vmatpush2.bf16.msra.mxu0 %v6287
        %8203 = vmatprep.subr.bf16.mxu0 0
        %8204 = vmatpush2.bf16.msra.mxu0 %v6286
        %8205 = vmatprep.subr.bf16.mxu0 0
        %8206 = vmatpush2.bf16.msra.mxu0 %v6285
        %8207 = vmatprep.subr.bf16.mxu0 0
        %8208 = vmatpush2.bf16.msra.mxu0 %v6284
        %8209 = vmatprep.subr.bf16.mxu0 0
        %8210 = vmatpush2.bf16.msra.mxu0 %v6283
        %8211 = vmatprep.mubr.bf16.mxu0 %v2378
        %8212 = vmatmul.mubr.bf16.gmra.mxu0 %v2377
        %v8213 = vpop.f32.mrf.mxu0
        %v8214 = vadd.f32 %v8174, %v8213
        %v8215 = vpop.f32.mrf.mxu0
        %v8216 = vpop.f32.mrf.mxu0
        %v8217 = vpop.f32.mrf.mxu0
        %8218 = vdwg.mxu0
        %8219 = vmatprep.subr.bf16.mxu0 0
        %8220 = vmatpush1.bf16.msra.mxu0 %v6298
        %8221 = vmatprep.subr.bf16.mxu0 0
        %8222 = vmatpush1.bf16.msra.mxu0 %v6297
        %8223 = vmatprep.subr.bf16.mxu0 0
        %8224 = vmatpush1.bf16.msra.mxu0 %v6296
        %8225 = vmatprep.subr.bf16.mxu0 0
        %8226 = vmatpush1.bf16.msra.mxu0 %v6295
        %8227 = vmatprep.subr.bf16.mxu0 0
        %8228 = vmatpush1.bf16.msra.mxu0 %v6294
        %8229 = vmatprep.subr.bf16.mxu0 0
        %8230 = vmatpush1.bf16.msra.mxu0 %v6293
        %8231 = vmatprep.subr.bf16.mxu0 0
        %8232 = vmatpush1.bf16.msra.mxu0 %v6292
        %8233 = vmatprep.subr.bf16.mxu0 0
        %8234 = vmatpush1.bf16.msra.mxu0 %v6291
        %8235 = vmatprep.subr.bf16.mxu0 0
        %8236 = vmatpush2.bf16.msra.mxu0 %v6306
        %8237 = vmatprep.subr.bf16.mxu0 0
        %8238 = vmatpush2.bf16.msra.mxu0 %v6305
        %8239 = vmatprep.subr.bf16.mxu0 0
        %8240 = vmatpush2.bf16.msra.mxu0 %v6304
        %8241 = vmatprep.subr.bf16.mxu0 0
        %8242 = vmatpush2.bf16.msra.mxu0 %v6303
        %8243 = vmatprep.subr.bf16.mxu0 0
        %8244 = vmatpush2.bf16.msra.mxu0 %v6302
        %8245 = vmatprep.subr.bf16.mxu0 0
        %8246 = vmatpush2.bf16.msra.mxu0 %v6301
        %8247 = vmatprep.subr.bf16.mxu0 0
        %8248 = vmatpush2.bf16.msra.mxu0 %v6300
        %8249 = vmatprep.subr.bf16.mxu0 0
        %8250 = vmatpush2.bf16.msra.mxu0 %v6299
        %8251 = vmatprep.mubr.bf16.mxu0 %v2380
        %8252 = vmatmul.mubr.bf16.gmra.mxu0 %v2379
        %v8253 = vpop.f32.mrf.mxu0
        %v8254 = vadd.f32 %v8214, %v8253
        %v8255 = vpop.f32.mrf.mxu0
        %v8256 = vpop.f32.mrf.mxu0
        %v8257 = vpop.f32.mrf.mxu0
        %8258 = vdwg.mxu0
        %8259 = vmatprep.subr.bf16.mxu0 0
        %8260 = vmatpush1.bf16.msra.mxu0 %v6314
        %8261 = vmatprep.subr.bf16.mxu0 0
        %8262 = vmatpush1.bf16.msra.mxu0 %v6313
        %8263 = vmatprep.subr.bf16.mxu0 0
        %8264 = vmatpush1.bf16.msra.mxu0 %v6312
        %8265 = vmatprep.subr.bf16.mxu0 0
        %8266 = vmatpush1.bf16.msra.mxu0 %v6311
        %8267 = vmatprep.subr.bf16.mxu0 0
        %8268 = vmatpush1.bf16.msra.mxu0 %v6310
        %8269 = vmatprep.subr.bf16.mxu0 0
        %8270 = vmatpush1.bf16.msra.mxu0 %v6309
        %8271 = vmatprep.subr.bf16.mxu0 0
        %8272 = vmatpush1.bf16.msra.mxu0 %v6308
        %8273 = vmatprep.subr.bf16.mxu0 0
        %8274 = vmatpush1.bf16.msra.mxu0 %v6307
        %8275 = vmatprep.subr.bf16.mxu0 0
        %8276 = vmatpush2.bf16.msra.mxu0 %v6322
        %8277 = vmatprep.subr.bf16.mxu0 0
        %8278 = vmatpush2.bf16.msra.mxu0 %v6321
        %8279 = vmatprep.subr.bf16.mxu0 0
        %8280 = vmatpush2.bf16.msra.mxu0 %v6320
        %8281 = vmatprep.subr.bf16.mxu0 0
        %8282 = vmatpush2.bf16.msra.mxu0 %v6319
        %8283 = vmatprep.subr.bf16.mxu0 0
        %8284 = vmatpush2.bf16.msra.mxu0 %v6318
        %8285 = vmatprep.subr.bf16.mxu0 0
        %8286 = vmatpush2.bf16.msra.mxu0 %v6317
        %8287 = vmatprep.subr.bf16.mxu0 0
        %8288 = vmatpush2.bf16.msra.mxu0 %v6316
        %8289 = vmatprep.subr.bf16.mxu0 0
        %8290 = vmatpush2.bf16.msra.mxu0 %v6315
        %8291 = vmatprep.mubr.bf16.mxu0 %v2382
        %8292 = vmatmul.mubr.bf16.gmra.mxu0 %v2381
        %v8293 = vpop.f32.mrf.mxu0
        %v8294 = vadd.f32 %v8254, %v8293
        %v8295 = vpop.f32.mrf.mxu0
        %v8296 = vpop.f32.mrf.mxu0
        %v8297 = vpop.f32.mrf.mxu0
        %8298 = vdwg.mxu0
        %8299 = vmatprep.subr.bf16.mxu0 0
        %8300 = vmatpush1.bf16.msra.mxu0 %v6330
        %8301 = vmatprep.subr.bf16.mxu0 0
        %8302 = vmatpush1.bf16.msra.mxu0 %v6329
        %8303 = vmatprep.subr.bf16.mxu0 0
        %8304 = vmatpush1.bf16.msra.mxu0 %v6328
        %8305 = vmatprep.subr.bf16.mxu0 0
        %8306 = vmatpush1.bf16.msra.mxu0 %v6327
        %8307 = vmatprep.subr.bf16.mxu0 0
        %8308 = vmatpush1.bf16.msra.mxu0 %v6326
        %8309 = vmatprep.subr.bf16.mxu0 0
        %8310 = vmatpush1.bf16.msra.mxu0 %v6325
        %8311 = vmatprep.subr.bf16.mxu0 0
        %8312 = vmatpush1.bf16.msra.mxu0 %v6324
        %8313 = vmatprep.subr.bf16.mxu0 0
        %8314 = vmatpush1.bf16.msra.mxu0 %v6323
        %8315 = vmatprep.subr.bf16.mxu0 0
        %8316 = vmatpush2.bf16.msra.mxu0 %v6338
        %8317 = vmatprep.subr.bf16.mxu0 0
        %8318 = vmatpush2.bf16.msra.mxu0 %v6337
        %8319 = vmatprep.subr.bf16.mxu0 0
        %8320 = vmatpush2.bf16.msra.mxu0 %v6336
        %8321 = vmatprep.subr.bf16.mxu0 0
        %8322 = vmatpush2.bf16.msra.mxu0 %v6335
        %8323 = vmatprep.subr.bf16.mxu0 0
        %8324 = vmatpush2.bf16.msra.mxu0 %v6334
        %8325 = vmatprep.subr.bf16.mxu0 0
        %8326 = vmatpush2.bf16.msra.mxu0 %v6333
        %8327 = vmatprep.subr.bf16.mxu0 0
        %8328 = vmatpush2.bf16.msra.mxu0 %v6332
        %8329 = vmatprep.subr.bf16.mxu0 0
        %8330 = vmatpush2.bf16.msra.mxu0 %v6331
        %8331 = vmatprep.mubr.bf16.mxu0 %v2384
        %8332 = vmatmul.mubr.bf16.gmra.mxu0 %v2383
        %v8333 = vpop.f32.mrf.mxu0
        %v8334 = vadd.f32 %v8294, %v8333
        %v8335 = vpop.f32.mrf.mxu0
        %v8336 = vpop.f32.mrf.mxu0
        %v8337 = vpop.f32.mrf.mxu0
        %8338 = vdwg.mxu0
        %8339 = vmatprep.subr.bf16.mxu0 0
        %8340 = vmatpush1.bf16.msra.mxu0 %v6346
        %8341 = vmatprep.subr.bf16.mxu0 0
        %8342 = vmatpush1.bf16.msra.mxu0 %v6345
        %8343 = vmatprep.subr.bf16.mxu0 0
        %8344 = vmatpush1.bf16.msra.mxu0 %v6344
        %8345 = vmatprep.subr.bf16.mxu0 0
        %8346 = vmatpush1.bf16.msra.mxu0 %v6343
        %8347 = vmatprep.subr.bf16.mxu0 0
        %8348 = vmatpush1.bf16.msra.mxu0 %v6342
        %8349 = vmatprep.subr.bf16.mxu0 0
        %8350 = vmatpush1.bf16.msra.mxu0 %v6341
        %8351 = vmatprep.subr.bf16.mxu0 0
        %8352 = vmatpush1.bf16.msra.mxu0 %v6340
        %8353 = vmatprep.subr.bf16.mxu0 0
        %8354 = vmatpush1.bf16.msra.mxu0 %v6339
        %8355 = vmatprep.subr.bf16.mxu0 0
        %8356 = vmatpush2.bf16.msra.mxu0 %v6354
        %8357 = vmatprep.subr.bf16.mxu0 0
        %8358 = vmatpush2.bf16.msra.mxu0 %v6353
        %8359 = vmatprep.subr.bf16.mxu0 0
        %8360 = vmatpush2.bf16.msra.mxu0 %v6352
        %8361 = vmatprep.subr.bf16.mxu0 0
        %8362 = vmatpush2.bf16.msra.mxu0 %v6351
        %8363 = vmatprep.subr.bf16.mxu0 0
        %8364 = vmatpush2.bf16.msra.mxu0 %v6350
        %8365 = vmatprep.subr.bf16.mxu0 0
        %8366 = vmatpush2.bf16.msra.mxu0 %v6349
        %8367 = vmatprep.subr.bf16.mxu0 0
        %8368 = vmatpush2.bf16.msra.mxu0 %v6348
        %8369 = vmatprep.subr.bf16.mxu0 0
        %8370 = vmatpush2.bf16.msra.mxu0 %v6347
        %8371 = vmatprep.mubr.bf16.mxu0 %v2386
        %8372 = vmatmul.mubr.bf16.gmra.mxu0 %v2385
        %v8373 = vpop.f32.mrf.mxu0
        %v8374 = vadd.f32 %v8334, %v8373
        %v8375 = vpop.f32.mrf.mxu0
        %v8376 = vpop.f32.mrf.mxu0
        %v8377 = vpop.f32.mrf.mxu0
        %8378 = vdwg.mxu0
        %8379 = vmatprep.subr.bf16.mxu0 0
        %8380 = vmatpush1.bf16.msra.mxu0 %v6362
        %8381 = vmatprep.subr.bf16.mxu0 0
        %8382 = vmatpush1.bf16.msra.mxu0 %v6361
        %8383 = vmatprep.subr.bf16.mxu0 0
        %8384 = vmatpush1.bf16.msra.mxu0 %v6360
        %8385 = vmatprep.subr.bf16.mxu0 0
        %8386 = vmatpush1.bf16.msra.mxu0 %v6359
        %8387 = vmatprep.subr.bf16.mxu0 0
        %8388 = vmatpush1.bf16.msra.mxu0 %v6358
        %8389 = vmatprep.subr.bf16.mxu0 0
        %8390 = vmatpush1.bf16.msra.mxu0 %v6357
        %8391 = vmatprep.subr.bf16.mxu0 0
        %8392 = vmatpush1.bf16.msra.mxu0 %v6356
        %8393 = vmatprep.subr.bf16.mxu0 0
        %8394 = vmatpush1.bf16.msra.mxu0 %v6355
        %8395 = vmatprep.subr.bf16.mxu0 0
        %8396 = vmatpush2.bf16.msra.mxu0 %v6370
        %8397 = vmatprep.subr.bf16.mxu0 0
        %8398 = vmatpush2.bf16.msra.mxu0 %v6369
        %8399 = vmatprep.subr.bf16.mxu0 0
        %8400 = vmatpush2.bf16.msra.mxu0 %v6368
        %8401 = vmatprep.subr.bf16.mxu0 0
        %8402 = vmatpush2.bf16.msra.mxu0 %v6367
        %8403 = vmatprep.subr.bf16.mxu0 0
        %8404 = vmatpush2.bf16.msra.mxu0 %v6366
        %8405 = vmatprep.subr.bf16.mxu0 0
        %8406 = vmatpush2.bf16.msra.mxu0 %v6365
        %8407 = vmatprep.subr.bf16.mxu0 0
        %8408 = vmatpush2.bf16.msra.mxu0 %v6364
        %8409 = vmatprep.subr.bf16.mxu0 0
        %8410 = vmatpush2.bf16.msra.mxu0 %v6363
        %8411 = vmatprep.mubr.bf16.mxu0 %v2388
        %8412 = vmatmul.mubr.bf16.gmra.mxu0 %v2387
        %v8413 = vpop.f32.mrf.mxu0
        %v8414 = vadd.f32 %v8374, %v8413
        %v8415 = vpop.f32.mrf.mxu0
        %v8416 = vpop.f32.mrf.mxu0
        %v8417 = vpop.f32.mrf.mxu0
        %8418 = vdwg.mxu0
        %8419 = vmatprep.subr.bf16.mxu0 0
        %8420 = vmatpush1.bf16.msra.mxu0 %v6378
        %8421 = vmatprep.subr.bf16.mxu0 0
        %8422 = vmatpush1.bf16.msra.mxu0 %v6377
        %8423 = vmatprep.subr.bf16.mxu0 0
        %8424 = vmatpush1.bf16.msra.mxu0 %v6376
        %8425 = vmatprep.subr.bf16.mxu0 0
        %8426 = vmatpush1.bf16.msra.mxu0 %v6375
        %8427 = vmatprep.subr.bf16.mxu0 0
        %8428 = vmatpush1.bf16.msra.mxu0 %v6374
        %8429 = vmatprep.subr.bf16.mxu0 0
        %8430 = vmatpush1.bf16.msra.mxu0 %v6373
        %8431 = vmatprep.subr.bf16.mxu0 0
        %8432 = vmatpush1.bf16.msra.mxu0 %v6372
        %8433 = vmatprep.subr.bf16.mxu0 0
        %8434 = vmatpush1.bf16.msra.mxu0 %v6371
        %8435 = vmatprep.subr.bf16.mxu0 0
        %8436 = vmatpush2.bf16.msra.mxu0 %v6386
        %8437 = vmatprep.subr.bf16.mxu0 0
        %8438 = vmatpush2.bf16.msra.mxu0 %v6385
        %8439 = vmatprep.subr.bf16.mxu0 0
        %8440 = vmatpush2.bf16.msra.mxu0 %v6384
        %8441 = vmatprep.subr.bf16.mxu0 0
        %8442 = vmatpush2.bf16.msra.mxu0 %v6383
        %8443 = vmatprep.subr.bf16.mxu0 0
        %8444 = vmatpush2.bf16.msra.mxu0 %v6382
        %8445 = vmatprep.subr.bf16.mxu0 0
        %8446 = vmatpush2.bf16.msra.mxu0 %v6381
        %8447 = vmatprep.subr.bf16.mxu0 0
        %8448 = vmatpush2.bf16.msra.mxu0 %v6380
        %8449 = vmatprep.subr.bf16.mxu0 0
        %8450 = vmatpush2.bf16.msra.mxu0 %v6379
        %8451 = vmatprep.mubr.bf16.mxu0 %v2390
        %8452 = vmatmul.mubr.bf16.gmra.mxu0 %v2389
        %v8453 = vpop.f32.mrf.mxu0
        %v8454 = vadd.f32 %v8414, %v8453
        %v8455 = vpop.f32.mrf.mxu0
        %v8456 = vpop.f32.mrf.mxu0
        %v8457 = vpop.f32.mrf.mxu0
        %8458 = vdwg.mxu0
        %8459 = vmatprep.subr.bf16.mxu0 0
        %8460 = vmatpush1.bf16.msra.mxu0 %v6394
        %8461 = vmatprep.subr.bf16.mxu0 0
        %8462 = vmatpush1.bf16.msra.mxu0 %v6393
        %8463 = vmatprep.subr.bf16.mxu0 0
        %8464 = vmatpush1.bf16.msra.mxu0 %v6392
        %8465 = vmatprep.subr.bf16.mxu0 0
        %8466 = vmatpush1.bf16.msra.mxu0 %v6391
        %8467 = vmatprep.subr.bf16.mxu0 0
        %8468 = vmatpush1.bf16.msra.mxu0 %v6390
        %8469 = vmatprep.subr.bf16.mxu0 0
        %8470 = vmatpush1.bf16.msra.mxu0 %v6389
        %8471 = vmatprep.subr.bf16.mxu0 0
        %8472 = vmatpush1.bf16.msra.mxu0 %v6388
        %8473 = vmatprep.subr.bf16.mxu0 0
        %8474 = vmatpush1.bf16.msra.mxu0 %v6387
        %8475 = vmatprep.subr.bf16.mxu0 0
        %8476 = vmatpush2.bf16.msra.mxu0 %v6402
        %8477 = vmatprep.subr.bf16.mxu0 0
        %8478 = vmatpush2.bf16.msra.mxu0 %v6401
        %8479 = vmatprep.subr.bf16.mxu0 0
        %8480 = vmatpush2.bf16.msra.mxu0 %v6400
        %8481 = vmatprep.subr.bf16.mxu0 0
        %8482 = vmatpush2.bf16.msra.mxu0 %v6399
        %8483 = vmatprep.subr.bf16.mxu0 0
        %8484 = vmatpush2.bf16.msra.mxu0 %v6398
        %8485 = vmatprep.subr.bf16.mxu0 0
        %8486 = vmatpush2.bf16.msra.mxu0 %v6397
        %8487 = vmatprep.subr.bf16.mxu0 0
        %8488 = vmatpush2.bf16.msra.mxu0 %v6396
        %8489 = vmatprep.subr.bf16.mxu0 0
        %8490 = vmatpush2.bf16.msra.mxu0 %v6395
        %8491 = vmatprep.mubr.bf16.mxu0 %v2392
        %8492 = vmatmul.mubr.bf16.gmra.mxu0 %v2391
        %v8493 = vpop.f32.mrf.mxu0
        %v8494 = vadd.f32 %v8454, %v8493
        %v8495 = vpop.f32.mrf.mxu0
        %v8496 = vpop.f32.mrf.mxu0
        %v8497 = vpop.f32.mrf.mxu0
        %8498 = vdwg.mxu0
        %8499 = vmatprep.subr.bf16.mxu0 0
        %8500 = vmatpush1.bf16.msra.mxu0 %v6410
        %8501 = vmatprep.subr.bf16.mxu0 0
        %8502 = vmatpush1.bf16.msra.mxu0 %v6409
        %8503 = vmatprep.subr.bf16.mxu0 0
        %8504 = vmatpush1.bf16.msra.mxu0 %v6408
        %8505 = vmatprep.subr.bf16.mxu0 0
        %8506 = vmatpush1.bf16.msra.mxu0 %v6407
        %8507 = vmatprep.subr.bf16.mxu0 0
        %8508 = vmatpush1.bf16.msra.mxu0 %v6406
        %8509 = vmatprep.subr.bf16.mxu0 0
        %8510 = vmatpush1.bf16.msra.mxu0 %v6405
        %8511 = vmatprep.subr.bf16.mxu0 0
        %8512 = vmatpush1.bf16.msra.mxu0 %v6404
        %8513 = vmatprep.subr.bf16.mxu0 0
        %8514 = vmatpush1.bf16.msra.mxu0 %v6403
        %8515 = vmatprep.subr.bf16.mxu0 0
        %8516 = vmatpush2.bf16.msra.mxu0 %v6418
        %8517 = vmatprep.subr.bf16.mxu0 0
        %8518 = vmatpush2.bf16.msra.mxu0 %v6417
        %8519 = vmatprep.subr.bf16.mxu0 0
        %8520 = vmatpush2.bf16.msra.mxu0 %v6416
        %8521 = vmatprep.subr.bf16.mxu0 0
        %8522 = vmatpush2.bf16.msra.mxu0 %v6415
        %8523 = vmatprep.subr.bf16.mxu0 0
        %8524 = vmatpush2.bf16.msra.mxu0 %v6414
        %8525 = vmatprep.subr.bf16.mxu0 0
        %8526 = vmatpush2.bf16.msra.mxu0 %v6413
        %8527 = vmatprep.subr.bf16.mxu0 0
        %8528 = vmatpush2.bf16.msra.mxu0 %v6412
        %8529 = vmatprep.subr.bf16.mxu0 0
        %8530 = vmatpush2.bf16.msra.mxu0 %v6411
        %8531 = vmatprep.mubr.bf16.mxu0 %v2394
        %8532 = vmatmul.mubr.bf16.gmra.mxu0 %v2393
        %v8533 = vpop.f32.mrf.mxu0
        %v8534 = vadd.f32 %v8494, %v8533
        %v8535 = vpop.f32.mrf.mxu0
        %v8536 = vpop.f32.mrf.mxu0
        %v8537 = vpop.f32.mrf.mxu0
        %8538 = vdwg.mxu0
        %8539 = vmatprep.subr.bf16.mxu0 0
        %8540 = vmatpush1.bf16.msra.mxu0 %v6426
        %8541 = vmatprep.subr.bf16.mxu0 0
        %8542 = vmatpush1.bf16.msra.mxu0 %v6425
        %8543 = vmatprep.subr.bf16.mxu0 0
        %8544 = vmatpush1.bf16.msra.mxu0 %v6424
        %8545 = vmatprep.subr.bf16.mxu0 0
        %8546 = vmatpush1.bf16.msra.mxu0 %v6423
        %8547 = vmatprep.subr.bf16.mxu0 0
        %8548 = vmatpush1.bf16.msra.mxu0 %v6422
        %8549 = vmatprep.subr.bf16.mxu0 0
        %8550 = vmatpush1.bf16.msra.mxu0 %v6421
        %8551 = vmatprep.subr.bf16.mxu0 0
        %8552 = vmatpush1.bf16.msra.mxu0 %v6420
        %8553 = vmatprep.subr.bf16.mxu0 0
        %8554 = vmatpush1.bf16.msra.mxu0 %v6419
        %8555 = vmatprep.subr.bf16.mxu0 0
        %8556 = vmatpush2.bf16.msra.mxu0 %v6434
        %8557 = vmatprep.subr.bf16.mxu0 0
        %8558 = vmatpush2.bf16.msra.mxu0 %v6433
        %8559 = vmatprep.subr.bf16.mxu0 0
        %8560 = vmatpush2.bf16.msra.mxu0 %v6432
        %8561 = vmatprep.subr.bf16.mxu0 0
        %8562 = vmatpush2.bf16.msra.mxu0 %v6431
        %8563 = vmatprep.subr.bf16.mxu0 0
        %8564 = vmatpush2.bf16.msra.mxu0 %v6430
        %8565 = vmatprep.subr.bf16.mxu0 0
        %8566 = vmatpush2.bf16.msra.mxu0 %v6429
        %8567 = vmatprep.subr.bf16.mxu0 0
        %8568 = vmatpush2.bf16.msra.mxu0 %v6428
        %8569 = vmatprep.subr.bf16.mxu0 0
        %8570 = vmatpush2.bf16.msra.mxu0 %v6427
        %8571 = vmatprep.mubr.bf16.mxu0 %v2396
        %8572 = vmatmul.mubr.bf16.gmra.mxu0 %v2395
        %v8573 = vpop.f32.mrf.mxu0
        %v8574 = vadd.f32 %v8534, %v8573
        %v8575 = vpop.f32.mrf.mxu0
        %v8576 = vpop.f32.mrf.mxu0
        %v8577 = vpop.f32.mrf.mxu0
        %8578 = vdwg.mxu0
        %8579 = vmatprep.subr.bf16.mxu0 0
        %8580 = vmatpush1.bf16.msra.mxu0 %v6442
        %8581 = vmatprep.subr.bf16.mxu0 0
        %8582 = vmatpush1.bf16.msra.mxu0 %v6441
        %8583 = vmatprep.subr.bf16.mxu0 0
        %8584 = vmatpush1.bf16.msra.mxu0 %v6440
        %8585 = vmatprep.subr.bf16.mxu0 0
        %8586 = vmatpush1.bf16.msra.mxu0 %v6439
        %8587 = vmatprep.subr.bf16.mxu0 0
        %8588 = vmatpush1.bf16.msra.mxu0 %v6438
        %8589 = vmatprep.subr.bf16.mxu0 0
        %8590 = vmatpush1.bf16.msra.mxu0 %v6437
        %8591 = vmatprep.subr.bf16.mxu0 0
        %8592 = vmatpush1.bf16.msra.mxu0 %v6436
        %8593 = vmatprep.subr.bf16.mxu0 0
        %8594 = vmatpush1.bf16.msra.mxu0 %v6435
        %8595 = vmatprep.subr.bf16.mxu0 0
        %8596 = vmatpush2.bf16.msra.mxu0 %v6450
        %8597 = vmatprep.subr.bf16.mxu0 0
        %8598 = vmatpush2.bf16.msra.mxu0 %v6449
        %8599 = vmatprep.subr.bf16.mxu0 0
        %8600 = vmatpush2.bf16.msra.mxu0 %v6448
        %8601 = vmatprep.subr.bf16.mxu0 0
        %8602 = vmatpush2.bf16.msra.mxu0 %v6447
        %8603 = vmatprep.subr.bf16.mxu0 0
        %8604 = vmatpush2.bf16.msra.mxu0 %v6446
        %8605 = vmatprep.subr.bf16.mxu0 0
        %8606 = vmatpush2.bf16.msra.mxu0 %v6445
        %8607 = vmatprep.subr.bf16.mxu0 0
        %8608 = vmatpush2.bf16.msra.mxu0 %v6444
        %8609 = vmatprep.subr.bf16.mxu0 0
        %8610 = vmatpush2.bf16.msra.mxu0 %v6443
        %8611 = vmatprep.mubr.bf16.mxu0 %v2398
        %8612 = vmatmul.mubr.bf16.gmra.mxu0 %v2397
        %v8613 = vpop.f32.mrf.mxu0
        %v8614 = vadd.f32 %v8574, %v8613
        %v8615 = vpop.f32.mrf.mxu0
        %v8616 = vpop.f32.mrf.mxu0
        %v8617 = vpop.f32.mrf.mxu0
        %8618 = vdwg.mxu0
        %8619 = vmatprep.subr.bf16.mxu0 0
        %8620 = vmatpush1.bf16.msra.mxu0 %v6458
        %8621 = vmatprep.subr.bf16.mxu0 0
        %8622 = vmatpush1.bf16.msra.mxu0 %v6457
        %8623 = vmatprep.subr.bf16.mxu0 0
        %8624 = vmatpush1.bf16.msra.mxu0 %v6456
        %8625 = vmatprep.subr.bf16.mxu0 0
        %8626 = vmatpush1.bf16.msra.mxu0 %v6455
        %8627 = vmatprep.subr.bf16.mxu0 0
        %8628 = vmatpush1.bf16.msra.mxu0 %v6454
        %8629 = vmatprep.subr.bf16.mxu0 0
        %8630 = vmatpush1.bf16.msra.mxu0 %v6453
        %8631 = vmatprep.subr.bf16.mxu0 0
        %8632 = vmatpush1.bf16.msra.mxu0 %v6452
        %8633 = vmatprep.subr.bf16.mxu0 0
        %8634 = vmatpush1.bf16.msra.mxu0 %v6451
        %8635 = vmatprep.subr.bf16.mxu0 0
        %8636 = vmatpush2.bf16.msra.mxu0 %v6466
        %8637 = vmatprep.subr.bf16.mxu0 0
        %8638 = vmatpush2.bf16.msra.mxu0 %v6465
        %8639 = vmatprep.subr.bf16.mxu0 0
        %8640 = vmatpush2.bf16.msra.mxu0 %v6464
        %8641 = vmatprep.subr.bf16.mxu0 0
        %8642 = vmatpush2.bf16.msra.mxu0 %v6463
        %8643 = vmatprep.subr.bf16.mxu0 0
        %8644 = vmatpush2.bf16.msra.mxu0 %v6462
        %8645 = vmatprep.subr.bf16.mxu0 0
        %8646 = vmatpush2.bf16.msra.mxu0 %v6461
        %8647 = vmatprep.subr.bf16.mxu0 0
        %8648 = vmatpush2.bf16.msra.mxu0 %v6460
        %8649 = vmatprep.subr.bf16.mxu0 0
        %8650 = vmatpush2.bf16.msra.mxu0 %v6459
        %8651 = vmatprep.mubr.bf16.mxu0 %v2400
        %8652 = vmatmul.mubr.bf16.gmra.mxu0 %v2399
        %v8653 = vpop.f32.mrf.mxu0
        %v8654 = vadd.f32 %v8614, %v8653
        %v8655 = vpop.f32.mrf.mxu0
        %v8656 = vpop.f32.mrf.mxu0
        %v8657 = vpop.f32.mrf.mxu0
        %8658 = vdwg.mxu0
        %8659 = vmatprep.subr.bf16.mxu0 0
        %8660 = vmatpush1.bf16.msra.mxu0 %v6474
        %8661 = vmatprep.subr.bf16.mxu0 0
        %8662 = vmatpush1.bf16.msra.mxu0 %v6473
        %8663 = vmatprep.subr.bf16.mxu0 0
        %8664 = vmatpush1.bf16.msra.mxu0 %v6472
        %8665 = vmatprep.subr.bf16.mxu0 0
        %8666 = vmatpush1.bf16.msra.mxu0 %v6471
        %8667 = vmatprep.subr.bf16.mxu0 0
        %8668 = vmatpush1.bf16.msra.mxu0 %v6470
        %8669 = vmatprep.subr.bf16.mxu0 0
        %8670 = vmatpush1.bf16.msra.mxu0 %v6469
        %8671 = vmatprep.subr.bf16.mxu0 0
        %8672 = vmatpush1.bf16.msra.mxu0 %v6468
        %8673 = vmatprep.subr.bf16.mxu0 0
        %8674 = vmatpush1.bf16.msra.mxu0 %v6467
        %8675 = vmatprep.subr.bf16.mxu0 0
        %8676 = vmatpush2.bf16.msra.mxu0 %v6482
        %8677 = vmatprep.subr.bf16.mxu0 0
        %8678 = vmatpush2.bf16.msra.mxu0 %v6481
        %8679 = vmatprep.subr.bf16.mxu0 0
        %8680 = vmatpush2.bf16.msra.mxu0 %v6480
        %8681 = vmatprep.subr.bf16.mxu0 0
        %8682 = vmatpush2.bf16.msra.mxu0 %v6479
        %8683 = vmatprep.subr.bf16.mxu0 0
        %8684 = vmatpush2.bf16.msra.mxu0 %v6478
        %8685 = vmatprep.subr.bf16.mxu0 0
        %8686 = vmatpush2.bf16.msra.mxu0 %v6477
        %8687 = vmatprep.subr.bf16.mxu0 0
        %8688 = vmatpush2.bf16.msra.mxu0 %v6476
        %8689 = vmatprep.subr.bf16.mxu0 0
        %8690 = vmatpush2.bf16.msra.mxu0 %v6475
        %8691 = vmatprep.mubr.bf16.mxu0 %v2402
        %8692 = vmatmul.mubr.bf16.gmra.mxu0 %v2401
        %v8693 = vpop.f32.mrf.mxu0
        %v8694 = vadd.f32 %v8654, %v8693
        %v8695 = vpop.f32.mrf.mxu0
        %v8696 = vpop.f32.mrf.mxu0
        %v8697 = vpop.f32.mrf.mxu0
        %8698 = vdwg.mxu0
        %8699 = vmatprep.subr.bf16.mxu0 0
        %8700 = vmatpush1.bf16.msra.mxu0 %v6490
        %8701 = vmatprep.subr.bf16.mxu0 0
        %8702 = vmatpush1.bf16.msra.mxu0 %v6489
        %8703 = vmatprep.subr.bf16.mxu0 0
        %8704 = vmatpush1.bf16.msra.mxu0 %v6488
        %8705 = vmatprep.subr.bf16.mxu0 0
        %8706 = vmatpush1.bf16.msra.mxu0 %v6487
        %8707 = vmatprep.subr.bf16.mxu0 0
        %8708 = vmatpush1.bf16.msra.mxu0 %v6486
        %8709 = vmatprep.subr.bf16.mxu0 0
        %8710 = vmatpush1.bf16.msra.mxu0 %v6485
        %8711 = vmatprep.subr.bf16.mxu0 0
        %8712 = vmatpush1.bf16.msra.mxu0 %v6484
        %8713 = vmatprep.subr.bf16.mxu0 0
        %8714 = vmatpush1.bf16.msra.mxu0 %v6483
        %8715 = vmatprep.subr.bf16.mxu0 0
        %8716 = vmatpush2.bf16.msra.mxu0 %v6498
        %8717 = vmatprep.subr.bf16.mxu0 0
        %8718 = vmatpush2.bf16.msra.mxu0 %v6497
        %8719 = vmatprep.subr.bf16.mxu0 0
        %8720 = vmatpush2.bf16.msra.mxu0 %v6496
        %8721 = vmatprep.subr.bf16.mxu0 0
        %8722 = vmatpush2.bf16.msra.mxu0 %v6495
        %8723 = vmatprep.subr.bf16.mxu0 0
        %8724 = vmatpush2.bf16.msra.mxu0 %v6494
        %8725 = vmatprep.subr.bf16.mxu0 0
        %8726 = vmatpush2.bf16.msra.mxu0 %v6493
        %8727 = vmatprep.subr.bf16.mxu0 0
        %8728 = vmatpush2.bf16.msra.mxu0 %v6492
        %8729 = vmatprep.subr.bf16.mxu0 0
        %8730 = vmatpush2.bf16.msra.mxu0 %v6491
        %8731 = vmatprep.mubr.bf16.mxu0 %v2404
        %8732 = vmatmul.mubr.bf16.gmra.mxu0 %v2403
        %v8733 = vpop.f32.mrf.mxu0
        %v8734 = vadd.f32 %v8694, %v8733
        %v8735 = vpop.f32.mrf.mxu0
        %v8736 = vpop.f32.mrf.mxu0
        %v8737 = vpop.f32.mrf.mxu0
        %8738 = vdwg.mxu0
        %8739 = vmatprep.subr.bf16.mxu0 0
        %8740 = vmatpush1.bf16.msra.mxu0 %v6506
        %8741 = vmatprep.subr.bf16.mxu0 0
        %8742 = vmatpush1.bf16.msra.mxu0 %v6505
        %8743 = vmatprep.subr.bf16.mxu0 0
        %8744 = vmatpush1.bf16.msra.mxu0 %v6504
        %8745 = vmatprep.subr.bf16.mxu0 0
        %8746 = vmatpush1.bf16.msra.mxu0 %v6503
        %8747 = vmatprep.subr.bf16.mxu0 0
        %8748 = vmatpush1.bf16.msra.mxu0 %v6502
        %8749 = vmatprep.subr.bf16.mxu0 0
        %8750 = vmatpush1.bf16.msra.mxu0 %v6501
        %8751 = vmatprep.subr.bf16.mxu0 0
        %8752 = vmatpush1.bf16.msra.mxu0 %v6500
        %8753 = vmatprep.subr.bf16.mxu0 0
        %8754 = vmatpush1.bf16.msra.mxu0 %v6499
        %8755 = vmatprep.subr.bf16.mxu0 0
        %8756 = vmatpush2.bf16.msra.mxu0 %v6514
        %8757 = vmatprep.subr.bf16.mxu0 0
        %8758 = vmatpush2.bf16.msra.mxu0 %v6513
        %8759 = vmatprep.subr.bf16.mxu0 0
        %8760 = vmatpush2.bf16.msra.mxu0 %v6512
        %8761 = vmatprep.subr.bf16.mxu0 0
        %8762 = vmatpush2.bf16.msra.mxu0 %v6511
        %8763 = vmatprep.subr.bf16.mxu0 0
        %8764 = vmatpush2.bf16.msra.mxu0 %v6510
        %8765 = vmatprep.subr.bf16.mxu0 0
        %8766 = vmatpush2.bf16.msra.mxu0 %v6509
        %8767 = vmatprep.subr.bf16.mxu0 0
        %8768 = vmatpush2.bf16.msra.mxu0 %v6508
        %8769 = vmatprep.subr.bf16.mxu0 0
        %8770 = vmatpush2.bf16.msra.mxu0 %v6507
        %8771 = vmatprep.mubr.bf16.mxu0 %v2406
        %8772 = vmatmul.mubr.bf16.gmra.mxu0 %v2405
        %v8773 = vpop.f32.mrf.mxu0
        %v8774 = vadd.f32 %v8734, %v8773
        %v8775 = vpop.f32.mrf.mxu0
        %v8776 = vpop.f32.mrf.mxu0
        %v8777 = vpop.f32.mrf.mxu0
        %8778 = vdwg.mxu0
        %8779 = vmatprep.subr.bf16.mxu0 0
        %8780 = vmatpush1.bf16.msra.mxu0 %v6522
        %8781 = vmatprep.subr.bf16.mxu0 0
        %8782 = vmatpush1.bf16.msra.mxu0 %v6521
        %8783 = vmatprep.subr.bf16.mxu0 0
        %8784 = vmatpush1.bf16.msra.mxu0 %v6520
        %8785 = vmatprep.subr.bf16.mxu0 0
        %8786 = vmatpush1.bf16.msra.mxu0 %v6519
        %8787 = vmatprep.subr.bf16.mxu0 0
        %8788 = vmatpush1.bf16.msra.mxu0 %v6518
        %8789 = vmatprep.subr.bf16.mxu0 0
        %8790 = vmatpush1.bf16.msra.mxu0 %v6517
        %8791 = vmatprep.subr.bf16.mxu0 0
        %8792 = vmatpush1.bf16.msra.mxu0 %v6516
        %8793 = vmatprep.subr.bf16.mxu0 0
        %8794 = vmatpush1.bf16.msra.mxu0 %v6515
        %8795 = vmatprep.subr.bf16.mxu0 0
        %8796 = vmatpush2.bf16.msra.mxu0 %v6530
        %8797 = vmatprep.subr.bf16.mxu0 0
        %8798 = vmatpush2.bf16.msra.mxu0 %v6529
        %8799 = vmatprep.subr.bf16.mxu0 0
        %8800 = vmatpush2.bf16.msra.mxu0 %v6528
        %8801 = vmatprep.subr.bf16.mxu0 0
        %8802 = vmatpush2.bf16.msra.mxu0 %v6527
        %8803 = vmatprep.subr.bf16.mxu0 0
        %8804 = vmatpush2.bf16.msra.mxu0 %v6526
        %8805 = vmatprep.subr.bf16.mxu0 0
        %8806 = vmatpush2.bf16.msra.mxu0 %v6525
        %8807 = vmatprep.subr.bf16.mxu0 0
        %8808 = vmatpush2.bf16.msra.mxu0 %v6524
        %8809 = vmatprep.subr.bf16.mxu0 0
        %8810 = vmatpush2.bf16.msra.mxu0 %v6523
        %8811 = vmatprep.mubr.bf16.mxu0 %v2408
        %8812 = vmatmul.mubr.bf16.gmra.mxu0 %v2407
        %v8813 = vpop.f32.mrf.mxu0
        %v8814 = vadd.f32 %v8774, %v8813
        %v8815 = vpop.f32.mrf.mxu0
        %v8816 = vpop.f32.mrf.mxu0
        %v8817 = vpop.f32.mrf.mxu0
        %8818 = vdwg.mxu0
        %8819 = vmatprep.subr.bf16.mxu0 0
        %8820 = vmatpush1.bf16.msra.mxu0 %v6538
        %8821 = vmatprep.subr.bf16.mxu0 0
        %8822 = vmatpush1.bf16.msra.mxu0 %v6537
        %8823 = vmatprep.subr.bf16.mxu0 0
        %8824 = vmatpush1.bf16.msra.mxu0 %v6536
        %8825 = vmatprep.subr.bf16.mxu0 0
        %8826 = vmatpush1.bf16.msra.mxu0 %v6535
        %8827 = vmatprep.subr.bf16.mxu0 0
        %8828 = vmatpush1.bf16.msra.mxu0 %v6534
        %8829 = vmatprep.subr.bf16.mxu0 0
        %8830 = vmatpush1.bf16.msra.mxu0 %v6533
        %8831 = vmatprep.subr.bf16.mxu0 0
        %8832 = vmatpush1.bf16.msra.mxu0 %v6532
        %8833 = vmatprep.subr.bf16.mxu0 0
        %8834 = vmatpush1.bf16.msra.mxu0 %v6531
        %8835 = vmatprep.subr.bf16.mxu0 0
        %8836 = vmatpush2.bf16.msra.mxu0 %v6546
        %8837 = vmatprep.subr.bf16.mxu0 0
        %8838 = vmatpush2.bf16.msra.mxu0 %v6545
        %8839 = vmatprep.subr.bf16.mxu0 0
        %8840 = vmatpush2.bf16.msra.mxu0 %v6544
        %8841 = vmatprep.subr.bf16.mxu0 0
        %8842 = vmatpush2.bf16.msra.mxu0 %v6543
        %8843 = vmatprep.subr.bf16.mxu0 0
        %8844 = vmatpush2.bf16.msra.mxu0 %v6542
        %8845 = vmatprep.subr.bf16.mxu0 0
        %8846 = vmatpush2.bf16.msra.mxu0 %v6541
        %8847 = vmatprep.subr.bf16.mxu0 0
        %8848 = vmatpush2.bf16.msra.mxu0 %v6540
        %8849 = vmatprep.subr.bf16.mxu0 0
        %8850 = vmatpush2.bf16.msra.mxu0 %v6539
        %8851 = vmatprep.mubr.bf16.mxu0 %v2410
        %8852 = vmatmul.mubr.bf16.gmra.mxu0 %v2409
        %v8853 = vpop.f32.mrf.mxu0
        %v8854 = vadd.f32 %v8814, %v8853
        %v8855 = vpop.f32.mrf.mxu0
        %v8856 = vpop.f32.mrf.mxu0
        %v8857 = vpop.f32.mrf.mxu0
        %8858 = vdwg.mxu0
        %8859 = vmatprep.subr.bf16.mxu0 0
        %8860 = vmatpush1.bf16.msra.mxu0 %v6554
        %8861 = vmatprep.subr.bf16.mxu0 0
        %8862 = vmatpush1.bf16.msra.mxu0 %v6553
        %8863 = vmatprep.subr.bf16.mxu0 0
        %8864 = vmatpush1.bf16.msra.mxu0 %v6552
        %8865 = vmatprep.subr.bf16.mxu0 0
        %8866 = vmatpush1.bf16.msra.mxu0 %v6551
        %8867 = vmatprep.subr.bf16.mxu0 0
        %8868 = vmatpush1.bf16.msra.mxu0 %v6550
        %8869 = vmatprep.subr.bf16.mxu0 0
        %8870 = vmatpush1.bf16.msra.mxu0 %v6549
        %8871 = vmatprep.subr.bf16.mxu0 0
        %8872 = vmatpush1.bf16.msra.mxu0 %v6548
        %8873 = vmatprep.subr.bf16.mxu0 0
        %8874 = vmatpush1.bf16.msra.mxu0 %v6547
        %8875 = vmatprep.subr.bf16.mxu0 0
        %8876 = vmatpush2.bf16.msra.mxu0 %v6562
        %8877 = vmatprep.subr.bf16.mxu0 0
        %8878 = vmatpush2.bf16.msra.mxu0 %v6561
        %8879 = vmatprep.subr.bf16.mxu0 0
        %8880 = vmatpush2.bf16.msra.mxu0 %v6560
        %8881 = vmatprep.subr.bf16.mxu0 0
        %8882 = vmatpush2.bf16.msra.mxu0 %v6559
        %8883 = vmatprep.subr.bf16.mxu0 0
        %8884 = vmatpush2.bf16.msra.mxu0 %v6558
        %8885 = vmatprep.subr.bf16.mxu0 0
        %8886 = vmatpush2.bf16.msra.mxu0 %v6557
        %8887 = vmatprep.subr.bf16.mxu0 0
        %8888 = vmatpush2.bf16.msra.mxu0 %v6556
        %8889 = vmatprep.subr.bf16.mxu0 0
        %8890 = vmatpush2.bf16.msra.mxu0 %v6555
        %8891 = vmatprep.mubr.bf16.mxu0 %v2412
        %8892 = vmatmul.mubr.bf16.gmra.mxu0 %v2411
        %v8893 = vpop.f32.mrf.mxu0
        %v8894 = vadd.f32 %v8854, %v8893
        %v8895 = vpop.f32.mrf.mxu0
        %v8896 = vpop.f32.mrf.mxu0
        %v8897 = vpop.f32.mrf.mxu0
        %8898 = vdwg.mxu0
        %8899 = vmatprep.subr.bf16.mxu0 0
        %8900 = vmatpush1.bf16.msra.mxu0 %v6570
        %8901 = vmatprep.subr.bf16.mxu0 0
        %8902 = vmatpush1.bf16.msra.mxu0 %v6569
        %8903 = vmatprep.subr.bf16.mxu0 0
        %8904 = vmatpush1.bf16.msra.mxu0 %v6568
        %8905 = vmatprep.subr.bf16.mxu0 0
        %8906 = vmatpush1.bf16.msra.mxu0 %v6567
        %8907 = vmatprep.subr.bf16.mxu0 0
        %8908 = vmatpush1.bf16.msra.mxu0 %v6566
        %8909 = vmatprep.subr.bf16.mxu0 0
        %8910 = vmatpush1.bf16.msra.mxu0 %v6565
        %8911 = vmatprep.subr.bf16.mxu0 0
        %8912 = vmatpush1.bf16.msra.mxu0 %v6564
        %8913 = vmatprep.subr.bf16.mxu0 0
        %8914 = vmatpush1.bf16.msra.mxu0 %v6563
        %8915 = vmatprep.subr.bf16.mxu0 0
        %8916 = vmatpush2.bf16.msra.mxu0 %v6578
        %8917 = vmatprep.subr.bf16.mxu0 0
        %8918 = vmatpush2.bf16.msra.mxu0 %v6577
        %8919 = vmatprep.subr.bf16.mxu0 0
        %8920 = vmatpush2.bf16.msra.mxu0 %v6576
        %8921 = vmatprep.subr.bf16.mxu0 0
        %8922 = vmatpush2.bf16.msra.mxu0 %v6575
        %8923 = vmatprep.subr.bf16.mxu0 0
        %8924 = vmatpush2.bf16.msra.mxu0 %v6574
        %8925 = vmatprep.subr.bf16.mxu0 0
        %8926 = vmatpush2.bf16.msra.mxu0 %v6573
        %8927 = vmatprep.subr.bf16.mxu0 0
        %8928 = vmatpush2.bf16.msra.mxu0 %v6572
        %8929 = vmatprep.subr.bf16.mxu0 0
        %8930 = vmatpush2.bf16.msra.mxu0 %v6571
        %8931 = vmatprep.mubr.bf16.mxu0 %v2414
        %8932 = vmatmul.mubr.bf16.gmra.mxu0 %v2413
        %v8933 = vpop.f32.mrf.mxu0
        %v8934 = vadd.f32 %v8894, %v8933
        %v8935 = vpop.f32.mrf.mxu0
        %v8936 = vpop.f32.mrf.mxu0
        %v8937 = vpop.f32.mrf.mxu0
        %8938 = vdwg.mxu0
        %8939 = vmatprep.subr.bf16.mxu0 0
        %8940 = vmatpush1.bf16.msra.mxu0 %v6586
        %8941 = vmatprep.subr.bf16.mxu0 0
        %8942 = vmatpush1.bf16.msra.mxu0 %v6585
        %8943 = vmatprep.subr.bf16.mxu0 0
        %8944 = vmatpush1.bf16.msra.mxu0 %v6584
        %8945 = vmatprep.subr.bf16.mxu0 0
        %8946 = vmatpush1.bf16.msra.mxu0 %v6583
        %8947 = vmatprep.subr.bf16.mxu0 0
        %8948 = vmatpush1.bf16.msra.mxu0 %v6582
        %8949 = vmatprep.subr.bf16.mxu0 0
        %8950 = vmatpush1.bf16.msra.mxu0 %v6581
        %8951 = vmatprep.subr.bf16.mxu0 0
        %8952 = vmatpush1.bf16.msra.mxu0 %v6580
        %8953 = vmatprep.subr.bf16.mxu0 0
        %8954 = vmatpush1.bf16.msra.mxu0 %v6579
        %8955 = vmatprep.subr.bf16.mxu0 0
        %8956 = vmatpush2.bf16.msra.mxu0 %v6594
        %8957 = vmatprep.subr.bf16.mxu0 0
        %8958 = vmatpush2.bf16.msra.mxu0 %v6593
        %8959 = vmatprep.subr.bf16.mxu0 0
        %8960 = vmatpush2.bf16.msra.mxu0 %v6592
        %8961 = vmatprep.subr.bf16.mxu0 0
        %8962 = vmatpush2.bf16.msra.mxu0 %v6591
        %8963 = vmatprep.subr.bf16.mxu0 0
        %8964 = vmatpush2.bf16.msra.mxu0 %v6590
        %8965 = vmatprep.subr.bf16.mxu0 0
        %8966 = vmatpush2.bf16.msra.mxu0 %v6589
        %8967 = vmatprep.subr.bf16.mxu0 0
        %8968 = vmatpush2.bf16.msra.mxu0 %v6588
        %8969 = vmatprep.subr.bf16.mxu0 0
        %8970 = vmatpush2.bf16.msra.mxu0 %v6587
        %8971 = vmatprep.mubr.bf16.mxu0 %v2416
        %8972 = vmatmul.mubr.bf16.gmra.mxu0 %v2415
        %v8973 = vpop.f32.mrf.mxu0
        %v8974 = vadd.f32 %v8934, %v8973
        %v8975 = vpop.f32.mrf.mxu0
        %v8976 = vpop.f32.mrf.mxu0
        %v8977 = vpop.f32.mrf.mxu0
        %8978 = vdwg.mxu0
        %8979 = vmatprep.subr.bf16.mxu0 0
        %8980 = vmatpush1.bf16.msra.mxu0 %v6602
        %8981 = vmatprep.subr.bf16.mxu0 0
        %8982 = vmatpush1.bf16.msra.mxu0 %v6601
        %8983 = vmatprep.subr.bf16.mxu0 0
        %8984 = vmatpush1.bf16.msra.mxu0 %v6600
        %8985 = vmatprep.subr.bf16.mxu0 0
        %8986 = vmatpush1.bf16.msra.mxu0 %v6599
        %8987 = vmatprep.subr.bf16.mxu0 0
        %8988 = vmatpush1.bf16.msra.mxu0 %v6598
        %8989 = vmatprep.subr.bf16.mxu0 0
        %8990 = vmatpush1.bf16.msra.mxu0 %v6597
        %8991 = vmatprep.subr.bf16.mxu0 0
        %8992 = vmatpush1.bf16.msra.mxu0 %v6596
        %8993 = vmatprep.subr.bf16.mxu0 0
        %8994 = vmatpush1.bf16.msra.mxu0 %v6595
        %8995 = vmatprep.subr.bf16.mxu0 0
        %8996 = vmatpush2.bf16.msra.mxu0 %v6610
        %8997 = vmatprep.subr.bf16.mxu0 0
        %8998 = vmatpush2.bf16.msra.mxu0 %v6609
        %8999 = vmatprep.subr.bf16.mxu0 0
        %9000 = vmatpush2.bf16.msra.mxu0 %v6608
        %9001 = vmatprep.subr.bf16.mxu0 0
        %9002 = vmatpush2.bf16.msra.mxu0 %v6607
        %9003 = vmatprep.subr.bf16.mxu0 0
        %9004 = vmatpush2.bf16.msra.mxu0 %v6606
        %9005 = vmatprep.subr.bf16.mxu0 0
        %9006 = vmatpush2.bf16.msra.mxu0 %v6605
        %9007 = vmatprep.subr.bf16.mxu0 0
        %9008 = vmatpush2.bf16.msra.mxu0 %v6604
        %9009 = vmatprep.subr.bf16.mxu0 0
        %9010 = vmatpush2.bf16.msra.mxu0 %v6603
        %9011 = vmatprep.mubr.bf16.mxu0 %v2418
        %9012 = vmatmul.mubr.bf16.gmra.mxu0 %v2417
        %v9013 = vpop.f32.mrf.mxu0
        %v9014 = vadd.f32 %v8974, %v9013
        %v9015 = vpop.f32.mrf.mxu0
        %v9016 = vpop.f32.mrf.mxu0
        %v9017 = vpop.f32.mrf.mxu0
        %9018 = vdwg.mxu0
        %9019 = vmatprep.subr.bf16.mxu0 0
        %9020 = vmatpush1.bf16.msra.mxu0 %v6618
        %9021 = vmatprep.subr.bf16.mxu0 0
        %9022 = vmatpush1.bf16.msra.mxu0 %v6617
        %9023 = vmatprep.subr.bf16.mxu0 0
        %9024 = vmatpush1.bf16.msra.mxu0 %v6616
        %9025 = vmatprep.subr.bf16.mxu0 0
        %9026 = vmatpush1.bf16.msra.mxu0 %v6615
        %9027 = vmatprep.subr.bf16.mxu0 0
        %9028 = vmatpush1.bf16.msra.mxu0 %v6614
        %9029 = vmatprep.subr.bf16.mxu0 0
        %9030 = vmatpush1.bf16.msra.mxu0 %v6613
        %9031 = vmatprep.subr.bf16.mxu0 0
        %9032 = vmatpush1.bf16.msra.mxu0 %v6612
        %9033 = vmatprep.subr.bf16.mxu0 0
        %9034 = vmatpush1.bf16.msra.mxu0 %v6611
        %9035 = vmatprep.subr.bf16.mxu0 0
        %9036 = vmatpush2.bf16.msra.mxu0 %v6626
        %9037 = vmatprep.subr.bf16.mxu0 0
        %9038 = vmatpush2.bf16.msra.mxu0 %v6625
        %9039 = vmatprep.subr.bf16.mxu0 0
        %9040 = vmatpush2.bf16.msra.mxu0 %v6624
        %9041 = vmatprep.subr.bf16.mxu0 0
        %9042 = vmatpush2.bf16.msra.mxu0 %v6623
        %9043 = vmatprep.subr.bf16.mxu0 0
        %9044 = vmatpush2.bf16.msra.mxu0 %v6622
        %9045 = vmatprep.subr.bf16.mxu0 0
        %9046 = vmatpush2.bf16.msra.mxu0 %v6621
        %9047 = vmatprep.subr.bf16.mxu0 0
        %9048 = vmatpush2.bf16.msra.mxu0 %v6620
        %9049 = vmatprep.subr.bf16.mxu0 0
        %9050 = vmatpush2.bf16.msra.mxu0 %v6619
        %9051 = vmatprep.mubr.bf16.mxu0 %v2420
        %9052 = vmatmul.mubr.bf16.gmra.mxu0 %v2419
        %v9053 = vpop.f32.mrf.mxu0
        %v9054 = vadd.f32 %v9014, %v9053
        %v9055 = vpop.f32.mrf.mxu0
        %v9056 = vpop.f32.mrf.mxu0
        %v9057 = vpop.f32.mrf.mxu0
        %9058 = vdwg.mxu0
        %9059 = vmatprep.subr.bf16.mxu0 0
        %9060 = vmatpush1.bf16.msra.mxu0 %v6634
        %9061 = vmatprep.subr.bf16.mxu0 0
        %9062 = vmatpush1.bf16.msra.mxu0 %v6633
        %9063 = vmatprep.subr.bf16.mxu0 0
        %9064 = vmatpush1.bf16.msra.mxu0 %v6632
        %9065 = vmatprep.subr.bf16.mxu0 0
        %9066 = vmatpush1.bf16.msra.mxu0 %v6631
        %9067 = vmatprep.subr.bf16.mxu0 0
        %9068 = vmatpush1.bf16.msra.mxu0 %v6630
        %9069 = vmatprep.subr.bf16.mxu0 0
        %9070 = vmatpush1.bf16.msra.mxu0 %v6629
        %9071 = vmatprep.subr.bf16.mxu0 0
        %9072 = vmatpush1.bf16.msra.mxu0 %v6628
        %9073 = vmatprep.subr.bf16.mxu0 0
        %9074 = vmatpush1.bf16.msra.mxu0 %v6627
        %9075 = vmatprep.subr.bf16.mxu0 0
        %9076 = vmatpush2.bf16.msra.mxu0 %v6642
        %9077 = vmatprep.subr.bf16.mxu0 0
        %9078 = vmatpush2.bf16.msra.mxu0 %v6641
        %9079 = vmatprep.subr.bf16.mxu0 0
        %9080 = vmatpush2.bf16.msra.mxu0 %v6640
        %9081 = vmatprep.subr.bf16.mxu0 0
        %9082 = vmatpush2.bf16.msra.mxu0 %v6639
        %9083 = vmatprep.subr.bf16.mxu0 0
        %9084 = vmatpush2.bf16.msra.mxu0 %v6638
        %9085 = vmatprep.subr.bf16.mxu0 0
        %9086 = vmatpush2.bf16.msra.mxu0 %v6637
        %9087 = vmatprep.subr.bf16.mxu0 0
        %9088 = vmatpush2.bf16.msra.mxu0 %v6636
        %9089 = vmatprep.subr.bf16.mxu0 0
        %9090 = vmatpush2.bf16.msra.mxu0 %v6635
        %9091 = vmatprep.mubr.bf16.mxu0 %v2422
        %9092 = vmatmul.mubr.bf16.gmra.mxu0 %v2421
        %v9093 = vpop.f32.mrf.mxu0
        %v9094 = vadd.f32 %v9054, %v9093
        %v9095 = vpop.f32.mrf.mxu0
        %v9096 = vpop.f32.mrf.mxu0
        %v9097 = vpop.f32.mrf.mxu0
        %9098 = vdwg.mxu0
        %9099 = vmatprep.subr.bf16.mxu0 0
        %9100 = vmatpush1.bf16.msra.mxu0 %v6650
        %9101 = vmatprep.subr.bf16.mxu0 0
        %9102 = vmatpush1.bf16.msra.mxu0 %v6649
        %9103 = vmatprep.subr.bf16.mxu0 0
        %9104 = vmatpush1.bf16.msra.mxu0 %v6648
        %9105 = vmatprep.subr.bf16.mxu0 0
        %9106 = vmatpush1.bf16.msra.mxu0 %v6647
        %9107 = vmatprep.subr.bf16.mxu0 0
        %9108 = vmatpush1.bf16.msra.mxu0 %v6646
        %9109 = vmatprep.subr.bf16.mxu0 0
        %9110 = vmatpush1.bf16.msra.mxu0 %v6645
        %9111 = vmatprep.subr.bf16.mxu0 0
        %9112 = vmatpush1.bf16.msra.mxu0 %v6644
        %9113 = vmatprep.subr.bf16.mxu0 0
        %9114 = vmatpush1.bf16.msra.mxu0 %v6643
        %9115 = vmatprep.subr.bf16.mxu0 0
        %9116 = vmatpush2.bf16.msra.mxu0 %v6658
        %9117 = vmatprep.subr.bf16.mxu0 0
        %9118 = vmatpush2.bf16.msra.mxu0 %v6657
        %9119 = vmatprep.subr.bf16.mxu0 0
        %9120 = vmatpush2.bf16.msra.mxu0 %v6656
        %9121 = vmatprep.subr.bf16.mxu0 0
        %9122 = vmatpush2.bf16.msra.mxu0 %v6655
        %9123 = vmatprep.subr.bf16.mxu0 0
        %9124 = vmatpush2.bf16.msra.mxu0 %v6654
        %9125 = vmatprep.subr.bf16.mxu0 0
        %9126 = vmatpush2.bf16.msra.mxu0 %v6653
        %9127 = vmatprep.subr.bf16.mxu0 0
        %9128 = vmatpush2.bf16.msra.mxu0 %v6652
        %9129 = vmatprep.subr.bf16.mxu0 0
        %9130 = vmatpush2.bf16.msra.mxu0 %v6651
        %9131 = vmatprep.mubr.bf16.mxu0 %v2424
        %9132 = vmatmul.mubr.bf16.gmra.mxu0 %v2423
        %v9133 = vpop.f32.mrf.mxu0
        %v9134 = vadd.f32 %v9094, %v9133
        %v9135 = vpop.f32.mrf.mxu0
        %v9136 = vpop.f32.mrf.mxu0
        %v9137 = vpop.f32.mrf.mxu0
        %9138 = vdwg.mxu0
        %9139 = vmatprep.subr.bf16.mxu0 0
        %9140 = vmatpush1.bf16.msra.mxu0 %v6666
        %9141 = vmatprep.subr.bf16.mxu0 0
        %9142 = vmatpush1.bf16.msra.mxu0 %v6665
        %9143 = vmatprep.subr.bf16.mxu0 0
        %9144 = vmatpush1.bf16.msra.mxu0 %v6664
        %9145 = vmatprep.subr.bf16.mxu0 0
        %9146 = vmatpush1.bf16.msra.mxu0 %v6663
        %9147 = vmatprep.subr.bf16.mxu0 0
        %9148 = vmatpush1.bf16.msra.mxu0 %v6662
        %9149 = vmatprep.subr.bf16.mxu0 0
        %9150 = vmatpush1.bf16.msra.mxu0 %v6661
        %9151 = vmatprep.subr.bf16.mxu0 0
        %9152 = vmatpush1.bf16.msra.mxu0 %v6660
        %9153 = vmatprep.subr.bf16.mxu0 0
        %9154 = vmatpush1.bf16.msra.mxu0 %v6659
        %9155 = vmatprep.subr.bf16.mxu0 0
        %9156 = vmatpush2.bf16.msra.mxu0 %v6674
        %9157 = vmatprep.subr.bf16.mxu0 0
        %9158 = vmatpush2.bf16.msra.mxu0 %v6673
        %9159 = vmatprep.subr.bf16.mxu0 0
        %9160 = vmatpush2.bf16.msra.mxu0 %v6672
        %9161 = vmatprep.subr.bf16.mxu0 0
        %9162 = vmatpush2.bf16.msra.mxu0 %v6671
        %9163 = vmatprep.subr.bf16.mxu0 0
        %9164 = vmatpush2.bf16.msra.mxu0 %v6670
        %9165 = vmatprep.subr.bf16.mxu0 0
        %9166 = vmatpush2.bf16.msra.mxu0 %v6669
        %9167 = vmatprep.subr.bf16.mxu0 0
        %9168 = vmatpush2.bf16.msra.mxu0 %v6668
        %9169 = vmatprep.subr.bf16.mxu0 0
        %9170 = vmatpush2.bf16.msra.mxu0 %v6667
        %9171 = vmatprep.mubr.bf16.mxu0 %v2426
        %9172 = vmatmul.mubr.bf16.gmra.mxu0 %v2425
        %v9173 = vpop.f32.mrf.mxu0
        %v9174 = vadd.f32 %v9134, %v9173
        %v9175 = vpop.f32.mrf.mxu0
        %v9176 = vpop.f32.mrf.mxu0
        %v9177 = vpop.f32.mrf.mxu0
        %9178 = vdwg.mxu0
        %9179 = vmatprep.subr.bf16.mxu0 0
        %9180 = vmatpush1.bf16.msra.mxu0 %v6682
        %9181 = vmatprep.subr.bf16.mxu0 0
        %9182 = vmatpush1.bf16.msra.mxu0 %v6681
        %9183 = vmatprep.subr.bf16.mxu0 0
        %9184 = vmatpush1.bf16.msra.mxu0 %v6680
        %9185 = vmatprep.subr.bf16.mxu0 0
        %9186 = vmatpush1.bf16.msra.mxu0 %v6679
        %9187 = vmatprep.subr.bf16.mxu0 0
        %9188 = vmatpush1.bf16.msra.mxu0 %v6678
        %9189 = vmatprep.subr.bf16.mxu0 0
        %9190 = vmatpush1.bf16.msra.mxu0 %v6677
        %9191 = vmatprep.subr.bf16.mxu0 0
        %9192 = vmatpush1.bf16.msra.mxu0 %v6676
        %9193 = vmatprep.subr.bf16.mxu0 0
        %9194 = vmatpush1.bf16.msra.mxu0 %v6675
        %9195 = vmatprep.subr.bf16.mxu0 0
        %9196 = vmatpush2.bf16.msra.mxu0 %v6690
        %9197 = vmatprep.subr.bf16.mxu0 0
        %9198 = vmatpush2.bf16.msra.mxu0 %v6689
        %9199 = vmatprep.subr.bf16.mxu0 0
        %9200 = vmatpush2.bf16.msra.mxu0 %v6688
        %9201 = vmatprep.subr.bf16.mxu0 0
        %9202 = vmatpush2.bf16.msra.mxu0 %v6687
        %9203 = vmatprep.subr.bf16.mxu0 0
        %9204 = vmatpush2.bf16.msra.mxu0 %v6686
        %9205 = vmatprep.subr.bf16.mxu0 0
        %9206 = vmatpush2.bf16.msra.mxu0 %v6685
        %9207 = vmatprep.subr.bf16.mxu0 0
        %9208 = vmatpush2.bf16.msra.mxu0 %v6684
        %9209 = vmatprep.subr.bf16.mxu0 0
        %9210 = vmatpush2.bf16.msra.mxu0 %v6683
        %9211 = vmatprep.mubr.bf16.mxu0 %v2428
        %9212 = vmatmul.mubr.bf16.gmra.mxu0 %v2427
        %v9213 = vpop.f32.mrf.mxu0
        %v9214 = vadd.f32 %v9174, %v9213
        %v9215 = vpop.f32.mrf.mxu0
        %v9216 = vpop.f32.mrf.mxu0
        %v9217 = vpop.f32.mrf.mxu0
        %9218 = vdwg.mxu0
        %9219 = vmatprep.subr.bf16.mxu0 0
        %9220 = vmatpush1.bf16.msra.mxu0 %v6698
        %9221 = vmatprep.subr.bf16.mxu0 0
        %9222 = vmatpush1.bf16.msra.mxu0 %v6697
        %9223 = vmatprep.subr.bf16.mxu0 0
        %9224 = vmatpush1.bf16.msra.mxu0 %v6696
        %9225 = vmatprep.subr.bf16.mxu0 0
        %9226 = vmatpush1.bf16.msra.mxu0 %v6695
        %9227 = vmatprep.subr.bf16.mxu0 0
        %9228 = vmatpush1.bf16.msra.mxu0 %v6694
        %9229 = vmatprep.subr.bf16.mxu0 0
        %9230 = vmatpush1.bf16.msra.mxu0 %v6693
        %9231 = vmatprep.subr.bf16.mxu0 0
        %9232 = vmatpush1.bf16.msra.mxu0 %v6692
        %9233 = vmatprep.subr.bf16.mxu0 0
        %9234 = vmatpush1.bf16.msra.mxu0 %v6691
        %9235 = vmatprep.subr.bf16.mxu0 0
        %9236 = vmatpush2.bf16.msra.mxu0 %v6706
        %9237 = vmatprep.subr.bf16.mxu0 0
        %9238 = vmatpush2.bf16.msra.mxu0 %v6705
        %9239 = vmatprep.subr.bf16.mxu0 0
        %9240 = vmatpush2.bf16.msra.mxu0 %v6704
        %9241 = vmatprep.subr.bf16.mxu0 0
        %9242 = vmatpush2.bf16.msra.mxu0 %v6703
        %9243 = vmatprep.subr.bf16.mxu0 0
        %9244 = vmatpush2.bf16.msra.mxu0 %v6702
        %9245 = vmatprep.subr.bf16.mxu0 0
        %9246 = vmatpush2.bf16.msra.mxu0 %v6701
        %9247 = vmatprep.subr.bf16.mxu0 0
        %9248 = vmatpush2.bf16.msra.mxu0 %v6700
        %9249 = vmatprep.subr.bf16.mxu0 0
        %9250 = vmatpush2.bf16.msra.mxu0 %v6699
        %9251 = vmatprep.mubr.bf16.mxu0 %v2430
        %9252 = vmatmul.mubr.bf16.gmra.mxu0 %v2429
        %v9253 = vpop.f32.mrf.mxu0
        %v9254 = vadd.f32 %v9214, %v9253
        %v9255 = vpop.f32.mrf.mxu0
        %v9256 = vpop.f32.mrf.mxu0
        %v9257 = vpop.f32.mrf.mxu0
        %9258 = vdwg.mxu0
        %9259 = vmatprep.subr.bf16.mxu0 0
        %9260 = vmatpush1.bf16.msra.mxu0 %v6714
        %9261 = vmatprep.subr.bf16.mxu0 0
        %9262 = vmatpush1.bf16.msra.mxu0 %v6713
        %9263 = vmatprep.subr.bf16.mxu0 0
        %9264 = vmatpush1.bf16.msra.mxu0 %v6712
        %9265 = vmatprep.subr.bf16.mxu0 0
        %9266 = vmatpush1.bf16.msra.mxu0 %v6711
        %9267 = vmatprep.subr.bf16.mxu0 0
        %9268 = vmatpush1.bf16.msra.mxu0 %v6710
        %9269 = vmatprep.subr.bf16.mxu0 0
        %9270 = vmatpush1.bf16.msra.mxu0 %v6709
        %9271 = vmatprep.subr.bf16.mxu0 0
        %9272 = vmatpush1.bf16.msra.mxu0 %v6708
        %9273 = vmatprep.subr.bf16.mxu0 0
        %9274 = vmatpush1.bf16.msra.mxu0 %v6707
        %9275 = vmatprep.subr.bf16.mxu0 0
        %9276 = vmatpush2.bf16.msra.mxu0 %v6722
        %9277 = vmatprep.subr.bf16.mxu0 0
        %9278 = vmatpush2.bf16.msra.mxu0 %v6721
        %9279 = vmatprep.subr.bf16.mxu0 0
        %9280 = vmatpush2.bf16.msra.mxu0 %v6720
        %9281 = vmatprep.subr.bf16.mxu0 0
        %9282 = vmatpush2.bf16.msra.mxu0 %v6719
        %9283 = vmatprep.subr.bf16.mxu0 0
        %9284 = vmatpush2.bf16.msra.mxu0 %v6718
        %9285 = vmatprep.subr.bf16.mxu0 0
        %9286 = vmatpush2.bf16.msra.mxu0 %v6717
        %9287 = vmatprep.subr.bf16.mxu0 0
        %9288 = vmatpush2.bf16.msra.mxu0 %v6716
        %9289 = vmatprep.subr.bf16.mxu0 0
        %9290 = vmatpush2.bf16.msra.mxu0 %v6715
        %9291 = vmatprep.mubr.bf16.mxu0 %v2432
        %9292 = vmatmul.mubr.bf16.gmra.mxu0 %v2431
        %v9293 = vpop.f32.mrf.mxu0
        %v9294 = vadd.f32 %v9254, %v9293
        %v9295 = vpop.f32.mrf.mxu0
        %v9296 = vpop.f32.mrf.mxu0
        %v9297 = vpop.f32.mrf.mxu0
        %9298 = vdwg.mxu0
        %9299 = vmatprep.subr.bf16.mxu0 0
        %9300 = vmatpush1.bf16.msra.mxu0 %v6730
        %9301 = vmatprep.subr.bf16.mxu0 0
        %9302 = vmatpush1.bf16.msra.mxu0 %v6729
        %9303 = vmatprep.subr.bf16.mxu0 0
        %9304 = vmatpush1.bf16.msra.mxu0 %v6728
        %9305 = vmatprep.subr.bf16.mxu0 0
        %9306 = vmatpush1.bf16.msra.mxu0 %v6727
        %9307 = vmatprep.subr.bf16.mxu0 0
        %9308 = vmatpush1.bf16.msra.mxu0 %v6726
        %9309 = vmatprep.subr.bf16.mxu0 0
        %9310 = vmatpush1.bf16.msra.mxu0 %v6725
        %9311 = vmatprep.subr.bf16.mxu0 0
        %9312 = vmatpush1.bf16.msra.mxu0 %v6724
        %9313 = vmatprep.subr.bf16.mxu0 0
        %9314 = vmatpush1.bf16.msra.mxu0 %v6723
        %9315 = vmatprep.subr.bf16.mxu0 0
        %9316 = vmatpush2.bf16.msra.mxu0 %v6738
        %9317 = vmatprep.subr.bf16.mxu0 0
        %9318 = vmatpush2.bf16.msra.mxu0 %v6737
        %9319 = vmatprep.subr.bf16.mxu0 0
        %9320 = vmatpush2.bf16.msra.mxu0 %v6736
        %9321 = vmatprep.subr.bf16.mxu0 0
        %9322 = vmatpush2.bf16.msra.mxu0 %v6735
        %9323 = vmatprep.subr.bf16.mxu0 0
        %9324 = vmatpush2.bf16.msra.mxu0 %v6734
        %9325 = vmatprep.subr.bf16.mxu0 0
        %9326 = vmatpush2.bf16.msra.mxu0 %v6733
        %9327 = vmatprep.subr.bf16.mxu0 0
        %9328 = vmatpush2.bf16.msra.mxu0 %v6732
        %9329 = vmatprep.subr.bf16.mxu0 0
        %9330 = vmatpush2.bf16.msra.mxu0 %v6731
        %9331 = vmatprep.mubr.bf16.mxu0 %v2434
        %9332 = vmatmul.mubr.bf16.gmra.mxu0 %v2433
        %v9333 = vpop.f32.mrf.mxu0
        %v9334 = vadd.f32 %v9294, %v9333
        %v9335 = vpop.f32.mrf.mxu0
        %v9336 = vpop.f32.mrf.mxu0
        %v9337 = vpop.f32.mrf.mxu0
        %9338 = vdwg.mxu0
        %9339 = vmatprep.subr.bf16.mxu0 0
        %9340 = vmatpush1.bf16.msra.mxu0 %v6746
        %9341 = vmatprep.subr.bf16.mxu0 0
        %9342 = vmatpush1.bf16.msra.mxu0 %v6745
        %9343 = vmatprep.subr.bf16.mxu0 0
        %9344 = vmatpush1.bf16.msra.mxu0 %v6744
        %9345 = vmatprep.subr.bf16.mxu0 0
        %9346 = vmatpush1.bf16.msra.mxu0 %v6743
        %9347 = vmatprep.subr.bf16.mxu0 0
        %9348 = vmatpush1.bf16.msra.mxu0 %v6742
        %9349 = vmatprep.subr.bf16.mxu0 0
        %9350 = vmatpush1.bf16.msra.mxu0 %v6741
        %9351 = vmatprep.subr.bf16.mxu0 0
        %9352 = vmatpush1.bf16.msra.mxu0 %v6740
        %9353 = vmatprep.subr.bf16.mxu0 0
        %9354 = vmatpush1.bf16.msra.mxu0 %v6739
        %9355 = vmatprep.subr.bf16.mxu0 0
        %9356 = vmatpush2.bf16.msra.mxu0 %v6754
        %9357 = vmatprep.subr.bf16.mxu0 0
        %9358 = vmatpush2.bf16.msra.mxu0 %v6753
        %9359 = vmatprep.subr.bf16.mxu0 0
        %9360 = vmatpush2.bf16.msra.mxu0 %v6752
        %9361 = vmatprep.subr.bf16.mxu0 0
        %9362 = vmatpush2.bf16.msra.mxu0 %v6751
        %9363 = vmatprep.subr.bf16.mxu0 0
        %9364 = vmatpush2.bf16.msra.mxu0 %v6750
        %9365 = vmatprep.subr.bf16.mxu0 0
        %9366 = vmatpush2.bf16.msra.mxu0 %v6749
        %9367 = vmatprep.subr.bf16.mxu0 0
        %9368 = vmatpush2.bf16.msra.mxu0 %v6748
        %9369 = vmatprep.subr.bf16.mxu0 0
        %9370 = vmatpush2.bf16.msra.mxu0 %v6747
        %9371 = vmatprep.mubr.bf16.mxu0 %v2436
        %9372 = vmatmul.mubr.bf16.gmra.mxu0 %v2435
        %v9373 = vpop.f32.mrf.mxu0
        %v9374 = vadd.f32 %v9334, %v9373
        %v9375 = vpop.f32.mrf.mxu0
        %v9376 = vpop.f32.mrf.mxu0
        %v9377 = vpop.f32.mrf.mxu0
        %9378 = vdwg.mxu0
        %9379 = vmatprep.subr.bf16.mxu0 0
        %9380 = vmatpush1.bf16.msra.mxu0 %v6762
        %9381 = vmatprep.subr.bf16.mxu0 0
        %9382 = vmatpush1.bf16.msra.mxu0 %v6761
        %9383 = vmatprep.subr.bf16.mxu0 0
        %9384 = vmatpush1.bf16.msra.mxu0 %v6760
        %9385 = vmatprep.subr.bf16.mxu0 0
        %9386 = vmatpush1.bf16.msra.mxu0 %v6759
        %9387 = vmatprep.subr.bf16.mxu0 0
        %9388 = vmatpush1.bf16.msra.mxu0 %v6758
        %9389 = vmatprep.subr.bf16.mxu0 0
        %9390 = vmatpush1.bf16.msra.mxu0 %v6757
        %9391 = vmatprep.subr.bf16.mxu0 0
        %9392 = vmatpush1.bf16.msra.mxu0 %v6756
        %9393 = vmatprep.subr.bf16.mxu0 0
        %9394 = vmatpush1.bf16.msra.mxu0 %v6755
        %9395 = vmatprep.subr.bf16.mxu0 0
        %9396 = vmatpush2.bf16.msra.mxu0 %v6770
        %9397 = vmatprep.subr.bf16.mxu0 0
        %9398 = vmatpush2.bf16.msra.mxu0 %v6769
        %9399 = vmatprep.subr.bf16.mxu0 0
        %9400 = vmatpush2.bf16.msra.mxu0 %v6768
        %9401 = vmatprep.subr.bf16.mxu0 0
        %9402 = vmatpush2.bf16.msra.mxu0 %v6767
        %9403 = vmatprep.subr.bf16.mxu0 0
        %9404 = vmatpush2.bf16.msra.mxu0 %v6766
        %9405 = vmatprep.subr.bf16.mxu0 0
        %9406 = vmatpush2.bf16.msra.mxu0 %v6765
        %9407 = vmatprep.subr.bf16.mxu0 0
        %9408 = vmatpush2.bf16.msra.mxu0 %v6764
        %9409 = vmatprep.subr.bf16.mxu0 0
        %9410 = vmatpush2.bf16.msra.mxu0 %v6763
        %9411 = vmatprep.mubr.bf16.mxu0 %v2438
        %9412 = vmatmul.mubr.bf16.gmra.mxu0 %v2437
        %v9413 = vpop.f32.mrf.mxu0
        %v9414 = vadd.f32 %v9374, %v9413
        %v9415 = vpop.f32.mrf.mxu0
        %v9416 = vpop.f32.mrf.mxu0
        %v9417 = vpop.f32.mrf.mxu0
        %9418 = vdwg.mxu0
        %9419 = vmatprep.subr.bf16.mxu0 0
        %9420 = vmatpush1.bf16.msra.mxu0 %v6778
        %9421 = vmatprep.subr.bf16.mxu0 0
        %9422 = vmatpush1.bf16.msra.mxu0 %v6777
        %9423 = vmatprep.subr.bf16.mxu0 0
        %9424 = vmatpush1.bf16.msra.mxu0 %v6776
        %9425 = vmatprep.subr.bf16.mxu0 0
        %9426 = vmatpush1.bf16.msra.mxu0 %v6775
        %9427 = vmatprep.subr.bf16.mxu0 0
        %9428 = vmatpush1.bf16.msra.mxu0 %v6774
        %9429 = vmatprep.subr.bf16.mxu0 0
        %9430 = vmatpush1.bf16.msra.mxu0 %v6773
        %9431 = vmatprep.subr.bf16.mxu0 0
        %9432 = vmatpush1.bf16.msra.mxu0 %v6772
        %9433 = vmatprep.subr.bf16.mxu0 0
        %9434 = vmatpush1.bf16.msra.mxu0 %v6771
        %9435 = vmatprep.subr.bf16.mxu0 0
        %9436 = vmatpush2.bf16.msra.mxu0 %v6786
        %9437 = vmatprep.subr.bf16.mxu0 0
        %9438 = vmatpush2.bf16.msra.mxu0 %v6785
        %9439 = vmatprep.subr.bf16.mxu0 0
        %9440 = vmatpush2.bf16.msra.mxu0 %v6784
        %9441 = vmatprep.subr.bf16.mxu0 0
        %9442 = vmatpush2.bf16.msra.mxu0 %v6783
        %9443 = vmatprep.subr.bf16.mxu0 0
        %9444 = vmatpush2.bf16.msra.mxu0 %v6782
        %9445 = vmatprep.subr.bf16.mxu0 0
        %9446 = vmatpush2.bf16.msra.mxu0 %v6781
        %9447 = vmatprep.subr.bf16.mxu0 0
        %9448 = vmatpush2.bf16.msra.mxu0 %v6780
        %9449 = vmatprep.subr.bf16.mxu0 0
        %9450 = vmatpush2.bf16.msra.mxu0 %v6779
        %9451 = vmatprep.mubr.bf16.mxu0 %v2440
        %9452 = vmatmul.mubr.bf16.gmra.mxu0 %v2439
        %v9453 = vpop.f32.mrf.mxu0
        %v9454 = vadd.f32 %v9414, %v9453
        %v9455 = vpop.f32.mrf.mxu0
        %v9456 = vpop.f32.mrf.mxu0
        %v9457 = vpop.f32.mrf.mxu0
        %9458 = vdwg.mxu0
        %9459 = vmatprep.subr.bf16.mxu0 0
        %9460 = vmatpush1.bf16.msra.mxu0 %v6794
        %9461 = vmatprep.subr.bf16.mxu0 0
        %9462 = vmatpush1.bf16.msra.mxu0 %v6793
        %9463 = vmatprep.subr.bf16.mxu0 0
        %9464 = vmatpush1.bf16.msra.mxu0 %v6792
        %9465 = vmatprep.subr.bf16.mxu0 0
        %9466 = vmatpush1.bf16.msra.mxu0 %v6791
        %9467 = vmatprep.subr.bf16.mxu0 0
        %9468 = vmatpush1.bf16.msra.mxu0 %v6790
        %9469 = vmatprep.subr.bf16.mxu0 0
        %9470 = vmatpush1.bf16.msra.mxu0 %v6789
        %9471 = vmatprep.subr.bf16.mxu0 0
        %9472 = vmatpush1.bf16.msra.mxu0 %v6788
        %9473 = vmatprep.subr.bf16.mxu0 0
        %9474 = vmatpush1.bf16.msra.mxu0 %v6787
        %9475 = vmatprep.subr.bf16.mxu0 0
        %9476 = vmatpush2.bf16.msra.mxu0 %v6802
        %9477 = vmatprep.subr.bf16.mxu0 0
        %9478 = vmatpush2.bf16.msra.mxu0 %v6801
        %9479 = vmatprep.subr.bf16.mxu0 0
        %9480 = vmatpush2.bf16.msra.mxu0 %v6800
        %9481 = vmatprep.subr.bf16.mxu0 0
        %9482 = vmatpush2.bf16.msra.mxu0 %v6799
        %9483 = vmatprep.subr.bf16.mxu0 0
        %9484 = vmatpush2.bf16.msra.mxu0 %v6798
        %9485 = vmatprep.subr.bf16.mxu0 0
        %9486 = vmatpush2.bf16.msra.mxu0 %v6797
        %9487 = vmatprep.subr.bf16.mxu0 0
        %9488 = vmatpush2.bf16.msra.mxu0 %v6796
        %9489 = vmatprep.subr.bf16.mxu0 0
        %9490 = vmatpush2.bf16.msra.mxu0 %v6795
        %9491 = vmatprep.mubr.bf16.mxu0 %v2442
        %9492 = vmatmul.mubr.bf16.gmra.mxu0 %v2441
        %v9493 = vpop.f32.mrf.mxu0
        %v9494 = vadd.f32 %v9454, %v9493
        %v9495 = vpop.f32.mrf.mxu0
        %v9496 = vpop.f32.mrf.mxu0
        %v9497 = vpop.f32.mrf.mxu0
        %9498 = vdwg.mxu0
        %9499 = vmatprep.subr.bf16.mxu0 0
        %9500 = vmatpush1.bf16.msra.mxu0 %v6810
        %9501 = vmatprep.subr.bf16.mxu0 0
        %9502 = vmatpush1.bf16.msra.mxu0 %v6809
        %9503 = vmatprep.subr.bf16.mxu0 0
        %9504 = vmatpush1.bf16.msra.mxu0 %v6808
        %9505 = vmatprep.subr.bf16.mxu0 0
        %9506 = vmatpush1.bf16.msra.mxu0 %v6807
        %9507 = vmatprep.subr.bf16.mxu0 0
        %9508 = vmatpush1.bf16.msra.mxu0 %v6806
        %9509 = vmatprep.subr.bf16.mxu0 0
        %9510 = vmatpush1.bf16.msra.mxu0 %v6805
        %9511 = vmatprep.subr.bf16.mxu0 0
        %9512 = vmatpush1.bf16.msra.mxu0 %v6804
        %9513 = vmatprep.subr.bf16.mxu0 0
        %9514 = vmatpush1.bf16.msra.mxu0 %v6803
        %9515 = vmatprep.subr.bf16.mxu0 0
        %9516 = vmatpush2.bf16.msra.mxu0 %v6818
        %9517 = vmatprep.subr.bf16.mxu0 0
        %9518 = vmatpush2.bf16.msra.mxu0 %v6817
        %9519 = vmatprep.subr.bf16.mxu0 0
        %9520 = vmatpush2.bf16.msra.mxu0 %v6816
        %9521 = vmatprep.subr.bf16.mxu0 0
        %9522 = vmatpush2.bf16.msra.mxu0 %v6815
        %9523 = vmatprep.subr.bf16.mxu0 0
        %9524 = vmatpush2.bf16.msra.mxu0 %v6814
        %9525 = vmatprep.subr.bf16.mxu0 0
        %9526 = vmatpush2.bf16.msra.mxu0 %v6813
        %9527 = vmatprep.subr.bf16.mxu0 0
        %9528 = vmatpush2.bf16.msra.mxu0 %v6812
        %9529 = vmatprep.subr.bf16.mxu0 0
        %9530 = vmatpush2.bf16.msra.mxu0 %v6811
        %9531 = vmatprep.mubr.bf16.mxu0 %v2444
        %9532 = vmatmul.mubr.bf16.gmra.mxu0 %v2443
        %v9533 = vpop.f32.mrf.mxu0
        %v9534 = vadd.f32 %v9494, %v9533
        %v9535 = vpop.f32.mrf.mxu0
        %v9536 = vpop.f32.mrf.mxu0
        %v9537 = vpop.f32.mrf.mxu0
        %9538 = vdwg.mxu0
        %9539 = vmatprep.subr.bf16.mxu0 0
        %9540 = vmatpush1.bf16.msra.mxu0 %v6826
        %9541 = vmatprep.subr.bf16.mxu0 0
        %9542 = vmatpush1.bf16.msra.mxu0 %v6825
        %9543 = vmatprep.subr.bf16.mxu0 0
        %9544 = vmatpush1.bf16.msra.mxu0 %v6824
        %9545 = vmatprep.subr.bf16.mxu0 0
        %9546 = vmatpush1.bf16.msra.mxu0 %v6823
        %9547 = vmatprep.subr.bf16.mxu0 0
        %9548 = vmatpush1.bf16.msra.mxu0 %v6822
        %9549 = vmatprep.subr.bf16.mxu0 0
        %9550 = vmatpush1.bf16.msra.mxu0 %v6821
        %9551 = vmatprep.subr.bf16.mxu0 0
        %9552 = vmatpush1.bf16.msra.mxu0 %v6820
        %9553 = vmatprep.subr.bf16.mxu0 0
        %9554 = vmatpush1.bf16.msra.mxu0 %v6819
        %9555 = vmatprep.subr.bf16.mxu0 0
        %9556 = vmatpush2.bf16.msra.mxu0 %v6834
        %9557 = vmatprep.subr.bf16.mxu0 0
        %9558 = vmatpush2.bf16.msra.mxu0 %v6833
        %9559 = vmatprep.subr.bf16.mxu0 0
        %9560 = vmatpush2.bf16.msra.mxu0 %v6832
        %9561 = vmatprep.subr.bf16.mxu0 0
        %9562 = vmatpush2.bf16.msra.mxu0 %v6831
        %9563 = vmatprep.subr.bf16.mxu0 0
        %9564 = vmatpush2.bf16.msra.mxu0 %v6830
        %9565 = vmatprep.subr.bf16.mxu0 0
        %9566 = vmatpush2.bf16.msra.mxu0 %v6829
        %9567 = vmatprep.subr.bf16.mxu0 0
        %9568 = vmatpush2.bf16.msra.mxu0 %v6828
        %9569 = vmatprep.subr.bf16.mxu0 0
        %9570 = vmatpush2.bf16.msra.mxu0 %v6827
        %9571 = vmatprep.mubr.bf16.mxu0 %v2446
        %9572 = vmatmul.mubr.bf16.gmra.mxu0 %v2445
        %v9573 = vpop.f32.mrf.mxu0
        %v9574 = vadd.f32 %v9534, %v9573
        %v9575 = vpop.f32.mrf.mxu0
        %v9576 = vpop.f32.mrf.mxu0
        %v9577 = vpop.f32.mrf.mxu0
        %9578 = vdwg.mxu0
        %9579 = vmatprep.subr.bf16.mxu0 0
        %9580 = vmatpush1.bf16.msra.mxu0 %v6842
        %9581 = vmatprep.subr.bf16.mxu0 0
        %9582 = vmatpush1.bf16.msra.mxu0 %v6841
        %9583 = vmatprep.subr.bf16.mxu0 0
        %9584 = vmatpush1.bf16.msra.mxu0 %v6840
        %9585 = vmatprep.subr.bf16.mxu0 0
        %9586 = vmatpush1.bf16.msra.mxu0 %v6839
        %9587 = vmatprep.subr.bf16.mxu0 0
        %9588 = vmatpush1.bf16.msra.mxu0 %v6838
        %9589 = vmatprep.subr.bf16.mxu0 0
        %9590 = vmatpush1.bf16.msra.mxu0 %v6837
        %9591 = vmatprep.subr.bf16.mxu0 0
        %9592 = vmatpush1.bf16.msra.mxu0 %v6836
        %9593 = vmatprep.subr.bf16.mxu0 0
        %9594 = vmatpush1.bf16.msra.mxu0 %v6835
        %9595 = vmatprep.subr.bf16.mxu0 0
        %9596 = vmatpush2.bf16.msra.mxu0 %v6850
        %9597 = vmatprep.subr.bf16.mxu0 0
        %9598 = vmatpush2.bf16.msra.mxu0 %v6849
        %9599 = vmatprep.subr.bf16.mxu0 0
        %9600 = vmatpush2.bf16.msra.mxu0 %v6848
        %9601 = vmatprep.subr.bf16.mxu0 0
        %9602 = vmatpush2.bf16.msra.mxu0 %v6847
        %9603 = vmatprep.subr.bf16.mxu0 0
        %9604 = vmatpush2.bf16.msra.mxu0 %v6846
        %9605 = vmatprep.subr.bf16.mxu0 0
        %9606 = vmatpush2.bf16.msra.mxu0 %v6845
        %9607 = vmatprep.subr.bf16.mxu0 0
        %9608 = vmatpush2.bf16.msra.mxu0 %v6844
        %9609 = vmatprep.subr.bf16.mxu0 0
        %9610 = vmatpush2.bf16.msra.mxu0 %v6843
        %9611 = vmatprep.mubr.bf16.mxu0 %v2448
        %9612 = vmatmul.mubr.bf16.gmra.mxu0 %v2447
        %v9613 = vpop.f32.mrf.mxu0
        %v9614 = vadd.f32 %v9574, %v9613
        %v9615 = vpop.f32.mrf.mxu0
        %v9616 = vpop.f32.mrf.mxu0
        %v9617 = vpop.f32.mrf.mxu0
        %9618 = vdwg.mxu0
        %9619 = vmatprep.subr.bf16.mxu0 0
        %9620 = vmatpush1.bf16.msra.mxu0 %v6858
        %9621 = vmatprep.subr.bf16.mxu0 0
        %9622 = vmatpush1.bf16.msra.mxu0 %v6857
        %9623 = vmatprep.subr.bf16.mxu0 0
        %9624 = vmatpush1.bf16.msra.mxu0 %v6856
        %9625 = vmatprep.subr.bf16.mxu0 0
        %9626 = vmatpush1.bf16.msra.mxu0 %v6855
        %9627 = vmatprep.subr.bf16.mxu0 0
        %9628 = vmatpush1.bf16.msra.mxu0 %v6854
        %9629 = vmatprep.subr.bf16.mxu0 0
        %9630 = vmatpush1.bf16.msra.mxu0 %v6853
        %9631 = vmatprep.subr.bf16.mxu0 0
        %9632 = vmatpush1.bf16.msra.mxu0 %v6852
        %9633 = vmatprep.subr.bf16.mxu0 0
        %9634 = vmatpush1.bf16.msra.mxu0 %v6851
        %9635 = vmatprep.subr.bf16.mxu0 0
        %9636 = vmatpush2.bf16.msra.mxu0 %v6866
        %9637 = vmatprep.subr.bf16.mxu0 0
        %9638 = vmatpush2.bf16.msra.mxu0 %v6865
        %9639 = vmatprep.subr.bf16.mxu0 0
        %9640 = vmatpush2.bf16.msra.mxu0 %v6864
        %9641 = vmatprep.subr.bf16.mxu0 0
        %9642 = vmatpush2.bf16.msra.mxu0 %v6863
        %9643 = vmatprep.subr.bf16.mxu0 0
        %9644 = vmatpush2.bf16.msra.mxu0 %v6862
        %9645 = vmatprep.subr.bf16.mxu0 0
        %9646 = vmatpush2.bf16.msra.mxu0 %v6861
        %9647 = vmatprep.subr.bf16.mxu0 0
        %9648 = vmatpush2.bf16.msra.mxu0 %v6860
        %9649 = vmatprep.subr.bf16.mxu0 0
        %9650 = vmatpush2.bf16.msra.mxu0 %v6859
        %9651 = vmatprep.mubr.bf16.mxu0 %v2450
        %9652 = vmatmul.mubr.bf16.gmra.mxu0 %v2449
        %v9653 = vpop.f32.mrf.mxu0
        %v9654 = vadd.f32 %v9614, %v9653
        %v9655 = vpop.f32.mrf.mxu0
        %v9656 = vpop.f32.mrf.mxu0
        %v9657 = vpop.f32.mrf.mxu0
        %9658 = vdwg.mxu0
        %9659 = vmatprep.subr.bf16.mxu0 0
        %9660 = vmatpush1.bf16.msra.mxu0 %v6874
        %9661 = vmatprep.subr.bf16.mxu0 0
        %9662 = vmatpush1.bf16.msra.mxu0 %v6873
        %9663 = vmatprep.subr.bf16.mxu0 0
        %9664 = vmatpush1.bf16.msra.mxu0 %v6872
        %9665 = vmatprep.subr.bf16.mxu0 0
        %9666 = vmatpush1.bf16.msra.mxu0 %v6871
        %9667 = vmatprep.subr.bf16.mxu0 0
        %9668 = vmatpush1.bf16.msra.mxu0 %v6870
        %9669 = vmatprep.subr.bf16.mxu0 0
        %9670 = vmatpush1.bf16.msra.mxu0 %v6869
        %9671 = vmatprep.subr.bf16.mxu0 0
        %9672 = vmatpush1.bf16.msra.mxu0 %v6868
        %9673 = vmatprep.subr.bf16.mxu0 0
        %9674 = vmatpush1.bf16.msra.mxu0 %v6867
        %9675 = vmatprep.subr.bf16.mxu0 0
        %9676 = vmatpush2.bf16.msra.mxu0 %v6882
        %9677 = vmatprep.subr.bf16.mxu0 0
        %9678 = vmatpush2.bf16.msra.mxu0 %v6881
        %9679 = vmatprep.subr.bf16.mxu0 0
        %9680 = vmatpush2.bf16.msra.mxu0 %v6880
        %9681 = vmatprep.subr.bf16.mxu0 0
        %9682 = vmatpush2.bf16.msra.mxu0 %v6879
        %9683 = vmatprep.subr.bf16.mxu0 0
        %9684 = vmatpush2.bf16.msra.mxu0 %v6878
        %9685 = vmatprep.subr.bf16.mxu0 0
        %9686 = vmatpush2.bf16.msra.mxu0 %v6877
        %9687 = vmatprep.subr.bf16.mxu0 0
        %9688 = vmatpush2.bf16.msra.mxu0 %v6876
        %9689 = vmatprep.subr.bf16.mxu0 0
        %9690 = vmatpush2.bf16.msra.mxu0 %v6875
        %9691 = vmatprep.mubr.bf16.mxu0 %v2452
        %9692 = vmatmul.mubr.bf16.gmra.mxu0 %v2451
        %v9693 = vpop.f32.mrf.mxu0
        %v9694 = vadd.f32 %v9654, %v9693
        %v9695 = vpop.f32.mrf.mxu0
        %v9696 = vpop.f32.mrf.mxu0
        %v9697 = vpop.f32.mrf.mxu0
        %9698 = vdwg.mxu0
        %9699 = vmatprep.subr.bf16.mxu0 0
        %9700 = vmatpush1.bf16.msra.mxu0 %v6890
        %9701 = vmatprep.subr.bf16.mxu0 0
        %9702 = vmatpush1.bf16.msra.mxu0 %v6889
        %9703 = vmatprep.subr.bf16.mxu0 0
        %9704 = vmatpush1.bf16.msra.mxu0 %v6888
        %9705 = vmatprep.subr.bf16.mxu0 0
        %9706 = vmatpush1.bf16.msra.mxu0 %v6887
        %9707 = vmatprep.subr.bf16.mxu0 0
        %9708 = vmatpush1.bf16.msra.mxu0 %v6886
        %9709 = vmatprep.subr.bf16.mxu0 0
        %9710 = vmatpush1.bf16.msra.mxu0 %v6885
        %9711 = vmatprep.subr.bf16.mxu0 0
        %9712 = vmatpush1.bf16.msra.mxu0 %v6884
        %9713 = vmatprep.subr.bf16.mxu0 0
        %9714 = vmatpush1.bf16.msra.mxu0 %v6883
        %9715 = vmatprep.subr.bf16.mxu0 0
        %9716 = vmatpush2.bf16.msra.mxu0 %v6898
        %9717 = vmatprep.subr.bf16.mxu0 0
        %9718 = vmatpush2.bf16.msra.mxu0 %v6897
        %9719 = vmatprep.subr.bf16.mxu0 0
        %9720 = vmatpush2.bf16.msra.mxu0 %v6896
        %9721 = vmatprep.subr.bf16.mxu0 0
        %9722 = vmatpush2.bf16.msra.mxu0 %v6895
        %9723 = vmatprep.subr.bf16.mxu0 0
        %9724 = vmatpush2.bf16.msra.mxu0 %v6894
        %9725 = vmatprep.subr.bf16.mxu0 0
        %9726 = vmatpush2.bf16.msra.mxu0 %v6893
        %9727 = vmatprep.subr.bf16.mxu0 0
        %9728 = vmatpush2.bf16.msra.mxu0 %v6892
        %9729 = vmatprep.subr.bf16.mxu0 0
        %9730 = vmatpush2.bf16.msra.mxu0 %v6891
        %9731 = vmatprep.mubr.bf16.mxu0 %v2454
        %9732 = vmatmul.mubr.bf16.gmra.mxu0 %v2453
        %v9733 = vpop.f32.mrf.mxu0
        %v9734 = vadd.f32 %v9694, %v9733
        %v9735 = vpop.f32.mrf.mxu0
        %v9736 = vpop.f32.mrf.mxu0
        %v9737 = vpop.f32.mrf.mxu0
        %9738 = vdwg.mxu0
        %9739 = vmatprep.subr.bf16.mxu0 0
        %9740 = vmatpush1.bf16.msra.mxu0 %v6906
        %9741 = vmatprep.subr.bf16.mxu0 0
        %9742 = vmatpush1.bf16.msra.mxu0 %v6905
        %9743 = vmatprep.subr.bf16.mxu0 0
        %9744 = vmatpush1.bf16.msra.mxu0 %v6904
        %9745 = vmatprep.subr.bf16.mxu0 0
        %9746 = vmatpush1.bf16.msra.mxu0 %v6903
        %9747 = vmatprep.subr.bf16.mxu0 0
        %9748 = vmatpush1.bf16.msra.mxu0 %v6902
        %9749 = vmatprep.subr.bf16.mxu0 0
        %9750 = vmatpush1.bf16.msra.mxu0 %v6901
        %9751 = vmatprep.subr.bf16.mxu0 0
        %9752 = vmatpush1.bf16.msra.mxu0 %v6900
        %9753 = vmatprep.subr.bf16.mxu0 0
        %9754 = vmatpush1.bf16.msra.mxu0 %v6899
        %9755 = vmatprep.subr.bf16.mxu0 0
        %9756 = vmatpush2.bf16.msra.mxu0 %v6914
        %9757 = vmatprep.subr.bf16.mxu0 0
        %9758 = vmatpush2.bf16.msra.mxu0 %v6913
        %9759 = vmatprep.subr.bf16.mxu0 0
        %9760 = vmatpush2.bf16.msra.mxu0 %v6912
        %9761 = vmatprep.subr.bf16.mxu0 0
        %9762 = vmatpush2.bf16.msra.mxu0 %v6911
        %9763 = vmatprep.subr.bf16.mxu0 0
        %9764 = vmatpush2.bf16.msra.mxu0 %v6910
        %9765 = vmatprep.subr.bf16.mxu0 0
        %9766 = vmatpush2.bf16.msra.mxu0 %v6909
        %9767 = vmatprep.subr.bf16.mxu0 0
        %9768 = vmatpush2.bf16.msra.mxu0 %v6908
        %9769 = vmatprep.subr.bf16.mxu0 0
        %9770 = vmatpush2.bf16.msra.mxu0 %v6907
        %9771 = vmatprep.mubr.bf16.mxu0 %v2456
        %9772 = vmatmul.mubr.bf16.gmra.mxu0 %v2455
        %v9773 = vpop.f32.mrf.mxu0
        %v9774 = vadd.f32 %v9734, %v9773
        %v9775 = vpop.f32.mrf.mxu0
        %v9776 = vpop.f32.mrf.mxu0
        %v9777 = vpop.f32.mrf.mxu0
        %9778 = vdwg.mxu0
        %9779 = vmatprep.subr.bf16.mxu0 0
        %9780 = vmatpush1.bf16.msra.mxu0 %v6922
        %9781 = vmatprep.subr.bf16.mxu0 0
        %9782 = vmatpush1.bf16.msra.mxu0 %v6921
        %9783 = vmatprep.subr.bf16.mxu0 0
        %9784 = vmatpush1.bf16.msra.mxu0 %v6920
        %9785 = vmatprep.subr.bf16.mxu0 0
        %9786 = vmatpush1.bf16.msra.mxu0 %v6919
        %9787 = vmatprep.subr.bf16.mxu0 0
        %9788 = vmatpush1.bf16.msra.mxu0 %v6918
        %9789 = vmatprep.subr.bf16.mxu0 0
        %9790 = vmatpush1.bf16.msra.mxu0 %v6917
        %9791 = vmatprep.subr.bf16.mxu0 0
        %9792 = vmatpush1.bf16.msra.mxu0 %v6916
        %9793 = vmatprep.subr.bf16.mxu0 0
        %9794 = vmatpush1.bf16.msra.mxu0 %v6915
        %9795 = vmatprep.subr.bf16.mxu0 0
        %9796 = vmatpush2.bf16.msra.mxu0 %v6930
        %9797 = vmatprep.subr.bf16.mxu0 0
        %9798 = vmatpush2.bf16.msra.mxu0 %v6929
        %9799 = vmatprep.subr.bf16.mxu0 0
        %9800 = vmatpush2.bf16.msra.mxu0 %v6928
        %9801 = vmatprep.subr.bf16.mxu0 0
        %9802 = vmatpush2.bf16.msra.mxu0 %v6927
        %9803 = vmatprep.subr.bf16.mxu0 0
        %9804 = vmatpush2.bf16.msra.mxu0 %v6926
        %9805 = vmatprep.subr.bf16.mxu0 0
        %9806 = vmatpush2.bf16.msra.mxu0 %v6925
        %9807 = vmatprep.subr.bf16.mxu0 0
        %9808 = vmatpush2.bf16.msra.mxu0 %v6924
        %9809 = vmatprep.subr.bf16.mxu0 0
        %9810 = vmatpush2.bf16.msra.mxu0 %v6923
        %9811 = vmatprep.mubr.bf16.mxu0 %v2458
        %9812 = vmatmul.mubr.bf16.gmra.mxu0 %v2457
        %v9813 = vpop.f32.mrf.mxu0
        %v9814 = vadd.f32 %v9774, %v9813
        %v9815 = vpop.f32.mrf.mxu0
        %v9816 = vpop.f32.mrf.mxu0
        %v9817 = vpop.f32.mrf.mxu0
        %9818 = vdwg.mxu0
        %9819 = vmatprep.subr.bf16.mxu0 0
        %9820 = vmatpush1.bf16.msra.mxu0 %v6938
        %9821 = vmatprep.subr.bf16.mxu0 0
        %9822 = vmatpush1.bf16.msra.mxu0 %v6937
        %9823 = vmatprep.subr.bf16.mxu0 0
        %9824 = vmatpush1.bf16.msra.mxu0 %v6936
        %9825 = vmatprep.subr.bf16.mxu0 0
        %9826 = vmatpush1.bf16.msra.mxu0 %v6935
        %9827 = vmatprep.subr.bf16.mxu0 0
        %9828 = vmatpush1.bf16.msra.mxu0 %v6934
        %9829 = vmatprep.subr.bf16.mxu0 0
        %9830 = vmatpush1.bf16.msra.mxu0 %v6933
        %9831 = vmatprep.subr.bf16.mxu0 0
        %9832 = vmatpush1.bf16.msra.mxu0 %v6932
        %9833 = vmatprep.subr.bf16.mxu0 0
        %9834 = vmatpush1.bf16.msra.mxu0 %v6931
        %9835 = vmatprep.subr.bf16.mxu0 0
        %9836 = vmatpush2.bf16.msra.mxu0 %v6946
        %9837 = vmatprep.subr.bf16.mxu0 0
        %9838 = vmatpush2.bf16.msra.mxu0 %v6945
        %9839 = vmatprep.subr.bf16.mxu0 0
        %9840 = vmatpush2.bf16.msra.mxu0 %v6944
        %9841 = vmatprep.subr.bf16.mxu0 0
        %9842 = vmatpush2.bf16.msra.mxu0 %v6943
        %9843 = vmatprep.subr.bf16.mxu0 0
        %9844 = vmatpush2.bf16.msra.mxu0 %v6942
        %9845 = vmatprep.subr.bf16.mxu0 0
        %9846 = vmatpush2.bf16.msra.mxu0 %v6941
        %9847 = vmatprep.subr.bf16.mxu0 0
        %9848 = vmatpush2.bf16.msra.mxu0 %v6940
        %9849 = vmatprep.subr.bf16.mxu0 0
        %9850 = vmatpush2.bf16.msra.mxu0 %v6939
        %9851 = vmatprep.mubr.bf16.mxu0 %v2460
        %9852 = vmatmul.mubr.bf16.gmra.mxu0 %v2459
        %v9853 = vpop.f32.mrf.mxu0
        %v9854 = vadd.f32 %v9814, %v9853
        %v9855 = vpop.f32.mrf.mxu0
        %v9856 = vpop.f32.mrf.mxu0
        %v9857 = vpop.f32.mrf.mxu0
        %9858 = vdwg.mxu0
        %9859 = vmatprep.subr.bf16.mxu0 0
        %9860 = vmatpush1.bf16.msra.mxu0 %v6954
        %9861 = vmatprep.subr.bf16.mxu0 0
        %9862 = vmatpush1.bf16.msra.mxu0 %v6953
        %9863 = vmatprep.subr.bf16.mxu0 0
        %9864 = vmatpush1.bf16.msra.mxu0 %v6952
        %9865 = vmatprep.subr.bf16.mxu0 0
        %9866 = vmatpush1.bf16.msra.mxu0 %v6951
        %9867 = vmatprep.subr.bf16.mxu0 0
        %9868 = vmatpush1.bf16.msra.mxu0 %v6950
        %9869 = vmatprep.subr.bf16.mxu0 0
        %9870 = vmatpush1.bf16.msra.mxu0 %v6949
        %9871 = vmatprep.subr.bf16.mxu0 0
        %9872 = vmatpush1.bf16.msra.mxu0 %v6948
        %9873 = vmatprep.subr.bf16.mxu0 0
        %9874 = vmatpush1.bf16.msra.mxu0 %v6947
        %9875 = vmatprep.subr.bf16.mxu0 0
        %9876 = vmatpush2.bf16.msra.mxu0 %v6962
        %9877 = vmatprep.subr.bf16.mxu0 0
        %9878 = vmatpush2.bf16.msra.mxu0 %v6961
        %9879 = vmatprep.subr.bf16.mxu0 0
        %9880 = vmatpush2.bf16.msra.mxu0 %v6960
        %9881 = vmatprep.subr.bf16.mxu0 0
        %9882 = vmatpush2.bf16.msra.mxu0 %v6959
        %9883 = vmatprep.subr.bf16.mxu0 0
        %9884 = vmatpush2.bf16.msra.mxu0 %v6958
        %9885 = vmatprep.subr.bf16.mxu0 0
        %9886 = vmatpush2.bf16.msra.mxu0 %v6957
        %9887 = vmatprep.subr.bf16.mxu0 0
        %9888 = vmatpush2.bf16.msra.mxu0 %v6956
        %9889 = vmatprep.subr.bf16.mxu0 0
        %9890 = vmatpush2.bf16.msra.mxu0 %v6955
        %9891 = vmatprep.mubr.bf16.mxu0 %v2462
        %9892 = vmatmul.mubr.bf16.gmra.mxu0 %v2461
        %v9893 = vpop.f32.mrf.mxu0
        %v9894 = vadd.f32 %v9854, %v9893
        %v9895 = vpop.f32.mrf.mxu0
        %v9896 = vpop.f32.mrf.mxu0
        %v9897 = vpop.f32.mrf.mxu0
        %9898 = vdwg.mxu0
        %9899 = vmatprep.subr.bf16.mxu0 0
        %9900 = vmatpush1.bf16.msra.mxu0 %v6970
        %9901 = vmatprep.subr.bf16.mxu0 0
        %9902 = vmatpush1.bf16.msra.mxu0 %v6969
        %9903 = vmatprep.subr.bf16.mxu0 0
        %9904 = vmatpush1.bf16.msra.mxu0 %v6968
        %9905 = vmatprep.subr.bf16.mxu0 0
        %9906 = vmatpush1.bf16.msra.mxu0 %v6967
        %9907 = vmatprep.subr.bf16.mxu0 0
        %9908 = vmatpush1.bf16.msra.mxu0 %v6966
        %9909 = vmatprep.subr.bf16.mxu0 0
        %9910 = vmatpush1.bf16.msra.mxu0 %v6965
        %9911 = vmatprep.subr.bf16.mxu0 0
        %9912 = vmatpush1.bf16.msra.mxu0 %v6964
        %9913 = vmatprep.subr.bf16.mxu0 0
        %9914 = vmatpush1.bf16.msra.mxu0 %v6963
        %9915 = vmatprep.subr.bf16.mxu0 0
        %9916 = vmatpush2.bf16.msra.mxu0 %v6978
        %9917 = vmatprep.subr.bf16.mxu0 0
        %9918 = vmatpush2.bf16.msra.mxu0 %v6977
        %9919 = vmatprep.subr.bf16.mxu0 0
        %9920 = vmatpush2.bf16.msra.mxu0 %v6976
        %9921 = vmatprep.subr.bf16.mxu0 0
        %9922 = vmatpush2.bf16.msra.mxu0 %v6975
        %9923 = vmatprep.subr.bf16.mxu0 0
        %9924 = vmatpush2.bf16.msra.mxu0 %v6974
        %9925 = vmatprep.subr.bf16.mxu0 0
        %9926 = vmatpush2.bf16.msra.mxu0 %v6973
        %9927 = vmatprep.subr.bf16.mxu0 0
        %9928 = vmatpush2.bf16.msra.mxu0 %v6972
        %9929 = vmatprep.subr.bf16.mxu0 0
        %9930 = vmatpush2.bf16.msra.mxu0 %v6971
        %9931 = vmatprep.mubr.bf16.mxu0 %v2464
        %9932 = vmatmul.mubr.bf16.gmra.mxu0 %v2463
        %v9933 = vpop.f32.mrf.mxu0
        %v9934 = vadd.f32 %v9894, %v9933
        %v9935 = vpop.f32.mrf.mxu0
        %v9936 = vpop.f32.mrf.mxu0
        %v9937 = vpop.f32.mrf.mxu0
        %9938 = vdwg.mxu0
        %9939 = vmatprep.subr.bf16.mxu0 0
        %9940 = vmatpush1.bf16.msra.mxu0 %v6986
        %9941 = vmatprep.subr.bf16.mxu0 0
        %9942 = vmatpush1.bf16.msra.mxu0 %v6985
        %9943 = vmatprep.subr.bf16.mxu0 0
        %9944 = vmatpush1.bf16.msra.mxu0 %v6984
        %9945 = vmatprep.subr.bf16.mxu0 0
        %9946 = vmatpush1.bf16.msra.mxu0 %v6983
        %9947 = vmatprep.subr.bf16.mxu0 0
        %9948 = vmatpush1.bf16.msra.mxu0 %v6982
        %9949 = vmatprep.subr.bf16.mxu0 0
        %9950 = vmatpush1.bf16.msra.mxu0 %v6981
        %9951 = vmatprep.subr.bf16.mxu0 0
        %9952 = vmatpush1.bf16.msra.mxu0 %v6980
        %9953 = vmatprep.subr.bf16.mxu0 0
        %9954 = vmatpush1.bf16.msra.mxu0 %v6979
        %9955 = vmatprep.subr.bf16.mxu0 0
        %9956 = vmatpush2.bf16.msra.mxu0 %v6994
        %9957 = vmatprep.subr.bf16.mxu0 0
        %9958 = vmatpush2.bf16.msra.mxu0 %v6993
        %9959 = vmatprep.subr.bf16.mxu0 0
        %9960 = vmatpush2.bf16.msra.mxu0 %v6992
        %9961 = vmatprep.subr.bf16.mxu0 0
        %9962 = vmatpush2.bf16.msra.mxu0 %v6991
        %9963 = vmatprep.subr.bf16.mxu0 0
        %9964 = vmatpush2.bf16.msra.mxu0 %v6990
        %9965 = vmatprep.subr.bf16.mxu0 0
        %9966 = vmatpush2.bf16.msra.mxu0 %v6989
        %9967 = vmatprep.subr.bf16.mxu0 0
        %9968 = vmatpush2.bf16.msra.mxu0 %v6988
        %9969 = vmatprep.subr.bf16.mxu0 0
        %9970 = vmatpush2.bf16.msra.mxu0 %v6987
        %9971 = vmatprep.mubr.bf16.mxu0 %v2466
        %9972 = vmatmul.mubr.bf16.gmra.mxu0 %v2465
        %v9973 = vpop.f32.mrf.mxu0
        %v9974 = vadd.f32 %v9934, %v9973
        %v9975 = vpop.f32.mrf.mxu0
        %v9976 = vpop.f32.mrf.mxu0
        %v9977 = vpop.f32.mrf.mxu0
        %9978 = vdwg.mxu0
        %9979 = vmatprep.subr.bf16.mxu0 0
        %9980 = vmatpush1.bf16.msra.mxu0 %v7002
        %9981 = vmatprep.subr.bf16.mxu0 0
        %9982 = vmatpush1.bf16.msra.mxu0 %v7001
        %9983 = vmatprep.subr.bf16.mxu0 0
        %9984 = vmatpush1.bf16.msra.mxu0 %v7000
        %9985 = vmatprep.subr.bf16.mxu0 0
        %9986 = vmatpush1.bf16.msra.mxu0 %v6999
        %9987 = vmatprep.subr.bf16.mxu0 0
        %9988 = vmatpush1.bf16.msra.mxu0 %v6998
        %9989 = vmatprep.subr.bf16.mxu0 0
        %9990 = vmatpush1.bf16.msra.mxu0 %v6997
        %9991 = vmatprep.subr.bf16.mxu0 0
        %9992 = vmatpush1.bf16.msra.mxu0 %v6996
        %9993 = vmatprep.subr.bf16.mxu0 0
        %9994 = vmatpush1.bf16.msra.mxu0 %v6995
        %9995 = vmatprep.subr.bf16.mxu0 0
        %9996 = vmatpush2.bf16.msra.mxu0 %v7010
        %9997 = vmatprep.subr.bf16.mxu0 0
        %9998 = vmatpush2.bf16.msra.mxu0 %v7009
        %9999 = vmatprep.subr.bf16.mxu0 0
        %10000 = vmatpush2.bf16.msra.mxu0 %v7008
        %10001 = vmatprep.subr.bf16.mxu0 0
        %10002 = vmatpush2.bf16.msra.mxu0 %v7007
        %10003 = vmatprep.subr.bf16.mxu0 0
        %10004 = vmatpush2.bf16.msra.mxu0 %v7006
        %10005 = vmatprep.subr.bf16.mxu0 0
        %10006 = vmatpush2.bf16.msra.mxu0 %v7005
        %10007 = vmatprep.subr.bf16.mxu0 0
        %10008 = vmatpush2.bf16.msra.mxu0 %v7004
        %10009 = vmatprep.subr.bf16.mxu0 0
        %10010 = vmatpush2.bf16.msra.mxu0 %v7003
        %10011 = vmatprep.mubr.bf16.mxu0 %v2468
        %10012 = vmatmul.mubr.bf16.gmra.mxu0 %v2467
        %v10013 = vpop.f32.mrf.mxu0
        %v10014 = vadd.f32 %v9974, %v10013
        %v10015 = vpop.f32.mrf.mxu0
        %v10016 = vpop.f32.mrf.mxu0
        %v10017 = vpop.f32.mrf.mxu0
        %10018 = vdwg.mxu0
        %10019 = vmatprep.subr.bf16.mxu0 0
        %10020 = vmatpush1.bf16.msra.mxu0 %v7018
        %10021 = vmatprep.subr.bf16.mxu0 0
        %10022 = vmatpush1.bf16.msra.mxu0 %v7017
        %10023 = vmatprep.subr.bf16.mxu0 0
        %10024 = vmatpush1.bf16.msra.mxu0 %v7016
        %10025 = vmatprep.subr.bf16.mxu0 0
        %10026 = vmatpush1.bf16.msra.mxu0 %v7015
        %10027 = vmatprep.subr.bf16.mxu0 0
        %10028 = vmatpush1.bf16.msra.mxu0 %v7014
        %10029 = vmatprep.subr.bf16.mxu0 0
        %10030 = vmatpush1.bf16.msra.mxu0 %v7013
        %10031 = vmatprep.subr.bf16.mxu0 0
        %10032 = vmatpush1.bf16.msra.mxu0 %v7012
        %10033 = vmatprep.subr.bf16.mxu0 0
        %10034 = vmatpush1.bf16.msra.mxu0 %v7011
        %10035 = vmatprep.subr.bf16.mxu0 0
        %10036 = vmatpush2.bf16.msra.mxu0 %v7026
        %10037 = vmatprep.subr.bf16.mxu0 0
        %10038 = vmatpush2.bf16.msra.mxu0 %v7025
        %10039 = vmatprep.subr.bf16.mxu0 0
        %10040 = vmatpush2.bf16.msra.mxu0 %v7024
        %10041 = vmatprep.subr.bf16.mxu0 0
        %10042 = vmatpush2.bf16.msra.mxu0 %v7023
        %10043 = vmatprep.subr.bf16.mxu0 0
        %10044 = vmatpush2.bf16.msra.mxu0 %v7022
        %10045 = vmatprep.subr.bf16.mxu0 0
        %10046 = vmatpush2.bf16.msra.mxu0 %v7021
        %10047 = vmatprep.subr.bf16.mxu0 0
        %10048 = vmatpush2.bf16.msra.mxu0 %v7020
        %10049 = vmatprep.subr.bf16.mxu0 0
        %10050 = vmatpush2.bf16.msra.mxu0 %v7019
        %10051 = vmatprep.mubr.bf16.mxu0 %v2470
        %10052 = vmatmul.mubr.bf16.gmra.mxu0 %v2469
        %v10053 = vpop.f32.mrf.mxu0
        %v10054 = vadd.f32 %v10014, %v10053
        %v10055 = vpop.f32.mrf.mxu0
        %v10056 = vpop.f32.mrf.mxu0
        %v10057 = vpop.f32.mrf.mxu0
        %10058 = vdwg.mxu0
        %10059 = vmatprep.subr.bf16.mxu0 0
        %10060 = vmatpush1.bf16.msra.mxu0 %v7034
        %10061 = vmatprep.subr.bf16.mxu0 0
        %10062 = vmatpush1.bf16.msra.mxu0 %v7033
        %10063 = vmatprep.subr.bf16.mxu0 0
        %10064 = vmatpush1.bf16.msra.mxu0 %v7032
        %10065 = vmatprep.subr.bf16.mxu0 0
        %10066 = vmatpush1.bf16.msra.mxu0 %v7031
        %10067 = vmatprep.subr.bf16.mxu0 0
        %10068 = vmatpush1.bf16.msra.mxu0 %v7030
        %10069 = vmatprep.subr.bf16.mxu0 0
        %10070 = vmatpush1.bf16.msra.mxu0 %v7029
        %10071 = vmatprep.subr.bf16.mxu0 0
        %10072 = vmatpush1.bf16.msra.mxu0 %v7028
        %10073 = vmatprep.subr.bf16.mxu0 0
        %10074 = vmatpush1.bf16.msra.mxu0 %v7027
        %10075 = vmatprep.subr.bf16.mxu0 0
        %10076 = vmatpush2.bf16.msra.mxu0 %v7042
        %10077 = vmatprep.subr.bf16.mxu0 0
        %10078 = vmatpush2.bf16.msra.mxu0 %v7041
        %10079 = vmatprep.subr.bf16.mxu0 0
        %10080 = vmatpush2.bf16.msra.mxu0 %v7040
        %10081 = vmatprep.subr.bf16.mxu0 0
        %10082 = vmatpush2.bf16.msra.mxu0 %v7039
        %10083 = vmatprep.subr.bf16.mxu0 0
        %10084 = vmatpush2.bf16.msra.mxu0 %v7038
        %10085 = vmatprep.subr.bf16.mxu0 0
        %10086 = vmatpush2.bf16.msra.mxu0 %v7037
        %10087 = vmatprep.subr.bf16.mxu0 0
        %10088 = vmatpush2.bf16.msra.mxu0 %v7036
        %10089 = vmatprep.subr.bf16.mxu0 0
        %10090 = vmatpush2.bf16.msra.mxu0 %v7035
        %10091 = vmatprep.mubr.bf16.mxu0 %v2472
        %10092 = vmatmul.mubr.bf16.gmra.mxu0 %v2471
        %v10093 = vpop.f32.mrf.mxu0
        %v10094 = vadd.f32 %v10054, %v10093
        %v10095 = vpop.f32.mrf.mxu0
        %v10096 = vpop.f32.mrf.mxu0
        %v10097 = vpop.f32.mrf.mxu0
        %10098 = vdwg.mxu0
        %10099 = vmatprep.subr.bf16.mxu0 0
        %10100 = vmatpush1.bf16.msra.mxu0 %v7050
        %10101 = vmatprep.subr.bf16.mxu0 0
        %10102 = vmatpush1.bf16.msra.mxu0 %v7049
        %10103 = vmatprep.subr.bf16.mxu0 0
        %10104 = vmatpush1.bf16.msra.mxu0 %v7048
        %10105 = vmatprep.subr.bf16.mxu0 0
        %10106 = vmatpush1.bf16.msra.mxu0 %v7047
        %10107 = vmatprep.subr.bf16.mxu0 0
        %10108 = vmatpush1.bf16.msra.mxu0 %v7046
        %10109 = vmatprep.subr.bf16.mxu0 0
        %10110 = vmatpush1.bf16.msra.mxu0 %v7045
        %10111 = vmatprep.subr.bf16.mxu0 0
        %10112 = vmatpush1.bf16.msra.mxu0 %v7044
        %10113 = vmatprep.subr.bf16.mxu0 0
        %10114 = vmatpush1.bf16.msra.mxu0 %v7043
        %10115 = vmatprep.subr.bf16.mxu0 0
        %10116 = vmatpush2.bf16.msra.mxu0 %v7058
        %10117 = vmatprep.subr.bf16.mxu0 0
        %10118 = vmatpush2.bf16.msra.mxu0 %v7057
        %10119 = vmatprep.subr.bf16.mxu0 0
        %10120 = vmatpush2.bf16.msra.mxu0 %v7056
        %10121 = vmatprep.subr.bf16.mxu0 0
        %10122 = vmatpush2.bf16.msra.mxu0 %v7055
        %10123 = vmatprep.subr.bf16.mxu0 0
        %10124 = vmatpush2.bf16.msra.mxu0 %v7054
        %10125 = vmatprep.subr.bf16.mxu0 0
        %10126 = vmatpush2.bf16.msra.mxu0 %v7053
        %10127 = vmatprep.subr.bf16.mxu0 0
        %10128 = vmatpush2.bf16.msra.mxu0 %v7052
        %10129 = vmatprep.subr.bf16.mxu0 0
        %10130 = vmatpush2.bf16.msra.mxu0 %v7051
        %10131 = vmatprep.mubr.bf16.mxu0 %v2474
        %10132 = vmatmul.mubr.bf16.gmra.mxu0 %v2473
        %v10133 = vpop.f32.mrf.mxu0
        %v10134 = vadd.f32 %v10094, %v10133
        %v10135 = vpop.f32.mrf.mxu0
        %v10136 = vpop.f32.mrf.mxu0
        %v10137 = vpop.f32.mrf.mxu0
        %10138 = vdwg.mxu0
        %10139 = vmatprep.subr.bf16.mxu0 0
        %10140 = vmatpush1.bf16.msra.mxu0 %v7066
        %10141 = vmatprep.subr.bf16.mxu0 0
        %10142 = vmatpush1.bf16.msra.mxu0 %v7065
        %10143 = vmatprep.subr.bf16.mxu0 0
        %10144 = vmatpush1.bf16.msra.mxu0 %v7064
        %10145 = vmatprep.subr.bf16.mxu0 0
        %10146 = vmatpush1.bf16.msra.mxu0 %v7063
        %10147 = vmatprep.subr.bf16.mxu0 0
        %10148 = vmatpush1.bf16.msra.mxu0 %v7062
        %10149 = vmatprep.subr.bf16.mxu0 0
        %10150 = vmatpush1.bf16.msra.mxu0 %v7061
        %10151 = vmatprep.subr.bf16.mxu0 0
        %10152 = vmatpush1.bf16.msra.mxu0 %v7060
        %10153 = vmatprep.subr.bf16.mxu0 0
        %10154 = vmatpush1.bf16.msra.mxu0 %v7059
        %10155 = vmatprep.subr.bf16.mxu0 0
        %10156 = vmatpush2.bf16.msra.mxu0 %v7074
        %10157 = vmatprep.subr.bf16.mxu0 0
        %10158 = vmatpush2.bf16.msra.mxu0 %v7073
        %10159 = vmatprep.subr.bf16.mxu0 0
        %10160 = vmatpush2.bf16.msra.mxu0 %v7072
        %10161 = vmatprep.subr.bf16.mxu0 0
        %10162 = vmatpush2.bf16.msra.mxu0 %v7071
        %10163 = vmatprep.subr.bf16.mxu0 0
        %10164 = vmatpush2.bf16.msra.mxu0 %v7070
        %10165 = vmatprep.subr.bf16.mxu0 0
        %10166 = vmatpush2.bf16.msra.mxu0 %v7069
        %10167 = vmatprep.subr.bf16.mxu0 0
        %10168 = vmatpush2.bf16.msra.mxu0 %v7068
        %10169 = vmatprep.subr.bf16.mxu0 0
        %10170 = vmatpush2.bf16.msra.mxu0 %v7067
        %10171 = vmatprep.mubr.bf16.mxu0 %v2476
        %10172 = vmatmul.mubr.bf16.gmra.mxu0 %v2475
        %v10173 = vpop.f32.mrf.mxu0
        %v10174 = vadd.f32 %v10134, %v10173
        %v10175 = vpop.f32.mrf.mxu0
        %v10176 = vpop.f32.mrf.mxu0
        %v10177 = vpop.f32.mrf.mxu0
        %10178 = vdwg.mxu0
        %10179 = vmatprep.subr.bf16.mxu0 0
        %10180 = vmatpush1.bf16.msra.mxu0 %v7082
        %10181 = vmatprep.subr.bf16.mxu0 0
        %10182 = vmatpush1.bf16.msra.mxu0 %v7081
        %10183 = vmatprep.subr.bf16.mxu0 0
        %10184 = vmatpush1.bf16.msra.mxu0 %v7080
        %10185 = vmatprep.subr.bf16.mxu0 0
        %10186 = vmatpush1.bf16.msra.mxu0 %v7079
        %10187 = vmatprep.subr.bf16.mxu0 0
        %10188 = vmatpush1.bf16.msra.mxu0 %v7078
        %10189 = vmatprep.subr.bf16.mxu0 0
        %10190 = vmatpush1.bf16.msra.mxu0 %v7077
        %10191 = vmatprep.subr.bf16.mxu0 0
        %10192 = vmatpush1.bf16.msra.mxu0 %v7076
        %10193 = vmatprep.subr.bf16.mxu0 0
        %10194 = vmatpush1.bf16.msra.mxu0 %v7075
        %10195 = vmatprep.subr.bf16.mxu0 0
        %10196 = vmatpush2.bf16.msra.mxu0 %v7090
        %10197 = vmatprep.subr.bf16.mxu0 0
        %10198 = vmatpush2.bf16.msra.mxu0 %v7089
        %10199 = vmatprep.subr.bf16.mxu0 0
        %10200 = vmatpush2.bf16.msra.mxu0 %v7088
        %10201 = vmatprep.subr.bf16.mxu0 0
        %10202 = vmatpush2.bf16.msra.mxu0 %v7087
        %10203 = vmatprep.subr.bf16.mxu0 0
        %10204 = vmatpush2.bf16.msra.mxu0 %v7086
        %10205 = vmatprep.subr.bf16.mxu0 0
        %10206 = vmatpush2.bf16.msra.mxu0 %v7085
        %10207 = vmatprep.subr.bf16.mxu0 0
        %10208 = vmatpush2.bf16.msra.mxu0 %v7084
        %10209 = vmatprep.subr.bf16.mxu0 0
        %10210 = vmatpush2.bf16.msra.mxu0 %v7083
        %10211 = vmatprep.mubr.bf16.mxu0 %v2478
        %10212 = vmatmul.mubr.bf16.gmra.mxu0 %v2477
        %v10213 = vpop.f32.mrf.mxu0
        %v10214 = vadd.f32 %v10174, %v10213
        %v10215 = vpop.f32.mrf.mxu0
        %v10216 = vpop.f32.mrf.mxu0
        %v10217 = vpop.f32.mrf.mxu0
        %10218 = vdwg.mxu0
        %10219 = vmatprep.subr.bf16.mxu0 0
        %10220 = vmatpush1.bf16.msra.mxu0 %v7098
        %10221 = vmatprep.subr.bf16.mxu0 0
        %10222 = vmatpush1.bf16.msra.mxu0 %v7097
        %10223 = vmatprep.subr.bf16.mxu0 0
        %10224 = vmatpush1.bf16.msra.mxu0 %v7096
        %10225 = vmatprep.subr.bf16.mxu0 0
        %10226 = vmatpush1.bf16.msra.mxu0 %v7095
        %10227 = vmatprep.subr.bf16.mxu0 0
        %10228 = vmatpush1.bf16.msra.mxu0 %v7094
        %10229 = vmatprep.subr.bf16.mxu0 0
        %10230 = vmatpush1.bf16.msra.mxu0 %v7093
        %10231 = vmatprep.subr.bf16.mxu0 0
        %10232 = vmatpush1.bf16.msra.mxu0 %v7092
        %10233 = vmatprep.subr.bf16.mxu0 0
        %10234 = vmatpush1.bf16.msra.mxu0 %v7091
        %10235 = vmatprep.subr.bf16.mxu0 0
        %10236 = vmatpush2.bf16.msra.mxu0 %v7106
        %10237 = vmatprep.subr.bf16.mxu0 0
        %10238 = vmatpush2.bf16.msra.mxu0 %v7105
        %10239 = vmatprep.subr.bf16.mxu0 0
        %10240 = vmatpush2.bf16.msra.mxu0 %v7104
        %10241 = vmatprep.subr.bf16.mxu0 0
        %10242 = vmatpush2.bf16.msra.mxu0 %v7103
        %10243 = vmatprep.subr.bf16.mxu0 0
        %10244 = vmatpush2.bf16.msra.mxu0 %v7102
        %10245 = vmatprep.subr.bf16.mxu0 0
        %10246 = vmatpush2.bf16.msra.mxu0 %v7101
        %10247 = vmatprep.subr.bf16.mxu0 0
        %10248 = vmatpush2.bf16.msra.mxu0 %v7100
        %10249 = vmatprep.subr.bf16.mxu0 0
        %10250 = vmatpush2.bf16.msra.mxu0 %v7099
        %10251 = vmatprep.mubr.bf16.mxu0 %v2480
        %10252 = vmatmul.mubr.bf16.gmra.mxu0 %v2479
        %v10253 = vpop.f32.mrf.mxu0
        %v10254 = vadd.f32 %v10214, %v10253
        %v10255 = vpop.f32.mrf.mxu0
        %v10256 = vpop.f32.mrf.mxu0
        %v10257 = vpop.f32.mrf.mxu0
        %10258 = vdwg.mxu0
        %10259 = vmatprep.subr.bf16.mxu0 0
        %10260 = vmatpush1.bf16.msra.mxu0 %v7114
        %10261 = vmatprep.subr.bf16.mxu0 0
        %10262 = vmatpush1.bf16.msra.mxu0 %v7113
        %10263 = vmatprep.subr.bf16.mxu0 0
        %10264 = vmatpush1.bf16.msra.mxu0 %v7112
        %10265 = vmatprep.subr.bf16.mxu0 0
        %10266 = vmatpush1.bf16.msra.mxu0 %v7111
        %10267 = vmatprep.subr.bf16.mxu0 0
        %10268 = vmatpush1.bf16.msra.mxu0 %v7110
        %10269 = vmatprep.subr.bf16.mxu0 0
        %10270 = vmatpush1.bf16.msra.mxu0 %v7109
        %10271 = vmatprep.subr.bf16.mxu0 0
        %10272 = vmatpush1.bf16.msra.mxu0 %v7108
        %10273 = vmatprep.subr.bf16.mxu0 0
        %10274 = vmatpush1.bf16.msra.mxu0 %v7107
        %10275 = vmatprep.subr.bf16.mxu0 0
        %10276 = vmatpush2.bf16.msra.mxu0 0
        %10277 = vmatprep.subr.bf16.mxu0 0
        %10278 = vmatpush2.bf16.msra.mxu0 0
        %10279 = vmatprep.subr.bf16.mxu0 0
        %10280 = vmatpush2.bf16.msra.mxu0 0
        %10281 = vmatprep.subr.bf16.mxu0 0
        %10282 = vmatpush2.bf16.msra.mxu0 0
        %10283 = vmatprep.subr.bf16.mxu0 0
        %10284 = vmatpush2.bf16.msra.mxu0 0
        %10285 = vmatprep.subr.bf16.mxu0 0
        %10286 = vmatpush2.bf16.msra.mxu0 0
        %10287 = vmatprep.subr.bf16.mxu0 0
        %10288 = vmatpush2.bf16.msra.mxu0 0
        %10289 = vmatprep.subr.bf16.mxu0 0
        %10290 = vmatpush2.bf16.msra.mxu0 0
        %10291 = vmatprep.mubr.bf16.mxu0 0
        %10292 = vmatmul.mubr.bf16.gmra.mxu0 %v2481
        %v10293 = vpop.f32.mrf.mxu0
        %v10294 = vadd.f32 %v10254, %v10293
        %v10295 = vpop.f32.mrf.mxu0
        %v10296 = vpop.f32.mrf.mxu0
        %v10297 = vpop.f32.mrf.mxu0
        %10298 = vdwg.mxu0
        %v10299 = vadd.f32 %v333, %v10294
        %10300 = vst [vmem:[#allocation2] sm:$0xff] %v10299
        // Predicated region
        $region53: #{actor_forward.1} parent=35 // pred_check
          %p10301 = pneg %p328
        $region54: #{actor_forward.1} parent=35 // pred_check_branch
          %10303 = sbr.rel (%p10301) target = $region56
        $region55: #{actor_forward.1} parent=35 // pred_region
          %v10304 = vld [vmem:[#allocation2] sm:$0xff]
          %v10305 = vld [vmem:[%s268] sm:$0x1]
          %v10307 = vlaneseq
          %v10308 = vshrl.u32 %v10307, 7
          %v10309 = vsub.s32 0, %v10308
          %v10310 = vrot.slane %v10305, %v10309
          %v10312 = vadd.f32 %v10304, %v10310
          %v10313 = vmax.f32 %v10312, 0.0
          %v10314 = vpack.c.bf16 %v10313, %v10313
          %v10315 = vld [vmem:[%s277] sm:$0xf]
          %v10316 = vld [vmem:[%s277 + $0x4] sm:$0xf]
          %v10317 = vld [vmem:[%s277 + $0x8] sm:$0xf]
          %v10318 = vld [vmem:[%s277 + $0xc] sm:$0xf]
          %v10319 = vld [vmem:[%s277 + $0x10] sm:$0xf]
          %v10320 = vld [vmem:[%s277 + $0x14] sm:$0xf]
          %v10321 = vld [vmem:[%s277 + $0x18] sm:$0xf]
          %v10322 = vld [vmem:[%s277 + $0x1c] sm:$0xf]
          %v10323 = vld [vmem:[%s277 + $0x20] sm:$0xf]
          %v10324 = vld [vmem:[%s277 + $0x24] sm:$0xf]
          %v10325 = vld [vmem:[%s277 + $0x28] sm:$0xf]
          %v10326 = vld [vmem:[%s277 + $0x2c] sm:$0xf]
          %v10327 = vld [vmem:[%s277 + $0x30] sm:$0xf]
          %v10328 = vld [vmem:[%s277 + $0x34] sm:$0xf]
          %v10329 = vld [vmem:[%s277 + $0x38] sm:$0xf]
          %v10330 = vld [vmem:[%s277 + $0x3c] sm:$0xf]
          %v10347 = vunpack.c.l.b16 %v10315
          %v10348 = vunpack.c.l.b16 %v10316
          %v10349 = vunpack.c.l.b16 %v10317
          %v10350 = vunpack.c.l.b16 %v10318
          %v10351 = vunpack.c.l.b16 %v10319
          %v10352 = vunpack.c.l.b16 %v10320
          %v10353 = vunpack.c.l.b16 %v10321
          %v10354 = vunpack.c.l.b16 %v10322
          %v10355 = vunpack.c.l.b16 %v10323
          %v10356 = vunpack.c.l.b16 %v10324
          %v10357 = vunpack.c.l.b16 %v10325
          %v10358 = vunpack.c.l.b16 %v10326
          %v10359 = vunpack.c.l.b16 %v10327
          %v10360 = vunpack.c.l.b16 %v10328
          %v10361 = vunpack.c.l.b16 %v10329
          %v10362 = vunpack.c.l.b16 %v10330
          %v10363 = vpack.c.b16 %v10348, %v10347
          %v10364 = vpack.c.b16 %v10350, %v10349
          %v10365 = vpack.c.b16 %v10352, %v10351
          %v10366 = vpack.c.b16 %v10354, %v10353
          %v10367 = vpack.c.b16 %v10356, %v10355
          %v10368 = vpack.c.b16 %v10358, %v10357
          %v10369 = vpack.c.b16 %v10360, %v10359
          %v10370 = vpack.c.b16 %v10362, %v10361
          %10379 = vmatprep.subr.bf16.mxu0 0
          %10380 = vmatpush1.bf16.msra.mxu0 %v10370
          %10381 = vmatprep.subr.bf16.mxu0 0
          %10382 = vmatpush1.bf16.msra.mxu0 %v10369
          %10383 = vmatprep.subr.bf16.mxu0 0
          %10384 = vmatpush1.bf16.msra.mxu0 %v10368
          %10385 = vmatprep.subr.bf16.mxu0 0
          %10386 = vmatpush1.bf16.msra.mxu0 %v10367
          %10387 = vmatprep.subr.bf16.mxu0 0
          %10388 = vmatpush1.bf16.msra.mxu0 %v10366
          %10389 = vmatprep.subr.bf16.mxu0 0
          %10390 = vmatpush1.bf16.msra.mxu0 %v10365
          %10391 = vmatprep.subr.bf16.mxu0 0
          %10392 = vmatpush1.bf16.msra.mxu0 %v10364
          %10393 = vmatprep.subr.bf16.mxu0 0
          %10394 = vmatpush1.bf16.msra.mxu0 %v10363
          %10395 = vmatprep.subr.bf16.mxu0 0
          %10396 = vmatpush2.bf16.msra.mxu0 0
          %10397 = vmatprep.subr.bf16.mxu0 0
          %10398 = vmatpush2.bf16.msra.mxu0 0
          %10399 = vmatprep.subr.bf16.mxu0 0
          %10400 = vmatpush2.bf16.msra.mxu0 0
          %10401 = vmatprep.subr.bf16.mxu0 0
          %10402 = vmatpush2.bf16.msra.mxu0 0
          %10403 = vmatprep.subr.bf16.mxu0 0
          %10404 = vmatpush2.bf16.msra.mxu0 0
          %10405 = vmatprep.subr.bf16.mxu0 0
          %10406 = vmatpush2.bf16.msra.mxu0 0
          %10407 = vmatprep.subr.bf16.mxu0 0
          %10408 = vmatpush2.bf16.msra.mxu0 0
          %10409 = vmatprep.subr.bf16.mxu0 0
          %10410 = vmatpush2.bf16.msra.mxu0 0
          %10411 = vmatprep.mubr.bf16.mxu0 0
          %10412 = vmatmul.mubr.bf16.gmra.mxu0 %v10314
          %v10413 = vpop.f32.mrf.mxu0
          %v10414 = vadd.f32 0.0, %v10413
          %v10415 = vpop.f32.mrf.mxu0
          %v10416 = vpop.f32.mrf.mxu0
          %v10417 = vpop.f32.mrf.mxu0
          %10418 = vdwg.mxu0
          %10419 = vst [vmem:[%s326] sm:$0xff] %v10414
        $region56: #{actor_forward.1} parent=35 // pred_fallthru
          _
        %p10420 = scmp.lt.s32.totalorder %s25, 1
        %s10421 = scalar_select %p10420, %s25, 1
        %s10422 = smul.addr %s10421, 8
        %s10423 = scalar_lea.vmem %s4, %s10422
        // Predicated region
        $region57: #{actor_forward.1} parent=35 // pred_check
          %p10424 = pneg %p157
        $region58: #{actor_forward.1} parent=35 // pred_check_branch
          %10426 = sbr.rel (%p10424) target = $region60
        $region59: #{actor_forward.1} parent=35 // pred_region
          _
        $region60: #{actor_forward.1} parent=35 // pred_fallthru
          _
      $region36: #{actor_forward.1} parent=5 // pred_fallthru
        _
      %p10427 = scmp.le.s32.totalorder 2, %s16
      // Predicated region
      $region61: #{actor_forward.1} parent=5 // pred_check
        %p10428 = pneg %p10427
      $region62: #{actor_forward.1} parent=5 // pred_check_branch
        %10430 = sbr.rel (%p10428) target = $region64
      $region63: #{actor_forward.1} parent=5 // pred_region
        %s10431 = ssub.s32 %s16, 2
        // Predicated region
        $region65: #{actor_forward.1} parent=63 // pred_check
          %p10432 = pneg %p163
        $region66: #{actor_forward.1} parent=63 // pred_check_branch
          %10434 = sbr.rel (%p10432) target = $region68
        $region67: #{actor_forward.1} parent=63 // pred_region
          %p10435 = scmp.lt.s32.totalorder %s27, 1
          %s10436 = scalar_select %p10435, %s27, 1
          %s10437 = smul.addr %s10436, 8
          %s10438 = scalar_lea.vmem %s4, %s10437
        $region68: #{actor_forward.1} parent=63 // pred_fallthru
          _
      $region64: #{actor_forward.1} parent=5 // pred_fallthru
        _
    $region6: #{actor_forward.1} parent=1 // loop_footer
      %s20 = sadd.s32 1, %s16
    $region7: #{actor_forward.1} parent=1 // loop_footer_branch
      %15 = sbr.rel target = $region3
    $region8: #{actor_forward.1} parent=1 // loop_exit
      _
    %10439 = vsyncpa [#allocation4], 1
    %s10440 = scalar_lea.sflag [#allocation4], 1
    %10441 = vsyncpa %s10440, 1
    %10442 = vsyncpa [#allocation6], 1
    %s10443 = scalar_lea.sflag [#allocation6], 1
    %10444 = vsyncpa %s10443, 1

</llo_original>
